<compile_context>
chip_gen: v7x
topology: tpu7x:2x2x1
jax: 0.10.0
libtpu: 0.0.40
codegen_flags: <defaults>
</compile_context>

<pallas_src>
import numpy as np
import jax
import jax.numpy as jnp
from jax import lax
from jax.experimental import pallas as pl
from jax.experimental.pallas import tpu as pltpu

# -------- config (mirrors MetaTrainer args at small scale) --------
TASK_NUM = 2                    # b  (task_num)
N_WAY, K_SPT, K_QRY = 2, 2, 2
SETSZ = N_WAY * K_SPT           # 4  (support set size)
QUERYSZ = N_WAY * K_QRY         # 4  (query set size)
S_ALL = SETSZ + QUERYSZ         # 8  support + query rows batched together
C, HH, WW = 4, 16, 16
FEAT = C * HH * WW              # 1024 flattened image features
SEQ_LEN = 8                     # args.seq_len
HID = 32                        # mapper hidden / embedding dim
VOCAB = 128                     # synthetic GPT vocab size
PAD_TOKEN_ID = VOCAB - 1        # stand-in for gpt_tokenizer.eos_token_id
UPDATE_LR = 0.4                 # args.update_lr
UPDATE_STEP = 3                 # args.update_step
NSTEP = UPDATE_STEP + 1
N_TOK = S_ALL * SEQ_LEN         # 64 token rows per task (support rows first)
N_SPT_TOK = SETSZ * SEQ_LEN     # 32 support token rows


# ----------------------- fused per-task MAML kernel -----------------------
def _maml_task_kernel(featrep_ref, featrepT_ref, y_ref, w_ref, b_ref,
                      postile_ref, e_ref, losses_ref, corrects_ref,
                      fastw_ref, fastb_ref):
    """One grid step == one meta-task: the full MAML inner loop.

    featrep_ref  : (1, N_TOK, FEAT)  image features repeated per token
    featrepT_ref : (1, FEAT, N_TOK)  transpose (gW = feat^T @ dhid, no in-kernel T)
    y_ref        : (1, N_TOK, 1)     target tokens (support then query)
    w_ref, b_ref : mapper_net params (FEAT, HID), (1, HID)
    postile_ref  : (N_TOK, HID)      positional table tiled over rows
    e_ref        : (VOCAB, HID)      frozen vocab embedding (LM head)
    losses_ref   : (1, 1, NSTEP)     per-step query CE loss for this task
    corrects_ref : (1, 1, NSTEP)     per-step correct-token count for this task
    fastw/fastb  : VMEM scratch fast weights, resident across inner steps
    """
    feat = featrep_ref[0]                 # [N_TOK, FEAT]
    featT = featrepT_ref[0]               # [FEAT, N_TOK]
    y = y_ref[0]                          # [N_TOK, 1] int32
    E = e_ref[...]                        # [VOCAB, HID]
    pos = postile_ref[...]                # [N_TOK, HID]
    n_tok = feat.shape[0]
    vocab = E.shape[0]

    # ---- step-invariant pieces, hoisted out of the unrolled inner loop ----
    iota_v = lax.broadcasted_iota(jnp.int32, (n_tok, vocab), 1)
    onehot = (iota_v == y).astype(jnp.float32)                  # [N_TOK, VOCAB]
    valid = (y != PAD_TOKEN_ID).astype(jnp.float32)             # [N_TOK, 1]
    tok_row = lax.broadcasted_iota(jnp.int32, (n_tok, 1), 0)
    is_qry = tok_row >= N_SPT_TOK                               # [N_TOK, 1] bool
    qf = is_qry.astype(jnp.float32)
    q_valid = valid * qf                                        # query tokens
    s_valid = valid * (1.0 - qf)                                # support tokens
    inv_ns = 1.0 / jnp.maximum(jnp.sum(s_valid, keepdims=True), 1.0)   # (1,1)
    inv_nq = 1.0 / jnp.maximum(jnp.sum(q_valid, keepdims=True), 1.0)   # (1,1)
    spt_scale = s_valid * inv_ns          # CE-mean scaling folded into dlogits
    step_iota = lax.broadcasted_iota(jnp.int32, (1, 1, NSTEP), 2)

    # fast weights start from the shared mapper_net params for every task
    fastw_ref[...] = w_ref[...]
    fastb_ref[...] = b_ref[...]

    loss_vec = jnp.zeros((1, 1, NSTEP), jnp.float32)
    corr_vec = jnp.zeros((1, 1, NSTEP), jnp.float32)

    for step in range(NSTEP):             # UPDATE_STEP + 1, statically unrolled
        wf = fastw_ref[...]               # [FEAT, HID]
        bf = fastb_ref[...]               # [1, HID]

        # mapper_net + positional table -> per-token hidden states
        hid = jnp.dot(feat, wf, preferred_element_type=jnp.float32) + bf + pos
        # LM head: logits = hid @ E^T   (contract on HID, no transpose op)
        logits = lax.dot_general(hid, E, (((1,), (1,)), ((), ())),
                                 preferred_element_type=jnp.float32)  # [N_TOK, V]

        m = jnp.max(logits, axis=-1, keepdims=True)
        ex = jnp.exp(logits - m)
        z = jnp.sum(ex, axis=-1, keepdims=True)
        tgt = jnp.sum(onehot * logits, axis=-1, keepdims=True)
        loss_tok = m + jnp.log(z) - tgt                                # [N_TOK, 1]

        # query cross-entropy (mean over non-pad tokens) + token accuracy
        loss_q = jnp.sum(loss_tok * q_valid, keepdims=True) * inv_nq   # (1, 1)
        is_max = logits == m                                           # reuse m
        pred = jnp.min(jnp.where(is_max, iota_v, vocab),
                       axis=-1, keepdims=True)                         # [N_TOK, 1]
        corr = jnp.sum(((pred == y) & is_qry).astype(jnp.float32),
                       keepdims=True)                                  # (1, 1)
        loss_vec = loss_vec + jnp.where(step_iota == step, loss_q, 0.0)
        corr_vec = corr_vec + jnp.where(step_iota == step, corr, 0.0)

        if step < UPDATE_STEP:
            # analytic grad of the support-set CE w.r.t. (W, b); SGD fast update
            p = ex / z
            dlogits = (p - onehot) * spt_scale                         # [N_TOK, V]
            dhid = jnp.dot(dlogits, E,
                           preferred_element_type=jnp.float32)         # [N_TOK, HID]
            gW = jnp.dot(featT, dhid,
                         preferred_element_type=jnp.float32)           # [FEAT, HID]
            gb = jnp.sum(dhid, axis=0, keepdims=True)                  # [1, HID]
            fastw_ref[...] = wf - UPDATE_LR * gW
            fastb_ref[...] = bf - UPDATE_LR * gb

    losses_ref[...] = loss_vec
    corrects_ref[...] = corr_vec


def _run_maml_tasks(feat_rep, feat_rep_t, y_tok, W, b2, pos_tile, E):
    task_num, n_tok, feat_dim = feat_rep.shape
    vocab, hid = E.shape
    return pl.pallas_call(
        _maml_task_kernel,
        out_shape=(jax.ShapeDtypeStruct((task_num, 1, NSTEP), jnp.float32),
                   jax.ShapeDtypeStruct((task_num, 1, NSTEP), jnp.float32)),
        grid=(task_num,),
        in_specs=[
            pl.BlockSpec((1, n_tok, feat_dim), lambda t: (t, 0, 0)),
            pl.BlockSpec((1, feat_dim, n_tok), lambda t: (t, 0, 0)),
            pl.BlockSpec((1, n_tok, 1), lambda t: (t, 0, 0)),
            pl.BlockSpec((feat_dim, hid), lambda t: (0, 0)),
            pl.BlockSpec((1, hid), lambda t: (0, 0)),
            pl.BlockSpec((n_tok, hid), lambda t: (0, 0)),
            pl.BlockSpec((vocab, hid), lambda t: (0, 0)),
        ],
        out_specs=(pl.BlockSpec((1, 1, NSTEP), lambda t: (t, 0, 0)),
                   pl.BlockSpec((1, 1, NSTEP), lambda t: (t, 0, 0))),
        scratch_shapes=[pltpu.VMEM((feat_dim, hid), jnp.float32),   # fast_W
                        pltpu.VMEM((1, hid), jnp.float32)],         # fast_b
        compiler_params=pltpu.CompilerParams(
            dimension_semantics=("parallel",)),
    )(feat_rep, feat_rep_t, y_tok, W, b2, pos_tile, E)


# ----------------------- MetaTrainer.forward (jitted) -----------------------
@jax.jit
def _meta_forward_device(params, x_spt, y_spt, x_qry, y_qry):
    W, b, pos, E = params
    task_num, setsz = x_spt.shape[0], x_spt.shape[1]
    querysz = x_qry.shape[1]
    seq_len = y_qry.shape[-1]

    # stack support (first) + query rows, flatten NCHW images, expand to tokens
    feat = jnp.concatenate(
        [x_spt.reshape(task_num, setsz, -1),
         x_qry.reshape(task_num, querysz, -1)], axis=1).astype(jnp.float32)
    feat_rep = jnp.repeat(feat, seq_len, axis=1)                  # [T, N_TOK, FEAT]
    feat_rep_t = jnp.swapaxes(feat_rep, 1, 2)                     # [T, FEAT, N_TOK]
    y_tok = jnp.concatenate([y_spt, y_qry], axis=1).astype(jnp.int32)
    y_tok = y_tok.reshape(task_num, (setsz + querysz) * seq_len, 1)
    pos_tile = jnp.tile(pos.astype(jnp.float32), (setsz + querysz, 1))

    losses_t, corr_t = _run_maml_tasks(
        feat_rep, feat_rep_t, y_tok, W.astype(jnp.float32),
        b.reshape(1, -1).astype(jnp.float32), pos_tile, E.astype(jnp.float32))

    losses_q = jnp.sum(losses_t[:, 0, :], axis=0)                 # [NSTEP]
    corrects = jnp.sum(corr_t[:, 0, :], axis=0)                   # [NSTEP] (counts)
    loss_q_meta = jnp.mean(losses_q[2:]) / task_num
    accs = corrects / (querysz * task_num * seq_len)
    return accs, losses_q, loss_q_meta


def meta_trainer_forward(params, x_spt, y_spt, y_spt_mask, id_spt,
                         x_qry, y_qry, y_qry_mask, id_qry):
    # TODO(synk): y_*_mask / id_* feed the GPT attention mask & logging in the
    # real MetaLearner; the synthetic LM head has no attention, so they are unused.
    # TODO(synk): the outer-loop AdamW step + grad-norm clipping (meta_optim)
    # needs second-order autodiff through the MAML loop; it is an optimizer side
    # effect, not a kernel op, and is omitted here.
    accs, losses_q, loss_q_meta = _meta_forward_device(
        params, x_spt, y_spt, x_qry, y_qry)
    accs_np = np.asarray(accs, dtype=np.float64)
    losses_q_ = [round(float(l), 4) for l in np.asarray(losses_q)]
    return accs_np, losses_q_, loss_q_meta


# ----------------------- main -----------------------
if __name__ == "__main__":
    key = jax.random.PRNGKey(0)
    kW, kb, kpos, kE, kxs, kxq, kys, kyq = jax.random.split(key, 8)

    # deterministic mapper_net params + frozen LM tables
    W = 0.02 * jax.random.normal(kW, (FEAT, HID), jnp.float32)
    b = jnp.zeros((HID,), jnp.float32)
    pos = 0.02 * jax.random.normal(kpos, (SEQ_LEN, HID), jnp.float32)
    E = 0.02 * jax.random.normal(kE, (VOCAB, HID), jnp.float32)
    params = (W, b, pos, E)

    # inputs: x_spt [b, setsz, c, h, w], y_spt [b, setsz, seq_len], etc.
    x_spt = jax.random.normal(kxs, (TASK_NUM, SETSZ, C, HH, WW), jnp.float32)
    x_qry = jax.random.normal(kxq, (TASK_NUM, QUERYSZ, C, HH, WW), jnp.float32)
    y_spt = jax.random.randint(kys, (TASK_NUM, SETSZ, SEQ_LEN), 0, VOCAB,
                               dtype=jnp.int32)
    y_qry = jax.random.randint(kyq, (TASK_NUM, QUERYSZ, SEQ_LEN), 0, VOCAB,
                               dtype=jnp.int32)
    y_spt_mask = jnp.ones((TASK_NUM, SETSZ, SEQ_LEN), jnp.int32)
    y_qry_mask = jnp.ones((TASK_NUM, QUERYSZ, SEQ_LEN), jnp.int32)
    id_spt = jnp.arange(TASK_NUM * SETSZ, dtype=jnp.int32).reshape(TASK_NUM, SETSZ)
    id_qry = jnp.arange(TASK_NUM * QUERYSZ, dtype=jnp.int32).reshape(TASK_NUM, QUERYSZ)

    accs, losses_q_, loss_q_meta = meta_trainer_forward(
        params, x_spt, y_spt, y_spt_mask, id_spt,
        x_qry, y_qry, y_qry_mask, id_qry)
    jax.block_until_ready(loss_q_meta)

    assert accs.shape == (UPDATE_STEP + 1,)
    assert len(losses_q_) == UPDATE_STEP + 1
    assert np.isfinite(float(loss_q_meta))
    print("KERNEL_OK")
</pallas_src>

<mosaic_0001>
module attributes {stable_mosaic.version = 11 : i64} {
  func.func @_maml_task_kernel(%arg0: i32, %arg1: memref<1x64x1024xf32, #tpu.memory_space<vmem>>, %arg2: memref<1x1024x64xf32, #tpu.memory_space<vmem>>, %arg3: memref<1x64x1xi32, #tpu.memory_space<vmem>>, %arg4: memref<1024x32xf32, #tpu.memory_space<vmem>>, %arg5: memref<1x32xf32, #tpu.memory_space<vmem>>, %arg6: memref<64x32xf32, #tpu.memory_space<vmem>>, %arg7: memref<128x32xf32, #tpu.memory_space<vmem>>, %arg8: memref<1x1x4xf32, #tpu.memory_space<vmem>>, %arg9: memref<1x1x4xf32, #tpu.memory_space<vmem>>, %arg10: memref<1024x32xf32, #tpu.memory_space<vmem>>, %arg11: memref<1x32xf32, #tpu.memory_space<vmem>>) attributes {dimension_semantics = [#tpu.dimension_semantics<parallel>], iteration_bounds = array<i64: 2>, scalar_prefetch = 0 : i64, scratch_operands = 2 : i64, tpu.core_type = #tpu.core_type<tc>, window_params = [{transform_indices = @transform_0, window_bounds = array<i64: 1, 64, 1024>}, {transform_indices = @transform_1, window_bounds = array<i64: 1, 1024, 64>}, {transform_indices = @transform_2, window_bounds = array<i64: 1, 64, 1>}, {pipeline_mode = #tpu.pipeline_mode<synchronous>, transform_indices = @transform_3, window_bounds = array<i64: 1024, 32>}, {pipeline_mode = #tpu.pipeline_mode<synchronous>, transform_indices = @transform_4, window_bounds = array<i64: 1, 32>}, {pipeline_mode = #tpu.pipeline_mode<synchronous>, transform_indices = @transform_5, window_bounds = array<i64: 64, 32>}, {pipeline_mode = #tpu.pipeline_mode<synchronous>, transform_indices = @transform_6, window_bounds = array<i64: 128, 32>}, {transform_indices = @transform_7, window_bounds = array<i64: 1, 1, 4>}, {transform_indices = @transform_8, window_bounds = array<i64: 1, 1, 4>}]} {
    %c0 = arith.constant 0 : index
    %c0_0 = arith.constant 0 : index
    %c0_1 = arith.constant 0 : index
    %0 = vector.load %arg1[%c0, %c0_0, %c0_1] : memref<1x64x1024xf32, #tpu.memory_space<vmem>>, vector<1x64x1024xf32>
    %1 = vector.shape_cast %0 : vector<1x64x1024xf32> to vector<64x1024xf32>
    %c0_2 = arith.constant 0 : index
    %c0_3 = arith.constant 0 : index
    %c0_4 = arith.constant 0 : index
    %2 = vector.load %arg2[%c0_2, %c0_3, %c0_4] : memref<1x1024x64xf32, #tpu.memory_space<vmem>>, vector<1x1024x64xf32>
    %3 = vector.shape_cast %2 : vector<1x1024x64xf32> to vector<1024x64xf32>
    %c0_5 = arith.constant 0 : index
    %c0_6 = arith.constant 0 : index
    %c0_7 = arith.constant 0 : index
    %4 = vector.load %arg3[%c0_5, %c0_6, %c0_7] : memref<1x64x1xi32, #tpu.memory_space<vmem>>, vector<1x64x1xi32>
    %5 = vector.shape_cast %4 : vector<1x64x1xi32> to vector<64x1xi32>
    %c0_8 = arith.constant 0 : index
    %c0_9 = arith.constant 0 : index
    %6 = vector.load %arg7[%c0_8, %c0_9] : memref<128x32xf32, #tpu.memory_space<vmem>>, vector<128x32xf32>
    %c0_10 = arith.constant 0 : index
    %c0_11 = arith.constant 0 : index
    %7 = vector.load %arg6[%c0_10, %c0_11] : memref<64x32xf32, #tpu.memory_space<vmem>>, vector<64x32xf32>
    %8 = tpu.iota {dimensions = array<i32: 1>} : vector<64x128xi32>
    %9 = vector.broadcast %5 : vector<64x1xi32> to vector<64x128xi32>
    %10 = arith.cmpi eq, %8, %9 : vector<64x128xi32>
    %11 = arith.extui %10 : vector<64x128xi1> to vector<64x128xi32>
    %12 = arith.sitofp %11 : vector<64x128xi32> to vector<64x128xf32>
    %c127_i32 = arith.constant 127 : i32
    %13 = vector.broadcast %c127_i32 : i32 to vector<64x1xi32>
    %14 = arith.cmpi ne, %5, %13 : vector<64x1xi32>
    %15 = arith.extui %14 : vector<64x1xi1> to vector<64x1xi32>
    %16 = arith.sitofp %15 : vector<64x1xi32> to vector<64x1xf32>
    %17 = tpu.iota {dimensions = array<i32: 0>} : vector<64x1xi32>
    %c32_i32 = arith.constant 32 : i32
    %18 = vector.broadcast %c32_i32 : i32 to vector<64x1xi32>
    %19 = arith.cmpi sge, %17, %18 : vector<64x1xi32>
    %20 = arith.extui %19 : vector<64x1xi1> to vector<64x1xi32>
    %21 = arith.sitofp %20 : vector<64x1xi32> to vector<64x1xf32>
    %22 = arith.mulf %16, %21 : vector<64x1xf32>
    %cst = arith.constant 1.000000e+00 : f32
    %23 = vector.broadcast %cst : f32 to vector<64x1xf32>
    %24 = arith.subf %23, %21 : vector<64x1xf32>
    %25 = arith.mulf %16, %24 : vector<64x1xf32>
    %26 = vector.shape_cast %25 : vector<64x1xf32> to vector<1x64x1xf32>
    %cst_12 = arith.constant dense<0.000000e+00> : vector<1xf32>
    %27 = vector.multi_reduction <add>, %26, %cst_12 [1, 2] : vector<1x64x1xf32> to vector<1xf32>
    %28 = vector.shape_cast %27 : vector<1xf32> to vector<1x1x1xf32>
    %29 = vector.extract %28[0, 0, 0] : f32 from vector<1x1x1xf32>
    %30 = vector.broadcast %29 : f32 to vector<1x1xf32>
    %cst_13 = arith.constant 1.000000e+00 : f32
    %31 = vector.broadcast %cst_13 : f32 to vector<1x1xf32>
    %32 = arith.maximumf %30, %31 : vector<1x1xf32>
    %cst_14 = arith.constant 1.000000e+00 : f32
    %33 = vector.broadcast %cst_14 : f32 to vector<1x1xf32>
    %34 = arith.divf %33, %32 : vector<1x1xf32>
    %35 = vector.shape_cast %22 : vector<64x1xf32> to vector<1x64x1xf32>
    %cst_15 = arith.constant dense<0.000000e+00> : vector<1xf32>
    %36 = vector.multi_reduction <add>, %35, %cst_15 [1, 2] : vector<1x64x1xf32> to vector<1xf32>
    %37 = vector.shape_cast %36 : vector<1xf32> to vector<1x1x1xf32>
    %38 = vector.extract %37[0, 0, 0] : f32 from vector<1x1x1xf32>
    %39 = vector.broadcast %38 : f32 to vector<1x1xf32>
    %cst_16 = arith.constant 1.000000e+00 : f32
    %40 = vector.broadcast %cst_16 : f32 to vector<1x1xf32>
    %41 = arith.maximumf %39, %40 : vector<1x1xf32>
    %cst_17 = arith.constant 1.000000e+00 : f32
    %42 = vector.broadcast %cst_17 : f32 to vector<1x1xf32>
    %43 = arith.divf %42, %41 : vector<1x1xf32>
    %44 = vector.broadcast %34 : vector<1x1xf32> to vector<64x1xf32>
    %45 = arith.mulf %25, %44 : vector<64x1xf32>
    %46 = tpu.iota {dimensions = array<i32: 2>} : vector<1x1x4xi32>
    %c0_18 = arith.constant 0 : index
    %c0_19 = arith.constant 0 : index
    %47 = vector.load %arg4[%c0_18, %c0_19] : memref<1024x32xf32, #tpu.memory_space<vmem>>, vector<1024x32xf32>
    %c0_20 = arith.constant 0 : index
    %c0_21 = arith.constant 0 : index
    %48 = vector.load %arg10[%c0_20, %c0_21] : memref<1024x32xf32, #tpu.memory_space<vmem>>, vector<1024x32xf32>
    tpu.vector_store %arg10[%c0_20, %c0_21], %47 {strides = array<i32>} : memref<1024x32xf32, #tpu.memory_space<vmem>>, vector<1024x32xf32>,
    %c0_22 = arith.constant 0 : index
    %c0_23 = arith.constant 0 : index
    %49 = vector.load %arg5[%c0_22, %c0_23] : memref<1x32xf32, #tpu.memory_space<vmem>>, vector<1x32xf32>
    %c0_24 = arith.constant 0 : index
    %c0_25 = arith.constant 0 : index
    %50 = vector.load %arg11[%c0_24, %c0_25] : memref<1x32xf32, #tpu.memory_space<vmem>>, vector<1x32xf32>
    tpu.vector_store %arg11[%c0_24, %c0_25], %49 {strides = array<i32>} : memref<1x32xf32, #tpu.memory_space<vmem>>, vector<1x32xf32>,
    %cst_26 = arith.constant 0.000000e+00 : f32
    %51 = vector.broadcast %cst_26 : f32 to vector<1x1x4xf32>
    %cst_27 = arith.constant 0.000000e+00 : f32
    %52 = vector.broadcast %cst_27 : f32 to vector<1x1x4xf32>
    %c0_28 = arith.constant 0 : index
    %c0_29 = arith.constant 0 : index
    %53 = vector.load %arg10[%c0_28, %c0_29] : memref<1024x32xf32, #tpu.memory_space<vmem>>, vector<1024x32xf32>
    %c0_30 = arith.constant 0 : index
    %c0_31 = arith.constant 0 : index
    %54 = vector.load %arg11[%c0_30, %c0_31] : memref<1x32xf32, #tpu.memory_space<vmem>>, vector<1x32xf32>
    %cst_32 = arith.constant dense<0.000000e+00> : vector<64x32xf32>
    %55 = tpu.matmul %1, %53, %cst_32 {dimension_numbers = #tpu.dot_dimension_numbers<[1], [0], [0], [1], [0, 0, 1, 1], [], []>} : vector<64x1024xf32>, vector<1024x32xf32>, vector<64x32xf32> -> vector<64x32xf32>
    %56 = vector.broadcast %54 : vector<1x32xf32> to vector<64x32xf32>
    %57 = arith.addf %55, %56 : vector<64x32xf32>
    %58 = arith.addf %57, %7 : vector<64x32xf32>
    %cst_33 = arith.constant dense<0.000000e+00> : vector<64x128xf32>
    %59 = tpu.matmul %58, %6, %cst_33 {dimension_numbers = #tpu.dot_dimension_numbers<[1], [1], [0], [0], [0, 0, 1, 0], [], []>} : vector<64x32xf32>, vector<128x32xf32>, vector<64x128xf32> -> vector<64x128xf32>
    %cst_34 = arith.constant dense<0xFF800000> : vector<64xf32>
    %60 = vector.multi_reduction <maximumf>, %59, %cst_34 [1] : vector<64x128xf32> to vector<64xf32>
    %61 = vector.shape_cast %60 : vector<64xf32> to vector<64x1xf32>
    %62 = vector.broadcast %61 : vector<64x1xf32> to vector<64x128xf32>
    %63 = arith.subf %59, %62 : vector<64x128xf32>
    %64 = math.exp %63 : vector<64x128xf32>
    %cst_35 = arith.constant dense<0.000000e+00> : vector<64xf32>
    %65 = vector.multi_reduction <add>, %64, %cst_35 [1] : vector<64x128xf32> to vector<64xf32>
    %66 = vector.shape_cast %65 : vector<64xf32> to vector<64x1xf32>
    %67 = arith.mulf %12, %59 : vector<64x128xf32>
    %cst_36 = arith.constant dense<0.000000e+00> : vector<64xf32>
    %68 = vector.multi_reduction <add>, %67, %cst_36 [1] : vector<64x128xf32> to vector<64xf32>
    %69 = vector.shape_cast %68 : vector<64xf32> to vector<64x1xf32>
    %70 = math.log %66 : vector<64x1xf32>
    %71 = arith.addf %61, %70 : vector<64x1xf32>
    %72 = arith.subf %71, %69 : vector<64x1xf32>
    %73 = arith.mulf %72, %22 : vector<64x1xf32>
    %74 = vector.shape_cast %73 : vector<64x1xf32> to vector<1x64x1xf32>
    %cst_37 = arith.constant dense<0.000000e+00> : vector<1xf32>
    %75 = vector.multi_reduction <add>, %74, %cst_37 [1, 2] : vector<1x64x1xf32> to vector<1xf32>
    %76 = vector.shape_cast %75 : vector<1xf32> to vector<1x1x1xf32>
    %77 = vector.extract %76[0, 0, 0] : f32 from vector<1x1x1xf32>
    %78 = vector.broadcast %77 : f32 to vector<1x1xf32>
    %79 = arith.mulf %78, %43 : vector<1x1xf32>
    %80 = vector.broadcast %61 : vector<64x1xf32> to vector<64x128xf32>
    %81 = arith.cmpf oeq, %59, %80 : vector<64x128xf32>
    %c128_i32 = arith.constant 128 : i32
    %82 = vector.broadcast %c128_i32 : i32 to vector<64x128xi32>
    %83 = arith.select %81, %8, %82 : vector<64x128xi1>, vector<64x128xi32>
    %cst_38 = arith.constant dense<2147483647> : vector<64xi32>
    %84 = vector.multi_reduction <minsi>, %83, %cst_38 [1] : vector<64x128xi32> to vector<64xi32>
    %85 = vector.shape_cast %84 : vector<64xi32> to vector<64x1xi32>
    %86 = arith.cmpi eq, %85, %5 : vector<64x1xi32>
    %87 = arith.andi %86, %19 : vector<64x1xi1>
    %88 = arith.extui %87 : vector<64x1xi1> to vector<64x1xi32>
    %89 = arith.sitofp %88 : vector<64x1xi32> to vector<64x1xf32>
    %90 = vector.shape_cast %89 : vector<64x1xf32> to vector<1x64x1xf32>
    %cst_39 = arith.constant dense<0.000000e+00> : vector<1xf32>
    %91 = vector.multi_reduction <add>, %90, %cst_39 [1, 2] : vector<1x64x1xf32> to vector<1xf32>
    %92 = vector.shape_cast %91 : vector<1xf32> to vector<1x1x1xf32>
    %93 = vector.extract %92[0, 0, 0] : f32 from vector<1x1x1xf32>
    %94 = vector.broadcast %93 : f32 to vector<1x1xf32>
    %c0_i32 = arith.constant 0 : i32
    %95 = vector.broadcast %c0_i32 : i32 to vector<1x1x4xi32>
    %96 = arith.cmpi eq, %46, %95 : vector<1x1x4xi32>
    %cst_40 = arith.constant 0.000000e+00 : f32
    %97 = vector.shape_cast %79 : vector<1x1xf32> to vector<1x1x1xf32>
    %98 = vector.broadcast %97 : vector<1x1x1xf32> to vector<1x1x4xf32>
    %99 = vector.broadcast %cst_40 : f32 to vector<1x1x4xf32>
    %100 = arith.select %96, %98, %99 : vector<1x1x4xi1>, vector<1x1x4xf32>
    %101 = arith.addf %51, %100 : vector<1x1x4xf32>
    %c0_i32_41 = arith.constant 0 : i32
    %102 = vector.broadcast %c0_i32_41 : i32 to vector<1x1x4xi32>
    %103 = arith.cmpi eq, %46, %102 : vector<1x1x4xi32>
    %cst_42 = arith.constant 0.000000e+00 : f32
    %104 = vector.shape_cast %94 : vector<1x1xf32> to vector<1x1x1xf32>
    %105 = vector.broadcast %104 : vector<1x1x1xf32> to vector<1x1x4xf32>
    %106 = vector.broadcast %cst_42 : f32 to vector<1x1x4xf32>
    %107 = arith.select %103, %105, %106 : vector<1x1x4xi1>, vector<1x1x4xf32>
    %108 = arith.addf %52, %107 : vector<1x1x4xf32>
    %109 = vector.broadcast %66 : vector<64x1xf32> to vector<64x128xf32>
    %110 = arith.divf %64, %109 : vector<64x128xf32>
    %111 = arith.subf %110, %12 : vector<64x128xf32>
    %112 = vector.broadcast %45 : vector<64x1xf32> to vector<64x128xf32>
    %113 = arith.mulf %111, %112 : vector<64x128xf32>
    %cst_43 = arith.constant dense<0.000000e+00> : vector<64x32xf32>
    %114 = tpu.matmul %113, %6, %cst_43 {dimension_numbers = #tpu.dot_dimension_numbers<[1], [0], [0], [1], [0, 0, 1, 1], [], []>} : vector<64x128xf32>, vector<128x32xf32>, vector<64x32xf32> -> vector<64x32xf32>
    %cst_44 = arith.constant dense<0.000000e+00> : vector<1024x32xf32>
    %115 = tpu.matmul %3, %114, %cst_44 {dimension_numbers = #tpu.dot_dimension_numbers<[1], [0], [0], [1], [0, 0, 1, 1], [], []>} : vector<1024x64xf32>, vector<64x32xf32>, vector<1024x32xf32> -> vector<1024x32xf32>
    %cst_45 = arith.constant dense<0.000000e+00> : vector<32xf32>
    %116 = vector.multi_reduction <add>, %114, %cst_45 [0] : vector<64x32xf32> to vector<32xf32>
    %117 = vector.shape_cast %116 : vector<32xf32> to vector<1x32xf32>
    %cst_46 = arith.constant 4.000000e-01 : f32
    %118 = vector.broadcast %cst_46 : f32 to vector<1024x32xf32>
    %119 = arith.mulf %118, %115 : vector<1024x32xf32>
    %120 = arith.subf %53, %119 : vector<1024x32xf32>
    %c0_47 = arith.constant 0 : index
    %c0_48 = arith.constant 0 : index
    %121 = vector.load %arg10[%c0_47, %c0_48] : memref<1024x32xf32, #tpu.memory_space<vmem>>, vector<1024x32xf32>
    tpu.vector_store %arg10[%c0_47, %c0_48], %120 {strides = array<i32>} : memref<1024x32xf32, #tpu.memory_space<vmem>>, vector<1024x32xf32>,
    %cst_49 = arith.constant 4.000000e-01 : f32
    %122 = vector.broadcast %cst_49 : f32 to vector<1x32xf32>
    %123 = arith.mulf %122, %117 : vector<1x32xf32>
    %124 = arith.subf %54, %123 : vector<1x32xf32>
    %c0_50 = arith.constant 0 : index
    %c0_51 = arith.constant 0 : index
    %125 = vector.load %arg11[%c0_50, %c0_51] : memref<1x32xf32, #tpu.memory_space<vmem>>, vector<1x32xf32>
    tpu.vector_store %arg11[%c0_50, %c0_51], %124 {strides = array<i32>} : memref<1x32xf32, #tpu.memory_space<vmem>>, vector<1x32xf32>,
    %c0_52 = arith.constant 0 : index
    %c0_53 = arith.constant 0 : index
    %126 = vector.load %arg10[%c0_52, %c0_53] : memref<1024x32xf32, #tpu.memory_space<vmem>>, vector<1024x32xf32>
    %c0_54 = arith.constant 0 : index
    %c0_55 = arith.constant 0 : index
    %127 = vector.load %arg11[%c0_54, %c0_55] : memref<1x32xf32, #tpu.memory_space<vmem>>, vector<1x32xf32>
    %cst_56 = arith.constant dense<0.000000e+00> : vector<64x32xf32>
    %128 = tpu.matmul %1, %126, %cst_56 {dimension_numbers = #tpu.dot_dimension_numbers<[1], [0], [0], [1], [0, 0, 1, 1], [], []>} : vector<64x1024xf32>, vector<1024x32xf32>, vector<64x32xf32> -> vector<64x32xf32>
    %129 = vector.broadcast %127 : vector<1x32xf32> to vector<64x32xf32>
    %130 = arith.addf %128, %129 : vector<64x32xf32>
    %131 = arith.addf %130, %7 : vector<64x32xf32>
    %cst_57 = arith.constant dense<0.000000e+00> : vector<64x128xf32>
    %132 = tpu.matmul %131, %6, %cst_57 {dimension_numbers = #tpu.dot_dimension_numbers<[1], [1], [0], [0], [0, 0, 1, 0], [], []>} : vector<64x32xf32>, vector<128x32xf32>, vector<64x128xf32> -> vector<64x128xf32>
    %cst_58 = arith.constant dense<0xFF800000> : vector<64xf32>
    %133 = vector.multi_reduction <maximumf>, %132, %cst_58 [1] : vector<64x128xf32> to vector<64xf32>
    %134 = vector.shape_cast %133 : vector<64xf32> to vector<64x1xf32>
    %135 = vector.broadcast %134 : vector<64x1xf32> to vector<64x128xf32>
    %136 = arith.subf %132, %135 : vector<64x128xf32>
    %137 = math.exp %136 : vector<64x128xf32>
    %cst_59 = arith.constant dense<0.000000e+00> : vector<64xf32>
    %138 = vector.multi_reduction <add>, %137, %cst_59 [1] : vector<64x128xf32> to vector<64xf32>
    %139 = vector.shape_cast %138 : vector<64xf32> to vector<64x1xf32>
    %140 = arith.mulf %12, %132 : vector<64x128xf32>
    %cst_60 = arith.constant dense<0.000000e+00> : vector<64xf32>
    %141 = vector.multi_reduction <add>, %140, %cst_60 [1] : vector<64x128xf32> to vector<64xf32>
    %142 = vector.shape_cast %141 : vector<64xf32> to vector<64x1xf32>
    %143 = math.log %139 : vector<64x1xf32>
    %144 = arith.addf %134, %143 : vector<64x1xf32>
    %145 = arith.subf %144, %142 : vector<64x1xf32>
    %146 = arith.mulf %145, %22 : vector<64x1xf32>
    %147 = vector.shape_cast %146 : vector<64x1xf32> to vector<1x64x1xf32>
    %cst_61 = arith.constant dense<0.000000e+00> : vector<1xf32>
    %148 = vector.multi_reduction <add>, %147, %cst_61 [1, 2] : vector<1x64x1xf32> to vector<1xf32>
    %149 = vector.shape_cast %148 : vector<1xf32> to vector<1x1x1xf32>
    %150 = vector.extract %149[0, 0, 0] : f32 from vector<1x1x1xf32>
    %151 = vector.broadcast %150 : f32 to vector<1x1xf32>
    %152 = arith.mulf %151, %43 : vector<1x1xf32>
    %153 = vector.broadcast %134 : vector<64x1xf32> to vector<64x128xf32>
    %154 = arith.cmpf oeq, %132, %153 : vector<64x128xf32>
    %c128_i32_62 = arith.constant 128 : i32
    %155 = vector.broadcast %c128_i32_62 : i32 to vector<64x128xi32>
    %156 = arith.select %154, %8, %155 : vector<64x128xi1>, vector<64x128xi32>
    %cst_63 = arith.constant dense<2147483647> : vector<64xi32>
    %157 = vector.multi_reduction <minsi>, %156, %cst_63 [1] : vector<64x128xi32> to vector<64xi32>
    %158 = vector.shape_cast %157 : vector<64xi32> to vector<64x1xi32>
    %159 = arith.cmpi eq, %158, %5 : vector<64x1xi32>
    %160 = arith.andi %159, %19 : vector<64x1xi1>
    %161 = arith.extui %160 : vector<64x1xi1> to vector<64x1xi32>
    %162 = arith.sitofp %161 : vector<64x1xi32> to vector<64x1xf32>
    %163 = vector.shape_cast %162 : vector<64x1xf32> to vector<1x64x1xf32>
    %cst_64 = arith.constant dense<0.000000e+00> : vector<1xf32>
    %164 = vector.multi_reduction <add>, %163, %cst_64 [1, 2] : vector<1x64x1xf32> to vector<1xf32>
    %165 = vector.shape_cast %164 : vector<1xf32> to vector<1x1x1xf32>
    %166 = vector.extract %165[0, 0, 0] : f32 from vector<1x1x1xf32>
    %167 = vector.broadcast %166 : f32 to vector<1x1xf32>
    %c1_i32 = arith.constant 1 : i32
    %168 = vector.broadcast %c1_i32 : i32 to vector<1x1x4xi32>
    %169 = arith.cmpi eq, %46, %168 : vector<1x1x4xi32>
    %cst_65 = arith.constant 0.000000e+00 : f32
    %170 = vector.shape_cast %152 : vector<1x1xf32> to vector<1x1x1xf32>
    %171 = vector.broadcast %170 : vector<1x1x1xf32> to vector<1x1x4xf32>
    %172 = vector.broadcast %cst_65 : f32 to vector<1x1x4xf32>
    %173 = arith.select %169, %171, %172 : vector<1x1x4xi1>, vector<1x1x4xf32>
    %174 = arith.addf %101, %173 : vector<1x1x4xf32>
    %c1_i32_66 = arith.constant 1 : i32
    %175 = vector.broadcast %c1_i32_66 : i32 to vector<1x1x4xi32>
    %176 = arith.cmpi eq, %46, %175 : vector<1x1x4xi32>
    %cst_67 = arith.constant 0.000000e+00 : f32
    %177 = vector.shape_cast %167 : vector<1x1xf32> to vector<1x1x1xf32>
    %178 = vector.broadcast %177 : vector<1x1x1xf32> to vector<1x1x4xf32>
    %179 = vector.broadcast %cst_67 : f32 to vector<1x1x4xf32>
    %180 = arith.select %176, %178, %179 : vector<1x1x4xi1>, vector<1x1x4xf32>
    %181 = arith.addf %108, %180 : vector<1x1x4xf32>
    %182 = vector.broadcast %139 : vector<64x1xf32> to vector<64x128xf32>
    %183 = arith.divf %137, %182 : vector<64x128xf32>
    %184 = arith.subf %183, %12 : vector<64x128xf32>
    %185 = vector.broadcast %45 : vector<64x1xf32> to vector<64x128xf32>
    %186 = arith.mulf %184, %185 : vector<64x128xf32>
    %cst_68 = arith.constant dense<0.000000e+00> : vector<64x32xf32>
    %187 = tpu.matmul %186, %6, %cst_68 {dimension_numbers = #tpu.dot_dimension_numbers<[1], [0], [0], [1], [0, 0, 1, 1], [], []>} : vector<64x128xf32>, vector<128x32xf32>, vector<64x32xf32> -> vector<64x32xf32>
    %cst_69 = arith.constant dense<0.000000e+00> : vector<1024x32xf32>
    %188 = tpu.matmul %3, %187, %cst_69 {dimension_numbers = #tpu.dot_dimension_numbers<[1], [0], [0], [1], [0, 0, 1, 1], [], []>} : vector<1024x64xf32>, vector<64x32xf32>, vector<1024x32xf32> -> vector<1024x32xf32>
    %cst_70 = arith.constant dense<0.000000e+00> : vector<32xf32>
    %189 = vector.multi_reduction <add>, %187, %cst_70 [0] : vector<64x32xf32> to vector<32xf32>
    %190 = vector.shape_cast %189 : vector<32xf32> to vector<1x32xf32>
    %cst_71 = arith.constant 4.000000e-01 : f32
    %191 = vector.broadcast %cst_71 : f32 to vector<1024x32xf32>
    %192 = arith.mulf %191, %188 : vector<1024x32xf32>
    %193 = arith.subf %126, %192 : vector<1024x32xf32>
    %c0_72 = arith.constant 0 : index
    %c0_73 = arith.constant 0 : index
    %194 = vector.load %arg10[%c0_72, %c0_73] : memref<1024x32xf32, #tpu.memory_space<vmem>>, vector<1024x32xf32>
    tpu.vector_store %arg10[%c0_72, %c0_73], %193 {strides = array<i32>} : memref<1024x32xf32, #tpu.memory_space<vmem>>, vector<1024x32xf32>,
    %cst_74 = arith.constant 4.000000e-01 : f32
    %195 = vector.broadcast %cst_74 : f32 to vector<1x32xf32>
    %196 = arith.mulf %195, %190 : vector<1x32xf32>
    %197 = arith.subf %127, %196 : vector<1x32xf32>
    %c0_75 = arith.constant 0 : index
    %c0_76 = arith.constant 0 : index
    %198 = vector.load %arg11[%c0_75, %c0_76] : memref<1x32xf32, #tpu.memory_space<vmem>>, vector<1x32xf32>
    tpu.vector_store %arg11[%c0_75, %c0_76], %197 {strides = array<i32>} : memref<1x32xf32, #tpu.memory_space<vmem>>, vector<1x32xf32>,
    %c0_77 = arith.constant 0 : index
    %c0_78 = arith.constant 0 : index
    %199 = vector.load %arg10[%c0_77, %c0_78] : memref<1024x32xf32, #tpu.memory_space<vmem>>, vector<1024x32xf32>
    %c0_79 = arith.constant 0 : index
    %c0_80 = arith.constant 0 : index
    %200 = vector.load %arg11[%c0_79, %c0_80] : memref<1x32xf32, #tpu.memory_space<vmem>>, vector<1x32xf32>
    %cst_81 = arith.constant dense<0.000000e+00> : vector<64x32xf32>
    %201 = tpu.matmul %1, %199, %cst_81 {dimension_numbers = #tpu.dot_dimension_numbers<[1], [0], [0], [1], [0, 0, 1, 1], [], []>} : vector<64x1024xf32>, vector<1024x32xf32>, vector<64x32xf32> -> vector<64x32xf32>
    %202 = vector.broadcast %200 : vector<1x32xf32> to vector<64x32xf32>
    %203 = arith.addf %201, %202 : vector<64x32xf32>
    %204 = arith.addf %203, %7 : vector<64x32xf32>
    %cst_82 = arith.constant dense<0.000000e+00> : vector<64x128xf32>
    %205 = tpu.matmul %204, %6, %cst_82 {dimension_numbers = #tpu.dot_dimension_numbers<[1], [1], [0], [0], [0, 0, 1, 0], [], []>} : vector<64x32xf32>, vector<128x32xf32>, vector<64x128xf32> -> vector<64x128xf32>
    %cst_83 = arith.constant dense<0xFF800000> : vector<64xf32>
    %206 = vector.multi_reduction <maximumf>, %205, %cst_83 [1] : vector<64x128xf32> to vector<64xf32>
    %207 = vector.shape_cast %206 : vector<64xf32> to vector<64x1xf32>
    %208 = vector.broadcast %207 : vector<64x1xf32> to vector<64x128xf32>
    %209 = arith.subf %205, %208 : vector<64x128xf32>
    %210 = math.exp %209 : vector<64x128xf32>
    %cst_84 = arith.constant dense<0.000000e+00> : vector<64xf32>
    %211 = vector.multi_reduction <add>, %210, %cst_84 [1] : vector<64x128xf32> to vector<64xf32>
    %212 = vector.shape_cast %211 : vector<64xf32> to vector<64x1xf32>
    %213 = arith.mulf %12, %205 : vector<64x128xf32>
    %cst_85 = arith.constant dense<0.000000e+00> : vector<64xf32>
    %214 = vector.multi_reduction <add>, %213, %cst_85 [1] : vector<64x128xf32> to vector<64xf32>
    %215 = vector.shape_cast %214 : vector<64xf32> to vector<64x1xf32>
    %216 = math.log %212 : vector<64x1xf32>
    %217 = arith.addf %207, %216 : vector<64x1xf32>
    %218 = arith.subf %217, %215 : vector<64x1xf32>
    %219 = arith.mulf %218, %22 : vector<64x1xf32>
    %220 = vector.shape_cast %219 : vector<64x1xf32> to vector<1x64x1xf32>
    %cst_86 = arith.constant dense<0.000000e+00> : vector<1xf32>
    %221 = vector.multi_reduction <add>, %220, %cst_86 [1, 2] : vector<1x64x1xf32> to vector<1xf32>
    %222 = vector.shape_cast %221 : vector<1xf32> to vector<1x1x1xf32>
    %223 = vector.extract %222[0, 0, 0] : f32 from vector<1x1x1xf32>
    %224 = vector.broadcast %223 : f32 to vector<1x1xf32>
    %225 = arith.mulf %224, %43 : vector<1x1xf32>
    %226 = vector.broadcast %207 : vector<64x1xf32> to vector<64x128xf32>
    %227 = arith.cmpf oeq, %205, %226 : vector<64x128xf32>
    %c128_i32_87 = arith.constant 128 : i32
    %228 = vector.broadcast %c128_i32_87 : i32 to vector<64x128xi32>
    %229 = arith.select %227, %8, %228 : vector<64x128xi1>, vector<64x128xi32>
    %cst_88 = arith.constant dense<2147483647> : vector<64xi32>
    %230 = vector.multi_reduction <minsi>, %229, %cst_88 [1] : vector<64x128xi32> to vector<64xi32>
    %231 = vector.shape_cast %230 : vector<64xi32> to vector<64x1xi32>
    %232 = arith.cmpi eq, %231, %5 : vector<64x1xi32>
    %233 = arith.andi %232, %19 : vector<64x1xi1>
    %234 = arith.extui %233 : vector<64x1xi1> to vector<64x1xi32>
    %235 = arith.sitofp %234 : vector<64x1xi32> to vector<64x1xf32>
    %236 = vector.shape_cast %235 : vector<64x1xf32> to vector<1x64x1xf32>
    %cst_89 = arith.constant dense<0.000000e+00> : vector<1xf32>
    %237 = vector.multi_reduction <add>, %236, %cst_89 [1, 2] : vector<1x64x1xf32> to vector<1xf32>
    %238 = vector.shape_cast %237 : vector<1xf32> to vector<1x1x1xf32>
    %239 = vector.extract %238[0, 0, 0] : f32 from vector<1x1x1xf32>
    %240 = vector.broadcast %239 : f32 to vector<1x1xf32>
    %c2_i32 = arith.constant 2 : i32
    %241 = vector.broadcast %c2_i32 : i32 to vector<1x1x4xi32>
    %242 = arith.cmpi eq, %46, %241 : vector<1x1x4xi32>
    %cst_90 = arith.constant 0.000000e+00 : f32
    %243 = vector.shape_cast %225 : vector<1x1xf32> to vector<1x1x1xf32>
    %244 = vector.broadcast %243 : vector<1x1x1xf32> to vector<1x1x4xf32>
    %245 = vector.broadcast %cst_90 : f32 to vector<1x1x4xf32>
    %246 = arith.select %242, %244, %245 : vector<1x1x4xi1>, vector<1x1x4xf32>
    %247 = arith.addf %174, %246 : vector<1x1x4xf32>
    %c2_i32_91 = arith.constant 2 : i32
    %248 = vector.broadcast %c2_i32_91 : i32 to vector<1x1x4xi32>
    %249 = arith.cmpi eq, %46, %248 : vector<1x1x4xi32>
    %cst_92 = arith.constant 0.000000e+00 : f32
    %250 = vector.shape_cast %240 : vector<1x1xf32> to vector<1x1x1xf32>
    %251 = vector.broadcast %250 : vector<1x1x1xf32> to vector<1x1x4xf32>
    %252 = vector.broadcast %cst_92 : f32 to vector<1x1x4xf32>
    %253 = arith.select %249, %251, %252 : vector<1x1x4xi1>, vector<1x1x4xf32>
    %254 = arith.addf %181, %253 : vector<1x1x4xf32>
    %255 = vector.broadcast %212 : vector<64x1xf32> to vector<64x128xf32>
    %256 = arith.divf %210, %255 : vector<64x128xf32>
    %257 = arith.subf %256, %12 : vector<64x128xf32>
    %258 = vector.broadcast %45 : vector<64x1xf32> to vector<64x128xf32>
    %259 = arith.mulf %257, %258 : vector<64x128xf32>
    %cst_93 = arith.constant dense<0.000000e+00> : vector<64x32xf32>
    %260 = tpu.matmul %259, %6, %cst_93 {dimension_numbers = #tpu.dot_dimension_numbers<[1], [0], [0], [1], [0, 0, 1, 1], [], []>} : vector<64x128xf32>, vector<128x32xf32>, vector<64x32xf32> -> vector<64x32xf32>
    %cst_94 = arith.constant dense<0.000000e+00> : vector<1024x32xf32>
    %261 = tpu.matmul %3, %260, %cst_94 {dimension_numbers = #tpu.dot_dimension_numbers<[1], [0], [0], [1], [0, 0, 1, 1], [], []>} : vector<1024x64xf32>, vector<64x32xf32>, vector<1024x32xf32> -> vector<1024x32xf32>
    %cst_95 = arith.constant dense<0.000000e+00> : vector<32xf32>
    %262 = vector.multi_reduction <add>, %260, %cst_95 [0] : vector<64x32xf32> to vector<32xf32>
    %263 = vector.shape_cast %262 : vector<32xf32> to vector<1x32xf32>
    %cst_96 = arith.constant 4.000000e-01 : f32
    %264 = vector.broadcast %cst_96 : f32 to vector<1024x32xf32>
    %265 = arith.mulf %264, %261 : vector<1024x32xf32>
    %266 = arith.subf %199, %265 : vector<1024x32xf32>
    %c0_97 = arith.constant 0 : index
    %c0_98 = arith.constant 0 : index
    %267 = vector.load %arg10[%c0_97, %c0_98] : memref<1024x32xf32, #tpu.memory_space<vmem>>, vector<1024x32xf32>
    tpu.vector_store %arg10[%c0_97, %c0_98], %266 {strides = array<i32>} : memref<1024x32xf32, #tpu.memory_space<vmem>>, vector<1024x32xf32>,
    %cst_99 = arith.constant 4.000000e-01 : f32
    %268 = vector.broadcast %cst_99 : f32 to vector<1x32xf32>
    %269 = arith.mulf %268, %263 : vector<1x32xf32>
    %270 = arith.subf %200, %269 : vector<1x32xf32>
    %c0_100 = arith.constant 0 : index
    %c0_101 = arith.constant 0 : index
    %271 = vector.load %arg11[%c0_100, %c0_101] : memref<1x32xf32, #tpu.memory_space<vmem>>, vector<1x32xf32>
    tpu.vector_store %arg11[%c0_100, %c0_101], %270 {strides = array<i32>} : memref<1x32xf32, #tpu.memory_space<vmem>>, vector<1x32xf32>,
    %c0_102 = arith.constant 0 : index
    %c0_103 = arith.constant 0 : index
    %272 = vector.load %arg10[%c0_102, %c0_103] : memref<1024x32xf32, #tpu.memory_space<vmem>>, vector<1024x32xf32>
    %c0_104 = arith.constant 0 : index
    %c0_105 = arith.constant 0 : index
    %273 = vector.load %arg11[%c0_104, %c0_105] : memref<1x32xf32, #tpu.memory_space<vmem>>, vector<1x32xf32>
    %cst_106 = arith.constant dense<0.000000e+00> : vector<64x32xf32>
    %274 = tpu.matmul %1, %272, %cst_106 {dimension_numbers = #tpu.dot_dimension_numbers<[1], [0], [0], [1], [0, 0, 1, 1], [], []>} : vector<64x1024xf32>, vector<1024x32xf32>, vector<64x32xf32> -> vector<64x32xf32>
    %275 = vector.broadcast %273 : vector<1x32xf32> to vector<64x32xf32>
    %276 = arith.addf %274, %275 : vector<64x32xf32>
    %277 = arith.addf %276, %7 : vector<64x32xf32>
    %cst_107 = arith.constant dense<0.000000e+00> : vector<64x128xf32>
    %278 = tpu.matmul %277, %6, %cst_107 {dimension_numbers = #tpu.dot_dimension_numbers<[1], [1], [0], [0], [0, 0, 1, 0], [], []>} : vector<64x32xf32>, vector<128x32xf32>, vector<64x128xf32> -> vector<64x128xf32>
    %cst_108 = arith.constant dense<0xFF800000> : vector<64xf32>
    %279 = vector.multi_reduction <maximumf>, %278, %cst_108 [1] : vector<64x128xf32> to vector<64xf32>
    %280 = vector.shape_cast %279 : vector<64xf32> to vector<64x1xf32>
    %281 = vector.broadcast %280 : vector<64x1xf32> to vector<64x128xf32>
    %282 = arith.subf %278, %281 : vector<64x128xf32>
    %283 = math.exp %282 : vector<64x128xf32>
    %cst_109 = arith.constant dense<0.000000e+00> : vector<64xf32>
    %284 = vector.multi_reduction <add>, %283, %cst_109 [1] : vector<64x128xf32> to vector<64xf32>
    %285 = vector.shape_cast %284 : vector<64xf32> to vector<64x1xf32>
    %286 = arith.mulf %12, %278 : vector<64x128xf32>
    %cst_110 = arith.constant dense<0.000000e+00> : vector<64xf32>
    %287 = vector.multi_reduction <add>, %286, %cst_110 [1] : vector<64x128xf32> to vector<64xf32>
    %288 = vector.shape_cast %287 : vector<64xf32> to vector<64x1xf32>
    %289 = math.log %285 : vector<64x1xf32>
    %290 = arith.addf %280, %289 : vector<64x1xf32>
    %291 = arith.subf %290, %288 : vector<64x1xf32>
    %292 = arith.mulf %291, %22 : vector<64x1xf32>
    %293 = vector.shape_cast %292 : vector<64x1xf32> to vector<1x64x1xf32>
    %cst_111 = arith.constant dense<0.000000e+00> : vector<1xf32>
    %294 = vector.multi_reduction <add>, %293, %cst_111 [1, 2] : vector<1x64x1xf32> to vector<1xf32>
    %295 = vector.shape_cast %294 : vector<1xf32> to vector<1x1x1xf32>
    %296 = vector.extract %295[0, 0, 0] : f32 from vector<1x1x1xf32>
    %297 = vector.broadcast %296 : f32 to vector<1x1xf32>
    %298 = arith.mulf %297, %43 : vector<1x1xf32>
    %299 = vector.broadcast %280 : vector<64x1xf32> to vector<64x128xf32>
    %300 = arith.cmpf oeq, %278, %299 : vector<64x128xf32>
    %c128_i32_112 = arith.constant 128 : i32
    %301 = vector.broadcast %c128_i32_112 : i32 to vector<64x128xi32>
    %302 = arith.select %300, %8, %301 : vector<64x128xi1>, vector<64x128xi32>
    %cst_113 = arith.constant dense<2147483647> : vector<64xi32>
    %303 = vector.multi_reduction <minsi>, %302, %cst_113 [1] : vector<64x128xi32> to vector<64xi32>
    %304 = vector.shape_cast %303 : vector<64xi32> to vector<64x1xi32>
    %305 = arith.cmpi eq, %304, %5 : vector<64x1xi32>
    %306 = arith.andi %305, %19 : vector<64x1xi1>
    %307 = arith.extui %306 : vector<64x1xi1> to vector<64x1xi32>
    %308 = arith.sitofp %307 : vector<64x1xi32> to vector<64x1xf32>
    %309 = vector.shape_cast %308 : vector<64x1xf32> to vector<1x64x1xf32>
    %cst_114 = arith.constant dense<0.000000e+00> : vector<1xf32>
    %310 = vector.multi_reduction <add>, %309, %cst_114 [1, 2] : vector<1x64x1xf32> to vector<1xf32>
    %311 = vector.shape_cast %310 : vector<1xf32> to vector<1x1x1xf32>
    %312 = vector.extract %311[0, 0, 0] : f32 from vector<1x1x1xf32>
    %313 = vector.broadcast %312 : f32 to vector<1x1xf32>
    %c3_i32 = arith.constant 3 : i32
    %314 = vector.broadcast %c3_i32 : i32 to vector<1x1x4xi32>
    %315 = arith.cmpi eq, %46, %314 : vector<1x1x4xi32>
    %cst_115 = arith.constant 0.000000e+00 : f32
    %316 = vector.shape_cast %298 : vector<1x1xf32> to vector<1x1x1xf32>
    %317 = vector.broadcast %316 : vector<1x1x1xf32> to vector<1x1x4xf32>
    %318 = vector.broadcast %cst_115 : f32 to vector<1x1x4xf32>
    %319 = arith.select %315, %317, %318 : vector<1x1x4xi1>, vector<1x1x4xf32>
    %320 = arith.addf %247, %319 : vector<1x1x4xf32>
    %c3_i32_116 = arith.constant 3 : i32
    %321 = vector.broadcast %c3_i32_116 : i32 to vector<1x1x4xi32>
    %322 = arith.cmpi eq, %46, %321 : vector<1x1x4xi32>
    %cst_117 = arith.constant 0.000000e+00 : f32
    %323 = vector.shape_cast %313 : vector<1x1xf32> to vector<1x1x1xf32>
    %324 = vector.broadcast %323 : vector<1x1x1xf32> to vector<1x1x4xf32>
    %325 = vector.broadcast %cst_117 : f32 to vector<1x1x4xf32>
    %326 = arith.select %322, %324, %325 : vector<1x1x4xi1>, vector<1x1x4xf32>
    %327 = arith.addf %254, %326 : vector<1x1x4xf32>
    %c0_118 = arith.constant 0 : index
    %c0_119 = arith.constant 0 : index
    %c0_120 = arith.constant 0 : index
    %328 = vector.load %arg8[%c0_118, %c0_119, %c0_120] : memref<1x1x4xf32, #tpu.memory_space<vmem>>, vector<1x1x4xf32>
    tpu.vector_store %arg8[%c0_118, %c0_119, %c0_120], %320 {strides = array<i32>} : memref<1x1x4xf32, #tpu.memory_space<vmem>>, vector<1x1x4xf32>,
    %c0_121 = arith.constant 0 : index
    %c0_122 = arith.constant 0 : index
    %c0_123 = arith.constant 0 : index
    %329 = vector.load %arg9[%c0_121, %c0_122, %c0_123] : memref<1x1x4xf32, #tpu.memory_space<vmem>>, vector<1x1x4xf32>
    tpu.vector_store %arg9[%c0_121, %c0_122, %c0_123], %327 {strides = array<i32>} : memref<1x1x4xf32, #tpu.memory_space<vmem>>, vector<1x1x4xf32>,
    return
  }
  func.func @transform_0(%arg0: i32) -> (i32, i32, i32) {
    %c0_i32 = arith.constant 0 : i32
    %c0_i32_0 = arith.constant 0 : i32
    %c0_i32_1 = arith.constant 0 : i32
    return %arg0, %c0_i32, %c0_i32_0 : i32, i32, i32
  }
  func.func @transform_1(%arg0: i32) -> (i32, i32, i32) {
    %c0_i32 = arith.constant 0 : i32
    %c0_i32_0 = arith.constant 0 : i32
    %c0_i32_1 = arith.constant 0 : i32
    return %arg0, %c0_i32, %c0_i32_0 : i32, i32, i32
  }
  func.func @transform_2(%arg0: i32) -> (i32, i32, i32) {
    %c0_i32 = arith.constant 0 : i32
    %c0_i32_0 = arith.constant 0 : i32
    %c0_i32_1 = arith.constant 0 : i32
    return %arg0, %c0_i32, %c0_i32_0 : i32, i32, i32
  }
  func.func @transform_3(%arg0: i32) -> (i32, i32) {
    %c0_i32 = arith.constant 0 : i32
    %c0_i32_0 = arith.constant 0 : i32
    %c0_i32_1 = arith.constant 0 : i32
    return %c0_i32, %c0_i32_0 : i32, i32
  }
  func.func @transform_4(%arg0: i32) -> (i32, i32) {
    %c0_i32 = arith.constant 0 : i32
    %c0_i32_0 = arith.constant 0 : i32
    %c0_i32_1 = arith.constant 0 : i32
    return %c0_i32, %c0_i32_0 : i32, i32
  }
  func.func @transform_5(%arg0: i32) -> (i32, i32) {
    %c0_i32 = arith.constant 0 : i32
    %c0_i32_0 = arith.constant 0 : i32
    %c0_i32_1 = arith.constant 0 : i32
    return %c0_i32, %c0_i32_0 : i32, i32
  }
  func.func @transform_6(%arg0: i32) -> (i32, i32) {
    %c0_i32 = arith.constant 0 : i32
    %c0_i32_0 = arith.constant 0 : i32
    %c0_i32_1 = arith.constant 0 : i32
    return %c0_i32, %c0_i32_0 : i32, i32
  }
  func.func @transform_7(%arg0: i32) -> (i32, i32, i32) {
    %c0_i32 = arith.constant 0 : i32
    %c0_i32_0 = arith.constant 0 : i32
    %c0_i32_1 = arith.constant 0 : i32
    return %arg0, %c0_i32, %c0_i32_0 : i32, i32, i32
  }
  func.func @transform_8(%arg0: i32) -> (i32, i32, i32) {
    %c0_i32 = arith.constant 0 : i32
    %c0_i32_0 = arith.constant 0 : i32
    %c0_i32_1 = arith.constant 0 : i32
    return %arg0, %c0_i32, %c0_i32_0 : i32, i32, i32
  }
}

</mosaic_0001>

<llo_original>
// kernel: _meta_forward_device.1
$region0: #{_meta_forward_device.1}
  #allocation0 [shape = 'u32[]', space=smem, size = 0x4, offset = 0x4, fixed_abs, tag = 'smem constant byte address 0x4 - core index']
  #allocation1 [shape = 'u32[144,128]{1,0:T(1,128)}', space=vmem, size = 0x12000, scoped, tag = 'internal scratch']
  #allocation2 [shape = 'f32[1024,32]{1,0:T(8,128)}', space=vmem, size = 0x80000, scoped, tag = 'scratch operand']
  #allocation3 [shape = 'f32[1,32]{1,0:T(1,128)}', space=vmem, size = 0x200, scoped, tag = 'scratch operand']
  %s0 = inlined_call_operand.vmem [shape: f32[2,64,1024], index: 0, kind: input, shape index: {}]
  %s1 = inlined_call_operand.vmem [shape: f32[2,1024,64], index: 1, kind: input, shape index: {}]
  %s2 = inlined_call_operand.vmem [shape: s32[2,64,1], index: 2, kind: input, shape index: {}]
  %s3 = inlined_call_operand.vmem [shape: f32[1024,32], index: 3, kind: input, shape index: {}]
  %s4 = inlined_call_operand.vmem [shape: f32[1,32], index: 4, kind: input, shape index: {}]
  %s5 = inlined_call_operand.vmem [shape: f32[64,32], index: 5, kind: input, shape index: {}]
  %s6 = inlined_call_operand.vmem [shape: f32[128,32], index: 6, kind: input, shape index: {}]
  %s7 = inlined_call_operand.vmem [shape: f32[2,1,4], index: 7, kind: output, shape index: {0}]
  %s8 = inlined_call_operand.vmem [shape: f32[2,1,4], index: 8, kind: output, shape index: {1}]
  %9 = xla_tuple %s7, %s8
  %s10 = sld [smem:[#allocation0]]
  $region69: #{_meta_forward_device.1} parent=0
    _
  %s12 = ssub.s32 1, %s10
  %s13 = scalar_select 0, %s12, %s10
  loop: start=0, step=1, limit=4
  $region2: #{_meta_forward_device.1} parent=0 // loop_pre_header
    _
  $region3: #{_meta_forward_device.1} parent=0 // loop_header
    %s15 = sphi 0, %s19
    %p16 = scmp.ge.s32.totalorder %s15, 4
    %s25 = sphi 0, %s27
    %s28 = sphi 0, %s25
    %s29 = sphi 0, %s28
    %s45 = sphi 0, %s29
    %s51 = sphi 0, %s53
    %s54 = sphi 0, %s51
    %s55 = sphi 0, %s54
    %s71 = sphi 0, %s55
    %s77 = sphi 0, %s79
    %s80 = sphi 0, %s77
    %s81 = sphi 0, %s80
    %s97 = sphi 0, %s81
    %s101 = sphi 0, %s101
    %s103 = sphi 0, %s101
    %s104 = sphi 0, %s103
    %s118 = sphi 0, %s104
    %s122 = sphi 0, %s122
    %s124 = sphi 0, %s122
    %s125 = sphi 0, %s124
    %s139 = sphi 0, %s125
    %s143 = sphi 0, %s143
    %s145 = sphi 0, %s143
    %s146 = sphi 0, %s145
    %s160 = sphi 0, %s146
    %s164 = sphi 0, %s164
    %s166 = sphi 0, %s164
    %s167 = sphi 0, %s166
    %s181 = sphi 0, %s167
    %s187 = sphi 0, %s189
    %s190 = sphi 0, %s187
    %s191 = sphi 0, %s190
    %s207 = sphi 0, %s191
    %s213 = sphi 0, %s215
    %s216 = sphi 0, %s213
    %s217 = sphi 0, %s216
    %s233 = sphi 0, %s217
  $region4: #{_meta_forward_device.1} parent=0 // loop_header_branch
    %18 = sbr.rel (%p16) target = $region8
  $region5: #{_meta_forward_device.1} parent=0 // loop_body
    %s20 = ssub.s32 %s15, 1
    %s21 = ssub.s32 %s15, 2
    %s22 = sadd.s32 %s15, 1
    %s23 = ssub.s32 %s15, %s22
    %p24 = scmp.eq.s32.totalorder %s23, 0
    %s26 = sadd.s32 %s25, 1
    %s27 = scalar_select %p24, %s25, %s26
    %p30 = pneg %p24
    %p31 = scmp.eq.s32.totalorder %s15, 1
    %p32 = por %p30, %p31
    %p33 = scmp.ne.s32.totalorder %s25, %s28
    %p34 = scmp.eq.s32.totalorder %s15, 0
    %p35 = por %p33, %p34
    %p36 = scmp.ne.s32.totalorder %s25, %s28
    %p37 = scmp.eq.s32.totalorder %s20, 1
    %p38 = por %p36, %p37
    %p39 = scmp.ne.s32.totalorder %s28, %s29
    %p40 = scmp.eq.s32.totalorder %s20, 0
    %p41 = por %p39, %p40
    %p42 = scmp.ne.s32.totalorder %s28, %s29
    %p43 = scmp.eq.s32.totalorder %s21, 1
    %p44 = por %p42, %p43
    %p46 = scmp.ne.s32.totalorder %s29, %s45
    %p47 = scmp.eq.s32.totalorder %s21, 0
    %p48 = por %p46, %p47
    %s49 = ssub.s32 %s15, %s22
    %p50 = scmp.eq.s32.totalorder %s49, 0
    %s52 = sadd.s32 %s51, 1
    %s53 = scalar_select %p50, %s51, %s52
    %p56 = pneg %p50
    %p57 = scmp.eq.s32.totalorder %s15, 1
    %p58 = por %p56, %p57
    %p59 = scmp.ne.s32.totalorder %s51, %s54
    %p60 = scmp.eq.s32.totalorder %s15, 0
    %p61 = por %p59, %p60
    %p62 = scmp.ne.s32.totalorder %s51, %s54
    %p63 = scmp.eq.s32.totalorder %s20, 1
    %p64 = por %p62, %p63
    %p65 = scmp.ne.s32.totalorder %s54, %s55
    %p66 = scmp.eq.s32.totalorder %s20, 0
    %p67 = por %p65, %p66
    %p68 = scmp.ne.s32.totalorder %s54, %s55
    %p69 = scmp.eq.s32.totalorder %s21, 1
    %p70 = por %p68, %p69
    %p72 = scmp.ne.s32.totalorder %s55, %s71
    %p73 = scmp.eq.s32.totalorder %s21, 0
    %p74 = por %p72, %p73
    %s75 = ssub.s32 %s15, %s22
    %p76 = scmp.eq.s32.totalorder %s75, 0
    %s78 = sadd.s32 %s77, 1
    %s79 = scalar_select %p76, %s77, %s78
    %p82 = pneg %p76
    %p83 = scmp.eq.s32.totalorder %s15, 1
    %p84 = por %p82, %p83
    %p85 = scmp.ne.s32.totalorder %s77, %s80
    %p86 = scmp.eq.s32.totalorder %s15, 0
    %p87 = por %p85, %p86
    %p88 = scmp.ne.s32.totalorder %s77, %s80
    %p89 = scmp.eq.s32.totalorder %s20, 1
    %p90 = por %p88, %p89
    %p91 = scmp.ne.s32.totalorder %s80, %s81
    %p92 = scmp.eq.s32.totalorder %s20, 0
    %p93 = por %p91, %p92
    %p94 = scmp.ne.s32.totalorder %s80, %s81
    %p95 = scmp.eq.s32.totalorder %s21, 1
    %p96 = por %p94, %p95
    %p98 = scmp.ne.s32.totalorder %s81, %s97
    %p99 = scmp.eq.s32.totalorder %s21, 0
    %p100 = por %p98, %p99
    %s102 = sadd.s32 %s101, 1
    %p105 = scmp.eq.s32.totalorder %s15, 1
    %p106 = scmp.ne.s32.totalorder %s101, %s103
    %p107 = scmp.eq.s32.totalorder %s15, 0
    %p108 = por %p106, %p107
    %p109 = scmp.ne.s32.totalorder %s101, %s103
    %p110 = scmp.eq.s32.totalorder %s20, 1
    %p111 = por %p109, %p110
    %p112 = scmp.ne.s32.totalorder %s103, %s104
    %p113 = scmp.eq.s32.totalorder %s20, 0
    %p114 = por %p112, %p113
    %p115 = scmp.ne.s32.totalorder %s103, %s104
    %p116 = scmp.eq.s32.totalorder %s21, 1
    %p117 = por %p115, %p116
    %p119 = scmp.ne.s32.totalorder %s104, %s118
    %p120 = scmp.eq.s32.totalorder %s21, 0
    %p121 = por %p119, %p120
    %s123 = sadd.s32 %s122, 1
    %p126 = scmp.eq.s32.totalorder %s15, 1
    %p127 = scmp.ne.s32.totalorder %s122, %s124
    %p128 = scmp.eq.s32.totalorder %s15, 0
    %p129 = por %p127, %p128
    %p130 = scmp.ne.s32.totalorder %s122, %s124
    %p131 = scmp.eq.s32.totalorder %s20, 1
    %p132 = por %p130, %p131
    %p133 = scmp.ne.s32.totalorder %s124, %s125
    %p134 = scmp.eq.s32.totalorder %s20, 0
    %p135 = por %p133, %p134
    %p136 = scmp.ne.s32.totalorder %s124, %s125
    %p137 = scmp.eq.s32.totalorder %s21, 1
    %p138 = por %p136, %p137
    %p140 = scmp.ne.s32.totalorder %s125, %s139
    %p141 = scmp.eq.s32.totalorder %s21, 0
    %p142 = por %p140, %p141
    %s144 = sadd.s32 %s143, 1
    %p147 = scmp.eq.s32.totalorder %s15, 1
    %p148 = scmp.ne.s32.totalorder %s143, %s145
    %p149 = scmp.eq.s32.totalorder %s15, 0
    %p150 = por %p148, %p149
    %p151 = scmp.ne.s32.totalorder %s143, %s145
    %p152 = scmp.eq.s32.totalorder %s20, 1
    %p153 = por %p151, %p152
    %p154 = scmp.ne.s32.totalorder %s145, %s146
    %p155 = scmp.eq.s32.totalorder %s20, 0
    %p156 = por %p154, %p155
    %p157 = scmp.ne.s32.totalorder %s145, %s146
    %p158 = scmp.eq.s32.totalorder %s21, 1
    %p159 = por %p157, %p158
    %p161 = scmp.ne.s32.totalorder %s146, %s160
    %p162 = scmp.eq.s32.totalorder %s21, 0
    %p163 = por %p161, %p162
    %s165 = sadd.s32 %s164, 1
    %p168 = scmp.eq.s32.totalorder %s15, 1
    %p169 = scmp.ne.s32.totalorder %s164, %s166
    %p170 = scmp.eq.s32.totalorder %s15, 0
    %p171 = por %p169, %p170
    %p172 = scmp.ne.s32.totalorder %s164, %s166
    %p173 = scmp.eq.s32.totalorder %s20, 1
    %p174 = por %p172, %p173
    %p175 = scmp.ne.s32.totalorder %s166, %s167
    %p176 = scmp.eq.s32.totalorder %s20, 0
    %p177 = por %p175, %p176
    %p178 = scmp.ne.s32.totalorder %s166, %s167
    %p179 = scmp.eq.s32.totalorder %s21, 1
    %p180 = por %p178, %p179
    %p182 = scmp.ne.s32.totalorder %s167, %s181
    %p183 = scmp.eq.s32.totalorder %s21, 0
    %p184 = por %p182, %p183
    %s185 = ssub.s32 %s15, %s22
    %p186 = scmp.eq.s32.totalorder %s185, 0
    %s188 = sadd.s32 %s187, 1
    %s189 = scalar_select %p186, %s187, %s188
    %p192 = pneg %p186
    %p193 = scmp.eq.s32.totalorder %s15, 1
    %p194 = por %p192, %p193
    %p195 = scmp.ne.s32.totalorder %s187, %s190
    %p196 = scmp.eq.s32.totalorder %s15, 0
    %p197 = por %p195, %p196
    %p198 = scmp.ne.s32.totalorder %s187, %s190
    %p199 = scmp.eq.s32.totalorder %s20, 1
    %p200 = por %p198, %p199
    %p201 = scmp.ne.s32.totalorder %s190, %s191
    %p202 = scmp.eq.s32.totalorder %s20, 0
    %p203 = por %p201, %p202
    %p204 = scmp.ne.s32.totalorder %s190, %s191
    %p205 = scmp.eq.s32.totalorder %s21, 1
    %p206 = por %p204, %p205
    %p208 = scmp.ne.s32.totalorder %s191, %s207
    %p209 = scmp.eq.s32.totalorder %s21, 0
    %p210 = por %p208, %p209
    %s211 = ssub.s32 %s15, %s22
    %p212 = scmp.eq.s32.totalorder %s211, 0
    %s214 = sadd.s32 %s213, 1
    %s215 = scalar_select %p212, %s213, %s214
    %p218 = pneg %p212
    %p219 = scmp.eq.s32.totalorder %s15, 1
    %p220 = por %p218, %p219
    %p221 = scmp.ne.s32.totalorder %s213, %s216
    %p222 = scmp.eq.s32.totalorder %s15, 0
    %p223 = por %p221, %p222
    %p224 = scmp.ne.s32.totalorder %s213, %s216
    %p225 = scmp.eq.s32.totalorder %s20, 1
    %p226 = por %p224, %p225
    %p227 = scmp.ne.s32.totalorder %s216, %s217
    %p228 = scmp.eq.s32.totalorder %s20, 0
    %p229 = por %p227, %p228
    %p230 = scmp.ne.s32.totalorder %s216, %s217
    %p231 = scmp.eq.s32.totalorder %s21, 1
    %p232 = por %p230, %p231
    %p234 = scmp.ne.s32.totalorder %s217, %s233
    %p235 = scmp.eq.s32.totalorder %s21, 0
    %p236 = por %p234, %p235
    %p237 = scmp.le.s32.totalorder 1, %s15
    %p238 = scmp.lt.s32.totalorder %s15, 3
    %p239 = pnand %p237, %p238
    %p240 = pneg %p239
    // Predicated region
    $region9: #{_meta_forward_device.1} parent=5 // pred_check
      _
    $region10: #{_meta_forward_device.1} parent=5 // pred_check_branch
      %242 = sbr.rel (%p239) target = $region12
    $region11: #{_meta_forward_device.1} parent=5 // pred_region
      %s243 = ssub.s32 %s15, 1
      // Predicated region
      $region13: #{_meta_forward_device.1} parent=11 // pred_check
        %p244 = pneg %p114
      $region14: #{_meta_forward_device.1} parent=11 // pred_check_branch
        %246 = sbr.rel (%p244) target = $region16
      $region15: #{_meta_forward_device.1} parent=11 // pred_region
        _
      $region16: #{_meta_forward_device.1} parent=11 // pred_fallthru
        _
      // Predicated region
      $region17: #{_meta_forward_device.1} parent=11 // pred_check
        %p247 = pneg %p135
      $region18: #{_meta_forward_device.1} parent=11 // pred_check_branch
        %249 = sbr.rel (%p247) target = $region20
      $region19: #{_meta_forward_device.1} parent=11 // pred_region
        _
      $region20: #{_meta_forward_device.1} parent=11 // pred_fallthru
        _
      // Predicated region
      $region21: #{_meta_forward_device.1} parent=11 // pred_check
        %p250 = pneg %p156
      $region22: #{_meta_forward_device.1} parent=11 // pred_check_branch
        %252 = sbr.rel (%p250) target = $region24
      $region23: #{_meta_forward_device.1} parent=11 // pred_region
        _
      $region24: #{_meta_forward_device.1} parent=11 // pred_fallthru
        _
      // Predicated region
      $region25: #{_meta_forward_device.1} parent=11 // pred_check
        %p253 = pneg %p177
      $region26: #{_meta_forward_device.1} parent=11 // pred_check_branch
        %255 = sbr.rel (%p253) target = $region28
      $region27: #{_meta_forward_device.1} parent=11 // pred_region
        _
      $region28: #{_meta_forward_device.1} parent=11 // pred_fallthru
        _
    $region12: #{_meta_forward_device.1} parent=5 // pred_fallthru
      _
    %p256 = scmp.lt.s32.totalorder %s15, 2
    // Predicated region
    $region29: #{_meta_forward_device.1} parent=5 // pred_check
      %p257 = pneg %p256
    $region30: #{_meta_forward_device.1} parent=5 // pred_check_branch
      %259 = sbr.rel (%p257) target = $region32
    $region31: #{_meta_forward_device.1} parent=5 // pred_region
      // Predicated region
      $region33: #{_meta_forward_device.1} parent=31 // pred_check
        %p260 = pneg %p35
      $region34: #{_meta_forward_device.1} parent=31 // pred_check_branch
        %262 = sbr.rel (%p260) target = $region36
      $region35: #{_meta_forward_device.1} parent=31 // pred_region
        %p263 = scmp.lt.s32.totalorder %s15, 1
        %s264 = scalar_select %p263, %s15, 1
        %s265 = smul.addr %s264, 64
        %s266 = smul.addr %s265, 8
        %s267 = scalar_lea.vmem %s0, %s266
      $region36: #{_meta_forward_device.1} parent=31 // pred_fallthru
        _
      // Predicated region
      $region37: #{_meta_forward_device.1} parent=31 // pred_check
        %p268 = pneg %p61
      $region38: #{_meta_forward_device.1} parent=31 // pred_check_branch
        %270 = sbr.rel (%p268) target = $region40
      $region39: #{_meta_forward_device.1} parent=31 // pred_region
        %p271 = scmp.lt.s32.totalorder %s15, 1
        %s272 = scalar_select %p271, %s15, 1
        %s273 = smul.addr %s272, 128
        %s274 = smul.addr %s273, 8
        %s275 = scalar_lea.vmem %s1, %s274
      $region40: #{_meta_forward_device.1} parent=31 // pred_fallthru
        _
      // Predicated region
      $region41: #{_meta_forward_device.1} parent=31 // pred_check
        %p276 = pneg %p87
      $region42: #{_meta_forward_device.1} parent=31 // pred_check_branch
        %278 = sbr.rel (%p276) target = $region44
      $region43: #{_meta_forward_device.1} parent=31 // pred_region
        %p279 = scmp.lt.s32.totalorder %s15, 1
        %s280 = scalar_select %p279, %s15, 1
        %s281 = smul.addr %s280, 8
        %s282 = smul.addr %s281, 8
        %s283 = scalar_lea.vmem %s2, %s282
      $region44: #{_meta_forward_device.1} parent=31 // pred_fallthru
        _
    $region32: #{_meta_forward_device.1} parent=5 // pred_fallthru
      _
    %p284 = scmp.le.s32.totalorder 1, %s15
    %p285 = scmp.lt.s32.totalorder %s15, 3
    %p286 = pnand %p284, %p285
    %p287 = pneg %p286
    // Predicated region
    $region45: #{_meta_forward_device.1} parent=5 // pred_check
      _
    $region46: #{_meta_forward_device.1} parent=5 // pred_check_branch
      %289 = sbr.rel (%p286) target = $region48
    $region47: #{_meta_forward_device.1} parent=5 // pred_region
      %s290 = ssub.s32 %s15, 1
      %p291 = scmp.lt.s32.totalorder %s20, 1
      %s292 = scalar_select %p291, %s20, 1
      %s293 = smul.addr %s292, 64
      %s294 = smul.addr %s293, 8
      %s295 = scalar_lea.vmem %s0, %s294
      %p296 = pneg %p41
      %p297 = pneg %p38
      %p298 = scmp.lt.s32.totalorder %s20, 1
      %s299 = scalar_select %p298, %s20, 1
      %s300 = smul.addr %s299, 128
      %s301 = smul.addr %s300, 8
      %s302 = scalar_lea.vmem %s1, %s301
      %p303 = pneg %p67
      %p304 = pneg %p64
      %p305 = scmp.lt.s32.totalorder %s20, 1
      %s306 = scalar_select %p305, %s20, 1
      %s307 = smul.addr %s306, 8
      %s308 = smul.addr %s307, 8
      %s309 = scalar_lea.vmem %s2, %s308
      %p310 = pneg %p93
      %p311 = pneg %p90
      %p312 = pneg %p114
      %p313 = pneg %p111
      %p314 = pneg %p135
      %p315 = pneg %p132
      %p316 = pneg %p156
      %p317 = pneg %p153
      %p318 = pneg %p177
      %p319 = pneg %p174
      %p320 = pneg %p203
      %p321 = pneg %p200
      %p322 = scmp.lt.s32.totalorder %s20, 1
      %s323 = scalar_select %p322, %s20, 1
      %s324 = scalar_lea.vmem %s7, %s323
      %p325 = pneg %p229
      %p326 = pneg %p226
      %p327 = scmp.lt.s32.totalorder %s20, 1
      %s328 = scalar_select %p327, %s20, 1
      %s329 = scalar_lea.vmem %s8, %s328
      %p330 = scmp.lt.s32.totalorder %s20, 1
      %s331 = scalar_select %p330, %s20, 1
      %s332 = smul.addr %s331, 64
      %s333 = smul.addr %s332, 8
      %s334 = scalar_lea.vmem %s0, %s333
      %p335 = scmp.lt.s32.totalorder %s20, 1
      %s336 = scalar_select %p335, %s20, 1
      %s337 = smul.addr %s336, 128
      %s338 = smul.addr %s337, 8
      %s339 = scalar_lea.vmem %s1, %s338
      %p340 = scmp.lt.s32.totalorder %s20, 1
      %s341 = scalar_select %p340, %s20, 1
      %s342 = smul.addr %s341, 8
      %s343 = smul.addr %s342, 8
      %s344 = scalar_lea.vmem %s2, %s343
      %p345 = scmp.lt.s32.totalorder %s20, 1
      %s346 = scalar_select %p345, %s20, 1
      %s347 = scalar_lea.vmem %s7, %s346
      %p348 = scmp.lt.s32.totalorder %s20, 1
      %s349 = scalar_select %p348, %s20, 1
      %s350 = scalar_lea.vmem %s8, %s349
      %v351 = vld [vmem:[%s334] sm:$0xff]
      %v352 = vld [vmem:[%s334 + $0x8] sm:$0xff]
      %v353 = vld [vmem:[%s334 + $0x10] sm:$0xff]
      %v354 = vld [vmem:[%s334 + $0x18] sm:$0xff]
      %v355 = vld [vmem:[%s334 + $0x20] sm:$0xff]
      %v356 = vld [vmem:[%s334 + $0x28] sm:$0xff]
      %v357 = vld [vmem:[%s334 + $0x30] sm:$0xff]
      %v358 = vld [vmem:[%s334 + $0x38] sm:$0xff]
      %v359 = vld [vmem:[%s334 + $0x40] sm:$0xff]
      %v360 = vld [vmem:[%s334 + $0x48] sm:$0xff]
      %v361 = vld [vmem:[%s334 + $0x50] sm:$0xff]
      %v362 = vld [vmem:[%s334 + $0x58] sm:$0xff]
      %v363 = vld [vmem:[%s334 + $0x60] sm:$0xff]
      %v364 = vld [vmem:[%s334 + $0x68] sm:$0xff]
      %v365 = vld [vmem:[%s334 + $0x70] sm:$0xff]
      %v366 = vld [vmem:[%s334 + $0x78] sm:$0xff]
      %v367 = vld [vmem:[%s334 + $0x80] sm:$0xff]
      %v368 = vld [vmem:[%s334 + $0x88] sm:$0xff]
      %v369 = vld [vmem:[%s334 + $0x90] sm:$0xff]
      %v370 = vld [vmem:[%s334 + $0x98] sm:$0xff]
      %v371 = vld [vmem:[%s334 + $0xa0] sm:$0xff]
      %v372 = vld [vmem:[%s334 + $0xa8] sm:$0xff]
      %v373 = vld [vmem:[%s334 + $0xb0] sm:$0xff]
      %v374 = vld [vmem:[%s334 + $0xb8] sm:$0xff]
      %v375 = vld [vmem:[%s334 + $0xc0] sm:$0xff]
      %v376 = vld [vmem:[%s334 + $0xc8] sm:$0xff]
      %v377 = vld [vmem:[%s334 + $0xd0] sm:$0xff]
      %v378 = vld [vmem:[%s334 + $0xd8] sm:$0xff]
      %v379 = vld [vmem:[%s334 + $0xe0] sm:$0xff]
      %v380 = vld [vmem:[%s334 + $0xe8] sm:$0xff]
      %v381 = vld [vmem:[%s334 + $0xf0] sm:$0xff]
      %v382 = vld [vmem:[%s334 + $0xf8] sm:$0xff]
      %v383 = vld [vmem:[%s334 + $0x100] sm:$0xff]
      %v384 = vld [vmem:[%s334 + $0x108] sm:$0xff]
      %v385 = vld [vmem:[%s334 + $0x110] sm:$0xff]
      %v386 = vld [vmem:[%s334 + $0x118] sm:$0xff]
      %v387 = vld [vmem:[%s334 + $0x120] sm:$0xff]
      %v388 = vld [vmem:[%s334 + $0x128] sm:$0xff]
      %v389 = vld [vmem:[%s334 + $0x130] sm:$0xff]
      %v390 = vld [vmem:[%s334 + $0x138] sm:$0xff]
      %v391 = vld [vmem:[%s334 + $0x140] sm:$0xff]
      %v392 = vld [vmem:[%s334 + $0x148] sm:$0xff]
      %v393 = vld [vmem:[%s334 + $0x150] sm:$0xff]
      %v394 = vld [vmem:[%s334 + $0x158] sm:$0xff]
      %v395 = vld [vmem:[%s334 + $0x160] sm:$0xff]
      %v396 = vld [vmem:[%s334 + $0x168] sm:$0xff]
      %v397 = vld [vmem:[%s334 + $0x170] sm:$0xff]
      %v398 = vld [vmem:[%s334 + $0x178] sm:$0xff]
      %v399 = vld [vmem:[%s334 + $0x180] sm:$0xff]
      %v400 = vld [vmem:[%s334 + $0x188] sm:$0xff]
      %v401 = vld [vmem:[%s334 + $0x190] sm:$0xff]
      %v402 = vld [vmem:[%s334 + $0x198] sm:$0xff]
      %v403 = vld [vmem:[%s334 + $0x1a0] sm:$0xff]
      %v404 = vld [vmem:[%s334 + $0x1a8] sm:$0xff]
      %v405 = vld [vmem:[%s334 + $0x1b0] sm:$0xff]
      %v406 = vld [vmem:[%s334 + $0x1b8] sm:$0xff]
      %v407 = vld [vmem:[%s334 + $0x1c0] sm:$0xff]
      %v408 = vld [vmem:[%s334 + $0x1c8] sm:$0xff]
      %v409 = vld [vmem:[%s334 + $0x1d0] sm:$0xff]
      %v410 = vld [vmem:[%s334 + $0x1d8] sm:$0xff]
      %v411 = vld [vmem:[%s334 + $0x1e0] sm:$0xff]
      %v412 = vld [vmem:[%s334 + $0x1e8] sm:$0xff]
      %v413 = vld [vmem:[%s334 + $0x1f0] sm:$0xff]
      %v414 = vld [vmem:[%s334 + $0x1f8] sm:$0xff]
      %v415 = vld [vmem:[%s339] sm:$0xff]
      %v416 = vld [vmem:[%s339 + $0x8] sm:$0xff]
      %v417 = vld [vmem:[%s339 + $0x10] sm:$0xff]
      %v418 = vld [vmem:[%s339 + $0x18] sm:$0xff]
      %v419 = vld [vmem:[%s339 + $0x20] sm:$0xff]
      %v420 = vld [vmem:[%s339 + $0x28] sm:$0xff]
      %v421 = vld [vmem:[%s339 + $0x30] sm:$0xff]
      %v422 = vld [vmem:[%s339 + $0x38] sm:$0xff]
      %v423 = vld [vmem:[%s339 + $0x40] sm:$0xff]
      %v424 = vld [vmem:[%s339 + $0x48] sm:$0xff]
      %v425 = vld [vmem:[%s339 + $0x50] sm:$0xff]
      %v426 = vld [vmem:[%s339 + $0x58] sm:$0xff]
      %v427 = vld [vmem:[%s339 + $0x60] sm:$0xff]
      %v428 = vld [vmem:[%s339 + $0x68] sm:$0xff]
      %v429 = vld [vmem:[%s339 + $0x70] sm:$0xff]
      %v430 = vld [vmem:[%s339 + $0x78] sm:$0xff]
      %v431 = vld [vmem:[%s339 + $0x80] sm:$0xff]
      %v432 = vld [vmem:[%s339 + $0x88] sm:$0xff]
      %v433 = vld [vmem:[%s339 + $0x90] sm:$0xff]
      %v434 = vld [vmem:[%s339 + $0x98] sm:$0xff]
      %v435 = vld [vmem:[%s339 + $0xa0] sm:$0xff]
      %v436 = vld [vmem:[%s339 + $0xa8] sm:$0xff]
      %v437 = vld [vmem:[%s339 + $0xb0] sm:$0xff]
      %v438 = vld [vmem:[%s339 + $0xb8] sm:$0xff]
      %v439 = vld [vmem:[%s339 + $0xc0] sm:$0xff]
      %v440 = vld [vmem:[%s339 + $0xc8] sm:$0xff]
      %v441 = vld [vmem:[%s339 + $0xd0] sm:$0xff]
      %v442 = vld [vmem:[%s339 + $0xd8] sm:$0xff]
      %v443 = vld [vmem:[%s339 + $0xe0] sm:$0xff]
      %v444 = vld [vmem:[%s339 + $0xe8] sm:$0xff]
      %v445 = vld [vmem:[%s339 + $0xf0] sm:$0xff]
      %v446 = vld [vmem:[%s339 + $0xf8] sm:$0xff]
      %v447 = vld [vmem:[%s339 + $0x100] sm:$0xff]
      %v448 = vld [vmem:[%s339 + $0x108] sm:$0xff]
      %v449 = vld [vmem:[%s339 + $0x110] sm:$0xff]
      %v450 = vld [vmem:[%s339 + $0x118] sm:$0xff]
      %v451 = vld [vmem:[%s339 + $0x120] sm:$0xff]
      %v452 = vld [vmem:[%s339 + $0x128] sm:$0xff]
      %v453 = vld [vmem:[%s339 + $0x130] sm:$0xff]
      %v454 = vld [vmem:[%s339 + $0x138] sm:$0xff]
      %v455 = vld [vmem:[%s339 + $0x140] sm:$0xff]
      %v456 = vld [vmem:[%s339 + $0x148] sm:$0xff]
      %v457 = vld [vmem:[%s339 + $0x150] sm:$0xff]
      %v458 = vld [vmem:[%s339 + $0x158] sm:$0xff]
      %v459 = vld [vmem:[%s339 + $0x160] sm:$0xff]
      %v460 = vld [vmem:[%s339 + $0x168] sm:$0xff]
      %v461 = vld [vmem:[%s339 + $0x170] sm:$0xff]
      %v462 = vld [vmem:[%s339 + $0x178] sm:$0xff]
      %v463 = vld [vmem:[%s339 + $0x180] sm:$0xff]
      %v464 = vld [vmem:[%s339 + $0x188] sm:$0xff]
      %v465 = vld [vmem:[%s339 + $0x190] sm:$0xff]
      %v466 = vld [vmem:[%s339 + $0x198] sm:$0xff]
      %v467 = vld [vmem:[%s339 + $0x1a0] sm:$0xff]
      %v468 = vld [vmem:[%s339 + $0x1a8] sm:$0xff]
      %v469 = vld [vmem:[%s339 + $0x1b0] sm:$0xff]
      %v470 = vld [vmem:[%s339 + $0x1b8] sm:$0xff]
      %v471 = vld [vmem:[%s339 + $0x1c0] sm:$0xff]
      %v472 = vld [vmem:[%s339 + $0x1c8] sm:$0xff]
      %v473 = vld [vmem:[%s339 + $0x1d0] sm:$0xff]
      %v474 = vld [vmem:[%s339 + $0x1d8] sm:$0xff]
      %v475 = vld [vmem:[%s339 + $0x1e0] sm:$0xff]
      %v476 = vld [vmem:[%s339 + $0x1e8] sm:$0xff]
      %v477 = vld [vmem:[%s339 + $0x1f0] sm:$0xff]
      %v478 = vld [vmem:[%s339 + $0x1f8] sm:$0xff]
      %v479 = vld [vmem:[%s339 + $0x200] sm:$0xff]
      %v480 = vld [vmem:[%s339 + $0x208] sm:$0xff]
      %v481 = vld [vmem:[%s339 + $0x210] sm:$0xff]
      %v482 = vld [vmem:[%s339 + $0x218] sm:$0xff]
      %v483 = vld [vmem:[%s339 + $0x220] sm:$0xff]
      %v484 = vld [vmem:[%s339 + $0x228] sm:$0xff]
      %v485 = vld [vmem:[%s339 + $0x230] sm:$0xff]
      %v486 = vld [vmem:[%s339 + $0x238] sm:$0xff]
      %v487 = vld [vmem:[%s339 + $0x240] sm:$0xff]
      %v488 = vld [vmem:[%s339 + $0x248] sm:$0xff]
      %v489 = vld [vmem:[%s339 + $0x250] sm:$0xff]
      %v490 = vld [vmem:[%s339 + $0x258] sm:$0xff]
      %v491 = vld [vmem:[%s339 + $0x260] sm:$0xff]
      %v492 = vld [vmem:[%s339 + $0x268] sm:$0xff]
      %v493 = vld [vmem:[%s339 + $0x270] sm:$0xff]
      %v494 = vld [vmem:[%s339 + $0x278] sm:$0xff]
      %v495 = vld [vmem:[%s339 + $0x280] sm:$0xff]
      %v496 = vld [vmem:[%s339 + $0x288] sm:$0xff]
      %v497 = vld [vmem:[%s339 + $0x290] sm:$0xff]
      %v498 = vld [vmem:[%s339 + $0x298] sm:$0xff]
      %v499 = vld [vmem:[%s339 + $0x2a0] sm:$0xff]
      %v500 = vld [vmem:[%s339 + $0x2a8] sm:$0xff]
      %v501 = vld [vmem:[%s339 + $0x2b0] sm:$0xff]
      %v502 = vld [vmem:[%s339 + $0x2b8] sm:$0xff]
      %v503 = vld [vmem:[%s339 + $0x2c0] sm:$0xff]
      %v504 = vld [vmem:[%s339 + $0x2c8] sm:$0xff]
      %v505 = vld [vmem:[%s339 + $0x2d0] sm:$0xff]
      %v506 = vld [vmem:[%s339 + $0x2d8] sm:$0xff]
      %v507 = vld [vmem:[%s339 + $0x2e0] sm:$0xff]
      %v508 = vld [vmem:[%s339 + $0x2e8] sm:$0xff]
      %v509 = vld [vmem:[%s339 + $0x2f0] sm:$0xff]
      %v510 = vld [vmem:[%s339 + $0x2f8] sm:$0xff]
      %v511 = vld [vmem:[%s339 + $0x300] sm:$0xff]
      %v512 = vld [vmem:[%s339 + $0x308] sm:$0xff]
      %v513 = vld [vmem:[%s339 + $0x310] sm:$0xff]
      %v514 = vld [vmem:[%s339 + $0x318] sm:$0xff]
      %v515 = vld [vmem:[%s339 + $0x320] sm:$0xff]
      %v516 = vld [vmem:[%s339 + $0x328] sm:$0xff]
      %v517 = vld [vmem:[%s339 + $0x330] sm:$0xff]
      %v518 = vld [vmem:[%s339 + $0x338] sm:$0xff]
      %v519 = vld [vmem:[%s339 + $0x340] sm:$0xff]
      %v520 = vld [vmem:[%s339 + $0x348] sm:$0xff]
      %v521 = vld [vmem:[%s339 + $0x350] sm:$0xff]
      %v522 = vld [vmem:[%s339 + $0x358] sm:$0xff]
      %v523 = vld [vmem:[%s339 + $0x360] sm:$0xff]
      %v524 = vld [vmem:[%s339 + $0x368] sm:$0xff]
      %v525 = vld [vmem:[%s339 + $0x370] sm:$0xff]
      %v526 = vld [vmem:[%s339 + $0x378] sm:$0xff]
      %v527 = vld [vmem:[%s339 + $0x380] sm:$0xff]
      %v528 = vld [vmem:[%s339 + $0x388] sm:$0xff]
      %v529 = vld [vmem:[%s339 + $0x390] sm:$0xff]
      %v530 = vld [vmem:[%s339 + $0x398] sm:$0xff]
      %v531 = vld [vmem:[%s339 + $0x3a0] sm:$0xff]
      %v532 = vld [vmem:[%s339 + $0x3a8] sm:$0xff]
      %v533 = vld [vmem:[%s339 + $0x3b0] sm:$0xff]
      %v534 = vld [vmem:[%s339 + $0x3b8] sm:$0xff]
      %v535 = vld [vmem:[%s339 + $0x3c0] sm:$0xff]
      %v536 = vld [vmem:[%s339 + $0x3c8] sm:$0xff]
      %v537 = vld [vmem:[%s339 + $0x3d0] sm:$0xff]
      %v538 = vld [vmem:[%s339 + $0x3d8] sm:$0xff]
      %v539 = vld [vmem:[%s339 + $0x3e0] sm:$0xff]
      %v540 = vld [vmem:[%s339 + $0x3e8] sm:$0xff]
      %v541 = vld [vmem:[%s339 + $0x3f0] sm:$0xff]
      %v542 = vld [vmem:[%s339 + $0x3f8] sm:$0xff]
      %v543 = vld [vmem:[%s344] sm:$0xff]
      %v544 = vld [vmem:[%s344 + $0x8] sm:$0xff]
      %v545 = vld [vmem:[%s344 + $0x10] sm:$0xff]
      %v546 = vld [vmem:[%s344 + $0x18] sm:$0xff]
      %v547 = vld [vmem:[%s344 + $0x20] sm:$0xff]
      %v548 = vld [vmem:[%s344 + $0x28] sm:$0xff]
      %v549 = vld [vmem:[%s344 + $0x30] sm:$0xff]
      %v550 = vld [vmem:[%s344 + $0x38] sm:$0xff]
      %v551 = vld [vmem:[%s6] sm:$0xff]
      %v552 = vld [vmem:[%s6 + $0x8] sm:$0xff]
      %v553 = vld [vmem:[%s6 + $0x10] sm:$0xff]
      %v554 = vld [vmem:[%s6 + $0x18] sm:$0xff]
      %v555 = vld [vmem:[%s6 + $0x20] sm:$0xff]
      %v556 = vld [vmem:[%s6 + $0x28] sm:$0xff]
      %v557 = vld [vmem:[%s6 + $0x30] sm:$0xff]
      %v558 = vld [vmem:[%s6 + $0x38] sm:$0xff]
      %v559 = vld [vmem:[%s6 + $0x40] sm:$0xff]
      %v560 = vld [vmem:[%s6 + $0x48] sm:$0xff]
      %v561 = vld [vmem:[%s6 + $0x50] sm:$0xff]
      %v562 = vld [vmem:[%s6 + $0x58] sm:$0xff]
      %v563 = vld [vmem:[%s6 + $0x60] sm:$0xff]
      %v564 = vld [vmem:[%s6 + $0x68] sm:$0xff]
      %v565 = vld [vmem:[%s6 + $0x70] sm:$0xff]
      %v566 = vld [vmem:[%s6 + $0x78] sm:$0xff]
      %v567 = vld [vmem:[%s5] sm:$0xff]
      %v568 = vld [vmem:[%s5 + $0x8] sm:$0xff]
      %v569 = vld [vmem:[%s5 + $0x10] sm:$0xff]
      %v570 = vld [vmem:[%s5 + $0x18] sm:$0xff]
      %v571 = vld [vmem:[%s5 + $0x20] sm:$0xff]
      %v572 = vld [vmem:[%s5 + $0x28] sm:$0xff]
      %v573 = vld [vmem:[%s5 + $0x30] sm:$0xff]
      %v574 = vld [vmem:[%s5 + $0x38] sm:$0xff]
      %v575 = vlaneseq
      %v576 = vand.u32 %v575, 127
      %577 = vset.pattern.permute.xlu0 0
      %578 = vperm.xlu0 %577, %v543
      %v579 = vpop.permute.xlu0 %578
      %580 = vset.pattern.permute.xlu0 0
      %581 = vperm.xlu0 %580, %v544
      %v582 = vpop.permute.xlu0 %581
      %583 = vset.pattern.permute.xlu0 0
      %584 = vperm.xlu0 %583, %v545
      %v585 = vpop.permute.xlu0 %584
      %586 = vset.pattern.permute.xlu0 0
      %587 = vperm.xlu0 %586, %v546
      %v588 = vpop.permute.xlu0 %587
      %589 = vset.pattern.permute.xlu0 0
      %590 = vperm.xlu0 %589, %v547
      %v591 = vpop.permute.xlu0 %590
      %592 = vset.pattern.permute.xlu0 0
      %593 = vperm.xlu0 %592, %v548
      %v594 = vpop.permute.xlu0 %593
      %595 = vset.pattern.permute.xlu0 0
      %596 = vperm.xlu0 %595, %v549
      %v597 = vpop.permute.xlu0 %596
      %598 = vset.pattern.permute.xlu0 0
      %599 = vperm.xlu0 %598, %v550
      %v600 = vpop.permute.xlu0 %599
      %vm601 = vcmp.eq.s32.totalorder %v576, %v579
      %vm602 = vcmp.eq.s32.totalorder %v576, %v582
      %vm603 = vcmp.eq.s32.totalorder %v576, %v585
      %vm604 = vcmp.eq.s32.totalorder %v576, %v588
      %vm605 = vcmp.eq.s32.totalorder %v576, %v591
      %vm606 = vcmp.eq.s32.totalorder %v576, %v594
      %vm607 = vcmp.eq.s32.totalorder %v576, %v597
      %vm608 = vcmp.eq.s32.totalorder %v576, %v600
      %v609 = vsel %vm601, 1, 0
      %v610 = vsel %vm602, 1, 0
      %v611 = vsel %vm603, 1, 0
      %v612 = vsel %vm604, 1, 0
      %v613 = vsel %vm605, 1, 0
      %v614 = vsel %vm606, 1, 0
      %v615 = vsel %vm607, 1, 0
      %v616 = vsel %vm608, 1, 0
      %v617 = vcvt.s32.f32 %v609
      %v618 = vcvt.s32.f32 %v610
      %v619 = vcvt.s32.f32 %v611
      %v620 = vcvt.s32.f32 %v612
      %v621 = vcvt.s32.f32 %v613
      %v622 = vcvt.s32.f32 %v614
      %v623 = vcvt.s32.f32 %v615
      %v624 = vcvt.s32.f32 %v616
      %vm625 = vcmp.ne.s32.totalorder %v543, 127
      %vm626 = vcmp.ne.s32.totalorder %v544, 127
      %vm627 = vcmp.ne.s32.totalorder %v545, 127
      %vm628 = vcmp.ne.s32.totalorder %v546, 127
      %vm629 = vcmp.ne.s32.totalorder %v547, 127
      %vm630 = vcmp.ne.s32.totalorder %v548, 127
      %vm631 = vcmp.ne.s32.totalorder %v549, 127
      %vm632 = vcmp.ne.s32.totalorder %v550, 127
      %v633 = vsel %vm625, 1, 0
      %v634 = vsel %vm626, 1, 0
      %v635 = vsel %vm627, 1, 0
      %v636 = vsel %vm628, 1, 0
      %v637 = vsel %vm629, 1, 0
      %v638 = vsel %vm630, 1, 0
      %v639 = vsel %vm631, 1, 0
      %v640 = vsel %vm632, 1, 0
      %v641 = vcvt.s32.f32 %v633
      %v642 = vcvt.s32.f32 %v634
      %v643 = vcvt.s32.f32 %v635
      %v644 = vcvt.s32.f32 %v636
      %v645 = vcvt.s32.f32 %v637
      %v646 = vcvt.s32.f32 %v638
      %v647 = vcvt.s32.f32 %v639
      %v648 = vcvt.s32.f32 %v640
      %v649 = vlaneseq
      %v650 = vshrl.u32 %v649, 7
      %v651 = vadd.s32 %v650, 8
      %v652 = vadd.s32 %v650, 16
      %v653 = vadd.s32 %v650, 24
      %v654 = vadd.s32 %v650, 32
      %v655 = vadd.s32 %v650, 40
      %v656 = vadd.s32 %v650, 48
      %v657 = vadd.s32 %v650, 56
      %vm658 = vcmp.ge.s32.totalorder %v650, 32
      %vm659 = vcmp.ge.s32.totalorder %v651, 32
      %vm660 = vcmp.ge.s32.totalorder %v652, 32
      %vm661 = vcmp.ge.s32.totalorder %v653, 32
      %vm662 = vcmp.ge.s32.totalorder %v654, 32
      %vm663 = vcmp.ge.s32.totalorder %v655, 32
      %vm664 = vcmp.ge.s32.totalorder %v656, 32
      %vm665 = vcmp.ge.s32.totalorder %v657, 32
      %v666 = vsel %vm658, 1, 0
      %v667 = vsel %vm659, 1, 0
      %v668 = vsel %vm660, 1, 0
      %v669 = vsel %vm661, 1, 0
      %v670 = vsel %vm662, 1, 0
      %v671 = vsel %vm663, 1, 0
      %v672 = vsel %vm664, 1, 0
      %v673 = vsel %vm665, 1, 0
      %v674 = vcvt.s32.f32 %v666
      %v675 = vcvt.s32.f32 %v667
      %v676 = vcvt.s32.f32 %v668
      %v677 = vcvt.s32.f32 %v669
      %v678 = vcvt.s32.f32 %v670
      %v679 = vcvt.s32.f32 %v671
      %v680 = vcvt.s32.f32 %v672
      %v681 = vcvt.s32.f32 %v673
      %v682 = vmul.f32 %v641, %v674
      %v683 = vmul.f32 %v642, %v675
      %v684 = vmul.f32 %v643, %v676
      %v685 = vmul.f32 %v644, %v677
      %v686 = vmul.f32 %v645, %v678
      %v687 = vmul.f32 %v646, %v679
      %v688 = vmul.f32 %v647, %v680
      %v689 = vmul.f32 %v648, %v681
      %v690 = vsub.f32 1.0, %v674
      %v691 = vsub.f32 1.0, %v675
      %v692 = vsub.f32 1.0, %v676
      %v693 = vsub.f32 1.0, %v677
      %v694 = vsub.f32 1.0, %v678
      %v695 = vsub.f32 1.0, %v679
      %v696 = vsub.f32 1.0, %v680
      %v697 = vsub.f32 1.0, %v681
      %v698 = vmul.f32 %v641, %v690
      %v699 = vmul.f32 %v642, %v691
      %v700 = vmul.f32 %v643, %v692
      %v701 = vmul.f32 %v644, %v693
      %v702 = vmul.f32 %v645, %v694
      %v703 = vmul.f32 %v646, %v695
      %v704 = vmul.f32 %v647, %v696
      %v705 = vmul.f32 %v648, %v697
      %vm706 = vcmask 7168
      %v707 = vsel %vm706, %v698, 0.0
      %v708 = vsel %vm706, %v699, 0.0
      %v709 = vadd.f32 %v707, %v708
      %v710 = vsel %vm706, %v700, 0.0
      %v711 = vadd.f32 %v709, %v710
      %v712 = vsel %vm706, %v701, 0.0
      %v713 = vadd.f32 %v711, %v712
      %v714 = vsel %vm706, %v702, 0.0
      %v715 = vadd.f32 %v713, %v714
      %v716 = vsel %vm706, %v703, 0.0
      %v717 = vadd.f32 %v715, %v716
      %v718 = vsel %vm706, %v704, 0.0
      %v719 = vadd.f32 %v717, %v718
      %v720 = vsel %vm706, %v705, 0.0
      %v721 = vadd.f32 %v719, %v720
      %722 = vadd.xlane.f32.xlu0 %v721
      %v723 = vpop.xlane.xlu0 %722
      %v724 = vrot.slane %v723, 4
      %v725 = vadd.f32 %v723, %v724
      %v726 = vrot.slane %v725, 2
      %v727 = vadd.f32 %v725, %v726
      %v728 = vrot.slane %v727, 1
      %v729 = vadd.f32 %v727, %v728
      %s730 = vtos %v729
      %v731 = vstv %s730
      %v732 = vmax.f32 %v731, 1.0
      %v733 = vrcp.pop %v732
      %v734 = vmul.f32 1.0, %v733
      %v735 = vsel %vm706, %v682, 0.0
      %v736 = vsel %vm706, %v683, 0.0
      %v737 = vadd.f32 %v735, %v736
      %v738 = vsel %vm706, %v684, 0.0
      %v739 = vadd.f32 %v737, %v738
      %v740 = vsel %vm706, %v685, 0.0
      %v741 = vadd.f32 %v739, %v740
      %v742 = vsel %vm706, %v686, 0.0
      %v743 = vadd.f32 %v741, %v742
      %v744 = vsel %vm706, %v687, 0.0
      %v745 = vadd.f32 %v743, %v744
      %v746 = vsel %vm706, %v688, 0.0
      %v747 = vadd.f32 %v745, %v746
      %v748 = vsel %vm706, %v689, 0.0
      %v749 = vadd.f32 %v747, %v748
      %750 = vadd.xlane.f32.xlu0 %v749
      %v751 = vpop.xlane.xlu0 %750
      %v752 = vrot.slane %v751, 4
      %v753 = vadd.f32 %v751, %v752
      %v754 = vrot.slane %v753, 2
      %v755 = vadd.f32 %v753, %v754
      %v756 = vrot.slane %v755, 1
      %v757 = vadd.f32 %v755, %v756
      %s758 = vtos %v757
      %v759 = vstv %s758
      %v760 = vmax.f32 %v759, 1.0
      %v761 = vrcp.pop %v760
      %v762 = vmul.f32 1.0, %v761
      %v763 = vmul.f32 %v698, %v734
      %v764 = vmul.f32 %v699, %v734
      %v765 = vmul.f32 %v700, %v734
      %v766 = vmul.f32 %v701, %v734
      %v767 = vmul.f32 %v702, %v734
      %v768 = vmul.f32 %v703, %v734
      %v769 = vmul.f32 %v704, %v734
      %v770 = vmul.f32 %v705, %v734
      %v771 = vld [vmem:[%s3] sm:$0xff]
      %v772 = vld [vmem:[%s3 + $0x8] sm:$0xff]
      %v773 = vld [vmem:[%s3 + $0x10] sm:$0xff]
      %v774 = vld [vmem:[%s3 + $0x18] sm:$0xff]
      %v775 = vld [vmem:[%s3 + $0x20] sm:$0xff]
      %v776 = vld [vmem:[%s3 + $0x28] sm:$0xff]
      %v777 = vld [vmem:[%s3 + $0x30] sm:$0xff]
      %v778 = vld [vmem:[%s3 + $0x38] sm:$0xff]
      %v779 = vld [vmem:[%s3 + $0x40] sm:$0xff]
      %v780 = vld [vmem:[%s3 + $0x48] sm:$0xff]
      %v781 = vld [vmem:[%s3 + $0x50] sm:$0xff]
      %v782 = vld [vmem:[%s3 + $0x58] sm:$0xff]
      %v783 = vld [vmem:[%s3 + $0x60] sm:$0xff]
      %v784 = vld [vmem:[%s3 + $0x68] sm:$0xff]
      %v785 = vld [vmem:[%s3 + $0x70] sm:$0xff]
      %v786 = vld [vmem:[%s3 + $0x78] sm:$0xff]
      %v787 = vld [vmem:[%s3 + $0x80] sm:$0xff]
      %v788 = vld [vmem:[%s3 + $0x88] sm:$0xff]
      %v789 = vld [vmem:[%s3 + $0x90] sm:$0xff]
      %v790 = vld [vmem:[%s3 + $0x98] sm:$0xff]
      %v791 = vld [vmem:[%s3 + $0xa0] sm:$0xff]
      %v792 = vld [vmem:[%s3 + $0xa8] sm:$0xff]
      %v793 = vld [vmem:[%s3 + $0xb0] sm:$0xff]
      %v794 = vld [vmem:[%s3 + $0xb8] sm:$0xff]
      %v795 = vld [vmem:[%s3 + $0xc0] sm:$0xff]
      %v796 = vld [vmem:[%s3 + $0xc8] sm:$0xff]
      %v797 = vld [vmem:[%s3 + $0xd0] sm:$0xff]
      %v798 = vld [vmem:[%s3 + $0xd8] sm:$0xff]
      %v799 = vld [vmem:[%s3 + $0xe0] sm:$0xff]
      %v800 = vld [vmem:[%s3 + $0xe8] sm:$0xff]
      %v801 = vld [vmem:[%s3 + $0xf0] sm:$0xff]
      %v802 = vld [vmem:[%s3 + $0xf8] sm:$0xff]
      %v803 = vld [vmem:[%s3 + $0x100] sm:$0xff]
      %v804 = vld [vmem:[%s3 + $0x108] sm:$0xff]
      %v805 = vld [vmem:[%s3 + $0x110] sm:$0xff]
      %v806 = vld [vmem:[%s3 + $0x118] sm:$0xff]
      %v807 = vld [vmem:[%s3 + $0x120] sm:$0xff]
      %v808 = vld [vmem:[%s3 + $0x128] sm:$0xff]
      %v809 = vld [vmem:[%s3 + $0x130] sm:$0xff]
      %v810 = vld [vmem:[%s3 + $0x138] sm:$0xff]
      %v811 = vld [vmem:[%s3 + $0x140] sm:$0xff]
      %v812 = vld [vmem:[%s3 + $0x148] sm:$0xff]
      %v813 = vld [vmem:[%s3 + $0x150] sm:$0xff]
      %v814 = vld [vmem:[%s3 + $0x158] sm:$0xff]
      %v815 = vld [vmem:[%s3 + $0x160] sm:$0xff]
      %v816 = vld [vmem:[%s3 + $0x168] sm:$0xff]
      %v817 = vld [vmem:[%s3 + $0x170] sm:$0xff]
      %v818 = vld [vmem:[%s3 + $0x178] sm:$0xff]
      %v819 = vld [vmem:[%s3 + $0x180] sm:$0xff]
      %v820 = vld [vmem:[%s3 + $0x188] sm:$0xff]
      %v821 = vld [vmem:[%s3 + $0x190] sm:$0xff]
      %v822 = vld [vmem:[%s3 + $0x198] sm:$0xff]
      %v823 = vld [vmem:[%s3 + $0x1a0] sm:$0xff]
      %v824 = vld [vmem:[%s3 + $0x1a8] sm:$0xff]
      %v825 = vld [vmem:[%s3 + $0x1b0] sm:$0xff]
      %v826 = vld [vmem:[%s3 + $0x1b8] sm:$0xff]
      %v827 = vld [vmem:[%s3 + $0x1c0] sm:$0xff]
      %v828 = vld [vmem:[%s3 + $0x1c8] sm:$0xff]
      %v829 = vld [vmem:[%s3 + $0x1d0] sm:$0xff]
      %v830 = vld [vmem:[%s3 + $0x1d8] sm:$0xff]
      %v831 = vld [vmem:[%s3 + $0x1e0] sm:$0xff]
      %v832 = vld [vmem:[%s3 + $0x1e8] sm:$0xff]
      %v833 = vld [vmem:[%s3 + $0x1f0] sm:$0xff]
      %v834 = vld [vmem:[%s3 + $0x1f8] sm:$0xff]
      %v835 = vld [vmem:[%s3 + $0x200] sm:$0xff]
      %v836 = vld [vmem:[%s3 + $0x208] sm:$0xff]
      %v837 = vld [vmem:[%s3 + $0x210] sm:$0xff]
      %v838 = vld [vmem:[%s3 + $0x218] sm:$0xff]
      %v839 = vld [vmem:[%s3 + $0x220] sm:$0xff]
      %v840 = vld [vmem:[%s3 + $0x228] sm:$0xff]
      %v841 = vld [vmem:[%s3 + $0x230] sm:$0xff]
      %v842 = vld [vmem:[%s3 + $0x238] sm:$0xff]
      %v843 = vld [vmem:[%s3 + $0x240] sm:$0xff]
      %v844 = vld [vmem:[%s3 + $0x248] sm:$0xff]
      %v845 = vld [vmem:[%s3 + $0x250] sm:$0xff]
      %v846 = vld [vmem:[%s3 + $0x258] sm:$0xff]
      %v847 = vld [vmem:[%s3 + $0x260] sm:$0xff]
      %v848 = vld [vmem:[%s3 + $0x268] sm:$0xff]
      %v849 = vld [vmem:[%s3 + $0x270] sm:$0xff]
      %v850 = vld [vmem:[%s3 + $0x278] sm:$0xff]
      %v851 = vld [vmem:[%s3 + $0x280] sm:$0xff]
      %v852 = vld [vmem:[%s3 + $0x288] sm:$0xff]
      %v853 = vld [vmem:[%s3 + $0x290] sm:$0xff]
      %v854 = vld [vmem:[%s3 + $0x298] sm:$0xff]
      %v855 = vld [vmem:[%s3 + $0x2a0] sm:$0xff]
      %v856 = vld [vmem:[%s3 + $0x2a8] sm:$0xff]
      %v857 = vld [vmem:[%s3 + $0x2b0] sm:$0xff]
      %v858 = vld [vmem:[%s3 + $0x2b8] sm:$0xff]
      %v859 = vld [vmem:[%s3 + $0x2c0] sm:$0xff]
      %v860 = vld [vmem:[%s3 + $0x2c8] sm:$0xff]
      %v861 = vld [vmem:[%s3 + $0x2d0] sm:$0xff]
      %v862 = vld [vmem:[%s3 + $0x2d8] sm:$0xff]
      %v863 = vld [vmem:[%s3 + $0x2e0] sm:$0xff]
      %v864 = vld [vmem:[%s3 + $0x2e8] sm:$0xff]
      %v865 = vld [vmem:[%s3 + $0x2f0] sm:$0xff]
      %v866 = vld [vmem:[%s3 + $0x2f8] sm:$0xff]
      %v867 = vld [vmem:[%s3 + $0x300] sm:$0xff]
      %v868 = vld [vmem:[%s3 + $0x308] sm:$0xff]
      %v869 = vld [vmem:[%s3 + $0x310] sm:$0xff]
      %v870 = vld [vmem:[%s3 + $0x318] sm:$0xff]
      %v871 = vld [vmem:[%s3 + $0x320] sm:$0xff]
      %v872 = vld [vmem:[%s3 + $0x328] sm:$0xff]
      %v873 = vld [vmem:[%s3 + $0x330] sm:$0xff]
      %v874 = vld [vmem:[%s3 + $0x338] sm:$0xff]
      %v875 = vld [vmem:[%s3 + $0x340] sm:$0xff]
      %v876 = vld [vmem:[%s3 + $0x348] sm:$0xff]
      %v877 = vld [vmem:[%s3 + $0x350] sm:$0xff]
      %v878 = vld [vmem:[%s3 + $0x358] sm:$0xff]
      %v879 = vld [vmem:[%s3 + $0x360] sm:$0xff]
      %v880 = vld [vmem:[%s3 + $0x368] sm:$0xff]
      %v881 = vld [vmem:[%s3 + $0x370] sm:$0xff]
      %v882 = vld [vmem:[%s3 + $0x378] sm:$0xff]
      %v883 = vld [vmem:[%s3 + $0x380] sm:$0xff]
      %v884 = vld [vmem:[%s3 + $0x388] sm:$0xff]
      %v885 = vld [vmem:[%s3 + $0x390] sm:$0xff]
      %v886 = vld [vmem:[%s3 + $0x398] sm:$0xff]
      %v887 = vld [vmem:[%s3 + $0x3a0] sm:$0xff]
      %v888 = vld [vmem:[%s3 + $0x3a8] sm:$0xff]
      %v889 = vld [vmem:[%s3 + $0x3b0] sm:$0xff]
      %v890 = vld [vmem:[%s3 + $0x3b8] sm:$0xff]
      %v891 = vld [vmem:[%s3 + $0x3c0] sm:$0xff]
      %v892 = vld [vmem:[%s3 + $0x3c8] sm:$0xff]
      %v893 = vld [vmem:[%s3 + $0x3d0] sm:$0xff]
      %v894 = vld [vmem:[%s3 + $0x3d8] sm:$0xff]
      %v895 = vld [vmem:[%s3 + $0x3e0] sm:$0xff]
      %v896 = vld [vmem:[%s3 + $0x3e8] sm:$0xff]
      %v897 = vld [vmem:[%s3 + $0x3f0] sm:$0xff]
      %v898 = vld [vmem:[%s3 + $0x3f8] sm:$0xff]
      %vm899 = vcmask 261120
      %900 = vst.msk [vmem:[#allocation2] sm:$0xff] %vm899, %v771
      %901 = vst.msk [vmem:[#allocation2 + $0x8] sm:$0xff] %vm899, %v772
      %902 = vst.msk [vmem:[#allocation2 + $0x10] sm:$0xff] %vm899, %v773
      %903 = vst.msk [vmem:[#allocation2 + $0x18] sm:$0xff] %vm899, %v774
      %904 = vst.msk [vmem:[#allocation2 + $0x20] sm:$0xff] %vm899, %v775
      %905 = vst.msk [vmem:[#allocation2 + $0x28] sm:$0xff] %vm899, %v776
      %906 = vst.msk [vmem:[#allocation2 + $0x30] sm:$0xff] %vm899, %v777
      %907 = vst.msk [vmem:[#allocation2 + $0x38] sm:$0xff] %vm899, %v778
      %908 = vst.msk [vmem:[#allocation2 + $0x40] sm:$0xff] %vm899, %v779
      %909 = vst.msk [vmem:[#allocation2 + $0x48] sm:$0xff] %vm899, %v780
      %910 = vst.msk [vmem:[#allocation2 + $0x50] sm:$0xff] %vm899, %v781
      %911 = vst.msk [vmem:[#allocation2 + $0x58] sm:$0xff] %vm899, %v782
      %912 = vst.msk [vmem:[#allocation2 + $0x60] sm:$0xff] %vm899, %v783
      %913 = vst.msk [vmem:[#allocation2 + $0x68] sm:$0xff] %vm899, %v784
      %914 = vst.msk [vmem:[#allocation2 + $0x70] sm:$0xff] %vm899, %v785
      %915 = vst.msk [vmem:[#allocation2 + $0x78] sm:$0xff] %vm899, %v786
      %916 = vst.msk [vmem:[#allocation2 + $0x80] sm:$0xff] %vm899, %v787
      %917 = vst.msk [vmem:[#allocation2 + $0x88] sm:$0xff] %vm899, %v788
      %918 = vst.msk [vmem:[#allocation2 + $0x90] sm:$0xff] %vm899, %v789
      %919 = vst.msk [vmem:[#allocation2 + $0x98] sm:$0xff] %vm899, %v790
      %920 = vst.msk [vmem:[#allocation2 + $0xa0] sm:$0xff] %vm899, %v791
      %921 = vst.msk [vmem:[#allocation2 + $0xa8] sm:$0xff] %vm899, %v792
      %922 = vst.msk [vmem:[#allocation2 + $0xb0] sm:$0xff] %vm899, %v793
      %923 = vst.msk [vmem:[#allocation2 + $0xb8] sm:$0xff] %vm899, %v794
      %924 = vst.msk [vmem:[#allocation2 + $0xc0] sm:$0xff] %vm899, %v795
      %925 = vst.msk [vmem:[#allocation2 + $0xc8] sm:$0xff] %vm899, %v796
      %926 = vst.msk [vmem:[#allocation2 + $0xd0] sm:$0xff] %vm899, %v797
      %927 = vst.msk [vmem:[#allocation2 + $0xd8] sm:$0xff] %vm899, %v798
      %928 = vst.msk [vmem:[#allocation2 + $0xe0] sm:$0xff] %vm899, %v799
      %929 = vst.msk [vmem:[#allocation2 + $0xe8] sm:$0xff] %vm899, %v800
      %930 = vst.msk [vmem:[#allocation2 + $0xf0] sm:$0xff] %vm899, %v801
      %931 = vst.msk [vmem:[#allocation2 + $0xf8] sm:$0xff] %vm899, %v802
      %932 = vst.msk [vmem:[#allocation2 + $0x100] sm:$0xff] %vm899, %v803
      %933 = vst.msk [vmem:[#allocation2 + $0x108] sm:$0xff] %vm899, %v804
      %934 = vst.msk [vmem:[#allocation2 + $0x110] sm:$0xff] %vm899, %v805
      %935 = vst.msk [vmem:[#allocation2 + $0x118] sm:$0xff] %vm899, %v806
      %936 = vst.msk [vmem:[#allocation2 + $0x120] sm:$0xff] %vm899, %v807
      %937 = vst.msk [vmem:[#allocation2 + $0x128] sm:$0xff] %vm899, %v808
      %938 = vst.msk [vmem:[#allocation2 + $0x130] sm:$0xff] %vm899, %v809
      %939 = vst.msk [vmem:[#allocation2 + $0x138] sm:$0xff] %vm899, %v810
      %940 = vst.msk [vmem:[#allocation2 + $0x140] sm:$0xff] %vm899, %v811
      %941 = vst.msk [vmem:[#allocation2 + $0x148] sm:$0xff] %vm899, %v812
      %942 = vst.msk [vmem:[#allocation2 + $0x150] sm:$0xff] %vm899, %v813
      %943 = vst.msk [vmem:[#allocation2 + $0x158] sm:$0xff] %vm899, %v814
      %944 = vst.msk [vmem:[#allocation2 + $0x160] sm:$0xff] %vm899, %v815
      %945 = vst.msk [vmem:[#allocation2 + $0x168] sm:$0xff] %vm899, %v816
      %946 = vst.msk [vmem:[#allocation2 + $0x170] sm:$0xff] %vm899, %v817
      %947 = vst.msk [vmem:[#allocation2 + $0x178] sm:$0xff] %vm899, %v818
      %948 = vst.msk [vmem:[#allocation2 + $0x180] sm:$0xff] %vm899, %v819
      %949 = vst.msk [vmem:[#allocation2 + $0x188] sm:$0xff] %vm899, %v820
      %950 = vst.msk [vmem:[#allocation2 + $0x190] sm:$0xff] %vm899, %v821
      %951 = vst.msk [vmem:[#allocation2 + $0x198] sm:$0xff] %vm899, %v822
      %952 = vst.msk [vmem:[#allocation2 + $0x1a0] sm:$0xff] %vm899, %v823
      %953 = vst.msk [vmem:[#allocation2 + $0x1a8] sm:$0xff] %vm899, %v824
      %954 = vst.msk [vmem:[#allocation2 + $0x1b0] sm:$0xff] %vm899, %v825
      %955 = vst.msk [vmem:[#allocation2 + $0x1b8] sm:$0xff] %vm899, %v826
      %956 = vst.msk [vmem:[#allocation2 + $0x1c0] sm:$0xff] %vm899, %v827
      %957 = vst.msk [vmem:[#allocation2 + $0x1c8] sm:$0xff] %vm899, %v828
      %958 = vst.msk [vmem:[#allocation2 + $0x1d0] sm:$0xff] %vm899, %v829
      %959 = vst.msk [vmem:[#allocation2 + $0x1d8] sm:$0xff] %vm899, %v830
      %960 = vst.msk [vmem:[#allocation2 + $0x1e0] sm:$0xff] %vm899, %v831
      %961 = vst.msk [vmem:[#allocation2 + $0x1e8] sm:$0xff] %vm899, %v832
      %962 = vst.msk [vmem:[#allocation2 + $0x1f0] sm:$0xff] %vm899, %v833
      %963 = vst.msk [vmem:[#allocation2 + $0x1f8] sm:$0xff] %vm899, %v834
      %964 = vst.msk [vmem:[#allocation2 + $0x200] sm:$0xff] %vm899, %v835
      %965 = vst.msk [vmem:[#allocation2 + $0x208] sm:$0xff] %vm899, %v836
      %966 = vst.msk [vmem:[#allocation2 + $0x210] sm:$0xff] %vm899, %v837
      %967 = vst.msk [vmem:[#allocation2 + $0x218] sm:$0xff] %vm899, %v838
      %968 = vst.msk [vmem:[#allocation2 + $0x220] sm:$0xff] %vm899, %v839
      %969 = vst.msk [vmem:[#allocation2 + $0x228] sm:$0xff] %vm899, %v840
      %970 = vst.msk [vmem:[#allocation2 + $0x230] sm:$0xff] %vm899, %v841
      %971 = vst.msk [vmem:[#allocation2 + $0x238] sm:$0xff] %vm899, %v842
      %972 = vst.msk [vmem:[#allocation2 + $0x240] sm:$0xff] %vm899, %v843
      %973 = vst.msk [vmem:[#allocation2 + $0x248] sm:$0xff] %vm899, %v844
      %974 = vst.msk [vmem:[#allocation2 + $0x250] sm:$0xff] %vm899, %v845
      %975 = vst.msk [vmem:[#allocation2 + $0x258] sm:$0xff] %vm899, %v846
      %976 = vst.msk [vmem:[#allocation2 + $0x260] sm:$0xff] %vm899, %v847
      %977 = vst.msk [vmem:[#allocation2 + $0x268] sm:$0xff] %vm899, %v848
      %978 = vst.msk [vmem:[#allocation2 + $0x270] sm:$0xff] %vm899, %v849
      %979 = vst.msk [vmem:[#allocation2 + $0x278] sm:$0xff] %vm899, %v850
      %980 = vst.msk [vmem:[#allocation2 + $0x280] sm:$0xff] %vm899, %v851
      %981 = vst.msk [vmem:[#allocation2 + $0x288] sm:$0xff] %vm899, %v852
      %982 = vst.msk [vmem:[#allocation2 + $0x290] sm:$0xff] %vm899, %v853
      %983 = vst.msk [vmem:[#allocation2 + $0x298] sm:$0xff] %vm899, %v854
      %984 = vst.msk [vmem:[#allocation2 + $0x2a0] sm:$0xff] %vm899, %v855
      %985 = vst.msk [vmem:[#allocation2 + $0x2a8] sm:$0xff] %vm899, %v856
      %986 = vst.msk [vmem:[#allocation2 + $0x2b0] sm:$0xff] %vm899, %v857
      %987 = vst.msk [vmem:[#allocation2 + $0x2b8] sm:$0xff] %vm899, %v858
      %988 = vst.msk [vmem:[#allocation2 + $0x2c0] sm:$0xff] %vm899, %v859
      %989 = vst.msk [vmem:[#allocation2 + $0x2c8] sm:$0xff] %vm899, %v860
      %990 = vst.msk [vmem:[#allocation2 + $0x2d0] sm:$0xff] %vm899, %v861
      %991 = vst.msk [vmem:[#allocation2 + $0x2d8] sm:$0xff] %vm899, %v862
      %992 = vst.msk [vmem:[#allocation2 + $0x2e0] sm:$0xff] %vm899, %v863
      %993 = vst.msk [vmem:[#allocation2 + $0x2e8] sm:$0xff] %vm899, %v864
      %994 = vst.msk [vmem:[#allocation2 + $0x2f0] sm:$0xff] %vm899, %v865
      %995 = vst.msk [vmem:[#allocation2 + $0x2f8] sm:$0xff] %vm899, %v866
      %996 = vst.msk [vmem:[#allocation2 + $0x300] sm:$0xff] %vm899, %v867
      %997 = vst.msk [vmem:[#allocation2 + $0x308] sm:$0xff] %vm899, %v868
      %998 = vst.msk [vmem:[#allocation2 + $0x310] sm:$0xff] %vm899, %v869
      %999 = vst.msk [vmem:[#allocation2 + $0x318] sm:$0xff] %vm899, %v870
      %1000 = vst.msk [vmem:[#allocation2 + $0x320] sm:$0xff] %vm899, %v871
      %1001 = vst.msk [vmem:[#allocation2 + $0x328] sm:$0xff] %vm899, %v872
      %1002 = vst.msk [vmem:[#allocation2 + $0x330] sm:$0xff] %vm899, %v873
      %1003 = vst.msk [vmem:[#allocation2 + $0x338] sm:$0xff] %vm899, %v874
      %1004 = vst.msk [vmem:[#allocation2 + $0x340] sm:$0xff] %vm899, %v875
      %1005 = vst.msk [vmem:[#allocation2 + $0x348] sm:$0xff] %vm899, %v876
      %1006 = vst.msk [vmem:[#allocation2 + $0x350] sm:$0xff] %vm899, %v877
      %1007 = vst.msk [vmem:[#allocation2 + $0x358] sm:$0xff] %vm899, %v878
      %1008 = vst.msk [vmem:[#allocation2 + $0x360] sm:$0xff] %vm899, %v879
      %1009 = vst.msk [vmem:[#allocation2 + $0x368] sm:$0xff] %vm899, %v880
      %1010 = vst.msk [vmem:[#allocation2 + $0x370] sm:$0xff] %vm899, %v881
      %1011 = vst.msk [vmem:[#allocation2 + $0x378] sm:$0xff] %vm899, %v882
      %1012 = vst.msk [vmem:[#allocation2 + $0x380] sm:$0xff] %vm899, %v883
      %1013 = vst.msk [vmem:[#allocation2 + $0x388] sm:$0xff] %vm899, %v884
      %1014 = vst.msk [vmem:[#allocation2 + $0x390] sm:$0xff] %vm899, %v885
      %1015 = vst.msk [vmem:[#allocation2 + $0x398] sm:$0xff] %vm899, %v886
      %1016 = vst.msk [vmem:[#allocation2 + $0x3a0] sm:$0xff] %vm899, %v887
      %1017 = vst.msk [vmem:[#allocation2 + $0x3a8] sm:$0xff] %vm899, %v888
      %1018 = vst.msk [vmem:[#allocation2 + $0x3b0] sm:$0xff] %vm899, %v889
      %1019 = vst.msk [vmem:[#allocation2 + $0x3b8] sm:$0xff] %vm899, %v890
      %1020 = vst.msk [vmem:[#allocation2 + $0x3c0] sm:$0xff] %vm899, %v891
      %1021 = vst.msk [vmem:[#allocation2 + $0x3c8] sm:$0xff] %vm899, %v892
      %1022 = vst.msk [vmem:[#allocation2 + $0x3d0] sm:$0xff] %vm899, %v893
      %1023 = vst.msk [vmem:[#allocation2 + $0x3d8] sm:$0xff] %vm899, %v894
      %1024 = vst.msk [vmem:[#allocation2 + $0x3e0] sm:$0xff] %vm899, %v895
      %1025 = vst.msk [vmem:[#allocation2 + $0x3e8] sm:$0xff] %vm899, %v896
      %1026 = vst.msk [vmem:[#allocation2 + $0x3f0] sm:$0xff] %vm899, %v897
      %1027 = vst.msk [vmem:[#allocation2 + $0x3f8] sm:$0xff] %vm899, %v898
      %v1028 = vld [vmem:[%s4] sm:$0x1]
      %vm1029 = vcmask 253952
      %1030 = vst.msk [vmem:[#allocation3] sm:$0x1] %vm1029, %v1028
      %v1031 = vld [vmem:[#allocation2] sm:$0xff]
      %v1032 = vld [vmem:[#allocation2 + $0x8] sm:$0xff]
      %v1033 = vld [vmem:[#allocation2 + $0x10] sm:$0xff]
      %v1034 = vld [vmem:[#allocation2 + $0x18] sm:$0xff]
      %v1035 = vld [vmem:[#allocation2 + $0x20] sm:$0xff]
      %v1036 = vld [vmem:[#allocation2 + $0x28] sm:$0xff]
      %v1037 = vld [vmem:[#allocation2 + $0x30] sm:$0xff]
      %v1038 = vld [vmem:[#allocation2 + $0x38] sm:$0xff]
      %v1039 = vld [vmem:[#allocation2 + $0x40] sm:$0xff]
      %v1040 = vld [vmem:[#allocation2 + $0x48] sm:$0xff]
      %v1041 = vld [vmem:[#allocation2 + $0x50] sm:$0xff]
      %v1042 = vld [vmem:[#allocation2 + $0x58] sm:$0xff]
      %v1043 = vld [vmem:[#allocation2 + $0x60] sm:$0xff]
      %v1044 = vld [vmem:[#allocation2 + $0x68] sm:$0xff]
      %v1045 = vld [vmem:[#allocation2 + $0x70] sm:$0xff]
      %v1046 = vld [vmem:[#allocation2 + $0x78] sm:$0xff]
      %v1047 = vld [vmem:[#allocation2 + $0x80] sm:$0xff]
      %v1048 = vld [vmem:[#allocation2 + $0x88] sm:$0xff]
      %v1049 = vld [vmem:[#allocation2 + $0x90] sm:$0xff]
      %v1050 = vld [vmem:[#allocation2 + $0x98] sm:$0xff]
      %v1051 = vld [vmem:[#allocation2 + $0xa0] sm:$0xff]
      %v1052 = vld [vmem:[#allocation2 + $0xa8] sm:$0xff]
      %v1053 = vld [vmem:[#allocation2 + $0xb0] sm:$0xff]
      %v1054 = vld [vmem:[#allocation2 + $0xb8] sm:$0xff]
      %v1055 = vld [vmem:[#allocation2 + $0xc0] sm:$0xff]
      %v1056 = vld [vmem:[#allocation2 + $0xc8] sm:$0xff]
      %v1057 = vld [vmem:[#allocation2 + $0xd0] sm:$0xff]
      %v1058 = vld [vmem:[#allocation2 + $0xd8] sm:$0xff]
      %v1059 = vld [vmem:[#allocation2 + $0xe0] sm:$0xff]
      %v1060 = vld [vmem:[#allocation2 + $0xe8] sm:$0xff]
      %v1061 = vld [vmem:[#allocation2 + $0xf0] sm:$0xff]
      %v1062 = vld [vmem:[#allocation2 + $0xf8] sm:$0xff]
      %v1063 = vld [vmem:[#allocation2 + $0x100] sm:$0xff]
      %v1064 = vld [vmem:[#allocation2 + $0x108] sm:$0xff]
      %v1065 = vld [vmem:[#allocation2 + $0x110] sm:$0xff]
      %v1066 = vld [vmem:[#allocation2 + $0x118] sm:$0xff]
      %v1067 = vld [vmem:[#allocation2 + $0x120] sm:$0xff]
      %v1068 = vld [vmem:[#allocation2 + $0x128] sm:$0xff]
      %v1069 = vld [vmem:[#allocation2 + $0x130] sm:$0xff]
      %v1070 = vld [vmem:[#allocation2 + $0x138] sm:$0xff]
      %v1071 = vld [vmem:[#allocation2 + $0x140] sm:$0xff]
      %v1072 = vld [vmem:[#allocation2 + $0x148] sm:$0xff]
      %v1073 = vld [vmem:[#allocation2 + $0x150] sm:$0xff]
      %v1074 = vld [vmem:[#allocation2 + $0x158] sm:$0xff]
      %v1075 = vld [vmem:[#allocation2 + $0x160] sm:$0xff]
      %v1076 = vld [vmem:[#allocation2 + $0x168] sm:$0xff]
      %v1077 = vld [vmem:[#allocation2 + $0x170] sm:$0xff]
      %v1078 = vld [vmem:[#allocation2 + $0x178] sm:$0xff]
      %v1079 = vld [vmem:[#allocation2 + $0x180] sm:$0xff]
      %v1080 = vld [vmem:[#allocation2 + $0x188] sm:$0xff]
      %v1081 = vld [vmem:[#allocation2 + $0x190] sm:$0xff]
      %v1082 = vld [vmem:[#allocation2 + $0x198] sm:$0xff]
      %v1083 = vld [vmem:[#allocation2 + $0x1a0] sm:$0xff]
      %v1084 = vld [vmem:[#allocation2 + $0x1a8] sm:$0xff]
      %v1085 = vld [vmem:[#allocation2 + $0x1b0] sm:$0xff]
      %v1086 = vld [vmem:[#allocation2 + $0x1b8] sm:$0xff]
      %v1087 = vld [vmem:[#allocation2 + $0x1c0] sm:$0xff]
      %v1088 = vld [vmem:[#allocation2 + $0x1c8] sm:$0xff]
      %v1089 = vld [vmem:[#allocation2 + $0x1d0] sm:$0xff]
      %v1090 = vld [vmem:[#allocation2 + $0x1d8] sm:$0xff]
      %v1091 = vld [vmem:[#allocation2 + $0x1e0] sm:$0xff]
      %v1092 = vld [vmem:[#allocation2 + $0x1e8] sm:$0xff]
      %v1093 = vld [vmem:[#allocation2 + $0x1f0] sm:$0xff]
      %v1094 = vld [vmem:[#allocation2 + $0x1f8] sm:$0xff]
      %v1095 = vld [vmem:[#allocation2 + $0x200] sm:$0xff]
      %v1096 = vld [vmem:[#allocation2 + $0x208] sm:$0xff]
      %v1097 = vld [vmem:[#allocation2 + $0x210] sm:$0xff]
      %v1098 = vld [vmem:[#allocation2 + $0x218] sm:$0xff]
      %v1099 = vld [vmem:[#allocation2 + $0x220] sm:$0xff]
      %v1100 = vld [vmem:[#allocation2 + $0x228] sm:$0xff]
      %v1101 = vld [vmem:[#allocation2 + $0x230] sm:$0xff]
      %v1102 = vld [vmem:[#allocation2 + $0x238] sm:$0xff]
      %v1103 = vld [vmem:[#allocation2 + $0x240] sm:$0xff]
      %v1104 = vld [vmem:[#allocation2 + $0x248] sm:$0xff]
      %v1105 = vld [vmem:[#allocation2 + $0x250] sm:$0xff]
      %v1106 = vld [vmem:[#allocation2 + $0x258] sm:$0xff]
      %v1107 = vld [vmem:[#allocation2 + $0x260] sm:$0xff]
      %v1108 = vld [vmem:[#allocation2 + $0x268] sm:$0xff]
      %v1109 = vld [vmem:[#allocation2 + $0x270] sm:$0xff]
      %v1110 = vld [vmem:[#allocation2 + $0x278] sm:$0xff]
      %v1111 = vld [vmem:[#allocation2 + $0x280] sm:$0xff]
      %v1112 = vld [vmem:[#allocation2 + $0x288] sm:$0xff]
      %v1113 = vld [vmem:[#allocation2 + $0x290] sm:$0xff]
      %v1114 = vld [vmem:[#allocation2 + $0x298] sm:$0xff]
      %v1115 = vld [vmem:[#allocation2 + $0x2a0] sm:$0xff]
      %v1116 = vld [vmem:[#allocation2 + $0x2a8] sm:$0xff]
      %v1117 = vld [vmem:[#allocation2 + $0x2b0] sm:$0xff]
      %v1118 = vld [vmem:[#allocation2 + $0x2b8] sm:$0xff]
      %v1119 = vld [vmem:[#allocation2 + $0x2c0] sm:$0xff]
      %v1120 = vld [vmem:[#allocation2 + $0x2c8] sm:$0xff]
      %v1121 = vld [vmem:[#allocation2 + $0x2d0] sm:$0xff]
      %v1122 = vld [vmem:[#allocation2 + $0x2d8] sm:$0xff]
      %v1123 = vld [vmem:[#allocation2 + $0x2e0] sm:$0xff]
      %v1124 = vld [vmem:[#allocation2 + $0x2e8] sm:$0xff]
      %v1125 = vld [vmem:[#allocation2 + $0x2f0] sm:$0xff]
      %v1126 = vld [vmem:[#allocation2 + $0x2f8] sm:$0xff]
      %v1127 = vld [vmem:[#allocation2 + $0x300] sm:$0xff]
      %v1128 = vld [vmem:[#allocation2 + $0x308] sm:$0xff]
      %v1129 = vld [vmem:[#allocation2 + $0x310] sm:$0xff]
      %v1130 = vld [vmem:[#allocation2 + $0x318] sm:$0xff]
      %v1131 = vld [vmem:[#allocation2 + $0x320] sm:$0xff]
      %v1132 = vld [vmem:[#allocation2 + $0x328] sm:$0xff]
      %v1133 = vld [vmem:[#allocation2 + $0x330] sm:$0xff]
      %v1134 = vld [vmem:[#allocation2 + $0x338] sm:$0xff]
      %v1135 = vld [vmem:[#allocation2 + $0x340] sm:$0xff]
      %v1136 = vld [vmem:[#allocation2 + $0x348] sm:$0xff]
      %v1137 = vld [vmem:[#allocation2 + $0x350] sm:$0xff]
      %v1138 = vld [vmem:[#allocation2 + $0x358] sm:$0xff]
      %v1139 = vld [vmem:[#allocation2 + $0x360] sm:$0xff]
      %v1140 = vld [vmem:[#allocation2 + $0x368] sm:$0xff]
      %v1141 = vld [vmem:[#allocation2 + $0x370] sm:$0xff]
      %v1142 = vld [vmem:[#allocation2 + $0x378] sm:$0xff]
      %v1143 = vld [vmem:[#allocation2 + $0x380] sm:$0xff]
      %v1144 = vld [vmem:[#allocation2 + $0x388] sm:$0xff]
      %v1145 = vld [vmem:[#allocation2 + $0x390] sm:$0xff]
      %v1146 = vld [vmem:[#allocation2 + $0x398] sm:$0xff]
      %v1147 = vld [vmem:[#allocation2 + $0x3a0] sm:$0xff]
      %v1148 = vld [vmem:[#allocation2 + $0x3a8] sm:$0xff]
      %v1149 = vld [vmem:[#allocation2 + $0x3b0] sm:$0xff]
      %v1150 = vld [vmem:[#allocation2 + $0x3b8] sm:$0xff]
      %v1151 = vld [vmem:[#allocation2 + $0x3c0] sm:$0xff]
      %v1152 = vld [vmem:[#allocation2 + $0x3c8] sm:$0xff]
      %v1153 = vld [vmem:[#allocation2 + $0x3d0] sm:$0xff]
      %v1154 = vld [vmem:[#allocation2 + $0x3d8] sm:$0xff]
      %v1155 = vld [vmem:[#allocation2 + $0x3e0] sm:$0xff]
      %v1156 = vld [vmem:[#allocation2 + $0x3e8] sm:$0xff]
      %v1157 = vld [vmem:[#allocation2 + $0x3f0] sm:$0xff]
      %v1158 = vld [vmem:[#allocation2 + $0x3f8] sm:$0xff]
      %v1159 = vld [vmem:[#allocation3] sm:$0x1]
      %v1161 = vlaneseq
      %v1162 = vshrl.u32 %v1161, 7
      %v1163 = vsub.s32 0, %v1162
      %v1164 = vrot.slane %v1159, %v1163
      %1166 = vmatprep.subr.mxu0 0.0
      %1167 = vmatpush1.msra.mxu0 %v1031
      %1168 = vmatprep.subr.mxu0 0.0
      %1169 = vmatpush1.msra.mxu0 %v1032
      %1170 = vmatprep.subr.mxu0 0.0
      %1171 = vmatpush1.msra.mxu0 %v1033
      %1172 = vmatprep.subr.mxu0 0.0
      %1173 = vmatpush1.msra.mxu0 %v1034
      %1174 = vmatprep.subr.mxu0 0.0
      %1175 = vmatpush1.msra.mxu0 %v1035
      %1176 = vmatprep.subr.mxu0 0.0
      %1177 = vmatpush1.msra.mxu0 %v1036
      %1178 = vmatprep.subr.mxu0 0.0
      %1179 = vmatpush1.msra.mxu0 %v1037
      %1180 = vmatprep.subr.mxu0 0.0
      %1181 = vmatpush1.msra.mxu0 %v1038
      %1182 = vmatprep.subr.mxu0 0.0
      %1183 = vmatpush1.msra.mxu0 %v1039
      %1184 = vmatprep.subr.mxu0 0.0
      %1185 = vmatpush1.msra.mxu0 %v1040
      %1186 = vmatprep.subr.mxu0 0.0
      %1187 = vmatpush1.msra.mxu0 %v1041
      %1188 = vmatprep.subr.mxu0 0.0
      %1189 = vmatpush1.msra.mxu0 %v1042
      %1190 = vmatprep.subr.mxu0 0.0
      %1191 = vmatpush1.msra.mxu0 %v1043
      %1192 = vmatprep.subr.mxu0 0.0
      %1193 = vmatpush1.msra.mxu0 %v1044
      %1194 = vmatprep.subr.mxu0 0.0
      %1195 = vmatpush1.msra.mxu0 %v1045
      %1196 = vmatprep.subr.mxu0 0.0
      %1197 = vmatpush1.msra.mxu0 %v1046
      %1198 = vmatprep.subr.mxu0 0.0
      %1199 = vmatpush1.msra.mxu0 %v1047
      %1200 = vmatprep.subr.mxu0 0.0
      %1201 = vmatpush1.msra.mxu0 %v1048
      %1202 = vmatprep.subr.mxu0 0.0
      %1203 = vmatpush1.msra.mxu0 %v1049
      %1204 = vmatprep.subr.mxu0 0.0
      %1205 = vmatpush1.msra.mxu0 %v1050
      %1206 = vmatprep.subr.mxu0 0.0
      %1207 = vmatpush1.msra.mxu0 %v1051
      %1208 = vmatprep.subr.mxu0 0.0
      %1209 = vmatpush1.msra.mxu0 %v1052
      %1210 = vmatprep.subr.mxu0 0.0
      %1211 = vmatpush1.msra.mxu0 %v1053
      %1212 = vmatprep.subr.mxu0 0.0
      %1213 = vmatpush1.msra.mxu0 %v1054
      %1214 = vmatprep.subr.mxu0 0.0
      %1215 = vmatpush1.msra.mxu0 %v1055
      %1216 = vmatprep.subr.mxu0 0.0
      %1217 = vmatpush1.msra.mxu0 %v1056
      %1218 = vmatprep.subr.mxu0 0.0
      %1219 = vmatpush1.msra.mxu0 %v1057
      %1220 = vmatprep.subr.mxu0 0.0
      %1221 = vmatpush1.msra.mxu0 %v1058
      %1222 = vmatprep.subr.mxu0 0.0
      %1223 = vmatpush1.msra.mxu0 %v1059
      %1224 = vmatprep.subr.mxu0 0.0
      %1225 = vmatpush1.msra.mxu0 %v1060
      %1226 = vmatprep.subr.mxu0 0.0
      %1227 = vmatpush1.msra.mxu0 %v1061
      %1228 = vmatprep.subr.mxu0 0.0
      %1229 = vmatpush1.msra.mxu0 %v1062
      %1230 = vmatprep.mubr.f32.mxu0 %v352
      %1231 = vmatmul.mubr.f32.gmra.mrb[0].mxu0 %v351
      %v1232 = vpop.f32.mrb[0].mxu0
      %v1233 = vadd.f32 %v1164, %v1232
      %v1234 = vpop.f32.mrb[0].mxu0
      %1235 = vmatprep.mubr.f32.mxu0 %v360
      %1236 = vmatmul.mubr.f32.gmra.mrb[0].mxu0 %v359
      %v1237 = vpop.f32.mrb[0].mxu0
      %v1238 = vadd.f32 %v1164, %v1237
      %v1239 = vpop.f32.mrb[0].mxu0
      %1240 = vmatprep.mubr.f32.mxu0 %v368
      %1241 = vmatmul.mubr.f32.gmra.mrb[0].mxu0 %v367
      %v1242 = vpop.f32.mrb[0].mxu0
      %v1243 = vadd.f32 %v1164, %v1242
      %v1244 = vpop.f32.mrb[0].mxu0
      %1245 = vmatprep.mubr.f32.mxu0 %v376
      %1246 = vmatmul.mubr.f32.gmra.mrb[0].mxu0 %v375
      %v1247 = vpop.f32.mrb[0].mxu0
      %v1248 = vadd.f32 %v1164, %v1247
      %v1249 = vpop.f32.mrb[0].mxu0
      %1250 = vmatprep.mubr.f32.mxu0 %v384
      %1251 = vmatmul.mubr.f32.gmra.mrb[0].mxu0 %v383
      %v1252 = vpop.f32.mrb[0].mxu0
      %v1253 = vadd.f32 %v1164, %v1252
      %v1254 = vpop.f32.mrb[0].mxu0
      %1255 = vmatprep.mubr.f32.mxu0 %v392
      %1256 = vmatmul.mubr.f32.gmra.mrb[0].mxu0 %v391
      %v1257 = vpop.f32.mrb[0].mxu0
      %v1258 = vadd.f32 %v1164, %v1257
      %v1259 = vpop.f32.mrb[0].mxu0
      %1260 = vmatprep.mubr.f32.mxu0 %v400
      %1261 = vmatmul.mubr.f32.gmra.mrb[0].mxu0 %v399
      %v1262 = vpop.f32.mrb[0].mxu0
      %v1263 = vadd.f32 %v1164, %v1262
      %v1264 = vpop.f32.mrb[0].mxu0
      %1265 = vmatprep.mubr.f32.mxu0 %v408
      %1266 = vmatmul.mubr.f32.gmra.mrb[0].mxu0 %v407
      %v1267 = vpop.f32.mrb[0].mxu0
      %v1268 = vadd.f32 %v1164, %v1267
      %v1269 = vpop.f32.mrb[0].mxu0
      %1270 = vdwg.mxu0
      %1271 = vmatprep.subr.mxu0 0.0
      %1272 = vmatpush1.msra.mxu0 %v1063
      %1273 = vmatprep.subr.mxu0 0.0
      %1274 = vmatpush1.msra.mxu0 %v1064
      %1275 = vmatprep.subr.mxu0 0.0
      %1276 = vmatpush1.msra.mxu0 %v1065
      %1277 = vmatprep.subr.mxu0 0.0
      %1278 = vmatpush1.msra.mxu0 %v1066
      %1279 = vmatprep.subr.mxu0 0.0
      %1280 = vmatpush1.msra.mxu0 %v1067
      %1281 = vmatprep.subr.mxu0 0.0
      %1282 = vmatpush1.msra.mxu0 %v1068
      %1283 = vmatprep.subr.mxu0 0.0
      %1284 = vmatpush1.msra.mxu0 %v1069
      %1285 = vmatprep.subr.mxu0 0.0
      %1286 = vmatpush1.msra.mxu0 %v1070
      %1287 = vmatprep.subr.mxu0 0.0
      %1288 = vmatpush1.msra.mxu0 %v1071
      %1289 = vmatprep.subr.mxu0 0.0
      %1290 = vmatpush1.msra.mxu0 %v1072
      %1291 = vmatprep.subr.mxu0 0.0
      %1292 = vmatpush1.msra.mxu0 %v1073
      %1293 = vmatprep.subr.mxu0 0.0
      %1294 = vmatpush1.msra.mxu0 %v1074
      %1295 = vmatprep.subr.mxu0 0.0
      %1296 = vmatpush1.msra.mxu0 %v1075
      %1297 = vmatprep.subr.mxu0 0.0
      %1298 = vmatpush1.msra.mxu0 %v1076
      %1299 = vmatprep.subr.mxu0 0.0
      %1300 = vmatpush1.msra.mxu0 %v1077
      %1301 = vmatprep.subr.mxu0 0.0
      %1302 = vmatpush1.msra.mxu0 %v1078
      %1303 = vmatprep.subr.mxu0 0.0
      %1304 = vmatpush1.msra.mxu0 %v1079
      %1305 = vmatprep.subr.mxu0 0.0
      %1306 = vmatpush1.msra.mxu0 %v1080
      %1307 = vmatprep.subr.mxu0 0.0
      %1308 = vmatpush1.msra.mxu0 %v1081
      %1309 = vmatprep.subr.mxu0 0.0
      %1310 = vmatpush1.msra.mxu0 %v1082
      %1311 = vmatprep.subr.mxu0 0.0
      %1312 = vmatpush1.msra.mxu0 %v1083
      %1313 = vmatprep.subr.mxu0 0.0
      %1314 = vmatpush1.msra.mxu0 %v1084
      %1315 = vmatprep.subr.mxu0 0.0
      %1316 = vmatpush1.msra.mxu0 %v1085
      %1317 = vmatprep.subr.mxu0 0.0
      %1318 = vmatpush1.msra.mxu0 %v1086
      %1319 = vmatprep.subr.mxu0 0.0
      %1320 = vmatpush1.msra.mxu0 %v1087
      %1321 = vmatprep.subr.mxu0 0.0
      %1322 = vmatpush1.msra.mxu0 %v1088
      %1323 = vmatprep.subr.mxu0 0.0
      %1324 = vmatpush1.msra.mxu0 %v1089
      %1325 = vmatprep.subr.mxu0 0.0
      %1326 = vmatpush1.msra.mxu0 %v1090
      %1327 = vmatprep.subr.mxu0 0.0
      %1328 = vmatpush1.msra.mxu0 %v1091
      %1329 = vmatprep.subr.mxu0 0.0
      %1330 = vmatpush1.msra.mxu0 %v1092
      %1331 = vmatprep.subr.mxu0 0.0
      %1332 = vmatpush1.msra.mxu0 %v1093
      %1333 = vmatprep.subr.mxu0 0.0
      %1334 = vmatpush1.msra.mxu0 %v1094
      %1335 = vmatprep.mubr.f32.mxu0 %v354
      %1336 = vmatmul.mubr.f32.gmra.mrb[0].mxu0 %v353
      %v1337 = vpop.f32.mrb[0].mxu0
      %v1338 = vadd.f32 %v1233, %v1337
      %v1339 = vpop.f32.mrb[0].mxu0
      %1340 = vmatprep.mubr.f32.mxu0 %v362
      %1341 = vmatmul.mubr.f32.gmra.mrb[0].mxu0 %v361
      %v1342 = vpop.f32.mrb[0].mxu0
      %v1343 = vadd.f32 %v1238, %v1342
      %v1344 = vpop.f32.mrb[0].mxu0
      %1345 = vmatprep.mubr.f32.mxu0 %v370
      %1346 = vmatmul.mubr.f32.gmra.mrb[0].mxu0 %v369
      %v1347 = vpop.f32.mrb[0].mxu0
      %v1348 = vadd.f32 %v1243, %v1347
      %v1349 = vpop.f32.mrb[0].mxu0
      %1350 = vmatprep.mubr.f32.mxu0 %v378
      %1351 = vmatmul.mubr.f32.gmra.mrb[0].mxu0 %v377
      %v1352 = vpop.f32.mrb[0].mxu0
      %v1353 = vadd.f32 %v1248, %v1352
      %v1354 = vpop.f32.mrb[0].mxu0
      %1355 = vmatprep.mubr.f32.mxu0 %v386
      %1356 = vmatmul.mubr.f32.gmra.mrb[0].mxu0 %v385
      %v1357 = vpop.f32.mrb[0].mxu0
      %v1358 = vadd.f32 %v1253, %v1357
      %v1359 = vpop.f32.mrb[0].mxu0
      %1360 = vmatprep.mubr.f32.mxu0 %v394
      %1361 = vmatmul.mubr.f32.gmra.mrb[0].mxu0 %v393
      %v1362 = vpop.f32.mrb[0].mxu0
      %v1363 = vadd.f32 %v1258, %v1362
      %v1364 = vpop.f32.mrb[0].mxu0
      %1365 = vmatprep.mubr.f32.mxu0 %v402
      %1366 = vmatmul.mubr.f32.gmra.mrb[0].mxu0 %v401
      %v1367 = vpop.f32.mrb[0].mxu0
      %v1368 = vadd.f32 %v1263, %v1367
      %v1369 = vpop.f32.mrb[0].mxu0
      %1370 = vmatprep.mubr.f32.mxu0 %v410
      %1371 = vmatmul.mubr.f32.gmra.mrb[0].mxu0 %v409
      %v1372 = vpop.f32.mrb[0].mxu0
      %v1373 = vadd.f32 %v1268, %v1372
      %v1374 = vpop.f32.mrb[0].mxu0
      %1375 = vdwg.mxu0
      %1376 = vmatprep.subr.mxu0 0.0
      %1377 = vmatpush1.msra.mxu0 %v1095
      %1378 = vmatprep.subr.mxu0 0.0
      %1379 = vmatpush1.msra.mxu0 %v1096
      %1380 = vmatprep.subr.mxu0 0.0
      %1381 = vmatpush1.msra.mxu0 %v1097
      %1382 = vmatprep.subr.mxu0 0.0
      %1383 = vmatpush1.msra.mxu0 %v1098
      %1384 = vmatprep.subr.mxu0 0.0
      %1385 = vmatpush1.msra.mxu0 %v1099
      %1386 = vmatprep.subr.mxu0 0.0
      %1387 = vmatpush1.msra.mxu0 %v1100
      %1388 = vmatprep.subr.mxu0 0.0
      %1389 = vmatpush1.msra.mxu0 %v1101
      %1390 = vmatprep.subr.mxu0 0.0
      %1391 = vmatpush1.msra.mxu0 %v1102
      %1392 = vmatprep.subr.mxu0 0.0
      %1393 = vmatpush1.msra.mxu0 %v1103
      %1394 = vmatprep.subr.mxu0 0.0
      %1395 = vmatpush1.msra.mxu0 %v1104
      %1396 = vmatprep.subr.mxu0 0.0
      %1397 = vmatpush1.msra.mxu0 %v1105
      %1398 = vmatprep.subr.mxu0 0.0
      %1399 = vmatpush1.msra.mxu0 %v1106
      %1400 = vmatprep.subr.mxu0 0.0
      %1401 = vmatpush1.msra.mxu0 %v1107
      %1402 = vmatprep.subr.mxu0 0.0
      %1403 = vmatpush1.msra.mxu0 %v1108
      %1404 = vmatprep.subr.mxu0 0.0
      %1405 = vmatpush1.msra.mxu0 %v1109
      %1406 = vmatprep.subr.mxu0 0.0
      %1407 = vmatpush1.msra.mxu0 %v1110
      %1408 = vmatprep.subr.mxu0 0.0
      %1409 = vmatpush1.msra.mxu0 %v1111
      %1410 = vmatprep.subr.mxu0 0.0
      %1411 = vmatpush1.msra.mxu0 %v1112
      %1412 = vmatprep.subr.mxu0 0.0
      %1413 = vmatpush1.msra.mxu0 %v1113
      %1414 = vmatprep.subr.mxu0 0.0
      %1415 = vmatpush1.msra.mxu0 %v1114
      %1416 = vmatprep.subr.mxu0 0.0
      %1417 = vmatpush1.msra.mxu0 %v1115
      %1418 = vmatprep.subr.mxu0 0.0
      %1419 = vmatpush1.msra.mxu0 %v1116
      %1420 = vmatprep.subr.mxu0 0.0
      %1421 = vmatpush1.msra.mxu0 %v1117
      %1422 = vmatprep.subr.mxu0 0.0
      %1423 = vmatpush1.msra.mxu0 %v1118
      %1424 = vmatprep.subr.mxu0 0.0
      %1425 = vmatpush1.msra.mxu0 %v1119
      %1426 = vmatprep.subr.mxu0 0.0
      %1427 = vmatpush1.msra.mxu0 %v1120
      %1428 = vmatprep.subr.mxu0 0.0
      %1429 = vmatpush1.msra.mxu0 %v1121
      %1430 = vmatprep.subr.mxu0 0.0
      %1431 = vmatpush1.msra.mxu0 %v1122
      %1432 = vmatprep.subr.mxu0 0.0
      %1433 = vmatpush1.msra.mxu0 %v1123
      %1434 = vmatprep.subr.mxu0 0.0
      %1435 = vmatpush1.msra.mxu0 %v1124
      %1436 = vmatprep.subr.mxu0 0.0
      %1437 = vmatpush1.msra.mxu0 %v1125
      %1438 = vmatprep.subr.mxu0 0.0
      %1439 = vmatpush1.msra.mxu0 %v1126
      %1440 = vmatprep.mubr.f32.mxu0 %v356
      %1441 = vmatmul.mubr.f32.gmra.mrb[0].mxu0 %v355
      %v1442 = vpop.f32.mrb[0].mxu0
      %v1443 = vadd.f32 %v1338, %v1442
      %v1444 = vpop.f32.mrb[0].mxu0
      %1445 = vmatprep.mubr.f32.mxu0 %v364
      %1446 = vmatmul.mubr.f32.gmra.mrb[0].mxu0 %v363
      %v1447 = vpop.f32.mrb[0].mxu0
      %v1448 = vadd.f32 %v1343, %v1447
      %v1449 = vpop.f32.mrb[0].mxu0
      %1450 = vmatprep.mubr.f32.mxu0 %v372
      %1451 = vmatmul.mubr.f32.gmra.mrb[0].mxu0 %v371
      %v1452 = vpop.f32.mrb[0].mxu0
      %v1453 = vadd.f32 %v1348, %v1452
      %v1454 = vpop.f32.mrb[0].mxu0
      %1455 = vmatprep.mubr.f32.mxu0 %v380
      %1456 = vmatmul.mubr.f32.gmra.mrb[0].mxu0 %v379
      %v1457 = vpop.f32.mrb[0].mxu0
      %v1458 = vadd.f32 %v1353, %v1457
      %v1459 = vpop.f32.mrb[0].mxu0
      %1460 = vmatprep.mubr.f32.mxu0 %v388
      %1461 = vmatmul.mubr.f32.gmra.mrb[0].mxu0 %v387
      %v1462 = vpop.f32.mrb[0].mxu0
      %v1463 = vadd.f32 %v1358, %v1462
      %v1464 = vpop.f32.mrb[0].mxu0
      %1465 = vmatprep.mubr.f32.mxu0 %v396
      %1466 = vmatmul.mubr.f32.gmra.mrb[0].mxu0 %v395
      %v1467 = vpop.f32.mrb[0].mxu0
      %v1468 = vadd.f32 %v1363, %v1467
      %v1469 = vpop.f32.mrb[0].mxu0
      %1470 = vmatprep.mubr.f32.mxu0 %v404
      %1471 = vmatmul.mubr.f32.gmra.mrb[0].mxu0 %v403
      %v1472 = vpop.f32.mrb[0].mxu0
      %v1473 = vadd.f32 %v1368, %v1472
      %v1474 = vpop.f32.mrb[0].mxu0
      %1475 = vmatprep.mubr.f32.mxu0 %v412
      %1476 = vmatmul.mubr.f32.gmra.mrb[0].mxu0 %v411
      %v1477 = vpop.f32.mrb[0].mxu0
      %v1478 = vadd.f32 %v1373, %v1477
      %v1479 = vpop.f32.mrb[0].mxu0
      %1480 = vdwg.mxu0
      %1481 = vmatprep.subr.mxu0 0.0
      %1482 = vmatpush1.msra.mxu0 %v1127
      %1483 = vmatprep.subr.mxu0 0.0
      %1484 = vmatpush1.msra.mxu0 %v1128
      %1485 = vmatprep.subr.mxu0 0.0
      %1486 = vmatpush1.msra.mxu0 %v1129
      %1487 = vmatprep.subr.mxu0 0.0
      %1488 = vmatpush1.msra.mxu0 %v1130
      %1489 = vmatprep.subr.mxu0 0.0
      %1490 = vmatpush1.msra.mxu0 %v1131
      %1491 = vmatprep.subr.mxu0 0.0
      %1492 = vmatpush1.msra.mxu0 %v1132
      %1493 = vmatprep.subr.mxu0 0.0
      %1494 = vmatpush1.msra.mxu0 %v1133
      %1495 = vmatprep.subr.mxu0 0.0
      %1496 = vmatpush1.msra.mxu0 %v1134
      %1497 = vmatprep.subr.mxu0 0.0
      %1498 = vmatpush1.msra.mxu0 %v1135
      %1499 = vmatprep.subr.mxu0 0.0
      %1500 = vmatpush1.msra.mxu0 %v1136
      %1501 = vmatprep.subr.mxu0 0.0
      %1502 = vmatpush1.msra.mxu0 %v1137
      %1503 = vmatprep.subr.mxu0 0.0
      %1504 = vmatpush1.msra.mxu0 %v1138
      %1505 = vmatprep.subr.mxu0 0.0
      %1506 = vmatpush1.msra.mxu0 %v1139
      %1507 = vmatprep.subr.mxu0 0.0
      %1508 = vmatpush1.msra.mxu0 %v1140
      %1509 = vmatprep.subr.mxu0 0.0
      %1510 = vmatpush1.msra.mxu0 %v1141
      %1511 = vmatprep.subr.mxu0 0.0
      %1512 = vmatpush1.msra.mxu0 %v1142
      %1513 = vmatprep.subr.mxu0 0.0
      %1514 = vmatpush1.msra.mxu0 %v1143
      %1515 = vmatprep.subr.mxu0 0.0
      %1516 = vmatpush1.msra.mxu0 %v1144
      %1517 = vmatprep.subr.mxu0 0.0
      %1518 = vmatpush1.msra.mxu0 %v1145
      %1519 = vmatprep.subr.mxu0 0.0
      %1520 = vmatpush1.msra.mxu0 %v1146
      %1521 = vmatprep.subr.mxu0 0.0
      %1522 = vmatpush1.msra.mxu0 %v1147
      %1523 = vmatprep.subr.mxu0 0.0
      %1524 = vmatpush1.msra.mxu0 %v1148
      %1525 = vmatprep.subr.mxu0 0.0
      %1526 = vmatpush1.msra.mxu0 %v1149
      %1527 = vmatprep.subr.mxu0 0.0
      %1528 = vmatpush1.msra.mxu0 %v1150
      %1529 = vmatprep.subr.mxu0 0.0
      %1530 = vmatpush1.msra.mxu0 %v1151
      %1531 = vmatprep.subr.mxu0 0.0
      %1532 = vmatpush1.msra.mxu0 %v1152
      %1533 = vmatprep.subr.mxu0 0.0
      %1534 = vmatpush1.msra.mxu0 %v1153
      %1535 = vmatprep.subr.mxu0 0.0
      %1536 = vmatpush1.msra.mxu0 %v1154
      %1537 = vmatprep.subr.mxu0 0.0
      %1538 = vmatpush1.msra.mxu0 %v1155
      %1539 = vmatprep.subr.mxu0 0.0
      %1540 = vmatpush1.msra.mxu0 %v1156
      %1541 = vmatprep.subr.mxu0 0.0
      %1542 = vmatpush1.msra.mxu0 %v1157
      %1543 = vmatprep.subr.mxu0 0.0
      %1544 = vmatpush1.msra.mxu0 %v1158
      %1545 = vmatprep.mubr.f32.mxu0 %v358
      %1546 = vmatmul.mubr.f32.gmra.mrb[0].mxu0 %v357
      %v1547 = vpop.f32.mrb[0].mxu0
      %v1548 = vadd.f32 %v1443, %v1547
      %v1549 = vpop.f32.mrb[0].mxu0
      %1550 = vmatprep.mubr.f32.mxu0 %v366
      %1551 = vmatmul.mubr.f32.gmra.mrb[0].mxu0 %v365
      %v1552 = vpop.f32.mrb[0].mxu0
      %v1553 = vadd.f32 %v1448, %v1552
      %v1554 = vpop.f32.mrb[0].mxu0
      %1555 = vmatprep.mubr.f32.mxu0 %v374
      %1556 = vmatmul.mubr.f32.gmra.mrb[0].mxu0 %v373
      %v1557 = vpop.f32.mrb[0].mxu0
      %v1558 = vadd.f32 %v1453, %v1557
      %v1559 = vpop.f32.mrb[0].mxu0
      %1560 = vmatprep.mubr.f32.mxu0 %v382
      %1561 = vmatmul.mubr.f32.gmra.mrb[0].mxu0 %v381
      %v1562 = vpop.f32.mrb[0].mxu0
      %v1563 = vadd.f32 %v1458, %v1562
      %v1564 = vpop.f32.mrb[0].mxu0
      %1565 = vmatprep.mubr.f32.mxu0 %v390
      %1566 = vmatmul.mubr.f32.gmra.mrb[0].mxu0 %v389
      %v1567 = vpop.f32.mrb[0].mxu0
      %v1568 = vadd.f32 %v1463, %v1567
      %v1569 = vpop.f32.mrb[0].mxu0
      %1570 = vmatprep.mubr.f32.mxu0 %v398
      %1571 = vmatmul.mubr.f32.gmra.mrb[0].mxu0 %v397
      %v1572 = vpop.f32.mrb[0].mxu0
      %v1573 = vadd.f32 %v1468, %v1572
      %v1574 = vpop.f32.mrb[0].mxu0
      %1575 = vmatprep.mubr.f32.mxu0 %v406
      %1576 = vmatmul.mubr.f32.gmra.mrb[0].mxu0 %v405
      %v1577 = vpop.f32.mrb[0].mxu0
      %v1578 = vadd.f32 %v1473, %v1577
      %v1579 = vpop.f32.mrb[0].mxu0
      %1580 = vmatprep.mubr.f32.mxu0 %v414
      %1581 = vmatmul.mubr.f32.gmra.mrb[0].mxu0 %v413
      %v1582 = vpop.f32.mrb[0].mxu0
      %v1583 = vadd.f32 %v1478, %v1582
      %v1584 = vpop.f32.mrb[0].mxu0
      %1585 = vdwg.mxu0
      %v1586 = vadd.f32 %v1548, %v567
      %v1587 = vadd.f32 %v1553, %v568
      %v1588 = vadd.f32 %v1558, %v569
      %v1589 = vadd.f32 %v1563, %v570
      %v1590 = vadd.f32 %v1568, %v571
      %v1591 = vadd.f32 %v1573, %v572
      %v1592 = vadd.f32 %v1578, %v573
      %v1593 = vadd.f32 %v1583, %v574
      %v1595 = vsel %vm899, %v1586, 0
      %v1598 = vsel %vm899, %v1587, 0
      %v1601 = vsel %vm899, %v1588, 0
      %v1604 = vsel %vm899, %v1589, 0
      %v1607 = vsel %vm899, %v1590, 0
      %v1610 = vsel %vm899, %v1591, 0
      %v1613 = vsel %vm899, %v1592, 0
      %v1616 = vsel %vm899, %v1593, 0
      %v1619 = vsel %vm899, %v551, 0
      %v1622 = vsel %vm899, %v552, 0
      %v1625 = vsel %vm899, %v553, 0
      %v1628 = vsel %vm899, %v554, 0
      %v1631 = vsel %vm899, %v555, 0
      %v1634 = vsel %vm899, %v556, 0
      %v1637 = vsel %vm899, %v557, 0
      %v1640 = vsel %vm899, %v558, 0
      %v1643 = vsel %vm899, %v559, 0
      %v1646 = vsel %vm899, %v560, 0
      %v1649 = vsel %vm899, %v561, 0
      %v1652 = vsel %vm899, %v562, 0
      %v1655 = vsel %vm899, %v563, 0
      %v1658 = vsel %vm899, %v564, 0
      %v1661 = vsel %vm899, %v565, 0
      %v1664 = vsel %vm899, %v566, 0
      %1666 = vmatprep.subr.mxu0 0.0
      %1667 = vmatpush1.xpose.msra.mxu0 %v1619
      %1668 = vmatprep.subr.mxu0 0.0
      %1669 = vmatpush1.xpose.msra.mxu0 %v1622
      %1670 = vmatprep.subr.mxu0 0.0
      %1671 = vmatpush1.xpose.msra.mxu0 %v1625
      %1672 = vmatprep.subr.mxu0 0.0
      %1673 = vmatpush1.xpose.msra.mxu0 %v1628
      %1674 = vmatprep.subr.mxu0 0.0
      %1675 = vmatpush1.xpose.msra.mxu0 %v1631
      %1676 = vmatprep.subr.mxu0 0.0
      %1677 = vmatpush1.xpose.msra.mxu0 %v1634
      %1678 = vmatprep.subr.mxu0 0.0
      %1679 = vmatpush1.xpose.msra.mxu0 %v1637
      %1680 = vmatprep.subr.mxu0 0.0
      %1681 = vmatpush1.xpose.msra.mxu0 %v1640
      %1682 = vmatprep.subr.mxu0 0.0
      %1683 = vmatpush1.xpose.msra.mxu0 %v1643
      %1684 = vmatprep.subr.mxu0 0.0
      %1685 = vmatpush1.xpose.msra.mxu0 %v1646
      %1686 = vmatprep.subr.mxu0 0.0
      %1687 = vmatpush1.xpose.msra.mxu0 %v1649
      %1688 = vmatprep.subr.mxu0 0.0
      %1689 = vmatpush1.xpose.msra.mxu0 %v1652
      %1690 = vmatprep.subr.mxu0 0.0
      %1691 = vmatpush1.xpose.msra.mxu0 %v1655
      %1692 = vmatprep.subr.mxu0 0.0
      %1693 = vmatpush1.xpose.msra.mxu0 %v1658
      %1694 = vmatprep.subr.mxu0 0.0
      %1695 = vmatpush1.xpose.msra.mxu0 %v1661
      %1696 = vmatprep.subr.mxu0 0.0
      %1697 = vmatpush1.xpose.msra.mxu0 %v1664
      %1698 = vmatprep.subr.mxu0 0.0
      %1699 = vmatpush1.xpose.msra.mxu0 0.0
      %1700 = vmatprep.subr.mxu0 0.0
      %1701 = vmatpush1.xpose.msra.mxu0 0.0
      %1702 = vmatprep.subr.mxu0 0.0
      %1703 = vmatpush1.xpose.msra.mxu0 0.0
      %1704 = vmatprep.subr.mxu0 0.0
      %1705 = vmatpush1.xpose.msra.mxu0 0.0
      %1706 = vmatprep.subr.mxu0 0.0
      %1707 = vmatpush1.xpose.msra.mxu0 0.0
      %1708 = vmatprep.subr.mxu0 0.0
      %1709 = vmatpush1.xpose.msra.mxu0 0.0
      %1710 = vmatprep.subr.mxu0 0.0
      %1711 = vmatpush1.xpose.msra.mxu0 0.0
      %1712 = vmatprep.subr.mxu0 0.0
      %1713 = vmatpush1.xpose.msra.mxu0 0.0
      %1714 = vmatprep.subr.mxu0 0.0
      %1715 = vmatpush1.xpose.msra.mxu0 0.0
      %1716 = vmatprep.subr.mxu0 0.0
      %1717 = vmatpush1.xpose.msra.mxu0 0.0
      %1718 = vmatprep.subr.mxu0 0.0
      %1719 = vmatpush1.xpose.msra.mxu0 0.0
      %1720 = vmatprep.subr.mxu0 0.0
      %1721 = vmatpush1.xpose.msra.mxu0 0.0
      %1722 = vmatprep.subr.mxu0 0.0
      %1723 = vmatpush1.xpose.msra.mxu0 0.0
      %1724 = vmatprep.subr.mxu0 0.0
      %1725 = vmatpush1.xpose.msra.mxu0 0.0
      %1726 = vmatprep.subr.mxu0 0.0
      %1727 = vmatpush1.xpose.msra.mxu0 0.0
      %1728 = vmatprep.subr.mxu0 0.0
      %1729 = vmatpush1.xpose.msra.mxu0 0.0
      %1730 = vmatprep.mubr.f32.mxu0 0.0
      %1731 = vmatmul.mubr.f32.gmra.mrb[0].mxu0 %v1595
      %v1732 = vpop.f32.mrb[0].mxu0
      %v1733 = vadd.f32 0.0, %v1732
      %v1734 = vpop.f32.mrb[0].mxu0
      %1735 = vmatprep.mubr.f32.mxu0 0.0
      %1736 = vmatmul.mubr.f32.gmra.mrb[0].mxu0 %v1598
      %v1737 = vpop.f32.mrb[0].mxu0
      %v1738 = vadd.f32 0.0, %v1737
      %v1739 = vpop.f32.mrb[0].mxu0
      %1740 = vmatprep.mubr.f32.mxu0 0.0
      %1741 = vmatmul.mubr.f32.gmra.mrb[0].mxu0 %v1601
      %v1742 = vpop.f32.mrb[0].mxu0
      %v1743 = vadd.f32 0.0, %v1742
      %v1744 = vpop.f32.mrb[0].mxu0
      %1745 = vmatprep.mubr.f32.mxu0 0.0
      %1746 = vmatmul.mubr.f32.gmra.mrb[0].mxu0 %v1604
      %v1747 = vpop.f32.mrb[0].mxu0
      %v1748 = vadd.f32 0.0, %v1747
      %v1749 = vpop.f32.mrb[0].mxu0
      %1750 = vmatprep.mubr.f32.mxu0 0.0
      %1751 = vmatmul.mubr.f32.gmra.mrb[0].mxu0 %v1607
      %v1752 = vpop.f32.mrb[0].mxu0
      %v1753 = vadd.f32 0.0, %v1752
      %v1754 = vpop.f32.mrb[0].mxu0
      %1755 = vmatprep.mubr.f32.mxu0 0.0
      %1756 = vmatmul.mubr.f32.gmra.mrb[0].mxu0 %v1610
      %v1757 = vpop.f32.mrb[0].mxu0
      %v1758 = vadd.f32 0.0, %v1757
      %v1759 = vpop.f32.mrb[0].mxu0
      %1760 = vmatprep.mubr.f32.mxu0 0.0
      %1761 = vmatmul.mubr.f32.gmra.mrb[0].mxu0 %v1613
      %v1762 = vpop.f32.mrb[0].mxu0
      %v1763 = vadd.f32 0.0, %v1762
      %v1764 = vpop.f32.mrb[0].mxu0
      %1765 = vmatprep.mubr.f32.mxu0 0.0
      %1766 = vmatmul.mubr.f32.gmra.mrb[0].mxu0 %v1616
      %v1767 = vpop.f32.mrb[0].mxu0
      %v1768 = vadd.f32 0.0, %v1767
      %v1769 = vpop.f32.mrb[0].mxu0
      %1770 = vdwg.mxu0
      %1771 = vmax.xlane.f32.xlu0 %v1733
      %v1772 = vpop.xlane.xlu0 %1771
      %1773 = vmax.xlane.f32.xlu0 %v1738
      %v1774 = vpop.xlane.xlu0 %1773
      %1775 = vmax.xlane.f32.xlu0 %v1743
      %v1776 = vpop.xlane.xlu0 %1775
      %1777 = vmax.xlane.f32.xlu0 %v1748
      %v1778 = vpop.xlane.xlu0 %1777
      %1779 = vmax.xlane.f32.xlu0 %v1753
      %v1780 = vpop.xlane.xlu0 %1779
      %1781 = vmax.xlane.f32.xlu0 %v1758
      %v1782 = vpop.xlane.xlu0 %1781
      %1783 = vmax.xlane.f32.xlu0 %v1763
      %v1784 = vpop.xlane.xlu0 %1783
      %1785 = vmax.xlane.f32.xlu0 %v1768
      %v1786 = vpop.xlane.xlu0 %1785
      %v1787 = vsub.f32 %v1733, %v1772
      %v1788 = vsub.f32 %v1738, %v1774
      %v1789 = vsub.f32 %v1743, %v1776
      %v1790 = vsub.f32 %v1748, %v1778
      %v1791 = vsub.f32 %v1753, %v1780
      %v1792 = vsub.f32 %v1758, %v1782
      %v1793 = vsub.f32 %v1763, %v1784
      %v1794 = vsub.f32 %v1768, %v1786
      %v1795 = vmul.f32 %v1787, 1.442695
      %v1796 = vpow.pop %v1795
      %v1797 = vmul.f32 %v1788, 1.442695
      %v1798 = vpow.pop %v1797
      %v1799 = vmul.f32 %v1789, 1.442695
      %v1800 = vpow.pop %v1799
      %v1801 = vmul.f32 %v1790, 1.442695
      %v1802 = vpow.pop %v1801
      %v1803 = vmul.f32 %v1791, 1.442695
      %v1804 = vpow.pop %v1803
      %v1805 = vmul.f32 %v1792, 1.442695
      %v1806 = vpow.pop %v1805
      %v1807 = vmul.f32 %v1793, 1.442695
      %v1808 = vpow.pop %v1807
      %v1809 = vmul.f32 %v1794, 1.442695
      %v1810 = vpow.pop %v1809
      %1811 = vadd.xlane.f32.xlu0 %v1796
      %v1812 = vpop.xlane.xlu0 %1811
      %1813 = vadd.xlane.f32.xlu0 %v1798
      %v1814 = vpop.xlane.xlu0 %1813
      %1815 = vadd.xlane.f32.xlu0 %v1800
      %v1816 = vpop.xlane.xlu0 %1815
      %1817 = vadd.xlane.f32.xlu0 %v1802
      %v1818 = vpop.xlane.xlu0 %1817
      %1819 = vadd.xlane.f32.xlu0 %v1804
      %v1820 = vpop.xlane.xlu0 %1819
      %1821 = vadd.xlane.f32.xlu0 %v1806
      %v1822 = vpop.xlane.xlu0 %1821
      %1823 = vadd.xlane.f32.xlu0 %v1808
      %v1824 = vpop.xlane.xlu0 %1823
      %1825 = vadd.xlane.f32.xlu0 %v1810
      %v1826 = vpop.xlane.xlu0 %1825
      %v1827 = vmul.f32 %v617, %v1733
      %v1828 = vmul.f32 %v618, %v1738
      %v1829 = vmul.f32 %v619, %v1743
      %v1830 = vmul.f32 %v620, %v1748
      %v1831 = vmul.f32 %v621, %v1753
      %v1832 = vmul.f32 %v622, %v1758
      %v1833 = vmul.f32 %v623, %v1763
      %v1834 = vmul.f32 %v624, %v1768
      %1835 = vadd.xlane.f32.xlu0 %v1827
      %v1836 = vpop.xlane.xlu0 %1835
      %1837 = vadd.xlane.f32.xlu0 %v1828
      %v1838 = vpop.xlane.xlu0 %1837
      %1839 = vadd.xlane.f32.xlu0 %v1829
      %v1840 = vpop.xlane.xlu0 %1839
      %1841 = vadd.xlane.f32.xlu0 %v1830
      %v1842 = vpop.xlane.xlu0 %1841
      %1843 = vadd.xlane.f32.xlu0 %v1831
      %v1844 = vpop.xlane.xlu0 %1843
      %1845 = vadd.xlane.f32.xlu0 %v1832
      %v1846 = vpop.xlane.xlu0 %1845
      %1847 = vadd.xlane.f32.xlu0 %v1833
      %v1848 = vpop.xlane.xlu0 %1847
      %1849 = vadd.xlane.f32.xlu0 %v1834
      %v1850 = vpop.xlane.xlu0 %1849
      %v1851 = vlog2.pop %v1812
      %v1852 = vmul.f32 %v1851, 0.6931472
      %v1853 = vlog2.pop %v1814
      %v1854 = vmul.f32 %v1853, 0.6931472
      %v1855 = vlog2.pop %v1816
      %v1856 = vmul.f32 %v1855, 0.6931472
      %v1857 = vlog2.pop %v1818
      %v1858 = vmul.f32 %v1857, 0.6931472
      %v1859 = vlog2.pop %v1820
      %v1860 = vmul.f32 %v1859, 0.6931472
      %v1861 = vlog2.pop %v1822
      %v1862 = vmul.f32 %v1861, 0.6931472
      %v1863 = vlog2.pop %v1824
      %v1864 = vmul.f32 %v1863, 0.6931472
      %v1865 = vlog2.pop %v1826
      %v1866 = vmul.f32 %v1865, 0.6931472
      %v1867 = vadd.f32 %v1772, %v1852
      %v1868 = vadd.f32 %v1774, %v1854
      %v1869 = vadd.f32 %v1776, %v1856
      %v1870 = vadd.f32 %v1778, %v1858
      %v1871 = vadd.f32 %v1780, %v1860
      %v1872 = vadd.f32 %v1782, %v1862
      %v1873 = vadd.f32 %v1784, %v1864
      %v1874 = vadd.f32 %v1786, %v1866
      %v1875 = vsub.f32 %v1867, %v1836
      %v1876 = vsub.f32 %v1868, %v1838
      %v1877 = vsub.f32 %v1869, %v1840
      %v1878 = vsub.f32 %v1870, %v1842
      %v1879 = vsub.f32 %v1871, %v1844
      %v1880 = vsub.f32 %v1872, %v1846
      %v1881 = vsub.f32 %v1873, %v1848
      %v1882 = vsub.f32 %v1874, %v1850
      %v1883 = vmul.f32 %v1875, %v682
      %v1884 = vmul.f32 %v1876, %v683
      %v1885 = vmul.f32 %v1877, %v684
      %v1886 = vmul.f32 %v1878, %v685
      %v1887 = vmul.f32 %v1879, %v686
      %v1888 = vmul.f32 %v1880, %v687
      %v1889 = vmul.f32 %v1881, %v688
      %v1890 = vmul.f32 %v1882, %v689
      %v1891 = vsel %vm706, %v1883, 0.0
      %v1892 = vsel %vm706, %v1884, 0.0
      %v1893 = vadd.f32 %v1891, %v1892
      %v1894 = vsel %vm706, %v1885, 0.0
      %v1895 = vadd.f32 %v1893, %v1894
      %v1896 = vsel %vm706, %v1886, 0.0
      %v1897 = vadd.f32 %v1895, %v1896
      %v1898 = vsel %vm706, %v1887, 0.0
      %v1899 = vadd.f32 %v1897, %v1898
      %v1900 = vsel %vm706, %v1888, 0.0
      %v1901 = vadd.f32 %v1899, %v1900
      %v1902 = vsel %vm706, %v1889, 0.0
      %v1903 = vadd.f32 %v1901, %v1902
      %v1904 = vsel %vm706, %v1890, 0.0
      %v1905 = vadd.f32 %v1903, %v1904
      %1906 = vadd.xlane.f32.xlu0 %v1905
      %v1907 = vpop.xlane.xlu0 %1906
      %v1908 = vrot.slane %v1907, 4
      %v1909 = vadd.f32 %v1907, %v1908
      %v1910 = vrot.slane %v1909, 2
      %v1911 = vadd.f32 %v1909, %v1910
      %v1912 = vrot.slane %v1911, 1
      %v1913 = vadd.f32 %v1911, %v1912
      %s1914 = vtos %v1913
      %v1915 = vstv %s1914
      %v1916 = vmul.f32 %v1915, %v762
      %vm1917 = vcmp.eq.f32.partialorder %v1733, %v1772
      %vm1918 = vcmp.eq.f32.partialorder %v1738, %v1774
      %vm1919 = vcmp.eq.f32.partialorder %v1743, %v1776
      %vm1920 = vcmp.eq.f32.partialorder %v1748, %v1778
      %vm1921 = vcmp.eq.f32.partialorder %v1753, %v1780
      %vm1922 = vcmp.eq.f32.partialorder %v1758, %v1782
      %vm1923 = vcmp.eq.f32.partialorder %v1763, %v1784
      %vm1924 = vcmp.eq.f32.partialorder %v1768, %v1786
      %v1925 = vsel %vm1917, %v576, 128
      %v1926 = vsel %vm1918, %v576, 128
      %v1927 = vsel %vm1919, %v576, 128
      %v1928 = vsel %vm1920, %v576, 128
      %v1929 = vsel %vm1921, %v576, 128
      %v1930 = vsel %vm1922, %v576, 128
      %v1931 = vsel %vm1923, %v576, 128
      %v1932 = vsel %vm1924, %v576, 128
      %v1933 = vand.u32 %v1925, 65535
      %v1934 = vshra.s32 %v1925, 16
      %v1935 = vcvt.s32.f32 %v1933
      %v1936 = vcvt.s32.f32 %v1934
      %1937 = vmin.xlane.f32.xlu0 %v1936
      %v1938 = vpop.xlane.xlu0 %1937
      %vm1939 = vcmp.eq.f32.partialorder %v1936, %v1938
      %v1940 = vsel %vm1939, %v1935, inf
      %1941 = vmin.xlane.f32.xlu0 %v1940
      %v1942 = vpop.xlane.xlu0 %1941
      %v1943 = vcvt.f32.s32 %v1942
      %v1944 = vcvt.f32.s32 %v1938
      %v1945 = vshll.u32 %v1944, 16
      %v1946 = vadd.s32 %v1945, %v1943
      %v1947 = vand.u32 %v1926, 65535
      %v1948 = vshra.s32 %v1926, 16
      %v1949 = vcvt.s32.f32 %v1947
      %v1950 = vcvt.s32.f32 %v1948
      %1951 = vmin.xlane.f32.xlu0 %v1950
      %v1952 = vpop.xlane.xlu0 %1951
      %vm1953 = vcmp.eq.f32.partialorder %v1950, %v1952
      %v1954 = vsel %vm1953, %v1949, inf
      %1955 = vmin.xlane.f32.xlu0 %v1954
      %v1956 = vpop.xlane.xlu0 %1955
      %v1957 = vcvt.f32.s32 %v1956
      %v1958 = vcvt.f32.s32 %v1952
      %v1959 = vshll.u32 %v1958, 16
      %v1960 = vadd.s32 %v1959, %v1957
      %v1961 = vand.u32 %v1927, 65535
      %v1962 = vshra.s32 %v1927, 16
      %v1963 = vcvt.s32.f32 %v1961
      %v1964 = vcvt.s32.f32 %v1962
      %1965 = vmin.xlane.f32.xlu0 %v1964
      %v1966 = vpop.xlane.xlu0 %1965
      %vm1967 = vcmp.eq.f32.partialorder %v1964, %v1966
      %v1968 = vsel %vm1967, %v1963, inf
      %1969 = vmin.xlane.f32.xlu0 %v1968
      %v1970 = vpop.xlane.xlu0 %1969
      %v1971 = vcvt.f32.s32 %v1970
      %v1972 = vcvt.f32.s32 %v1966
      %v1973 = vshll.u32 %v1972, 16
      %v1974 = vadd.s32 %v1973, %v1971
      %v1975 = vand.u32 %v1928, 65535
      %v1976 = vshra.s32 %v1928, 16
      %v1977 = vcvt.s32.f32 %v1975
      %v1978 = vcvt.s32.f32 %v1976
      %1979 = vmin.xlane.f32.xlu0 %v1978
      %v1980 = vpop.xlane.xlu0 %1979
      %vm1981 = vcmp.eq.f32.partialorder %v1978, %v1980
      %v1982 = vsel %vm1981, %v1977, inf
      %1983 = vmin.xlane.f32.xlu0 %v1982
      %v1984 = vpop.xlane.xlu0 %1983
      %v1985 = vcvt.f32.s32 %v1984
      %v1986 = vcvt.f32.s32 %v1980
      %v1987 = vshll.u32 %v1986, 16
      %v1988 = vadd.s32 %v1987, %v1985
      %v1989 = vand.u32 %v1929, 65535
      %v1990 = vshra.s32 %v1929, 16
      %v1991 = vcvt.s32.f32 %v1989
      %v1992 = vcvt.s32.f32 %v1990
      %1993 = vmin.xlane.f32.xlu0 %v1992
      %v1994 = vpop.xlane.xlu0 %1993
      %vm1995 = vcmp.eq.f32.partialorder %v1992, %v1994
      %v1996 = vsel %vm1995, %v1991, inf
      %1997 = vmin.xlane.f32.xlu0 %v1996
      %v1998 = vpop.xlane.xlu0 %1997
      %v1999 = vcvt.f32.s32 %v1998
      %v2000 = vcvt.f32.s32 %v1994
      %v2001 = vshll.u32 %v2000, 16
      %v2002 = vadd.s32 %v2001, %v1999
      %v2003 = vand.u32 %v1930, 65535
      %v2004 = vshra.s32 %v1930, 16
      %v2005 = vcvt.s32.f32 %v2003
      %v2006 = vcvt.s32.f32 %v2004
      %2007 = vmin.xlane.f32.xlu0 %v2006
      %v2008 = vpop.xlane.xlu0 %2007
      %vm2009 = vcmp.eq.f32.partialorder %v2006, %v2008
      %v2010 = vsel %vm2009, %v2005, inf
      %2011 = vmin.xlane.f32.xlu0 %v2010
      %v2012 = vpop.xlane.xlu0 %2011
      %v2013 = vcvt.f32.s32 %v2012
      %v2014 = vcvt.f32.s32 %v2008
      %v2015 = vshll.u32 %v2014, 16
      %v2016 = vadd.s32 %v2015, %v2013
      %v2017 = vand.u32 %v1931, 65535
      %v2018 = vshra.s32 %v1931, 16
      %v2019 = vcvt.s32.f32 %v2017
      %v2020 = vcvt.s32.f32 %v2018
      %2021 = vmin.xlane.f32.xlu0 %v2020
      %v2022 = vpop.xlane.xlu0 %2021
      %vm2023 = vcmp.eq.f32.partialorder %v2020, %v2022
      %v2024 = vsel %vm2023, %v2019, inf
      %2025 = vmin.xlane.f32.xlu0 %v2024
      %v2026 = vpop.xlane.xlu0 %2025
      %v2027 = vcvt.f32.s32 %v2026
      %v2028 = vcvt.f32.s32 %v2022
      %v2029 = vshll.u32 %v2028, 16
      %v2030 = vadd.s32 %v2029, %v2027
      %v2031 = vand.u32 %v1932, 65535
      %v2032 = vshra.s32 %v1932, 16
      %v2033 = vcvt.s32.f32 %v2031
      %v2034 = vcvt.s32.f32 %v2032
      %2035 = vmin.xlane.f32.xlu0 %v2034
      %v2036 = vpop.xlane.xlu0 %2035
      %vm2037 = vcmp.eq.f32.partialorder %v2034, %v2036
      %v2038 = vsel %vm2037, %v2033, inf
      %2039 = vmin.xlane.f32.xlu0 %v2038
      %v2040 = vpop.xlane.xlu0 %2039
      %v2041 = vcvt.f32.s32 %v2040
      %v2042 = vcvt.f32.s32 %v2036
      %v2043 = vshll.u32 %v2042, 16
      %v2044 = vadd.s32 %v2043, %v2041
      %vm2045 = vcmp.eq.s32.totalorder %v1946, %v543
      %vm2046 = vcmp.eq.s32.totalorder %v1960, %v544
      %vm2047 = vcmp.eq.s32.totalorder %v1974, %v545
      %vm2048 = vcmp.eq.s32.totalorder %v1988, %v546
      %vm2049 = vcmp.eq.s32.totalorder %v2002, %v547
      %vm2050 = vcmp.eq.s32.totalorder %v2016, %v548
      %vm2051 = vcmp.eq.s32.totalorder %v2030, %v549
      %vm2052 = vcmp.eq.s32.totalorder %v2044, %v550
      %vm2053 = vmand %vm2045, %vm658
      %vm2054 = vmand %vm2046, %vm659
      %vm2055 = vmand %vm2047, %vm660
      %vm2056 = vmand %vm2048, %vm661
      %vm2057 = vmand %vm2049, %vm662
      %vm2058 = vmand %vm2050, %vm663
      %vm2059 = vmand %vm2051, %vm664
      %vm2060 = vmand %vm2052, %vm665
      %v2061 = vsel %vm2053, 1, 0
      %v2062 = vsel %vm2054, 1, 0
      %v2063 = vsel %vm2055, 1, 0
      %v2064 = vsel %vm2056, 1, 0
      %v2065 = vsel %vm2057, 1, 0
      %v2066 = vsel %vm2058, 1, 0
      %v2067 = vsel %vm2059, 1, 0
      %v2068 = vsel %vm2060, 1, 0
      %v2069 = vcvt.s32.f32 %v2061
      %v2070 = vcvt.s32.f32 %v2062
      %v2071 = vcvt.s32.f32 %v2063
      %v2072 = vcvt.s32.f32 %v2064
      %v2073 = vcvt.s32.f32 %v2065
      %v2074 = vcvt.s32.f32 %v2066
      %v2075 = vcvt.s32.f32 %v2067
      %v2076 = vcvt.s32.f32 %v2068
      %v2077 = vsel %vm706, %v2069, 0.0
      %v2078 = vsel %vm706, %v2070, 0.0
      %v2079 = vadd.f32 %v2077, %v2078
      %v2080 = vsel %vm706, %v2071, 0.0
      %v2081 = vadd.f32 %v2079, %v2080
      %v2082 = vsel %vm706, %v2072, 0.0
      %v2083 = vadd.f32 %v2081, %v2082
      %v2084 = vsel %vm706, %v2073, 0.0
      %v2085 = vadd.f32 %v2083, %v2084
      %v2086 = vsel %vm706, %v2074, 0.0
      %v2087 = vadd.f32 %v2085, %v2086
      %v2088 = vsel %vm706, %v2075, 0.0
      %v2089 = vadd.f32 %v2087, %v2088
      %v2090 = vsel %vm706, %v2076, 0.0
      %v2091 = vadd.f32 %v2089, %v2090
      %2092 = vadd.xlane.f32.xlu0 %v2091
      %v2093 = vpop.xlane.xlu0 %2092
      %v2094 = vrot.slane %v2093, 4
      %v2095 = vadd.f32 %v2093, %v2094
      %v2096 = vrot.slane %v2095, 2
      %v2097 = vadd.f32 %v2095, %v2096
      %v2098 = vrot.slane %v2097, 1
      %v2099 = vadd.f32 %v2097, %v2098
      %s2100 = vtos %v2099
      %vm2101 = vcmp.eq.s32.totalorder %v576, 0
      %v2102 = vsel %vm2101, %v1916, 0.0
      %v2103 = vadd.f32 %v2102, 0.0
      %v2104 = vstv %s2100
      %v2105 = vsel %vm2101, %v2104, 0.0
      %v2106 = vadd.f32 %v2105, 0.0
      %v2107 = vrcp.pop %v1812
      %v2108 = vmul.f32 %v1796, %v2107
      %v2109 = vrcp.pop %v1814
      %v2110 = vmul.f32 %v1798, %v2109
      %v2111 = vrcp.pop %v1816
      %v2112 = vmul.f32 %v1800, %v2111
      %v2113 = vrcp.pop %v1818
      %v2114 = vmul.f32 %v1802, %v2113
      %v2115 = vrcp.pop %v1820
      %v2116 = vmul.f32 %v1804, %v2115
      %v2117 = vrcp.pop %v1822
      %v2118 = vmul.f32 %v1806, %v2117
      %v2119 = vrcp.pop %v1824
      %v2120 = vmul.f32 %v1808, %v2119
      %v2121 = vrcp.pop %v1826
      %v2122 = vmul.f32 %v1810, %v2121
      %v2123 = vsub.f32 %v2108, %v617
      %v2124 = vsub.f32 %v2110, %v618
      %v2125 = vsub.f32 %v2112, %v619
      %v2126 = vsub.f32 %v2114, %v620
      %v2127 = vsub.f32 %v2116, %v621
      %v2128 = vsub.f32 %v2118, %v622
      %v2129 = vsub.f32 %v2120, %v623
      %v2130 = vsub.f32 %v2122, %v624
      %2132 = vset.pattern.permute.xlu0 0
      %2133 = vperm.xlu0 %2132, %v763
      %v2134 = vpop.permute.xlu0 %2133
      %2137 = vset.pattern.permute.xlu0 0
      %2138 = vperm.xlu0 %2137, %v764
      %v2139 = vpop.permute.xlu0 %2138
      %2142 = vset.pattern.permute.xlu0 0
      %2143 = vperm.xlu0 %2142, %v765
      %v2144 = vpop.permute.xlu0 %2143
      %2147 = vset.pattern.permute.xlu0 0
      %2148 = vperm.xlu0 %2147, %v766
      %v2149 = vpop.permute.xlu0 %2148
      %2152 = vset.pattern.permute.xlu0 0
      %2153 = vperm.xlu0 %2152, %v767
      %v2154 = vpop.permute.xlu0 %2153
      %2157 = vset.pattern.permute.xlu0 0
      %2158 = vperm.xlu0 %2157, %v768
      %v2159 = vpop.permute.xlu0 %2158
      %2162 = vset.pattern.permute.xlu0 0
      %2163 = vperm.xlu0 %2162, %v769
      %v2164 = vpop.permute.xlu0 %2163
      %2167 = vset.pattern.permute.xlu0 0
      %2168 = vperm.xlu0 %2167, %v770
      %v2169 = vpop.permute.xlu0 %2168
      %v2171 = vmul.f32 %v2123, %v2134
      %v2172 = vmul.f32 %v2124, %v2139
      %v2173 = vmul.f32 %v2125, %v2144
      %v2174 = vmul.f32 %v2126, %v2149
      %v2175 = vmul.f32 %v2127, %v2154
      %v2176 = vmul.f32 %v2128, %v2159
      %v2177 = vmul.f32 %v2129, %v2164
      %v2178 = vmul.f32 %v2130, %v2169
      %2179 = vmatprep.subr.mxu0 0.0
      %2180 = vmatpush1.msra.mxu0 %v551
      %2181 = vmatprep.subr.mxu0 0.0
      %2182 = vmatpush1.msra.mxu0 %v552
      %2183 = vmatprep.subr.mxu0 0.0
      %2184 = vmatpush1.msra.mxu0 %v553
      %2185 = vmatprep.subr.mxu0 0.0
      %2186 = vmatpush1.msra.mxu0 %v554
      %2187 = vmatprep.subr.mxu0 0.0
      %2188 = vmatpush1.msra.mxu0 %v555
      %2189 = vmatprep.subr.mxu0 0.0
      %2190 = vmatpush1.msra.mxu0 %v556
      %2191 = vmatprep.subr.mxu0 0.0
      %2192 = vmatpush1.msra.mxu0 %v557
      %2193 = vmatprep.subr.mxu0 0.0
      %2194 = vmatpush1.msra.mxu0 %v558
      %2195 = vmatprep.subr.mxu0 0.0
      %2196 = vmatpush1.msra.mxu0 %v559
      %2197 = vmatprep.subr.mxu0 0.0
      %2198 = vmatpush1.msra.mxu0 %v560
      %2199 = vmatprep.subr.mxu0 0.0
      %2200 = vmatpush1.msra.mxu0 %v561
      %2201 = vmatprep.subr.mxu0 0.0
      %2202 = vmatpush1.msra.mxu0 %v562
      %2203 = vmatprep.subr.mxu0 0.0
      %2204 = vmatpush1.msra.mxu0 %v563
      %2205 = vmatprep.subr.mxu0 0.0
      %2206 = vmatpush1.msra.mxu0 %v564
      %2207 = vmatprep.subr.mxu0 0.0
      %2208 = vmatpush1.msra.mxu0 %v565
      %2209 = vmatprep.subr.mxu0 0.0
      %2210 = vmatpush1.msra.mxu0 %v566
      %2211 = vmatprep.subr.mxu0 0.0
      %2212 = vmatpush1.msra.mxu0 0.0
      %2213 = vmatprep.subr.mxu0 0.0
      %2214 = vmatpush1.msra.mxu0 0.0
      %2215 = vmatprep.subr.mxu0 0.0
      %2216 = vmatpush1.msra.mxu0 0.0
      %2217 = vmatprep.subr.mxu0 0.0
      %2218 = vmatpush1.msra.mxu0 0.0
      %2219 = vmatprep.subr.mxu0 0.0
      %2220 = vmatpush1.msra.mxu0 0.0
      %2221 = vmatprep.subr.mxu0 0.0
      %2222 = vmatpush1.msra.mxu0 0.0
      %2223 = vmatprep.subr.mxu0 0.0
      %2224 = vmatpush1.msra.mxu0 0.0
      %2225 = vmatprep.subr.mxu0 0.0
      %2226 = vmatpush1.msra.mxu0 0.0
      %2227 = vmatprep.subr.mxu0 0.0
      %2228 = vmatpush1.msra.mxu0 0.0
      %2229 = vmatprep.subr.mxu0 0.0
      %2230 = vmatpush1.msra.mxu0 0.0
      %2231 = vmatprep.subr.mxu0 0.0
      %2232 = vmatpush1.msra.mxu0 0.0
      %2233 = vmatprep.subr.mxu0 0.0
      %2234 = vmatpush1.msra.mxu0 0.0
      %2235 = vmatprep.subr.mxu0 0.0
      %2236 = vmatpush1.msra.mxu0 0.0
      %2237 = vmatprep.subr.mxu0 0.0
      %2238 = vmatpush1.msra.mxu0 0.0
      %2239 = vmatprep.subr.mxu0 0.0
      %2240 = vmatpush1.msra.mxu0 0.0
      %2241 = vmatprep.subr.mxu0 0.0
      %2242 = vmatpush1.msra.mxu0 0.0
      %2243 = vmatprep.mubr.f32.mxu0 0.0
      %2244 = vmatmul.mubr.f32.gmra.mrb[0].mxu0 %v2171
      %v2245 = vpop.f32.mrb[0].mxu0
      %v2246 = vadd.f32 0.0, %v2245
      %v2247 = vpop.f32.mrb[0].mxu0
      %2248 = vmatprep.mubr.f32.mxu0 0.0
      %2249 = vmatmul.mubr.f32.gmra.mrb[0].mxu0 %v2172
      %v2250 = vpop.f32.mrb[0].mxu0
      %v2251 = vadd.f32 0.0, %v2250
      %v2252 = vpop.f32.mrb[0].mxu0
      %2253 = vmatprep.mubr.f32.mxu0 0.0
      %2254 = vmatmul.mubr.f32.gmra.mrb[0].mxu0 %v2173
      %v2255 = vpop.f32.mrb[0].mxu0
      %v2256 = vadd.f32 0.0, %v2255
      %v2257 = vpop.f32.mrb[0].mxu0
      %2258 = vmatprep.mubr.f32.mxu0 0.0
      %2259 = vmatmul.mubr.f32.gmra.mrb[0].mxu0 %v2174
      %v2260 = vpop.f32.mrb[0].mxu0
      %v2261 = vadd.f32 0.0, %v2260
      %v2262 = vpop.f32.mrb[0].mxu0
      %2263 = vmatprep.mubr.f32.mxu0 0.0
      %2264 = vmatmul.mubr.f32.gmra.mrb[0].mxu0 %v2175
      %v2265 = vpop.f32.mrb[0].mxu0
      %v2266 = vadd.f32 0.0, %v2265
      %v2267 = vpop.f32.mrb[0].mxu0
      %2268 = vmatprep.mubr.f32.mxu0 0.0
      %2269 = vmatmul.mubr.f32.gmra.mrb[0].mxu0 %v2176
      %v2270 = vpop.f32.mrb[0].mxu0
      %v2271 = vadd.f32 0.0, %v2270
      %v2272 = vpop.f32.mrb[0].mxu0
      %2273 = vmatprep.mubr.f32.mxu0 0.0
      %2274 = vmatmul.mubr.f32.gmra.mrb[0].mxu0 %v2177
      %v2275 = vpop.f32.mrb[0].mxu0
      %v2276 = vadd.f32 0.0, %v2275
      %v2277 = vpop.f32.mrb[0].mxu0
      %2278 = vmatprep.mubr.f32.mxu0 0.0
      %2279 = vmatmul.mubr.f32.gmra.mrb[0].mxu0 %v2178
      %v2280 = vpop.f32.mrb[0].mxu0
      %v2281 = vadd.f32 0.0, %v2280
      %v2282 = vpop.f32.mrb[0].mxu0
      %2283 = vdwg.mxu0
      %vm2284 = vcmask 523264
      %v2286 = vsel %vm2284, %v415, 0
      %v2289 = vsel %vm2284, %v416, 0
      %v2292 = vsel %vm2284, %v417, 0
      %v2295 = vsel %vm2284, %v418, 0
      %v2298 = vsel %vm2284, %v419, 0
      %v2301 = vsel %vm2284, %v420, 0
      %v2304 = vsel %vm2284, %v421, 0
      %v2307 = vsel %vm2284, %v422, 0
      %v2310 = vsel %vm2284, %v423, 0
      %v2313 = vsel %vm2284, %v424, 0
      %v2316 = vsel %vm2284, %v425, 0
      %v2319 = vsel %vm2284, %v426, 0
      %v2322 = vsel %vm2284, %v427, 0
      %v2325 = vsel %vm2284, %v428, 0
      %v2328 = vsel %vm2284, %v429, 0
      %v2331 = vsel %vm2284, %v430, 0
      %v2334 = vsel %vm2284, %v431, 0
      %v2337 = vsel %vm2284, %v432, 0
      %v2340 = vsel %vm2284, %v433, 0
      %v2343 = vsel %vm2284, %v434, 0
      %v2346 = vsel %vm2284, %v435, 0
      %v2349 = vsel %vm2284, %v436, 0
      %v2352 = vsel %vm2284, %v437, 0
      %v2355 = vsel %vm2284, %v438, 0
      %v2358 = vsel %vm2284, %v439, 0
      %v2361 = vsel %vm2284, %v440, 0
      %v2364 = vsel %vm2284, %v441, 0
      %v2367 = vsel %vm2284, %v442, 0
      %v2370 = vsel %vm2284, %v443, 0
      %v2373 = vsel %vm2284, %v444, 0
      %v2376 = vsel %vm2284, %v445, 0
      %v2379 = vsel %vm2284, %v446, 0
      %v2382 = vsel %vm2284, %v447, 0
      %v2385 = vsel %vm2284, %v448, 0
      %v2388 = vsel %vm2284, %v449, 0
      %v2391 = vsel %vm2284, %v450, 0
      %v2394 = vsel %vm2284, %v451, 0
      %v2397 = vsel %vm2284, %v452, 0
      %v2400 = vsel %vm2284, %v453, 0
      %v2403 = vsel %vm2284, %v454, 0
      %v2406 = vsel %vm2284, %v455, 0
      %v2409 = vsel %vm2284, %v456, 0
      %v2412 = vsel %vm2284, %v457, 0
      %v2415 = vsel %vm2284, %v458, 0
      %v2418 = vsel %vm2284, %v459, 0
      %v2421 = vsel %vm2284, %v460, 0
      %v2424 = vsel %vm2284, %v461, 0
      %v2427 = vsel %vm2284, %v462, 0
      %v2430 = vsel %vm2284, %v463, 0
      %v2433 = vsel %vm2284, %v464, 0
      %v2436 = vsel %vm2284, %v465, 0
      %v2439 = vsel %vm2284, %v466, 0
      %v2442 = vsel %vm2284, %v467, 0
      %v2445 = vsel %vm2284, %v468, 0
      %v2448 = vsel %vm2284, %v469, 0
      %v2451 = vsel %vm2284, %v470, 0
      %v2454 = vsel %vm2284, %v471, 0
      %v2457 = vsel %vm2284, %v472, 0
      %v2460 = vsel %vm2284, %v473, 0
      %v2463 = vsel %vm2284, %v474, 0
      %v2466 = vsel %vm2284, %v475, 0
      %v2469 = vsel %vm2284, %v476, 0
      %v2472 = vsel %vm2284, %v477, 0
      %v2475 = vsel %vm2284, %v478, 0
      %v2478 = vsel %vm2284, %v479, 0
      %v2481 = vsel %vm2284, %v480, 0
      %v2484 = vsel %vm2284, %v481, 0
      %v2487 = vsel %vm2284, %v482, 0
      %v2490 = vsel %vm2284, %v483, 0
      %v2493 = vsel %vm2284, %v484, 0
      %v2496 = vsel %vm2284, %v485, 0
      %v2499 = vsel %vm2284, %v486, 0
      %v2502 = vsel %vm2284, %v487, 0
      %v2505 = vsel %vm2284, %v488, 0
      %v2508 = vsel %vm2284, %v489, 0
      %v2511 = vsel %vm2284, %v490, 0
      %v2514 = vsel %vm2284, %v491, 0
      %v2517 = vsel %vm2284, %v492, 0
      %v2520 = vsel %vm2284, %v493, 0
      %v2523 = vsel %vm2284, %v494, 0
      %v2526 = vsel %vm2284, %v495, 0
      %v2529 = vsel %vm2284, %v496, 0
      %v2532 = vsel %vm2284, %v497, 0
      %v2535 = vsel %vm2284, %v498, 0
      %v2538 = vsel %vm2284, %v499, 0
      %v2541 = vsel %vm2284, %v500, 0
      %v2544 = vsel %vm2284, %v501, 0
      %v2547 = vsel %vm2284, %v502, 0
      %v2550 = vsel %vm2284, %v503, 0
      %v2553 = vsel %vm2284, %v504, 0
      %v2556 = vsel %vm2284, %v505, 0
      %v2559 = vsel %vm2284, %v506, 0
      %v2562 = vsel %vm2284, %v507, 0
      %v2565 = vsel %vm2284, %v508, 0
      %v2568 = vsel %vm2284, %v509, 0
      %v2571 = vsel %vm2284, %v510, 0
      %v2574 = vsel %vm2284, %v511, 0
      %v2577 = vsel %vm2284, %v512, 0
      %v2580 = vsel %vm2284, %v513, 0
      %v2583 = vsel %vm2284, %v514, 0
      %v2586 = vsel %vm2284, %v515, 0
      %v2589 = vsel %vm2284, %v516, 0
      %v2592 = vsel %vm2284, %v517, 0
      %v2595 = vsel %vm2284, %v518, 0
      %v2598 = vsel %vm2284, %v519, 0
      %v2601 = vsel %vm2284, %v520, 0
      %v2604 = vsel %vm2284, %v521, 0
      %v2607 = vsel %vm2284, %v522, 0
      %v2610 = vsel %vm2284, %v523, 0
      %v2613 = vsel %vm2284, %v524, 0
      %v2616 = vsel %vm2284, %v525, 0
      %v2619 = vsel %vm2284, %v526, 0
      %v2622 = vsel %vm2284, %v527, 0
      %v2625 = vsel %vm2284, %v528, 0
      %v2628 = vsel %vm2284, %v529, 0
      %v2631 = vsel %vm2284, %v530, 0
      %v2634 = vsel %vm2284, %v531, 0
      %v2637 = vsel %vm2284, %v532, 0
      %v2640 = vsel %vm2284, %v533, 0
      %v2643 = vsel %vm2284, %v534, 0
      %v2646 = vsel %vm2284, %v535, 0
      %v2649 = vsel %vm2284, %v536, 0
      %v2652 = vsel %vm2284, %v537, 0
      %v2655 = vsel %vm2284, %v538, 0
      %v2658 = vsel %vm2284, %v539, 0
      %v2661 = vsel %vm2284, %v540, 0
      %v2664 = vsel %vm2284, %v541, 0
      %v2667 = vsel %vm2284, %v542, 0
      %2669 = vmatprep.subr.mxu0 0.0
      %2670 = vmatpush1.msra.mxu0 %v2246
      %2671 = vmatprep.subr.mxu0 0.0
      %2672 = vmatpush1.msra.mxu0 %v2251
      %2673 = vmatprep.subr.mxu0 0.0
      %2674 = vmatpush1.msra.mxu0 %v2256
      %2675 = vmatprep.subr.mxu0 0.0
      %2676 = vmatpush1.msra.mxu0 %v2261
      %2677 = vmatprep.subr.mxu0 0.0
      %2678 = vmatpush1.msra.mxu0 %v2266
      %2679 = vmatprep.subr.mxu0 0.0
      %2680 = vmatpush1.msra.mxu0 %v2271
      %2681 = vmatprep.subr.mxu0 0.0
      %2682 = vmatpush1.msra.mxu0 %v2276
      %2683 = vmatprep.subr.mxu0 0.0
      %2684 = vmatpush1.msra.mxu0 %v2281
      %2685 = vmatprep.subr.mxu0 0.0
      %2686 = vmatpush1.msra.mxu0 0.0
      %2687 = vmatprep.subr.mxu0 0.0
      %2688 = vmatpush1.msra.mxu0 0.0
      %2689 = vmatprep.subr.mxu0 0.0
      %2690 = vmatpush1.msra.mxu0 0.0
      %2691 = vmatprep.subr.mxu0 0.0
      %2692 = vmatpush1.msra.mxu0 0.0
      %2693 = vmatprep.subr.mxu0 0.0
      %2694 = vmatpush1.msra.mxu0 0.0
      %2695 = vmatprep.subr.mxu0 0.0
      %2696 = vmatpush1.msra.mxu0 0.0
      %2697 = vmatprep.subr.mxu0 0.0
      %2698 = vmatpush1.msra.mxu0 0.0
      %2699 = vmatprep.subr.mxu0 0.0
      %2700 = vmatpush1.msra.mxu0 0.0
      %2701 = vmatprep.subr.mxu0 0.0
      %2702 = vmatpush1.msra.mxu0 0.0
      %2703 = vmatprep.subr.mxu0 0.0
      %2704 = vmatpush1.msra.mxu0 0.0
      %2705 = vmatprep.subr.mxu0 0.0
      %2706 = vmatpush1.msra.mxu0 0.0
      %2707 = vmatprep.subr.mxu0 0.0
      %2708 = vmatpush1.msra.mxu0 0.0
      %2709 = vmatprep.subr.mxu0 0.0
      %2710 = vmatpush1.msra.mxu0 0.0
      %2711 = vmatprep.subr.mxu0 0.0
      %2712 = vmatpush1.msra.mxu0 0.0
      %2713 = vmatprep.subr.mxu0 0.0
      %2714 = vmatpush1.msra.mxu0 0.0
      %2715 = vmatprep.subr.mxu0 0.0
      %2716 = vmatpush1.msra.mxu0 0.0
      %2717 = vmatprep.subr.mxu0 0.0
      %2718 = vmatpush1.msra.mxu0 0.0
      %2719 = vmatprep.subr.mxu0 0.0
      %2720 = vmatpush1.msra.mxu0 0.0
      %2721 = vmatprep.subr.mxu0 0.0
      %2722 = vmatpush1.msra.mxu0 0.0
      %2723 = vmatprep.subr.mxu0 0.0
      %2724 = vmatpush1.msra.mxu0 0.0
      %2725 = vmatprep.subr.mxu0 0.0
      %2726 = vmatpush1.msra.mxu0 0.0
      %2727 = vmatprep.subr.mxu0 0.0
      %2728 = vmatpush1.msra.mxu0 0.0
      %2729 = vmatprep.subr.mxu0 0.0
      %2730 = vmatpush1.msra.mxu0 0.0
      %2731 = vmatprep.subr.mxu0 0.0
      %2732 = vmatpush1.msra.mxu0 0.0
      %2733 = vmatprep.mubr.f32.mxu0 0.0
      %2734 = vmatmul.mubr.f32.gmra.mrb[0].mxu0 %v2286
      %v2735 = vpop.f32.mrb[0].mxu0
      %v2736 = vadd.f32 0.0, %v2735
      %v2737 = vpop.f32.mrb[0].mxu0
      %2738 = vmatprep.mubr.f32.mxu0 0.0
      %2739 = vmatmul.mubr.f32.gmra.mrb[0].mxu0 %v2289
      %v2740 = vpop.f32.mrb[0].mxu0
      %v2741 = vadd.f32 0.0, %v2740
      %v2742 = vpop.f32.mrb[0].mxu0
      %2743 = vmatprep.mubr.f32.mxu0 0.0
      %2744 = vmatmul.mubr.f32.gmra.mrb[0].mxu0 %v2292
      %v2745 = vpop.f32.mrb[0].mxu0
      %v2746 = vadd.f32 0.0, %v2745
      %v2747 = vpop.f32.mrb[0].mxu0
      %2748 = vmatprep.mubr.f32.mxu0 0.0
      %2749 = vmatmul.mubr.f32.gmra.mrb[0].mxu0 %v2295
      %v2750 = vpop.f32.mrb[0].mxu0
      %v2751 = vadd.f32 0.0, %v2750
      %v2752 = vpop.f32.mrb[0].mxu0
      %2753 = vmatprep.mubr.f32.mxu0 0.0
      %2754 = vmatmul.mubr.f32.gmra.mrb[0].mxu0 %v2298
      %v2755 = vpop.f32.mrb[0].mxu0
      %v2756 = vadd.f32 0.0, %v2755
      %v2757 = vpop.f32.mrb[0].mxu0
      %2758 = vmatprep.mubr.f32.mxu0 0.0
      %2759 = vmatmul.mubr.f32.gmra.mrb[0].mxu0 %v2301
      %v2760 = vpop.f32.mrb[0].mxu0
      %v2761 = vadd.f32 0.0, %v2760
      %v2762 = vpop.f32.mrb[0].mxu0
      %2763 = vmatprep.mubr.f32.mxu0 0.0
      %2764 = vmatmul.mubr.f32.gmra.mrb[0].mxu0 %v2304
      %v2765 = vpop.f32.mrb[0].mxu0
      %v2766 = vadd.f32 0.0, %v2765
      %v2767 = vpop.f32.mrb[0].mxu0
      %2768 = vmatprep.mubr.f32.mxu0 0.0
      %2769 = vmatmul.mubr.f32.gmra.mrb[0].mxu0 %v2307
      %v2770 = vpop.f32.mrb[0].mxu0
      %v2771 = vadd.f32 0.0, %v2770
      %v2772 = vpop.f32.mrb[0].mxu0
      %2773 = vmatprep.mubr.f32.mxu0 0.0
      %2774 = vmatmul.mubr.f32.gmra.mrb[0].mxu0 %v2310
      %v2775 = vpop.f32.mrb[0].mxu0
      %v2776 = vadd.f32 0.0, %v2775
      %v2777 = vpop.f32.mrb[0].mxu0
      %2778 = vmatprep.mubr.f32.mxu0 0.0
      %2779 = vmatmul.mubr.f32.gmra.mrb[0].mxu0 %v2313
      %v2780 = vpop.f32.mrb[0].mxu0
      %v2781 = vadd.f32 0.0, %v2780
      %v2782 = vpop.f32.mrb[0].mxu0
      %2783 = vmatprep.mubr.f32.mxu0 0.0
      %2784 = vmatmul.mubr.f32.gmra.mrb[0].mxu0 %v2316
      %v2785 = vpop.f32.mrb[0].mxu0
      %v2786 = vadd.f32 0.0, %v2785
      %v2787 = vpop.f32.mrb[0].mxu0
      %2788 = vmatprep.mubr.f32.mxu0 0.0
      %2789 = vmatmul.mubr.f32.gmra.mrb[0].mxu0 %v2319
      %v2790 = vpop.f32.mrb[0].mxu0
      %v2791 = vadd.f32 0.0, %v2790
      %v2792 = vpop.f32.mrb[0].mxu0
      %2793 = vmatprep.mubr.f32.mxu0 0.0
      %2794 = vmatmul.mubr.f32.gmra.mrb[0].mxu0 %v2322
      %v2795 = vpop.f32.mrb[0].mxu0
      %v2796 = vadd.f32 0.0, %v2795
      %v2797 = vpop.f32.mrb[0].mxu0
      %2798 = vmatprep.mubr.f32.mxu0 0.0
      %2799 = vmatmul.mubr.f32.gmra.mrb[0].mxu0 %v2325
      %v2800 = vpop.f32.mrb[0].mxu0
      %v2801 = vadd.f32 0.0, %v2800
      %v2802 = vpop.f32.mrb[0].mxu0
      %2803 = vmatprep.mubr.f32.mxu0 0.0
      %2804 = vmatmul.mubr.f32.gmra.mrb[0].mxu0 %v2328
      %v2805 = vpop.f32.mrb[0].mxu0
      %v2806 = vadd.f32 0.0, %v2805
      %v2807 = vpop.f32.mrb[0].mxu0
      %2808 = vmatprep.mubr.f32.mxu0 0.0
      %2809 = vmatmul.mubr.f32.gmra.mrb[0].mxu0 %v2331
      %v2810 = vpop.f32.mrb[0].mxu0
      %v2811 = vadd.f32 0.0, %v2810
      %v2812 = vpop.f32.mrb[0].mxu0
      %2813 = vmatprep.mubr.f32.mxu0 0.0
      %2814 = vmatmul.mubr.f32.gmra.mrb[0].mxu0 %v2334
      %v2815 = vpop.f32.mrb[0].mxu0
      %v2816 = vadd.f32 0.0, %v2815
      %v2817 = vpop.f32.mrb[0].mxu0
      %2818 = vmatprep.mubr.f32.mxu0 0.0
      %2819 = vmatmul.mubr.f32.gmra.mrb[0].mxu0 %v2337
      %v2820 = vpop.f32.mrb[0].mxu0
      %v2821 = vadd.f32 0.0, %v2820
      %v2822 = vpop.f32.mrb[0].mxu0
      %2823 = vmatprep.mubr.f32.mxu0 0.0
      %2824 = vmatmul.mubr.f32.gmra.mrb[0].mxu0 %v2340
      %v2825 = vpop.f32.mrb[0].mxu0
      %v2826 = vadd.f32 0.0, %v2825
      %v2827 = vpop.f32.mrb[0].mxu0
      %2828 = vmatprep.mubr.f32.mxu0 0.0
      %2829 = vmatmul.mubr.f32.gmra.mrb[0].mxu0 %v2343
      %v2830 = vpop.f32.mrb[0].mxu0
      %v2831 = vadd.f32 0.0, %v2830
      %v2832 = vpop.f32.mrb[0].mxu0
      %2833 = vmatprep.mubr.f32.mxu0 0.0
      %2834 = vmatmul.mubr.f32.gmra.mrb[0].mxu0 %v2346
      %v2835 = vpop.f32.mrb[0].mxu0
      %v2836 = vadd.f32 0.0, %v2835
      %v2837 = vpop.f32.mrb[0].mxu0
      %2838 = vmatprep.mubr.f32.mxu0 0.0
      %2839 = vmatmul.mubr.f32.gmra.mrb[0].mxu0 %v2349
      %v2840 = vpop.f32.mrb[0].mxu0
      %v2841 = vadd.f32 0.0, %v2840
      %v2842 = vpop.f32.mrb[0].mxu0
      %2843 = vmatprep.mubr.f32.mxu0 0.0
      %2844 = vmatmul.mubr.f32.gmra.mrb[0].mxu0 %v2352
      %v2845 = vpop.f32.mrb[0].mxu0
      %v2846 = vadd.f32 0.0, %v2845
      %v2847 = vpop.f32.mrb[0].mxu0
      %2848 = vmatprep.mubr.f32.mxu0 0.0
      %2849 = vmatmul.mubr.f32.gmra.mrb[0].mxu0 %v2355
      %v2850 = vpop.f32.mrb[0].mxu0
      %v2851 = vadd.f32 0.0, %v2850
      %v2852 = vpop.f32.mrb[0].mxu0
      %2853 = vmatprep.mubr.f32.mxu0 0.0
      %2854 = vmatmul.mubr.f32.gmra.mrb[0].mxu0 %v2358
      %v2855 = vpop.f32.mrb[0].mxu0
      %v2856 = vadd.f32 0.0, %v2855
      %v2857 = vpop.f32.mrb[0].mxu0
      %2858 = vmatprep.mubr.f32.mxu0 0.0
      %2859 = vmatmul.mubr.f32.gmra.mrb[0].mxu0 %v2361
      %v2860 = vpop.f32.mrb[0].mxu0
      %v2861 = vadd.f32 0.0, %v2860
      %v2862 = vpop.f32.mrb[0].mxu0
      %2863 = vmatprep.mubr.f32.mxu0 0.0
      %2864 = vmatmul.mubr.f32.gmra.mrb[0].mxu0 %v2364
      %v2865 = vpop.f32.mrb[0].mxu0
      %v2866 = vadd.f32 0.0, %v2865
      %v2867 = vpop.f32.mrb[0].mxu0
      %2868 = vmatprep.mubr.f32.mxu0 0.0
      %2869 = vmatmul.mubr.f32.gmra.mrb[0].mxu0 %v2367
      %v2870 = vpop.f32.mrb[0].mxu0
      %v2871 = vadd.f32 0.0, %v2870
      %v2872 = vpop.f32.mrb[0].mxu0
      %2873 = vmatprep.mubr.f32.mxu0 0.0
      %2874 = vmatmul.mubr.f32.gmra.mrb[0].mxu0 %v2370
      %v2875 = vpop.f32.mrb[0].mxu0
      %v2876 = vadd.f32 0.0, %v2875
      %v2877 = vpop.f32.mrb[0].mxu0
      %2878 = vmatprep.mubr.f32.mxu0 0.0
      %2879 = vmatmul.mubr.f32.gmra.mrb[0].mxu0 %v2373
      %v2880 = vpop.f32.mrb[0].mxu0
      %v2881 = vadd.f32 0.0, %v2880
      %v2882 = vpop.f32.mrb[0].mxu0
      %2883 = vmatprep.mubr.f32.mxu0 0.0
      %2884 = vmatmul.mubr.f32.gmra.mrb[0].mxu0 %v2376
      %v2885 = vpop.f32.mrb[0].mxu0
      %v2886 = vadd.f32 0.0, %v2885
      %v2887 = vpop.f32.mrb[0].mxu0
      %2888 = vmatprep.mubr.f32.mxu0 0.0
      %2889 = vmatmul.mubr.f32.gmra.mrb[0].mxu0 %v2379
      %v2890 = vpop.f32.mrb[0].mxu0
      %v2891 = vadd.f32 0.0, %v2890
      %v2892 = vpop.f32.mrb[0].mxu0
      %2893 = vmatprep.mubr.f32.mxu0 0.0
      %2894 = vmatmul.mubr.f32.gmra.mrb[0].mxu0 %v2382
      %v2895 = vpop.f32.mrb[0].mxu0
      %v2896 = vadd.f32 0.0, %v2895
      %v2897 = vpop.f32.mrb[0].mxu0
      %2898 = vmatprep.mubr.f32.mxu0 0.0
      %2899 = vmatmul.mubr.f32.gmra.mrb[0].mxu0 %v2385
      %v2900 = vpop.f32.mrb[0].mxu0
      %v2901 = vadd.f32 0.0, %v2900
      %v2902 = vpop.f32.mrb[0].mxu0
      %2903 = vmatprep.mubr.f32.mxu0 0.0
      %2904 = vmatmul.mubr.f32.gmra.mrb[0].mxu0 %v2388
      %v2905 = vpop.f32.mrb[0].mxu0
      %v2906 = vadd.f32 0.0, %v2905
      %v2907 = vpop.f32.mrb[0].mxu0
      %2908 = vmatprep.mubr.f32.mxu0 0.0
      %2909 = vmatmul.mubr.f32.gmra.mrb[0].mxu0 %v2391
      %v2910 = vpop.f32.mrb[0].mxu0
      %v2911 = vadd.f32 0.0, %v2910
      %v2912 = vpop.f32.mrb[0].mxu0
      %2913 = vmatprep.mubr.f32.mxu0 0.0
      %2914 = vmatmul.mubr.f32.gmra.mrb[0].mxu0 %v2394
      %v2915 = vpop.f32.mrb[0].mxu0
      %v2916 = vadd.f32 0.0, %v2915
      %v2917 = vpop.f32.mrb[0].mxu0
      %2918 = vmatprep.mubr.f32.mxu0 0.0
      %2919 = vmatmul.mubr.f32.gmra.mrb[0].mxu0 %v2397
      %v2920 = vpop.f32.mrb[0].mxu0
      %v2921 = vadd.f32 0.0, %v2920
      %v2922 = vpop.f32.mrb[0].mxu0
      %2923 = vmatprep.mubr.f32.mxu0 0.0
      %2924 = vmatmul.mubr.f32.gmra.mrb[0].mxu0 %v2400
      %v2925 = vpop.f32.mrb[0].mxu0
      %v2926 = vadd.f32 0.0, %v2925
      %v2927 = vpop.f32.mrb[0].mxu0
      %2928 = vmatprep.mubr.f32.mxu0 0.0
      %2929 = vmatmul.mubr.f32.gmra.mrb[0].mxu0 %v2403
      %v2930 = vpop.f32.mrb[0].mxu0
      %v2931 = vadd.f32 0.0, %v2930
      %v2932 = vpop.f32.mrb[0].mxu0
      %2933 = vmatprep.mubr.f32.mxu0 0.0
      %2934 = vmatmul.mubr.f32.gmra.mrb[0].mxu0 %v2406
      %v2935 = vpop.f32.mrb[0].mxu0
      %v2936 = vadd.f32 0.0, %v2935
      %v2937 = vpop.f32.mrb[0].mxu0
      %2938 = vmatprep.mubr.f32.mxu0 0.0
      %2939 = vmatmul.mubr.f32.gmra.mrb[0].mxu0 %v2409
      %v2940 = vpop.f32.mrb[0].mxu0
      %v2941 = vadd.f32 0.0, %v2940
      %v2942 = vpop.f32.mrb[0].mxu0
      %2943 = vmatprep.mubr.f32.mxu0 0.0
      %2944 = vmatmul.mubr.f32.gmra.mrb[0].mxu0 %v2412
      %v2945 = vpop.f32.mrb[0].mxu0
      %v2946 = vadd.f32 0.0, %v2945
      %v2947 = vpop.f32.mrb[0].mxu0
      %2948 = vmatprep.mubr.f32.mxu0 0.0
      %2949 = vmatmul.mubr.f32.gmra.mrb[0].mxu0 %v2415
      %v2950 = vpop.f32.mrb[0].mxu0
      %v2951 = vadd.f32 0.0, %v2950
      %v2952 = vpop.f32.mrb[0].mxu0
      %2953 = vmatprep.mubr.f32.mxu0 0.0
      %2954 = vmatmul.mubr.f32.gmra.mrb[0].mxu0 %v2418
      %v2955 = vpop.f32.mrb[0].mxu0
      %v2956 = vadd.f32 0.0, %v2955
      %v2957 = vpop.f32.mrb[0].mxu0
      %2958 = vmatprep.mubr.f32.mxu0 0.0
      %2959 = vmatmul.mubr.f32.gmra.mrb[0].mxu0 %v2421
      %v2960 = vpop.f32.mrb[0].mxu0
      %v2961 = vadd.f32 0.0, %v2960
      %v2962 = vpop.f32.mrb[0].mxu0
      %2963 = vmatprep.mubr.f32.mxu0 0.0
      %2964 = vmatmul.mubr.f32.gmra.mrb[0].mxu0 %v2424
      %v2965 = vpop.f32.mrb[0].mxu0
      %v2966 = vadd.f32 0.0, %v2965
      %v2967 = vpop.f32.mrb[0].mxu0
      %2968 = vmatprep.mubr.f32.mxu0 0.0
      %2969 = vmatmul.mubr.f32.gmra.mrb[0].mxu0 %v2427
      %v2970 = vpop.f32.mrb[0].mxu0
      %v2971 = vadd.f32 0.0, %v2970
      %v2972 = vpop.f32.mrb[0].mxu0
      %2973 = vmatprep.mubr.f32.mxu0 0.0
      %2974 = vmatmul.mubr.f32.gmra.mrb[0].mxu0 %v2430
      %v2975 = vpop.f32.mrb[0].mxu0
      %v2976 = vadd.f32 0.0, %v2975
      %v2977 = vpop.f32.mrb[0].mxu0
      %2978 = vmatprep.mubr.f32.mxu0 0.0
      %2979 = vmatmul.mubr.f32.gmra.mrb[0].mxu0 %v2433
      %v2980 = vpop.f32.mrb[0].mxu0
      %v2981 = vadd.f32 0.0, %v2980
      %v2982 = vpop.f32.mrb[0].mxu0
      %2983 = vmatprep.mubr.f32.mxu0 0.0
      %2984 = vmatmul.mubr.f32.gmra.mrb[0].mxu0 %v2436
      %v2985 = vpop.f32.mrb[0].mxu0
      %v2986 = vadd.f32 0.0, %v2985
      %v2987 = vpop.f32.mrb[0].mxu0
      %2988 = vmatprep.mubr.f32.mxu0 0.0
      %2989 = vmatmul.mubr.f32.gmra.mrb[0].mxu0 %v2439
      %v2990 = vpop.f32.mrb[0].mxu0
      %v2991 = vadd.f32 0.0, %v2990
      %v2992 = vpop.f32.mrb[0].mxu0
      %2993 = vmatprep.mubr.f32.mxu0 0.0
      %2994 = vmatmul.mubr.f32.gmra.mrb[0].mxu0 %v2442
      %v2995 = vpop.f32.mrb[0].mxu0
      %v2996 = vadd.f32 0.0, %v2995
      %v2997 = vpop.f32.mrb[0].mxu0
      %2998 = vmatprep.mubr.f32.mxu0 0.0
      %2999 = vmatmul.mubr.f32.gmra.mrb[0].mxu0 %v2445
      %v3000 = vpop.f32.mrb[0].mxu0
      %v3001 = vadd.f32 0.0, %v3000
      %v3002 = vpop.f32.mrb[0].mxu0
      %3003 = vmatprep.mubr.f32.mxu0 0.0
      %3004 = vmatmul.mubr.f32.gmra.mrb[0].mxu0 %v2448
      %v3005 = vpop.f32.mrb[0].mxu0
      %v3006 = vadd.f32 0.0, %v3005
      %v3007 = vpop.f32.mrb[0].mxu0
      %3008 = vmatprep.mubr.f32.mxu0 0.0
      %3009 = vmatmul.mubr.f32.gmra.mrb[0].mxu0 %v2451
      %v3010 = vpop.f32.mrb[0].mxu0
      %v3011 = vadd.f32 0.0, %v3010
      %v3012 = vpop.f32.mrb[0].mxu0
      %3013 = vmatprep.mubr.f32.mxu0 0.0
      %3014 = vmatmul.mubr.f32.gmra.mrb[0].mxu0 %v2454
      %v3015 = vpop.f32.mrb[0].mxu0
      %v3016 = vadd.f32 0.0, %v3015
      %v3017 = vpop.f32.mrb[0].mxu0
      %3018 = vmatprep.mubr.f32.mxu0 0.0
      %3019 = vmatmul.mubr.f32.gmra.mrb[0].mxu0 %v2457
      %v3020 = vpop.f32.mrb[0].mxu0
      %v3021 = vadd.f32 0.0, %v3020
      %v3022 = vpop.f32.mrb[0].mxu0
      %3023 = vmatprep.mubr.f32.mxu0 0.0
      %3024 = vmatmul.mubr.f32.gmra.mrb[0].mxu0 %v2460
      %v3025 = vpop.f32.mrb[0].mxu0
      %v3026 = vadd.f32 0.0, %v3025
      %v3027 = vpop.f32.mrb[0].mxu0
      %3028 = vmatprep.mubr.f32.mxu0 0.0
      %3029 = vmatmul.mubr.f32.gmra.mrb[0].mxu0 %v2463
      %v3030 = vpop.f32.mrb[0].mxu0
      %v3031 = vadd.f32 0.0, %v3030
      %v3032 = vpop.f32.mrb[0].mxu0
      %3033 = vmatprep.mubr.f32.mxu0 0.0
      %3034 = vmatmul.mubr.f32.gmra.mrb[0].mxu0 %v2466
      %v3035 = vpop.f32.mrb[0].mxu0
      %v3036 = vadd.f32 0.0, %v3035
      %v3037 = vpop.f32.mrb[0].mxu0
      %3038 = vmatprep.mubr.f32.mxu0 0.0
      %3039 = vmatmul.mubr.f32.gmra.mrb[0].mxu0 %v2469
      %v3040 = vpop.f32.mrb[0].mxu0
      %v3041 = vadd.f32 0.0, %v3040
      %v3042 = vpop.f32.mrb[0].mxu0
      %3043 = vmatprep.mubr.f32.mxu0 0.0
      %3044 = vmatmul.mubr.f32.gmra.mrb[0].mxu0 %v2472
      %v3045 = vpop.f32.mrb[0].mxu0
      %v3046 = vadd.f32 0.0, %v3045
      %v3047 = vpop.f32.mrb[0].mxu0
      %3048 = vmatprep.mubr.f32.mxu0 0.0
      %3049 = vmatmul.mubr.f32.gmra.mrb[0].mxu0 %v2475
      %v3050 = vpop.f32.mrb[0].mxu0
      %v3051 = vadd.f32 0.0, %v3050
      %v3052 = vpop.f32.mrb[0].mxu0
      %3053 = vmatprep.mubr.f32.mxu0 0.0
      %3054 = vmatmul.mubr.f32.gmra.mrb[0].mxu0 %v2478
      %v3055 = vpop.f32.mrb[0].mxu0
      %v3056 = vadd.f32 0.0, %v3055
      %v3057 = vpop.f32.mrb[0].mxu0
      %3058 = vmatprep.mubr.f32.mxu0 0.0
      %3059 = vmatmul.mubr.f32.gmra.mrb[0].mxu0 %v2481
      %v3060 = vpop.f32.mrb[0].mxu0
      %v3061 = vadd.f32 0.0, %v3060
      %v3062 = vpop.f32.mrb[0].mxu0
      %3063 = vmatprep.mubr.f32.mxu0 0.0
      %3064 = vmatmul.mubr.f32.gmra.mrb[0].mxu0 %v2484
      %v3065 = vpop.f32.mrb[0].mxu0
      %v3066 = vadd.f32 0.0, %v3065
      %v3067 = vpop.f32.mrb[0].mxu0
      %3068 = vmatprep.mubr.f32.mxu0 0.0
      %3069 = vmatmul.mubr.f32.gmra.mrb[0].mxu0 %v2487
      %v3070 = vpop.f32.mrb[0].mxu0
      %v3071 = vadd.f32 0.0, %v3070
      %v3072 = vpop.f32.mrb[0].mxu0
      %3073 = vmatprep.mubr.f32.mxu0 0.0
      %3074 = vmatmul.mubr.f32.gmra.mrb[0].mxu0 %v2490
      %v3075 = vpop.f32.mrb[0].mxu0
      %v3076 = vadd.f32 0.0, %v3075
      %v3077 = vpop.f32.mrb[0].mxu0
      %3078 = vmatprep.mubr.f32.mxu0 0.0
      %3079 = vmatmul.mubr.f32.gmra.mrb[0].mxu0 %v2493
      %v3080 = vpop.f32.mrb[0].mxu0
      %v3081 = vadd.f32 0.0, %v3080
      %v3082 = vpop.f32.mrb[0].mxu0
      %3083 = vmatprep.mubr.f32.mxu0 0.0
      %3084 = vmatmul.mubr.f32.gmra.mrb[0].mxu0 %v2496
      %v3085 = vpop.f32.mrb[0].mxu0
      %v3086 = vadd.f32 0.0, %v3085
      %v3087 = vpop.f32.mrb[0].mxu0
      %3088 = vmatprep.mubr.f32.mxu0 0.0
      %3089 = vmatmul.mubr.f32.gmra.mrb[0].mxu0 %v2499
      %v3090 = vpop.f32.mrb[0].mxu0
      %v3091 = vadd.f32 0.0, %v3090
      %v3092 = vpop.f32.mrb[0].mxu0
      %3093 = vmatprep.mubr.f32.mxu0 0.0
      %3094 = vmatmul.mubr.f32.gmra.mrb[0].mxu0 %v2502
      %v3095 = vpop.f32.mrb[0].mxu0
      %v3096 = vadd.f32 0.0, %v3095
      %v3097 = vpop.f32.mrb[0].mxu0
      %3098 = vmatprep.mubr.f32.mxu0 0.0
      %3099 = vmatmul.mubr.f32.gmra.mrb[0].mxu0 %v2505
      %v3100 = vpop.f32.mrb[0].mxu0
      %v3101 = vadd.f32 0.0, %v3100
      %v3102 = vpop.f32.mrb[0].mxu0
      %3103 = vmatprep.mubr.f32.mxu0 0.0
      %3104 = vmatmul.mubr.f32.gmra.mrb[0].mxu0 %v2508
      %v3105 = vpop.f32.mrb[0].mxu0
      %v3106 = vadd.f32 0.0, %v3105
      %v3107 = vpop.f32.mrb[0].mxu0
      %3108 = vmatprep.mubr.f32.mxu0 0.0
      %3109 = vmatmul.mubr.f32.gmra.mrb[0].mxu0 %v2511
      %v3110 = vpop.f32.mrb[0].mxu0
      %v3111 = vadd.f32 0.0, %v3110
      %v3112 = vpop.f32.mrb[0].mxu0
      %3113 = vmatprep.mubr.f32.mxu0 0.0
      %3114 = vmatmul.mubr.f32.gmra.mrb[0].mxu0 %v2514
      %v3115 = vpop.f32.mrb[0].mxu0
      %v3116 = vadd.f32 0.0, %v3115
      %v3117 = vpop.f32.mrb[0].mxu0
      %3118 = vmatprep.mubr.f32.mxu0 0.0
      %3119 = vmatmul.mubr.f32.gmra.mrb[0].mxu0 %v2517
      %v3120 = vpop.f32.mrb[0].mxu0
      %v3121 = vadd.f32 0.0, %v3120
      %v3122 = vpop.f32.mrb[0].mxu0
      %3123 = vmatprep.mubr.f32.mxu0 0.0
      %3124 = vmatmul.mubr.f32.gmra.mrb[0].mxu0 %v2520
      %v3125 = vpop.f32.mrb[0].mxu0
      %v3126 = vadd.f32 0.0, %v3125
      %v3127 = vpop.f32.mrb[0].mxu0
      %3128 = vmatprep.mubr.f32.mxu0 0.0
      %3129 = vmatmul.mubr.f32.gmra.mrb[0].mxu0 %v2523
      %v3130 = vpop.f32.mrb[0].mxu0
      %v3131 = vadd.f32 0.0, %v3130
      %v3132 = vpop.f32.mrb[0].mxu0
      %3133 = vmatprep.mubr.f32.mxu0 0.0
      %3134 = vmatmul.mubr.f32.gmra.mrb[0].mxu0 %v2526
      %v3135 = vpop.f32.mrb[0].mxu0
      %v3136 = vadd.f32 0.0, %v3135
      %v3137 = vpop.f32.mrb[0].mxu0
      %3138 = vmatprep.mubr.f32.mxu0 0.0
      %3139 = vmatmul.mubr.f32.gmra.mrb[0].mxu0 %v2529
      %v3140 = vpop.f32.mrb[0].mxu0
      %v3141 = vadd.f32 0.0, %v3140
      %v3142 = vpop.f32.mrb[0].mxu0
      %3143 = vmatprep.mubr.f32.mxu0 0.0
      %3144 = vmatmul.mubr.f32.gmra.mrb[0].mxu0 %v2532
      %v3145 = vpop.f32.mrb[0].mxu0
      %v3146 = vadd.f32 0.0, %v3145
      %v3147 = vpop.f32.mrb[0].mxu0
      %3148 = vmatprep.mubr.f32.mxu0 0.0
      %3149 = vmatmul.mubr.f32.gmra.mrb[0].mxu0 %v2535
      %v3150 = vpop.f32.mrb[0].mxu0
      %v3151 = vadd.f32 0.0, %v3150
      %v3152 = vpop.f32.mrb[0].mxu0
      %3153 = vmatprep.mubr.f32.mxu0 0.0
      %3154 = vmatmul.mubr.f32.gmra.mrb[0].mxu0 %v2538
      %v3155 = vpop.f32.mrb[0].mxu0
      %v3156 = vadd.f32 0.0, %v3155
      %v3157 = vpop.f32.mrb[0].mxu0
      %3158 = vmatprep.mubr.f32.mxu0 0.0
      %3159 = vmatmul.mubr.f32.gmra.mrb[0].mxu0 %v2541
      %v3160 = vpop.f32.mrb[0].mxu0
      %v3161 = vadd.f32 0.0, %v3160
      %v3162 = vpop.f32.mrb[0].mxu0
      %3163 = vmatprep.mubr.f32.mxu0 0.0
      %3164 = vmatmul.mubr.f32.gmra.mrb[0].mxu0 %v2544
      %v3165 = vpop.f32.mrb[0].mxu0
      %v3166 = vadd.f32 0.0, %v3165
      %v3167 = vpop.f32.mrb[0].mxu0
      %3168 = vmatprep.mubr.f32.mxu0 0.0
      %3169 = vmatmul.mubr.f32.gmra.mrb[0].mxu0 %v2547
      %v3170 = vpop.f32.mrb[0].mxu0
      %v3171 = vadd.f32 0.0, %v3170
      %v3172 = vpop.f32.mrb[0].mxu0
      %3173 = vmatprep.mubr.f32.mxu0 0.0
      %3174 = vmatmul.mubr.f32.gmra.mrb[0].mxu0 %v2550
      %v3175 = vpop.f32.mrb[0].mxu0
      %v3176 = vadd.f32 0.0, %v3175
      %v3177 = vpop.f32.mrb[0].mxu0
      %3178 = vmatprep.mubr.f32.mxu0 0.0
      %3179 = vmatmul.mubr.f32.gmra.mrb[0].mxu0 %v2553
      %v3180 = vpop.f32.mrb[0].mxu0
      %v3181 = vadd.f32 0.0, %v3180
      %v3182 = vpop.f32.mrb[0].mxu0
      %3183 = vmatprep.mubr.f32.mxu0 0.0
      %3184 = vmatmul.mubr.f32.gmra.mrb[0].mxu0 %v2556
      %v3185 = vpop.f32.mrb[0].mxu0
      %v3186 = vadd.f32 0.0, %v3185
      %v3187 = vpop.f32.mrb[0].mxu0
      %3188 = vmatprep.mubr.f32.mxu0 0.0
      %3189 = vmatmul.mubr.f32.gmra.mrb[0].mxu0 %v2559
      %v3190 = vpop.f32.mrb[0].mxu0
      %v3191 = vadd.f32 0.0, %v3190
      %v3192 = vpop.f32.mrb[0].mxu0
      %3193 = vmatprep.mubr.f32.mxu0 0.0
      %3194 = vmatmul.mubr.f32.gmra.mrb[0].mxu0 %v2562
      %v3195 = vpop.f32.mrb[0].mxu0
      %v3196 = vadd.f32 0.0, %v3195
      %v3197 = vpop.f32.mrb[0].mxu0
      %3198 = vmatprep.mubr.f32.mxu0 0.0
      %3199 = vmatmul.mubr.f32.gmra.mrb[0].mxu0 %v2565
      %v3200 = vpop.f32.mrb[0].mxu0
      %v3201 = vadd.f32 0.0, %v3200
      %v3202 = vpop.f32.mrb[0].mxu0
      %3203 = vmatprep.mubr.f32.mxu0 0.0
      %3204 = vmatmul.mubr.f32.gmra.mrb[0].mxu0 %v2568
      %v3205 = vpop.f32.mrb[0].mxu0
      %v3206 = vadd.f32 0.0, %v3205
      %v3207 = vpop.f32.mrb[0].mxu0
      %3208 = vmatprep.mubr.f32.mxu0 0.0
      %3209 = vmatmul.mubr.f32.gmra.mrb[0].mxu0 %v2571
      %v3210 = vpop.f32.mrb[0].mxu0
      %v3211 = vadd.f32 0.0, %v3210
      %v3212 = vpop.f32.mrb[0].mxu0
      %3213 = vmatprep.mubr.f32.mxu0 0.0
      %3214 = vmatmul.mubr.f32.gmra.mrb[0].mxu0 %v2574
      %v3215 = vpop.f32.mrb[0].mxu0
      %v3216 = vadd.f32 0.0, %v3215
      %v3217 = vpop.f32.mrb[0].mxu0
      %3218 = vmatprep.mubr.f32.mxu0 0.0
      %3219 = vmatmul.mubr.f32.gmra.mrb[0].mxu0 %v2577
      %v3220 = vpop.f32.mrb[0].mxu0
      %v3221 = vadd.f32 0.0, %v3220
      %v3222 = vpop.f32.mrb[0].mxu0
      %3223 = vmatprep.mubr.f32.mxu0 0.0
      %3224 = vmatmul.mubr.f32.gmra.mrb[0].mxu0 %v2580
      %v3225 = vpop.f32.mrb[0].mxu0
      %v3226 = vadd.f32 0.0, %v3225
      %v3227 = vpop.f32.mrb[0].mxu0
      %3228 = vmatprep.mubr.f32.mxu0 0.0
      %3229 = vmatmul.mubr.f32.gmra.mrb[0].mxu0 %v2583
      %v3230 = vpop.f32.mrb[0].mxu0
      %v3231 = vadd.f32 0.0, %v3230
      %v3232 = vpop.f32.mrb[0].mxu0
      %3233 = vmatprep.mubr.f32.mxu0 0.0
      %3234 = vmatmul.mubr.f32.gmra.mrb[0].mxu0 %v2586
      %v3235 = vpop.f32.mrb[0].mxu0
      %v3236 = vadd.f32 0.0, %v3235
      %v3237 = vpop.f32.mrb[0].mxu0
      %3238 = vmatprep.mubr.f32.mxu0 0.0
      %3239 = vmatmul.mubr.f32.gmra.mrb[0].mxu0 %v2589
      %v3240 = vpop.f32.mrb[0].mxu0
      %v3241 = vadd.f32 0.0, %v3240
      %v3242 = vpop.f32.mrb[0].mxu0
      %3243 = vmatprep.mubr.f32.mxu0 0.0
      %3244 = vmatmul.mubr.f32.gmra.mrb[0].mxu0 %v2592
      %v3245 = vpop.f32.mrb[0].mxu0
      %v3246 = vadd.f32 0.0, %v3245
      %v3247 = vpop.f32.mrb[0].mxu0
      %3248 = vmatprep.mubr.f32.mxu0 0.0
      %3249 = vmatmul.mubr.f32.gmra.mrb[0].mxu0 %v2595
      %v3250 = vpop.f32.mrb[0].mxu0
      %v3251 = vadd.f32 0.0, %v3250
      %v3252 = vpop.f32.mrb[0].mxu0
      %3253 = vmatprep.mubr.f32.mxu0 0.0
      %3254 = vmatmul.mubr.f32.gmra.mrb[0].mxu0 %v2598
      %v3255 = vpop.f32.mrb[0].mxu0
      %v3256 = vadd.f32 0.0, %v3255
      %v3257 = vpop.f32.mrb[0].mxu0
      %3258 = vmatprep.mubr.f32.mxu0 0.0
      %3259 = vmatmul.mubr.f32.gmra.mrb[0].mxu0 %v2601
      %v3260 = vpop.f32.mrb[0].mxu0
      %v3261 = vadd.f32 0.0, %v3260
      %v3262 = vpop.f32.mrb[0].mxu0
      %3263 = vmatprep.mubr.f32.mxu0 0.0
      %3264 = vmatmul.mubr.f32.gmra.mrb[0].mxu0 %v2604
      %v3265 = vpop.f32.mrb[0].mxu0
      %v3266 = vadd.f32 0.0, %v3265
      %v3267 = vpop.f32.mrb[0].mxu0
      %3268 = vmatprep.mubr.f32.mxu0 0.0
      %3269 = vmatmul.mubr.f32.gmra.mrb[0].mxu0 %v2607
      %v3270 = vpop.f32.mrb[0].mxu0
      %v3271 = vadd.f32 0.0, %v3270
      %v3272 = vpop.f32.mrb[0].mxu0
      %3273 = vmatprep.mubr.f32.mxu0 0.0
      %3274 = vmatmul.mubr.f32.gmra.mrb[0].mxu0 %v2610
      %v3275 = vpop.f32.mrb[0].mxu0
      %v3276 = vadd.f32 0.0, %v3275
      %v3277 = vpop.f32.mrb[0].mxu0
      %3278 = vmatprep.mubr.f32.mxu0 0.0
      %3279 = vmatmul.mubr.f32.gmra.mrb[0].mxu0 %v2613
      %v3280 = vpop.f32.mrb[0].mxu0
      %v3281 = vadd.f32 0.0, %v3280
      %v3282 = vpop.f32.mrb[0].mxu0
      %3283 = vmatprep.mubr.f32.mxu0 0.0
      %3284 = vmatmul.mubr.f32.gmra.mrb[0].mxu0 %v2616
      %v3285 = vpop.f32.mrb[0].mxu0
      %v3286 = vadd.f32 0.0, %v3285
      %v3287 = vpop.f32.mrb[0].mxu0
      %3288 = vmatprep.mubr.f32.mxu0 0.0
      %3289 = vmatmul.mubr.f32.gmra.mrb[0].mxu0 %v2619
      %v3290 = vpop.f32.mrb[0].mxu0
      %v3291 = vadd.f32 0.0, %v3290
      %v3292 = vpop.f32.mrb[0].mxu0
      %3293 = vmatprep.mubr.f32.mxu0 0.0
      %3294 = vmatmul.mubr.f32.gmra.mrb[0].mxu0 %v2622
      %v3295 = vpop.f32.mrb[0].mxu0
      %v3296 = vadd.f32 0.0, %v3295
      %v3297 = vpop.f32.mrb[0].mxu0
      %3298 = vmatprep.mubr.f32.mxu0 0.0
      %3299 = vmatmul.mubr.f32.gmra.mrb[0].mxu0 %v2625
      %v3300 = vpop.f32.mrb[0].mxu0
      %v3301 = vadd.f32 0.0, %v3300
      %v3302 = vpop.f32.mrb[0].mxu0
      %3303 = vmatprep.mubr.f32.mxu0 0.0
      %3304 = vmatmul.mubr.f32.gmra.mrb[0].mxu0 %v2628
      %v3305 = vpop.f32.mrb[0].mxu0
      %v3306 = vadd.f32 0.0, %v3305
      %v3307 = vpop.f32.mrb[0].mxu0
      %3308 = vmatprep.mubr.f32.mxu0 0.0
      %3309 = vmatmul.mubr.f32.gmra.mrb[0].mxu0 %v2631
      %v3310 = vpop.f32.mrb[0].mxu0
      %v3311 = vadd.f32 0.0, %v3310
      %v3312 = vpop.f32.mrb[0].mxu0
      %3313 = vmatprep.mubr.f32.mxu0 0.0
      %3314 = vmatmul.mubr.f32.gmra.mrb[0].mxu0 %v2634
      %v3315 = vpop.f32.mrb[0].mxu0
      %v3316 = vadd.f32 0.0, %v3315
      %v3317 = vpop.f32.mrb[0].mxu0
      %3318 = vmatprep.mubr.f32.mxu0 0.0
      %3319 = vmatmul.mubr.f32.gmra.mrb[0].mxu0 %v2637
      %v3320 = vpop.f32.mrb[0].mxu0
      %v3321 = vadd.f32 0.0, %v3320
      %v3322 = vpop.f32.mrb[0].mxu0
      %3323 = vmatprep.mubr.f32.mxu0 0.0
      %3324 = vmatmul.mubr.f32.gmra.mrb[0].mxu0 %v2640
      %v3325 = vpop.f32.mrb[0].mxu0
      %v3326 = vadd.f32 0.0, %v3325
      %v3327 = vpop.f32.mrb[0].mxu0
      %3328 = vmatprep.mubr.f32.mxu0 0.0
      %3329 = vmatmul.mubr.f32.gmra.mrb[0].mxu0 %v2643
      %v3330 = vpop.f32.mrb[0].mxu0
      %v3331 = vadd.f32 0.0, %v3330
      %v3332 = vpop.f32.mrb[0].mxu0
      %3333 = vmatprep.mubr.f32.mxu0 0.0
      %3334 = vmatmul.mubr.f32.gmra.mrb[0].mxu0 %v2646
      %v3335 = vpop.f32.mrb[0].mxu0
      %v3336 = vadd.f32 0.0, %v3335
      %v3337 = vpop.f32.mrb[0].mxu0
      %3338 = vmatprep.mubr.f32.mxu0 0.0
      %3339 = vmatmul.mubr.f32.gmra.mrb[0].mxu0 %v2649
      %v3340 = vpop.f32.mrb[0].mxu0
      %v3341 = vadd.f32 0.0, %v3340
      %v3342 = vpop.f32.mrb[0].mxu0
      %3343 = vmatprep.mubr.f32.mxu0 0.0
      %3344 = vmatmul.mubr.f32.gmra.mrb[0].mxu0 %v2652
      %v3345 = vpop.f32.mrb[0].mxu0
      %v3346 = vadd.f32 0.0, %v3345
      %v3347 = vpop.f32.mrb[0].mxu0
      %3348 = vmatprep.mubr.f32.mxu0 0.0
      %3349 = vmatmul.mubr.f32.gmra.mrb[0].mxu0 %v2655
      %v3350 = vpop.f32.mrb[0].mxu0
      %v3351 = vadd.f32 0.0, %v3350
      %v3352 = vpop.f32.mrb[0].mxu0
      %3353 = vmatprep.mubr.f32.mxu0 0.0
      %3354 = vmatmul.mubr.f32.gmra.mrb[0].mxu0 %v2658
      %v3355 = vpop.f32.mrb[0].mxu0
      %v3356 = vadd.f32 0.0, %v3355
      %v3357 = vpop.f32.mrb[0].mxu0
      %3358 = vmatprep.mubr.f32.mxu0 0.0
      %3359 = vmatmul.mubr.f32.gmra.mrb[0].mxu0 %v2661
      %v3360 = vpop.f32.mrb[0].mxu0
      %v3361 = vadd.f32 0.0, %v3360
      %v3362 = vpop.f32.mrb[0].mxu0
      %3363 = vmatprep.mubr.f32.mxu0 0.0
      %3364 = vmatmul.mubr.f32.gmra.mrb[0].mxu0 %v2664
      %v3365 = vpop.f32.mrb[0].mxu0
      %v3366 = vadd.f32 0.0, %v3365
      %v3367 = vpop.f32.mrb[0].mxu0
      %3368 = vmatprep.mubr.f32.mxu0 0.0
      %3369 = vmatmul.mubr.f32.gmra.mrb[0].mxu0 %v2667
      %v3370 = vpop.f32.mrb[0].mxu0
      %v3371 = vadd.f32 0.0, %v3370
      %v3372 = vpop.f32.mrb[0].mxu0
      %3373 = vdwg.mxu0
      %v3374 = vsel %vm899, %v2246, 0.0
      %v3375 = vsel %vm899, %v2251, 0.0
      %v3376 = vadd.f32 %v3374, %v3375
      %v3377 = vsel %vm899, %v2256, 0.0
      %v3378 = vadd.f32 %v3376, %v3377
      %v3379 = vsel %vm899, %v2261, 0.0
      %v3380 = vadd.f32 %v3378, %v3379
      %v3381 = vsel %vm899, %v2266, 0.0
      %v3382 = vadd.f32 %v3380, %v3381
      %v3383 = vsel %vm899, %v2271, 0.0
      %v3384 = vadd.f32 %v3382, %v3383
      %v3385 = vsel %vm899, %v2276, 0.0
      %v3386 = vadd.f32 %v3384, %v3385
      %v3387 = vsel %vm899, %v2281, 0.0
      %v3388 = vadd.f32 %v3386, %v3387
      %v3389 = vrot.slane %v3388, 4
      %v3390 = vadd.f32 %v3388, %v3389
      %v3391 = vrot.slane %v3390, 2
      %v3392 = vadd.f32 %v3390, %v3391
      %v3393 = vrot.slane %v3392, 1
      %v3394 = vadd.f32 %v3392, %v3393
      %v3395 = vmul.f32 %v2736, 0.4
      %v3396 = vmul.f32 %v2741, 0.4
      %v3397 = vmul.f32 %v2746, 0.4
      %v3398 = vmul.f32 %v2751, 0.4
      %v3399 = vmul.f32 %v2756, 0.4
      %v3400 = vmul.f32 %v2761, 0.4
      %v3401 = vmul.f32 %v2766, 0.4
      %v3402 = vmul.f32 %v2771, 0.4
      %v3403 = vmul.f32 %v2776, 0.4
      %v3404 = vmul.f32 %v2781, 0.4
      %v3405 = vmul.f32 %v2786, 0.4
      %v3406 = vmul.f32 %v2791, 0.4
      %v3407 = vmul.f32 %v2796, 0.4
      %v3408 = vmul.f32 %v2801, 0.4
      %v3409 = vmul.f32 %v2806, 0.4
      %v3410 = vmul.f32 %v2811, 0.4
      %v3411 = vmul.f32 %v2816, 0.4
      %v3412 = vmul.f32 %v2821, 0.4
      %v3413 = vmul.f32 %v2826, 0.4
      %v3414 = vmul.f32 %v2831, 0.4
      %v3415 = vmul.f32 %v2836, 0.4
      %v3416 = vmul.f32 %v2841, 0.4
      %v3417 = vmul.f32 %v2846, 0.4
      %v3418 = vmul.f32 %v2851, 0.4
      %v3419 = vmul.f32 %v2856, 0.4
      %v3420 = vmul.f32 %v2861, 0.4
      %v3421 = vmul.f32 %v2866, 0.4
      %v3422 = vmul.f32 %v2871, 0.4
      %v3423 = vmul.f32 %v2876, 0.4
      %v3424 = vmul.f32 %v2881, 0.4
      %v3425 = vmul.f32 %v2886, 0.4
      %v3426 = vmul.f32 %v2891, 0.4
      %v3427 = vmul.f32 %v2896, 0.4
      %v3428 = vmul.f32 %v2901, 0.4
      %v3429 = vmul.f32 %v2906, 0.4
      %v3430 = vmul.f32 %v2911, 0.4
      %v3431 = vmul.f32 %v2916, 0.4
      %v3432 = vmul.f32 %v2921, 0.4
      %v3433 = vmul.f32 %v2926, 0.4
      %v3434 = vmul.f32 %v2931, 0.4
      %v3435 = vmul.f32 %v2936, 0.4
      %v3436 = vmul.f32 %v2941, 0.4
      %v3437 = vmul.f32 %v2946, 0.4
      %v3438 = vmul.f32 %v2951, 0.4
      %v3439 = vmul.f32 %v2956, 0.4
      %v3440 = vmul.f32 %v2961, 0.4
      %v3441 = vmul.f32 %v2966, 0.4
      %v3442 = vmul.f32 %v2971, 0.4
      %v3443 = vmul.f32 %v2976, 0.4
      %v3444 = vmul.f32 %v2981, 0.4
      %v3445 = vmul.f32 %v2986, 0.4
      %v3446 = vmul.f32 %v2991, 0.4
      %v3447 = vmul.f32 %v2996, 0.4
      %v3448 = vmul.f32 %v3001, 0.4
      %v3449 = vmul.f32 %v3006, 0.4
      %v3450 = vmul.f32 %v3011, 0.4
      %v3451 = vmul.f32 %v3016, 0.4
      %v3452 = vmul.f32 %v3021, 0.4
      %v3453 = vmul.f32 %v3026, 0.4
      %v3454 = vmul.f32 %v3031, 0.4
      %v3455 = vmul.f32 %v3036, 0.4
      %v3456 = vmul.f32 %v3041, 0.4
      %v3457 = vmul.f32 %v3046, 0.4
      %v3458 = vmul.f32 %v3051, 0.4
      %v3459 = vmul.f32 %v3056, 0.4
      %v3460 = vmul.f32 %v3061, 0.4
      %v3461 = vmul.f32 %v3066, 0.4
      %v3462 = vmul.f32 %v3071, 0.4
      %v3463 = vmul.f32 %v3076, 0.4
      %v3464 = vmul.f32 %v3081, 0.4
      %v3465 = vmul.f32 %v3086, 0.4
      %v3466 = vmul.f32 %v3091, 0.4
      %v3467 = vmul.f32 %v3096, 0.4
      %v3468 = vmul.f32 %v3101, 0.4
      %v3469 = vmul.f32 %v3106, 0.4
      %v3470 = vmul.f32 %v3111, 0.4
      %v3471 = vmul.f32 %v3116, 0.4
      %v3472 = vmul.f32 %v3121, 0.4
      %v3473 = vmul.f32 %v3126, 0.4
      %v3474 = vmul.f32 %v3131, 0.4
      %v3475 = vmul.f32 %v3136, 0.4
      %v3476 = vmul.f32 %v3141, 0.4
      %v3477 = vmul.f32 %v3146, 0.4
      %v3478 = vmul.f32 %v3151, 0.4
      %v3479 = vmul.f32 %v3156, 0.4
      %v3480 = vmul.f32 %v3161, 0.4
      %v3481 = vmul.f32 %v3166, 0.4
      %v3482 = vmul.f32 %v3171, 0.4
      %v3483 = vmul.f32 %v3176, 0.4
      %v3484 = vmul.f32 %v3181, 0.4
      %v3485 = vmul.f32 %v3186, 0.4
      %v3486 = vmul.f32 %v3191, 0.4
      %v3487 = vmul.f32 %v3196, 0.4
      %v3488 = vmul.f32 %v3201, 0.4
      %v3489 = vmul.f32 %v3206, 0.4
      %v3490 = vmul.f32 %v3211, 0.4
      %v3491 = vmul.f32 %v3216, 0.4
      %v3492 = vmul.f32 %v3221, 0.4
      %v3493 = vmul.f32 %v3226, 0.4
      %v3494 = vmul.f32 %v3231, 0.4
      %v3495 = vmul.f32 %v3236, 0.4
      %v3496 = vmul.f32 %v3241, 0.4
      %v3497 = vmul.f32 %v3246, 0.4
      %v3498 = vmul.f32 %v3251, 0.4
      %v3499 = vmul.f32 %v3256, 0.4
      %v3500 = vmul.f32 %v3261, 0.4
      %v3501 = vmul.f32 %v3266, 0.4
      %v3502 = vmul.f32 %v3271, 0.4
      %v3503 = vmul.f32 %v3276, 0.4
      %v3504 = vmul.f32 %v3281, 0.4
      %v3505 = vmul.f32 %v3286, 0.4
      %v3506 = vmul.f32 %v3291, 0.4
      %v3507 = vmul.f32 %v3296, 0.4
      %v3508 = vmul.f32 %v3301, 0.4
      %v3509 = vmul.f32 %v3306, 0.4
      %v3510 = vmul.f32 %v3311, 0.4
      %v3511 = vmul.f32 %v3316, 0.4
      %v3512 = vmul.f32 %v3321, 0.4
      %v3513 = vmul.f32 %v3326, 0.4
      %v3514 = vmul.f32 %v3331, 0.4
      %v3515 = vmul.f32 %v3336, 0.4
      %v3516 = vmul.f32 %v3341, 0.4
      %v3517 = vmul.f32 %v3346, 0.4
      %v3518 = vmul.f32 %v3351, 0.4
      %v3519 = vmul.f32 %v3356, 0.4
      %v3520 = vmul.f32 %v3361, 0.4
      %v3521 = vmul.f32 %v3366, 0.4
      %v3522 = vmul.f32 %v3371, 0.4
      %v3523 = vsub.f32 %v1031, %v3395
      %v3524 = vsub.f32 %v1032, %v3396
      %v3525 = vsub.f32 %v1033, %v3397
      %v3526 = vsub.f32 %v1034, %v3398
      %v3527 = vsub.f32 %v1035, %v3399
      %v3528 = vsub.f32 %v1036, %v3400
      %v3529 = vsub.f32 %v1037, %v3401
      %v3530 = vsub.f32 %v1038, %v3402
      %v3531 = vsub.f32 %v1039, %v3403
      %v3532 = vsub.f32 %v1040, %v3404
      %v3533 = vsub.f32 %v1041, %v3405
      %v3534 = vsub.f32 %v1042, %v3406
      %v3535 = vsub.f32 %v1043, %v3407
      %v3536 = vsub.f32 %v1044, %v3408
      %v3537 = vsub.f32 %v1045, %v3409
      %v3538 = vsub.f32 %v1046, %v3410
      %v3539 = vsub.f32 %v1047, %v3411
      %v3540 = vsub.f32 %v1048, %v3412
      %v3541 = vsub.f32 %v1049, %v3413
      %v3542 = vsub.f32 %v1050, %v3414
      %v3543 = vsub.f32 %v1051, %v3415
      %v3544 = vsub.f32 %v1052, %v3416
      %v3545 = vsub.f32 %v1053, %v3417
      %v3546 = vsub.f32 %v1054, %v3418
      %v3547 = vsub.f32 %v1055, %v3419
      %v3548 = vsub.f32 %v1056, %v3420
      %v3549 = vsub.f32 %v1057, %v3421
      %v3550 = vsub.f32 %v1058, %v3422
      %v3551 = vsub.f32 %v1059, %v3423
      %v3552 = vsub.f32 %v1060, %v3424
      %v3553 = vsub.f32 %v1061, %v3425
      %v3554 = vsub.f32 %v1062, %v3426
      %v3555 = vsub.f32 %v1063, %v3427
      %v3556 = vsub.f32 %v1064, %v3428
      %v3557 = vsub.f32 %v1065, %v3429
      %v3558 = vsub.f32 %v1066, %v3430
      %v3559 = vsub.f32 %v1067, %v3431
      %v3560 = vsub.f32 %v1068, %v3432
      %v3561 = vsub.f32 %v1069, %v3433
      %v3562 = vsub.f32 %v1070, %v3434
      %v3563 = vsub.f32 %v1071, %v3435
      %v3564 = vsub.f32 %v1072, %v3436
      %v3565 = vsub.f32 %v1073, %v3437
      %v3566 = vsub.f32 %v1074, %v3438
      %v3567 = vsub.f32 %v1075, %v3439
      %v3568 = vsub.f32 %v1076, %v3440
      %v3569 = vsub.f32 %v1077, %v3441
      %v3570 = vsub.f32 %v1078, %v3442
      %v3571 = vsub.f32 %v1079, %v3443
      %v3572 = vsub.f32 %v1080, %v3444
      %v3573 = vsub.f32 %v1081, %v3445
      %v3574 = vsub.f32 %v1082, %v3446
      %v3575 = vsub.f32 %v1083, %v3447
      %v3576 = vsub.f32 %v1084, %v3448
      %v3577 = vsub.f32 %v1085, %v3449
      %v3578 = vsub.f32 %v1086, %v3450
      %v3579 = vsub.f32 %v1087, %v3451
      %v3580 = vsub.f32 %v1088, %v3452
      %v3581 = vsub.f32 %v1089, %v3453
      %v3582 = vsub.f32 %v1090, %v3454
      %v3583 = vsub.f32 %v1091, %v3455
      %v3584 = vsub.f32 %v1092, %v3456
      %v3585 = vsub.f32 %v1093, %v3457
      %v3586 = vsub.f32 %v1094, %v3458
      %v3587 = vsub.f32 %v1095, %v3459
      %v3588 = vsub.f32 %v1096, %v3460
      %v3589 = vsub.f32 %v1097, %v3461
      %v3590 = vsub.f32 %v1098, %v3462
      %v3591 = vsub.f32 %v1099, %v3463
      %v3592 = vsub.f32 %v1100, %v3464
      %v3593 = vsub.f32 %v1101, %v3465
      %v3594 = vsub.f32 %v1102, %v3466
      %v3595 = vsub.f32 %v1103, %v3467
      %v3596 = vsub.f32 %v1104, %v3468
      %v3597 = vsub.f32 %v1105, %v3469
      %v3598 = vsub.f32 %v1106, %v3470
      %v3599 = vsub.f32 %v1107, %v3471
      %v3600 = vsub.f32 %v1108, %v3472
      %v3601 = vsub.f32 %v1109, %v3473
      %v3602 = vsub.f32 %v1110, %v3474
      %v3603 = vsub.f32 %v1111, %v3475
      %v3604 = vsub.f32 %v1112, %v3476
      %v3605 = vsub.f32 %v1113, %v3477
      %v3606 = vsub.f32 %v1114, %v3478
      %v3607 = vsub.f32 %v1115, %v3479
      %v3608 = vsub.f32 %v1116, %v3480
      %v3609 = vsub.f32 %v1117, %v3481
      %v3610 = vsub.f32 %v1118, %v3482
      %v3611 = vsub.f32 %v1119, %v3483
      %v3612 = vsub.f32 %v1120, %v3484
      %v3613 = vsub.f32 %v1121, %v3485
      %v3614 = vsub.f32 %v1122, %v3486
      %v3615 = vsub.f32 %v1123, %v3487
      %v3616 = vsub.f32 %v1124, %v3488
      %v3617 = vsub.f32 %v1125, %v3489
      %v3618 = vsub.f32 %v1126, %v3490
      %v3619 = vsub.f32 %v1127, %v3491
      %v3620 = vsub.f32 %v1128, %v3492
      %v3621 = vsub.f32 %v1129, %v3493
      %v3622 = vsub.f32 %v1130, %v3494
      %v3623 = vsub.f32 %v1131, %v3495
      %v3624 = vsub.f32 %v1132, %v3496
      %v3625 = vsub.f32 %v1133, %v3497
      %v3626 = vsub.f32 %v1134, %v3498
      %v3627 = vsub.f32 %v1135, %v3499
      %v3628 = vsub.f32 %v1136, %v3500
      %v3629 = vsub.f32 %v1137, %v3501
      %v3630 = vsub.f32 %v1138, %v3502
      %v3631 = vsub.f32 %v1139, %v3503
      %v3632 = vsub.f32 %v1140, %v3504
      %v3633 = vsub.f32 %v1141, %v3505
      %v3634 = vsub.f32 %v1142, %v3506
      %v3635 = vsub.f32 %v1143, %v3507
      %v3636 = vsub.f32 %v1144, %v3508
      %v3637 = vsub.f32 %v1145, %v3509
      %v3638 = vsub.f32 %v1146, %v3510
      %v3639 = vsub.f32 %v1147, %v3511
      %v3640 = vsub.f32 %v1148, %v3512
      %v3641 = vsub.f32 %v1149, %v3513
      %v3642 = vsub.f32 %v1150, %v3514
      %v3643 = vsub.f32 %v1151, %v3515
      %v3644 = vsub.f32 %v1152, %v3516
      %v3645 = vsub.f32 %v1153, %v3517
      %v3646 = vsub.f32 %v1154, %v3518
      %v3647 = vsub.f32 %v1155, %v3519
      %v3648 = vsub.f32 %v1156, %v3520
      %v3649 = vsub.f32 %v1157, %v3521
      %v3650 = vsub.f32 %v1158, %v3522
      %3651 = vst.msk [vmem:[#allocation2] sm:$0xff] %vm899, %v3523
      %3652 = vst.msk [vmem:[#allocation2 + $0x8] sm:$0xff] %vm899, %v3524
      %3653 = vst.msk [vmem:[#allocation2 + $0x10] sm:$0xff] %vm899, %v3525
      %3654 = vst.msk [vmem:[#allocation2 + $0x18] sm:$0xff] %vm899, %v3526
      %3655 = vst.msk [vmem:[#allocation2 + $0x20] sm:$0xff] %vm899, %v3527
      %3656 = vst.msk [vmem:[#allocation2 + $0x28] sm:$0xff] %vm899, %v3528
      %3657 = vst.msk [vmem:[#allocation2 + $0x30] sm:$0xff] %vm899, %v3529
      %3658 = vst.msk [vmem:[#allocation2 + $0x38] sm:$0xff] %vm899, %v3530
      %3659 = vst.msk [vmem:[#allocation2 + $0x40] sm:$0xff] %vm899, %v3531
      %3660 = vst.msk [vmem:[#allocation2 + $0x48] sm:$0xff] %vm899, %v3532
      %3661 = vst.msk [vmem:[#allocation2 + $0x50] sm:$0xff] %vm899, %v3533
      %3662 = vst.msk [vmem:[#allocation2 + $0x58] sm:$0xff] %vm899, %v3534
      %3663 = vst.msk [vmem:[#allocation2 + $0x60] sm:$0xff] %vm899, %v3535
      %3664 = vst.msk [vmem:[#allocation2 + $0x68] sm:$0xff] %vm899, %v3536
      %3665 = vst.msk [vmem:[#allocation2 + $0x70] sm:$0xff] %vm899, %v3537
      %3666 = vst.msk [vmem:[#allocation2 + $0x78] sm:$0xff] %vm899, %v3538
      %3667 = vst.msk [vmem:[#allocation2 + $0x80] sm:$0xff] %vm899, %v3539
      %3668 = vst.msk [vmem:[#allocation2 + $0x88] sm:$0xff] %vm899, %v3540
      %3669 = vst.msk [vmem:[#allocation2 + $0x90] sm:$0xff] %vm899, %v3541
      %3670 = vst.msk [vmem:[#allocation2 + $0x98] sm:$0xff] %vm899, %v3542
      %3671 = vst.msk [vmem:[#allocation2 + $0xa0] sm:$0xff] %vm899, %v3543
      %3672 = vst.msk [vmem:[#allocation2 + $0xa8] sm:$0xff] %vm899, %v3544
      %3673 = vst.msk [vmem:[#allocation2 + $0xb0] sm:$0xff] %vm899, %v3545
      %3674 = vst.msk [vmem:[#allocation2 + $0xb8] sm:$0xff] %vm899, %v3546
      %3675 = vst.msk [vmem:[#allocation2 + $0xc0] sm:$0xff] %vm899, %v3547
      %3676 = vst.msk [vmem:[#allocation2 + $0xc8] sm:$0xff] %vm899, %v3548
      %3677 = vst.msk [vmem:[#allocation2 + $0xd0] sm:$0xff] %vm899, %v3549
      %3678 = vst.msk [vmem:[#allocation2 + $0xd8] sm:$0xff] %vm899, %v3550
      %3679 = vst.msk [vmem:[#allocation2 + $0xe0] sm:$0xff] %vm899, %v3551
      %3680 = vst.msk [vmem:[#allocation2 + $0xe8] sm:$0xff] %vm899, %v3552
      %3681 = vst.msk [vmem:[#allocation2 + $0xf0] sm:$0xff] %vm899, %v3553
      %3682 = vst.msk [vmem:[#allocation2 + $0xf8] sm:$0xff] %vm899, %v3554
      %3683 = vst.msk [vmem:[#allocation2 + $0x100] sm:$0xff] %vm899, %v3555
      %3684 = vst.msk [vmem:[#allocation2 + $0x108] sm:$0xff] %vm899, %v3556
      %3685 = vst.msk [vmem:[#allocation2 + $0x110] sm:$0xff] %vm899, %v3557
      %3686 = vst.msk [vmem:[#allocation2 + $0x118] sm:$0xff] %vm899, %v3558
      %3687 = vst.msk [vmem:[#allocation2 + $0x120] sm:$0xff] %vm899, %v3559
      %3688 = vst.msk [vmem:[#allocation2 + $0x128] sm:$0xff] %vm899, %v3560
      %3689 = vst.msk [vmem:[#allocation2 + $0x130] sm:$0xff] %vm899, %v3561
      %3690 = vst.msk [vmem:[#allocation2 + $0x138] sm:$0xff] %vm899, %v3562
      %3691 = vst.msk [vmem:[#allocation2 + $0x140] sm:$0xff] %vm899, %v3563
      %3692 = vst.msk [vmem:[#allocation2 + $0x148] sm:$0xff] %vm899, %v3564
      %3693 = vst.msk [vmem:[#allocation2 + $0x150] sm:$0xff] %vm899, %v3565
      %3694 = vst.msk [vmem:[#allocation2 + $0x158] sm:$0xff] %vm899, %v3566
      %3695 = vst.msk [vmem:[#allocation2 + $0x160] sm:$0xff] %vm899, %v3567
      %3696 = vst.msk [vmem:[#allocation2 + $0x168] sm:$0xff] %vm899, %v3568
      %3697 = vst.msk [vmem:[#allocation2 + $0x170] sm:$0xff] %vm899, %v3569
      %3698 = vst.msk [vmem:[#allocation2 + $0x178] sm:$0xff] %vm899, %v3570
      %3699 = vst.msk [vmem:[#allocation2 + $0x180] sm:$0xff] %vm899, %v3571
      %3700 = vst.msk [vmem:[#allocation2 + $0x188] sm:$0xff] %vm899, %v3572
      %3701 = vst.msk [vmem:[#allocation2 + $0x190] sm:$0xff] %vm899, %v3573
      %3702 = vst.msk [vmem:[#allocation2 + $0x198] sm:$0xff] %vm899, %v3574
      %3703 = vst.msk [vmem:[#allocation2 + $0x1a0] sm:$0xff] %vm899, %v3575
      %3704 = vst.msk [vmem:[#allocation2 + $0x1a8] sm:$0xff] %vm899, %v3576
      %3705 = vst.msk [vmem:[#allocation2 + $0x1b0] sm:$0xff] %vm899, %v3577
      %3706 = vst.msk [vmem:[#allocation2 + $0x1b8] sm:$0xff] %vm899, %v3578
      %3707 = vst.msk [vmem:[#allocation2 + $0x1c0] sm:$0xff] %vm899, %v3579
      %3708 = vst.msk [vmem:[#allocation2 + $0x1c8] sm:$0xff] %vm899, %v3580
      %3709 = vst.msk [vmem:[#allocation2 + $0x1d0] sm:$0xff] %vm899, %v3581
      %3710 = vst.msk [vmem:[#allocation2 + $0x1d8] sm:$0xff] %vm899, %v3582
      %3711 = vst.msk [vmem:[#allocation2 + $0x1e0] sm:$0xff] %vm899, %v3583
      %3712 = vst.msk [vmem:[#allocation2 + $0x1e8] sm:$0xff] %vm899, %v3584
      %3713 = vst.msk [vmem:[#allocation2 + $0x1f0] sm:$0xff] %vm899, %v3585
      %3714 = vst.msk [vmem:[#allocation2 + $0x1f8] sm:$0xff] %vm899, %v3586
      %3715 = vst.msk [vmem:[#allocation2 + $0x200] sm:$0xff] %vm899, %v3587
      %3716 = vst.msk [vmem:[#allocation2 + $0x208] sm:$0xff] %vm899, %v3588
      %3717 = vst.msk [vmem:[#allocation2 + $0x210] sm:$0xff] %vm899, %v3589
      %3718 = vst.msk [vmem:[#allocation2 + $0x218] sm:$0xff] %vm899, %v3590
      %3719 = vst.msk [vmem:[#allocation2 + $0x220] sm:$0xff] %vm899, %v3591
      %3720 = vst.msk [vmem:[#allocation2 + $0x228] sm:$0xff] %vm899, %v3592
      %3721 = vst.msk [vmem:[#allocation2 + $0x230] sm:$0xff] %vm899, %v3593
      %3722 = vst.msk [vmem:[#allocation2 + $0x238] sm:$0xff] %vm899, %v3594
      %3723 = vst.msk [vmem:[#allocation2 + $0x240] sm:$0xff] %vm899, %v3595
      %3724 = vst.msk [vmem:[#allocation2 + $0x248] sm:$0xff] %vm899, %v3596
      %3725 = vst.msk [vmem:[#allocation2 + $0x250] sm:$0xff] %vm899, %v3597
      %3726 = vst.msk [vmem:[#allocation2 + $0x258] sm:$0xff] %vm899, %v3598
      %3727 = vst.msk [vmem:[#allocation2 + $0x260] sm:$0xff] %vm899, %v3599
      %3728 = vst.msk [vmem:[#allocation2 + $0x268] sm:$0xff] %vm899, %v3600
      %3729 = vst.msk [vmem:[#allocation2 + $0x270] sm:$0xff] %vm899, %v3601
      %3730 = vst.msk [vmem:[#allocation2 + $0x278] sm:$0xff] %vm899, %v3602
      %3731 = vst.msk [vmem:[#allocation2 + $0x280] sm:$0xff] %vm899, %v3603
      %3732 = vst.msk [vmem:[#allocation2 + $0x288] sm:$0xff] %vm899, %v3604
      %3733 = vst.msk [vmem:[#allocation2 + $0x290] sm:$0xff] %vm899, %v3605
      %3734 = vst.msk [vmem:[#allocation2 + $0x298] sm:$0xff] %vm899, %v3606
      %3735 = vst.msk [vmem:[#allocation2 + $0x2a0] sm:$0xff] %vm899, %v3607
      %3736 = vst.msk [vmem:[#allocation2 + $0x2a8] sm:$0xff] %vm899, %v3608
      %3737 = vst.msk [vmem:[#allocation2 + $0x2b0] sm:$0xff] %vm899, %v3609
      %3738 = vst.msk [vmem:[#allocation2 + $0x2b8] sm:$0xff] %vm899, %v3610
      %3739 = vst.msk [vmem:[#allocation2 + $0x2c0] sm:$0xff] %vm899, %v3611
      %3740 = vst.msk [vmem:[#allocation2 + $0x2c8] sm:$0xff] %vm899, %v3612
      %3741 = vst.msk [vmem:[#allocation2 + $0x2d0] sm:$0xff] %vm899, %v3613
      %3742 = vst.msk [vmem:[#allocation2 + $0x2d8] sm:$0xff] %vm899, %v3614
      %3743 = vst.msk [vmem:[#allocation2 + $0x2e0] sm:$0xff] %vm899, %v3615
      %3744 = vst.msk [vmem:[#allocation2 + $0x2e8] sm:$0xff] %vm899, %v3616
      %3745 = vst.msk [vmem:[#allocation2 + $0x2f0] sm:$0xff] %vm899, %v3617
      %3746 = vst.msk [vmem:[#allocation2 + $0x2f8] sm:$0xff] %vm899, %v3618
      %3747 = vst.msk [vmem:[#allocation2 + $0x300] sm:$0xff] %vm899, %v3619
      %3748 = vst.msk [vmem:[#allocation2 + $0x308] sm:$0xff] %vm899, %v3620
      %3749 = vst.msk [vmem:[#allocation2 + $0x310] sm:$0xff] %vm899, %v3621
      %3750 = vst.msk [vmem:[#allocation2 + $0x318] sm:$0xff] %vm899, %v3622
      %3751 = vst.msk [vmem:[#allocation2 + $0x320] sm:$0xff] %vm899, %v3623
      %3752 = vst.msk [vmem:[#allocation2 + $0x328] sm:$0xff] %vm899, %v3624
      %3753 = vst.msk [vmem:[#allocation2 + $0x330] sm:$0xff] %vm899, %v3625
      %3754 = vst.msk [vmem:[#allocation2 + $0x338] sm:$0xff] %vm899, %v3626
      %3755 = vst.msk [vmem:[#allocation2 + $0x340] sm:$0xff] %vm899, %v3627
      %3756 = vst.msk [vmem:[#allocation2 + $0x348] sm:$0xff] %vm899, %v3628
      %3757 = vst.msk [vmem:[#allocation2 + $0x350] sm:$0xff] %vm899, %v3629
      %3758 = vst.msk [vmem:[#allocation2 + $0x358] sm:$0xff] %vm899, %v3630
      %3759 = vst.msk [vmem:[#allocation2 + $0x360] sm:$0xff] %vm899, %v3631
      %3760 = vst.msk [vmem:[#allocation2 + $0x368] sm:$0xff] %vm899, %v3632
      %3761 = vst.msk [vmem:[#allocation2 + $0x370] sm:$0xff] %vm899, %v3633
      %3762 = vst.msk [vmem:[#allocation2 + $0x378] sm:$0xff] %vm899, %v3634
      %3763 = vst.msk [vmem:[#allocation2 + $0x380] sm:$0xff] %vm899, %v3635
      %3764 = vst.msk [vmem:[#allocation2 + $0x388] sm:$0xff] %vm899, %v3636
      %3765 = vst.msk [vmem:[#allocation2 + $0x390] sm:$0xff] %vm899, %v3637
      %3766 = vst.msk [vmem:[#allocation2 + $0x398] sm:$0xff] %vm899, %v3638
      %3767 = vst.msk [vmem:[#allocation2 + $0x3a0] sm:$0xff] %vm899, %v3639
      %3768 = vst.msk [vmem:[#allocation2 + $0x3a8] sm:$0xff] %vm899, %v3640
      %3769 = vst.msk [vmem:[#allocation2 + $0x3b0] sm:$0xff] %vm899, %v3641
      %3770 = vst.msk [vmem:[#allocation2 + $0x3b8] sm:$0xff] %vm899, %v3642
      %3771 = vst.msk [vmem:[#allocation2 + $0x3c0] sm:$0xff] %vm899, %v3643
      %3772 = vst.msk [vmem:[#allocation2 + $0x3c8] sm:$0xff] %vm899, %v3644
      %3773 = vst.msk [vmem:[#allocation2 + $0x3d0] sm:$0xff] %vm899, %v3645
      %3774 = vst.msk [vmem:[#allocation2 + $0x3d8] sm:$0xff] %vm899, %v3646
      %3775 = vst.msk [vmem:[#allocation2 + $0x3e0] sm:$0xff] %vm899, %v3647
      %3776 = vst.msk [vmem:[#allocation2 + $0x3e8] sm:$0xff] %vm899, %v3648
      %3777 = vst.msk [vmem:[#allocation2 + $0x3f0] sm:$0xff] %vm899, %v3649
      %3778 = vst.msk [vmem:[#allocation2 + $0x3f8] sm:$0xff] %vm899, %v3650
      %v3779 = vmul.f32 %v3394, 0.4
      %v3780 = vsub.f32 %v1159, %v3779
      %3781 = vst.msk [vmem:[#allocation3] sm:$0x1] %vm1029, %v3780
      %v3782 = vld [vmem:[#allocation2] sm:$0xff]
      %v3783 = vld [vmem:[#allocation2 + $0x8] sm:$0xff]
      %v3784 = vld [vmem:[#allocation2 + $0x10] sm:$0xff]
      %v3785 = vld [vmem:[#allocation2 + $0x18] sm:$0xff]
      %v3786 = vld [vmem:[#allocation2 + $0x20] sm:$0xff]
      %v3787 = vld [vmem:[#allocation2 + $0x28] sm:$0xff]
      %v3788 = vld [vmem:[#allocation2 + $0x30] sm:$0xff]
      %v3789 = vld [vmem:[#allocation2 + $0x38] sm:$0xff]
      %v3790 = vld [vmem:[#allocation2 + $0x40] sm:$0xff]
      %v3791 = vld [vmem:[#allocation2 + $0x48] sm:$0xff]
      %v3792 = vld [vmem:[#allocation2 + $0x50] sm:$0xff]
      %v3793 = vld [vmem:[#allocation2 + $0x58] sm:$0xff]
      %v3794 = vld [vmem:[#allocation2 + $0x60] sm:$0xff]
      %v3795 = vld [vmem:[#allocation2 + $0x68] sm:$0xff]
      %v3796 = vld [vmem:[#allocation2 + $0x70] sm:$0xff]
      %v3797 = vld [vmem:[#allocation2 + $0x78] sm:$0xff]
      %v3798 = vld [vmem:[#allocation2 + $0x80] sm:$0xff]
      %v3799 = vld [vmem:[#allocation2 + $0x88] sm:$0xff]
      %v3800 = vld [vmem:[#allocation2 + $0x90] sm:$0xff]
      %v3801 = vld [vmem:[#allocation2 + $0x98] sm:$0xff]
      %v3802 = vld [vmem:[#allocation2 + $0xa0] sm:$0xff]
      %v3803 = vld [vmem:[#allocation2 + $0xa8] sm:$0xff]
      %v3804 = vld [vmem:[#allocation2 + $0xb0] sm:$0xff]
      %v3805 = vld [vmem:[#allocation2 + $0xb8] sm:$0xff]
      %v3806 = vld [vmem:[#allocation2 + $0xc0] sm:$0xff]
      %v3807 = vld [vmem:[#allocation2 + $0xc8] sm:$0xff]
      %v3808 = vld [vmem:[#allocation2 + $0xd0] sm:$0xff]
      %v3809 = vld [vmem:[#allocation2 + $0xd8] sm:$0xff]
      %v3810 = vld [vmem:[#allocation2 + $0xe0] sm:$0xff]
      %v3811 = vld [vmem:[#allocation2 + $0xe8] sm:$0xff]
      %v3812 = vld [vmem:[#allocation2 + $0xf0] sm:$0xff]
      %v3813 = vld [vmem:[#allocation2 + $0xf8] sm:$0xff]
      %v3814 = vld [vmem:[#allocation2 + $0x100] sm:$0xff]
      %v3815 = vld [vmem:[#allocation2 + $0x108] sm:$0xff]
      %v3816 = vld [vmem:[#allocation2 + $0x110] sm:$0xff]
      %v3817 = vld [vmem:[#allocation2 + $0x118] sm:$0xff]
      %v3818 = vld [vmem:[#allocation2 + $0x120] sm:$0xff]
      %v3819 = vld [vmem:[#allocation2 + $0x128] sm:$0xff]
      %v3820 = vld [vmem:[#allocation2 + $0x130] sm:$0xff]
      %v3821 = vld [vmem:[#allocation2 + $0x138] sm:$0xff]
      %v3822 = vld [vmem:[#allocation2 + $0x140] sm:$0xff]
      %v3823 = vld [vmem:[#allocation2 + $0x148] sm:$0xff]
      %v3824 = vld [vmem:[#allocation2 + $0x150] sm:$0xff]
      %v3825 = vld [vmem:[#allocation2 + $0x158] sm:$0xff]
      %v3826 = vld [vmem:[#allocation2 + $0x160] sm:$0xff]
      %v3827 = vld [vmem:[#allocation2 + $0x168] sm:$0xff]
      %v3828 = vld [vmem:[#allocation2 + $0x170] sm:$0xff]
      %v3829 = vld [vmem:[#allocation2 + $0x178] sm:$0xff]
      %v3830 = vld [vmem:[#allocation2 + $0x180] sm:$0xff]
      %v3831 = vld [vmem:[#allocation2 + $0x188] sm:$0xff]
      %v3832 = vld [vmem:[#allocation2 + $0x190] sm:$0xff]
      %v3833 = vld [vmem:[#allocation2 + $0x198] sm:$0xff]
      %v3834 = vld [vmem:[#allocation2 + $0x1a0] sm:$0xff]
      %v3835 = vld [vmem:[#allocation2 + $0x1a8] sm:$0xff]
      %v3836 = vld [vmem:[#allocation2 + $0x1b0] sm:$0xff]
      %v3837 = vld [vmem:[#allocation2 + $0x1b8] sm:$0xff]
      %v3838 = vld [vmem:[#allocation2 + $0x1c0] sm:$0xff]
      %v3839 = vld [vmem:[#allocation2 + $0x1c8] sm:$0xff]
      %v3840 = vld [vmem:[#allocation2 + $0x1d0] sm:$0xff]
      %v3841 = vld [vmem:[#allocation2 + $0x1d8] sm:$0xff]
      %v3842 = vld [vmem:[#allocation2 + $0x1e0] sm:$0xff]
      %v3843 = vld [vmem:[#allocation2 + $0x1e8] sm:$0xff]
      %v3844 = vld [vmem:[#allocation2 + $0x1f0] sm:$0xff]
      %v3845 = vld [vmem:[#allocation2 + $0x1f8] sm:$0xff]
      %v3846 = vld [vmem:[#allocation2 + $0x200] sm:$0xff]
      %v3847 = vld [vmem:[#allocation2 + $0x208] sm:$0xff]
      %v3848 = vld [vmem:[#allocation2 + $0x210] sm:$0xff]
      %v3849 = vld [vmem:[#allocation2 + $0x218] sm:$0xff]
      %v3850 = vld [vmem:[#allocation2 + $0x220] sm:$0xff]
      %v3851 = vld [vmem:[#allocation2 + $0x228] sm:$0xff]
      %v3852 = vld [vmem:[#allocation2 + $0x230] sm:$0xff]
      %v3853 = vld [vmem:[#allocation2 + $0x238] sm:$0xff]
      %v3854 = vld [vmem:[#allocation2 + $0x240] sm:$0xff]
      %v3855 = vld [vmem:[#allocation2 + $0x248] sm:$0xff]
      %v3856 = vld [vmem:[#allocation2 + $0x250] sm:$0xff]
      %v3857 = vld [vmem:[#allocation2 + $0x258] sm:$0xff]
      %v3858 = vld [vmem:[#allocation2 + $0x260] sm:$0xff]
      %v3859 = vld [vmem:[#allocation2 + $0x268] sm:$0xff]
      %v3860 = vld [vmem:[#allocation2 + $0x270] sm:$0xff]
      %v3861 = vld [vmem:[#allocation2 + $0x278] sm:$0xff]
      %v3862 = vld [vmem:[#allocation2 + $0x280] sm:$0xff]
      %v3863 = vld [vmem:[#allocation2 + $0x288] sm:$0xff]
      %v3864 = vld [vmem:[#allocation2 + $0x290] sm:$0xff]
      %v3865 = vld [vmem:[#allocation2 + $0x298] sm:$0xff]
      %v3866 = vld [vmem:[#allocation2 + $0x2a0] sm:$0xff]
      %v3867 = vld [vmem:[#allocation2 + $0x2a8] sm:$0xff]
      %v3868 = vld [vmem:[#allocation2 + $0x2b0] sm:$0xff]
      %v3869 = vld [vmem:[#allocation2 + $0x2b8] sm:$0xff]
      %v3870 = vld [vmem:[#allocation2 + $0x2c0] sm:$0xff]
      %v3871 = vld [vmem:[#allocation2 + $0x2c8] sm:$0xff]
      %v3872 = vld [vmem:[#allocation2 + $0x2d0] sm:$0xff]
      %v3873 = vld [vmem:[#allocation2 + $0x2d8] sm:$0xff]
      %v3874 = vld [vmem:[#allocation2 + $0x2e0] sm:$0xff]
      %v3875 = vld [vmem:[#allocation2 + $0x2e8] sm:$0xff]
      %v3876 = vld [vmem:[#allocation2 + $0x2f0] sm:$0xff]
      %v3877 = vld [vmem:[#allocation2 + $0x2f8] sm:$0xff]
      %v3878 = vld [vmem:[#allocation2 + $0x300] sm:$0xff]
      %v3879 = vld [vmem:[#allocation2 + $0x308] sm:$0xff]
      %v3880 = vld [vmem:[#allocation2 + $0x310] sm:$0xff]
      %v3881 = vld [vmem:[#allocation2 + $0x318] sm:$0xff]
      %v3882 = vld [vmem:[#allocation2 + $0x320] sm:$0xff]
      %v3883 = vld [vmem:[#allocation2 + $0x328] sm:$0xff]
      %v3884 = vld [vmem:[#allocation2 + $0x330] sm:$0xff]
      %v3885 = vld [vmem:[#allocation2 + $0x338] sm:$0xff]
      %v3886 = vld [vmem:[#allocation2 + $0x340] sm:$0xff]
      %v3887 = vld [vmem:[#allocation2 + $0x348] sm:$0xff]
      %v3888 = vld [vmem:[#allocation2 + $0x350] sm:$0xff]
      %v3889 = vld [vmem:[#allocation2 + $0x358] sm:$0xff]
      %v3890 = vld [vmem:[#allocation2 + $0x360] sm:$0xff]
      %v3891 = vld [vmem:[#allocation2 + $0x368] sm:$0xff]
      %v3892 = vld [vmem:[#allocation2 + $0x370] sm:$0xff]
      %v3893 = vld [vmem:[#allocation2 + $0x378] sm:$0xff]
      %v3894 = vld [vmem:[#allocation2 + $0x380] sm:$0xff]
      %v3895 = vld [vmem:[#allocation2 + $0x388] sm:$0xff]
      %v3896 = vld [vmem:[#allocation2 + $0x390] sm:$0xff]
      %v3897 = vld [vmem:[#allocation2 + $0x398] sm:$0xff]
      %v3898 = vld [vmem:[#allocation2 + $0x3a0] sm:$0xff]
      %v3899 = vld [vmem:[#allocation2 + $0x3a8] sm:$0xff]
      %v3900 = vld [vmem:[#allocation2 + $0x3b0] sm:$0xff]
      %v3901 = vld [vmem:[#allocation2 + $0x3b8] sm:$0xff]
      %v3902 = vld [vmem:[#allocation2 + $0x3c0] sm:$0xff]
      %v3903 = vld [vmem:[#allocation2 + $0x3c8] sm:$0xff]
      %v3904 = vld [vmem:[#allocation2 + $0x3d0] sm:$0xff]
      %v3905 = vld [vmem:[#allocation2 + $0x3d8] sm:$0xff]
      %v3906 = vld [vmem:[#allocation2 + $0x3e0] sm:$0xff]
      %v3907 = vld [vmem:[#allocation2 + $0x3e8] sm:$0xff]
      %v3908 = vld [vmem:[#allocation2 + $0x3f0] sm:$0xff]
      %v3909 = vld [vmem:[#allocation2 + $0x3f8] sm:$0xff]
      %v3910 = vld [vmem:[#allocation3] sm:$0x1]
      %v3912 = vlaneseq
      %v3913 = vshrl.u32 %v3912, 7
      %v3914 = vsub.s32 0, %v3913
      %v3915 = vrot.slane %v3910, %v3914
      %3917 = vmatprep.subr.mxu0 0.0
      %3918 = vmatpush1.msra.mxu0 %v3782
      %3919 = vmatprep.subr.mxu0 0.0
      %3920 = vmatpush1.msra.mxu0 %v3783
      %3921 = vmatprep.subr.mxu0 0.0
      %3922 = vmatpush1.msra.mxu0 %v3784
      %3923 = vmatprep.subr.mxu0 0.0
      %3924 = vmatpush1.msra.mxu0 %v3785
      %3925 = vmatprep.subr.mxu0 0.0
      %3926 = vmatpush1.msra.mxu0 %v3786
      %3927 = vmatprep.subr.mxu0 0.0
      %3928 = vmatpush1.msra.mxu0 %v3787
      %3929 = vmatprep.subr.mxu0 0.0
      %3930 = vmatpush1.msra.mxu0 %v3788
      %3931 = vmatprep.subr.mxu0 0.0
      %3932 = vmatpush1.msra.mxu0 %v3789
      %3933 = vmatprep.subr.mxu0 0.0
      %3934 = vmatpush1.msra.mxu0 %v3790
      %3935 = vmatprep.subr.mxu0 0.0
      %3936 = vmatpush1.msra.mxu0 %v3791
      %3937 = vmatprep.subr.mxu0 0.0
      %3938 = vmatpush1.msra.mxu0 %v3792
      %3939 = vmatprep.subr.mxu0 0.0
      %3940 = vmatpush1.msra.mxu0 %v3793
      %3941 = vmatprep.subr.mxu0 0.0
      %3942 = vmatpush1.msra.mxu0 %v3794
      %3943 = vmatprep.subr.mxu0 0.0
      %3944 = vmatpush1.msra.mxu0 %v3795
      %3945 = vmatprep.subr.mxu0 0.0
      %3946 = vmatpush1.msra.mxu0 %v3796
      %3947 = vmatprep.subr.mxu0 0.0
      %3948 = vmatpush1.msra.mxu0 %v3797
      %3949 = vmatprep.subr.mxu0 0.0
      %3950 = vmatpush1.msra.mxu0 %v3798
      %3951 = vmatprep.subr.mxu0 0.0
      %3952 = vmatpush1.msra.mxu0 %v3799
      %3953 = vmatprep.subr.mxu0 0.0
      %3954 = vmatpush1.msra.mxu0 %v3800
      %3955 = vmatprep.subr.mxu0 0.0
      %3956 = vmatpush1.msra.mxu0 %v3801
      %3957 = vmatprep.subr.mxu0 0.0
      %3958 = vmatpush1.msra.mxu0 %v3802
      %3959 = vmatprep.subr.mxu0 0.0
      %3960 = vmatpush1.msra.mxu0 %v3803
      %3961 = vmatprep.subr.mxu0 0.0
      %3962 = vmatpush1.msra.mxu0 %v3804
      %3963 = vmatprep.subr.mxu0 0.0
      %3964 = vmatpush1.msra.mxu0 %v3805
      %3965 = vmatprep.subr.mxu0 0.0
      %3966 = vmatpush1.msra.mxu0 %v3806
      %3967 = vmatprep.subr.mxu0 0.0
      %3968 = vmatpush1.msra.mxu0 %v3807
      %3969 = vmatprep.subr.mxu0 0.0
      %3970 = vmatpush1.msra.mxu0 %v3808
      %3971 = vmatprep.subr.mxu0 0.0
      %3972 = vmatpush1.msra.mxu0 %v3809
      %3973 = vmatprep.subr.mxu0 0.0
      %3974 = vmatpush1.msra.mxu0 %v3810
      %3975 = vmatprep.subr.mxu0 0.0
      %3976 = vmatpush1.msra.mxu0 %v3811
      %3977 = vmatprep.subr.mxu0 0.0
      %3978 = vmatpush1.msra.mxu0 %v3812
      %3979 = vmatprep.subr.mxu0 0.0
      %3980 = vmatpush1.msra.mxu0 %v3813
      %3981 = vmatprep.mubr.f32.mxu0 %v352
      %3982 = vmatmul.mubr.f32.gmra.mrb[0].mxu0 %v351
      %v3983 = vpop.f32.mrb[0].mxu0
      %v3984 = vadd.f32 %v3915, %v3983
      %v3985 = vpop.f32.mrb[0].mxu0
      %3986 = vmatprep.mubr.f32.mxu0 %v360
      %3987 = vmatmul.mubr.f32.gmra.mrb[0].mxu0 %v359
      %v3988 = vpop.f32.mrb[0].mxu0
      %v3989 = vadd.f32 %v3915, %v3988
      %v3990 = vpop.f32.mrb[0].mxu0
      %3991 = vmatprep.mubr.f32.mxu0 %v368
      %3992 = vmatmul.mubr.f32.gmra.mrb[0].mxu0 %v367
      %v3993 = vpop.f32.mrb[0].mxu0
      %v3994 = vadd.f32 %v3915, %v3993
      %v3995 = vpop.f32.mrb[0].mxu0
      %3996 = vmatprep.mubr.f32.mxu0 %v376
      %3997 = vmatmul.mubr.f32.gmra.mrb[0].mxu0 %v375
      %v3998 = vpop.f32.mrb[0].mxu0
      %v3999 = vadd.f32 %v3915, %v3998
      %v4000 = vpop.f32.mrb[0].mxu0
      %4001 = vmatprep.mubr.f32.mxu0 %v384
      %4002 = vmatmul.mubr.f32.gmra.mrb[0].mxu0 %v383
      %v4003 = vpop.f32.mrb[0].mxu0
      %v4004 = vadd.f32 %v3915, %v4003
      %v4005 = vpop.f32.mrb[0].mxu0
      %4006 = vmatprep.mubr.f32.mxu0 %v392
      %4007 = vmatmul.mubr.f32.gmra.mrb[0].mxu0 %v391
      %v4008 = vpop.f32.mrb[0].mxu0
      %v4009 = vadd.f32 %v3915, %v4008
      %v4010 = vpop.f32.mrb[0].mxu0
      %4011 = vmatprep.mubr.f32.mxu0 %v400
      %4012 = vmatmul.mubr.f32.gmra.mrb[0].mxu0 %v399
      %v4013 = vpop.f32.mrb[0].mxu0
      %v4014 = vadd.f32 %v3915, %v4013
      %v4015 = vpop.f32.mrb[0].mxu0
      %4016 = vmatprep.mubr.f32.mxu0 %v408
      %4017 = vmatmul.mubr.f32.gmra.mrb[0].mxu0 %v407
      %v4018 = vpop.f32.mrb[0].mxu0
      %v4019 = vadd.f32 %v3915, %v4018
      %v4020 = vpop.f32.mrb[0].mxu0
      %4021 = vdwg.mxu0
      %4022 = vmatprep.subr.mxu0 0.0
      %4023 = vmatpush1.msra.mxu0 %v3814
      %4024 = vmatprep.subr.mxu0 0.0
      %4025 = vmatpush1.msra.mxu0 %v3815
      %4026 = vmatprep.subr.mxu0 0.0
      %4027 = vmatpush1.msra.mxu0 %v3816
      %4028 = vmatprep.subr.mxu0 0.0
      %4029 = vmatpush1.msra.mxu0 %v3817
      %4030 = vmatprep.subr.mxu0 0.0
      %4031 = vmatpush1.msra.mxu0 %v3818
      %4032 = vmatprep.subr.mxu0 0.0
      %4033 = vmatpush1.msra.mxu0 %v3819
      %4034 = vmatprep.subr.mxu0 0.0
      %4035 = vmatpush1.msra.mxu0 %v3820
      %4036 = vmatprep.subr.mxu0 0.0
      %4037 = vmatpush1.msra.mxu0 %v3821
      %4038 = vmatprep.subr.mxu0 0.0
      %4039 = vmatpush1.msra.mxu0 %v3822
      %4040 = vmatprep.subr.mxu0 0.0
      %4041 = vmatpush1.msra.mxu0 %v3823
      %4042 = vmatprep.subr.mxu0 0.0
      %4043 = vmatpush1.msra.mxu0 %v3824
      %4044 = vmatprep.subr.mxu0 0.0
      %4045 = vmatpush1.msra.mxu0 %v3825
      %4046 = vmatprep.subr.mxu0 0.0
      %4047 = vmatpush1.msra.mxu0 %v3826
      %4048 = vmatprep.subr.mxu0 0.0
      %4049 = vmatpush1.msra.mxu0 %v3827
      %4050 = vmatprep.subr.mxu0 0.0
      %4051 = vmatpush1.msra.mxu0 %v3828
      %4052 = vmatprep.subr.mxu0 0.0
      %4053 = vmatpush1.msra.mxu0 %v3829
      %4054 = vmatprep.subr.mxu0 0.0
      %4055 = vmatpush1.msra.mxu0 %v3830
      %4056 = vmatprep.subr.mxu0 0.0
      %4057 = vmatpush1.msra.mxu0 %v3831
      %4058 = vmatprep.subr.mxu0 0.0
      %4059 = vmatpush1.msra.mxu0 %v3832
      %4060 = vmatprep.subr.mxu0 0.0
      %4061 = vmatpush1.msra.mxu0 %v3833
      %4062 = vmatprep.subr.mxu0 0.0
      %4063 = vmatpush1.msra.mxu0 %v3834
      %4064 = vmatprep.subr.mxu0 0.0
      %4065 = vmatpush1.msra.mxu0 %v3835
      %4066 = vmatprep.subr.mxu0 0.0
      %4067 = vmatpush1.msra.mxu0 %v3836
      %4068 = vmatprep.subr.mxu0 0.0
      %4069 = vmatpush1.msra.mxu0 %v3837
      %4070 = vmatprep.subr.mxu0 0.0
      %4071 = vmatpush1.msra.mxu0 %v3838
      %4072 = vmatprep.subr.mxu0 0.0
      %4073 = vmatpush1.msra.mxu0 %v3839
      %4074 = vmatprep.subr.mxu0 0.0
      %4075 = vmatpush1.msra.mxu0 %v3840
      %4076 = vmatprep.subr.mxu0 0.0
      %4077 = vmatpush1.msra.mxu0 %v3841
      %4078 = vmatprep.subr.mxu0 0.0
      %4079 = vmatpush1.msra.mxu0 %v3842
      %4080 = vmatprep.subr.mxu0 0.0
      %4081 = vmatpush1.msra.mxu0 %v3843
      %4082 = vmatprep.subr.mxu0 0.0
      %4083 = vmatpush1.msra.mxu0 %v3844
      %4084 = vmatprep.subr.mxu0 0.0
      %4085 = vmatpush1.msra.mxu0 %v3845
      %4086 = vmatprep.mubr.f32.mxu0 %v354
      %4087 = vmatmul.mubr.f32.gmra.mrb[0].mxu0 %v353
      %v4088 = vpop.f32.mrb[0].mxu0
      %v4089 = vadd.f32 %v3984, %v4088
      %v4090 = vpop.f32.mrb[0].mxu0
      %4091 = vmatprep.mubr.f32.mxu0 %v362
      %4092 = vmatmul.mubr.f32.gmra.mrb[0].mxu0 %v361
      %v4093 = vpop.f32.mrb[0].mxu0
      %v4094 = vadd.f32 %v3989, %v4093
      %v4095 = vpop.f32.mrb[0].mxu0
      %4096 = vmatprep.mubr.f32.mxu0 %v370
      %4097 = vmatmul.mubr.f32.gmra.mrb[0].mxu0 %v369
      %v4098 = vpop.f32.mrb[0].mxu0
      %v4099 = vadd.f32 %v3994, %v4098
      %v4100 = vpop.f32.mrb[0].mxu0
      %4101 = vmatprep.mubr.f32.mxu0 %v378
      %4102 = vmatmul.mubr.f32.gmra.mrb[0].mxu0 %v377
      %v4103 = vpop.f32.mrb[0].mxu0
      %v4104 = vadd.f32 %v3999, %v4103
      %v4105 = vpop.f32.mrb[0].mxu0
      %4106 = vmatprep.mubr.f32.mxu0 %v386
      %4107 = vmatmul.mubr.f32.gmra.mrb[0].mxu0 %v385
      %v4108 = vpop.f32.mrb[0].mxu0
      %v4109 = vadd.f32 %v4004, %v4108
      %v4110 = vpop.f32.mrb[0].mxu0
      %4111 = vmatprep.mubr.f32.mxu0 %v394
      %4112 = vmatmul.mubr.f32.gmra.mrb[0].mxu0 %v393
      %v4113 = vpop.f32.mrb[0].mxu0
      %v4114 = vadd.f32 %v4009, %v4113
      %v4115 = vpop.f32.mrb[0].mxu0
      %4116 = vmatprep.mubr.f32.mxu0 %v402
      %4117 = vmatmul.mubr.f32.gmra.mrb[0].mxu0 %v401
      %v4118 = vpop.f32.mrb[0].mxu0
      %v4119 = vadd.f32 %v4014, %v4118
      %v4120 = vpop.f32.mrb[0].mxu0
      %4121 = vmatprep.mubr.f32.mxu0 %v410
      %4122 = vmatmul.mubr.f32.gmra.mrb[0].mxu0 %v409
      %v4123 = vpop.f32.mrb[0].mxu0
      %v4124 = vadd.f32 %v4019, %v4123
      %v4125 = vpop.f32.mrb[0].mxu0
      %4126 = vdwg.mxu0
      %4127 = vmatprep.subr.mxu0 0.0
      %4128 = vmatpush1.msra.mxu0 %v3846
      %4129 = vmatprep.subr.mxu0 0.0
      %4130 = vmatpush1.msra.mxu0 %v3847
      %4131 = vmatprep.subr.mxu0 0.0
      %4132 = vmatpush1.msra.mxu0 %v3848
      %4133 = vmatprep.subr.mxu0 0.0
      %4134 = vmatpush1.msra.mxu0 %v3849
      %4135 = vmatprep.subr.mxu0 0.0
      %4136 = vmatpush1.msra.mxu0 %v3850
      %4137 = vmatprep.subr.mxu0 0.0
      %4138 = vmatpush1.msra.mxu0 %v3851
      %4139 = vmatprep.subr.mxu0 0.0
      %4140 = vmatpush1.msra.mxu0 %v3852
      %4141 = vmatprep.subr.mxu0 0.0
      %4142 = vmatpush1.msra.mxu0 %v3853
      %4143 = vmatprep.subr.mxu0 0.0
      %4144 = vmatpush1.msra.mxu0 %v3854
      %4145 = vmatprep.subr.mxu0 0.0
      %4146 = vmatpush1.msra.mxu0 %v3855
      %4147 = vmatprep.subr.mxu0 0.0
      %4148 = vmatpush1.msra.mxu0 %v3856
      %4149 = vmatprep.subr.mxu0 0.0
      %4150 = vmatpush1.msra.mxu0 %v3857
      %4151 = vmatprep.subr.mxu0 0.0
      %4152 = vmatpush1.msra.mxu0 %v3858
      %4153 = vmatprep.subr.mxu0 0.0
      %4154 = vmatpush1.msra.mxu0 %v3859
      %4155 = vmatprep.subr.mxu0 0.0
      %4156 = vmatpush1.msra.mxu0 %v3860
      %4157 = vmatprep.subr.mxu0 0.0
      %4158 = vmatpush1.msra.mxu0 %v3861
      %4159 = vmatprep.subr.mxu0 0.0
      %4160 = vmatpush1.msra.mxu0 %v3862
      %4161 = vmatprep.subr.mxu0 0.0
      %4162 = vmatpush1.msra.mxu0 %v3863
      %4163 = vmatprep.subr.mxu0 0.0
      %4164 = vmatpush1.msra.mxu0 %v3864
      %4165 = vmatprep.subr.mxu0 0.0
      %4166 = vmatpush1.msra.mxu0 %v3865
      %4167 = vmatprep.subr.mxu0 0.0
      %4168 = vmatpush1.msra.mxu0 %v3866
      %4169 = vmatprep.subr.mxu0 0.0
      %4170 = vmatpush1.msra.mxu0 %v3867
      %4171 = vmatprep.subr.mxu0 0.0
      %4172 = vmatpush1.msra.mxu0 %v3868
      %4173 = vmatprep.subr.mxu0 0.0
      %4174 = vmatpush1.msra.mxu0 %v3869
      %4175 = vmatprep.subr.mxu0 0.0
      %4176 = vmatpush1.msra.mxu0 %v3870
      %4177 = vmatprep.subr.mxu0 0.0
      %4178 = vmatpush1.msra.mxu0 %v3871
      %4179 = vmatprep.subr.mxu0 0.0
      %4180 = vmatpush1.msra.mxu0 %v3872
      %4181 = vmatprep.subr.mxu0 0.0
      %4182 = vmatpush1.msra.mxu0 %v3873
      %4183 = vmatprep.subr.mxu0 0.0
      %4184 = vmatpush1.msra.mxu0 %v3874
      %4185 = vmatprep.subr.mxu0 0.0
      %4186 = vmatpush1.msra.mxu0 %v3875
      %4187 = vmatprep.subr.mxu0 0.0
      %4188 = vmatpush1.msra.mxu0 %v3876
      %4189 = vmatprep.subr.mxu0 0.0
      %4190 = vmatpush1.msra.mxu0 %v3877
      %4191 = vmatprep.mubr.f32.mxu0 %v356
      %4192 = vmatmul.mubr.f32.gmra.mrb[0].mxu0 %v355
      %v4193 = vpop.f32.mrb[0].mxu0
      %v4194 = vadd.f32 %v4089, %v4193
      %v4195 = vpop.f32.mrb[0].mxu0
      %4196 = vmatprep.mubr.f32.mxu0 %v364
      %4197 = vmatmul.mubr.f32.gmra.mrb[0].mxu0 %v363
      %v4198 = vpop.f32.mrb[0].mxu0
      %v4199 = vadd.f32 %v4094, %v4198
      %v4200 = vpop.f32.mrb[0].mxu0
      %4201 = vmatprep.mubr.f32.mxu0 %v372
      %4202 = vmatmul.mubr.f32.gmra.mrb[0].mxu0 %v371
      %v4203 = vpop.f32.mrb[0].mxu0
      %v4204 = vadd.f32 %v4099, %v4203
      %v4205 = vpop.f32.mrb[0].mxu0
      %4206 = vmatprep.mubr.f32.mxu0 %v380
      %4207 = vmatmul.mubr.f32.gmra.mrb[0].mxu0 %v379
      %v4208 = vpop.f32.mrb[0].mxu0
      %v4209 = vadd.f32 %v4104, %v4208
      %v4210 = vpop.f32.mrb[0].mxu0
      %4211 = vmatprep.mubr.f32.mxu0 %v388
      %4212 = vmatmul.mubr.f32.gmra.mrb[0].mxu0 %v387
      %v4213 = vpop.f32.mrb[0].mxu0
      %v4214 = vadd.f32 %v4109, %v4213
      %v4215 = vpop.f32.mrb[0].mxu0
      %4216 = vmatprep.mubr.f32.mxu0 %v396
      %4217 = vmatmul.mubr.f32.gmra.mrb[0].mxu0 %v395
      %v4218 = vpop.f32.mrb[0].mxu0
      %v4219 = vadd.f32 %v4114, %v4218
      %v4220 = vpop.f32.mrb[0].mxu0
      %4221 = vmatprep.mubr.f32.mxu0 %v404
      %4222 = vmatmul.mubr.f32.gmra.mrb[0].mxu0 %v403
      %v4223 = vpop.f32.mrb[0].mxu0
      %v4224 = vadd.f32 %v4119, %v4223
      %v4225 = vpop.f32.mrb[0].mxu0
      %4226 = vmatprep.mubr.f32.mxu0 %v412
      %4227 = vmatmul.mubr.f32.gmra.mrb[0].mxu0 %v411
      %v4228 = vpop.f32.mrb[0].mxu0
      %v4229 = vadd.f32 %v4124, %v4228
      %v4230 = vpop.f32.mrb[0].mxu0
      %4231 = vdwg.mxu0
      %4232 = vmatprep.subr.mxu0 0.0
      %4233 = vmatpush1.msra.mxu0 %v3878
      %4234 = vmatprep.subr.mxu0 0.0
      %4235 = vmatpush1.msra.mxu0 %v3879
      %4236 = vmatprep.subr.mxu0 0.0
      %4237 = vmatpush1.msra.mxu0 %v3880
      %4238 = vmatprep.subr.mxu0 0.0
      %4239 = vmatpush1.msra.mxu0 %v3881
      %4240 = vmatprep.subr.mxu0 0.0
      %4241 = vmatpush1.msra.mxu0 %v3882
      %4242 = vmatprep.subr.mxu0 0.0
      %4243 = vmatpush1.msra.mxu0 %v3883
      %4244 = vmatprep.subr.mxu0 0.0
      %4245 = vmatpush1.msra.mxu0 %v3884
      %4246 = vmatprep.subr.mxu0 0.0
      %4247 = vmatpush1.msra.mxu0 %v3885
      %4248 = vmatprep.subr.mxu0 0.0
      %4249 = vmatpush1.msra.mxu0 %v3886
      %4250 = vmatprep.subr.mxu0 0.0
      %4251 = vmatpush1.msra.mxu0 %v3887
      %4252 = vmatprep.subr.mxu0 0.0
      %4253 = vmatpush1.msra.mxu0 %v3888
      %4254 = vmatprep.subr.mxu0 0.0
      %4255 = vmatpush1.msra.mxu0 %v3889
      %4256 = vmatprep.subr.mxu0 0.0
      %4257 = vmatpush1.msra.mxu0 %v3890
      %4258 = vmatprep.subr.mxu0 0.0
      %4259 = vmatpush1.msra.mxu0 %v3891
      %4260 = vmatprep.subr.mxu0 0.0
      %4261 = vmatpush1.msra.mxu0 %v3892
      %4262 = vmatprep.subr.mxu0 0.0
      %4263 = vmatpush1.msra.mxu0 %v3893
      %4264 = vmatprep.subr.mxu0 0.0
      %4265 = vmatpush1.msra.mxu0 %v3894
      %4266 = vmatprep.subr.mxu0 0.0
      %4267 = vmatpush1.msra.mxu0 %v3895
      %4268 = vmatprep.subr.mxu0 0.0
      %4269 = vmatpush1.msra.mxu0 %v3896
      %4270 = vmatprep.subr.mxu0 0.0
      %4271 = vmatpush1.msra.mxu0 %v3897
      %4272 = vmatprep.subr.mxu0 0.0
      %4273 = vmatpush1.msra.mxu0 %v3898
      %4274 = vmatprep.subr.mxu0 0.0
      %4275 = vmatpush1.msra.mxu0 %v3899
      %4276 = vmatprep.subr.mxu0 0.0
      %4277 = vmatpush1.msra.mxu0 %v3900
      %4278 = vmatprep.subr.mxu0 0.0
      %4279 = vmatpush1.msra.mxu0 %v3901
      %4280 = vmatprep.subr.mxu0 0.0
      %4281 = vmatpush1.msra.mxu0 %v3902
      %4282 = vmatprep.subr.mxu0 0.0
      %4283 = vmatpush1.msra.mxu0 %v3903
      %4284 = vmatprep.subr.mxu0 0.0
      %4285 = vmatpush1.msra.mxu0 %v3904
      %4286 = vmatprep.subr.mxu0 0.0
      %4287 = vmatpush1.msra.mxu0 %v3905
      %4288 = vmatprep.subr.mxu0 0.0
      %4289 = vmatpush1.msra.mxu0 %v3906
      %4290 = vmatprep.subr.mxu0 0.0
      %4291 = vmatpush1.msra.mxu0 %v3907
      %4292 = vmatprep.subr.mxu0 0.0
      %4293 = vmatpush1.msra.mxu0 %v3908
      %4294 = vmatprep.subr.mxu0 0.0
      %4295 = vmatpush1.msra.mxu0 %v3909
      %4296 = vmatprep.mubr.f32.mxu0 %v358
      %4297 = vmatmul.mubr.f32.gmra.mrb[0].mxu0 %v357
      %v4298 = vpop.f32.mrb[0].mxu0
      %v4299 = vadd.f32 %v4194, %v4298
      %v4300 = vpop.f32.mrb[0].mxu0
      %4301 = vmatprep.mubr.f32.mxu0 %v366
      %4302 = vmatmul.mubr.f32.gmra.mrb[0].mxu0 %v365
      %v4303 = vpop.f32.mrb[0].mxu0
      %v4304 = vadd.f32 %v4199, %v4303
      %v4305 = vpop.f32.mrb[0].mxu0
      %4306 = vmatprep.mubr.f32.mxu0 %v374
      %4307 = vmatmul.mubr.f32.gmra.mrb[0].mxu0 %v373
      %v4308 = vpop.f32.mrb[0].mxu0
      %v4309 = vadd.f32 %v4204, %v4308
      %v4310 = vpop.f32.mrb[0].mxu0
      %4311 = vmatprep.mubr.f32.mxu0 %v382
      %4312 = vmatmul.mubr.f32.gmra.mrb[0].mxu0 %v381
      %v4313 = vpop.f32.mrb[0].mxu0
      %v4314 = vadd.f32 %v4209, %v4313
      %v4315 = vpop.f32.mrb[0].mxu0
      %4316 = vmatprep.mubr.f32.mxu0 %v390
      %4317 = vmatmul.mubr.f32.gmra.mrb[0].mxu0 %v389
      %v4318 = vpop.f32.mrb[0].mxu0
      %v4319 = vadd.f32 %v4214, %v4318
      %v4320 = vpop.f32.mrb[0].mxu0
      %4321 = vmatprep.mubr.f32.mxu0 %v398
      %4322 = vmatmul.mubr.f32.gmra.mrb[0].mxu0 %v397
      %v4323 = vpop.f32.mrb[0].mxu0
      %v4324 = vadd.f32 %v4219, %v4323
      %v4325 = vpop.f32.mrb[0].mxu0
      %4326 = vmatprep.mubr.f32.mxu0 %v406
      %4327 = vmatmul.mubr.f32.gmra.mrb[0].mxu0 %v405
      %v4328 = vpop.f32.mrb[0].mxu0
      %v4329 = vadd.f32 %v4224, %v4328
      %v4330 = vpop.f32.mrb[0].mxu0
      %4331 = vmatprep.mubr.f32.mxu0 %v414
      %4332 = vmatmul.mubr.f32.gmra.mrb[0].mxu0 %v413
      %v4333 = vpop.f32.mrb[0].mxu0
      %v4334 = vadd.f32 %v4229, %v4333
      %v4335 = vpop.f32.mrb[0].mxu0
      %4336 = vdwg.mxu0
      %v4337 = vadd.f32 %v4299, %v567
      %v4338 = vadd.f32 %v4304, %v568
      %v4339 = vadd.f32 %v4309, %v569
      %v4340 = vadd.f32 %v4314, %v570
      %v4341 = vadd.f32 %v4319, %v571
      %v4342 = vadd.f32 %v4324, %v572
      %v4343 = vadd.f32 %v4329, %v573
      %v4344 = vadd.f32 %v4334, %v574
      %v4346 = vsel %vm899, %v4337, 0
      %v4349 = vsel %vm899, %v4338, 0
      %v4352 = vsel %vm899, %v4339, 0
      %v4355 = vsel %vm899, %v4340, 0
      %v4358 = vsel %vm899, %v4341, 0
      %v4361 = vsel %vm899, %v4342, 0
      %v4364 = vsel %vm899, %v4343, 0
      %v4367 = vsel %vm899, %v4344, 0
      %4369 = vmatprep.subr.mxu0 0.0
      %4370 = vmatpush1.xpose.msra.mxu0 %v1619
      %4371 = vmatprep.subr.mxu0 0.0
      %4372 = vmatpush1.xpose.msra.mxu0 %v1622
      %4373 = vmatprep.subr.mxu0 0.0
      %4374 = vmatpush1.xpose.msra.mxu0 %v1625
      %4375 = vmatprep.subr.mxu0 0.0
      %4376 = vmatpush1.xpose.msra.mxu0 %v1628
      %4377 = vmatprep.subr.mxu0 0.0
      %4378 = vmatpush1.xpose.msra.mxu0 %v1631
      %4379 = vmatprep.subr.mxu0 0.0
      %4380 = vmatpush1.xpose.msra.mxu0 %v1634
      %4381 = vmatprep.subr.mxu0 0.0
      %4382 = vmatpush1.xpose.msra.mxu0 %v1637
      %4383 = vmatprep.subr.mxu0 0.0
      %4384 = vmatpush1.xpose.msra.mxu0 %v1640
      %4385 = vmatprep.subr.mxu0 0.0
      %4386 = vmatpush1.xpose.msra.mxu0 %v1643
      %4387 = vmatprep.subr.mxu0 0.0
      %4388 = vmatpush1.xpose.msra.mxu0 %v1646
      %4389 = vmatprep.subr.mxu0 0.0
      %4390 = vmatpush1.xpose.msra.mxu0 %v1649
      %4391 = vmatprep.subr.mxu0 0.0
      %4392 = vmatpush1.xpose.msra.mxu0 %v1652
      %4393 = vmatprep.subr.mxu0 0.0
      %4394 = vmatpush1.xpose.msra.mxu0 %v1655
      %4395 = vmatprep.subr.mxu0 0.0
      %4396 = vmatpush1.xpose.msra.mxu0 %v1658
      %4397 = vmatprep.subr.mxu0 0.0
      %4398 = vmatpush1.xpose.msra.mxu0 %v1661
      %4399 = vmatprep.subr.mxu0 0.0
      %4400 = vmatpush1.xpose.msra.mxu0 %v1664
      %4401 = vmatprep.subr.mxu0 0.0
      %4402 = vmatpush1.xpose.msra.mxu0 0.0
      %4403 = vmatprep.subr.mxu0 0.0
      %4404 = vmatpush1.xpose.msra.mxu0 0.0
      %4405 = vmatprep.subr.mxu0 0.0
      %4406 = vmatpush1.xpose.msra.mxu0 0.0
      %4407 = vmatprep.subr.mxu0 0.0
      %4408 = vmatpush1.xpose.msra.mxu0 0.0
      %4409 = vmatprep.subr.mxu0 0.0
      %4410 = vmatpush1.xpose.msra.mxu0 0.0
      %4411 = vmatprep.subr.mxu0 0.0
      %4412 = vmatpush1.xpose.msra.mxu0 0.0
      %4413 = vmatprep.subr.mxu0 0.0
      %4414 = vmatpush1.xpose.msra.mxu0 0.0
      %4415 = vmatprep.subr.mxu0 0.0
      %4416 = vmatpush1.xpose.msra.mxu0 0.0
      %4417 = vmatprep.subr.mxu0 0.0
      %4418 = vmatpush1.xpose.msra.mxu0 0.0
      %4419 = vmatprep.subr.mxu0 0.0
      %4420 = vmatpush1.xpose.msra.mxu0 0.0
      %4421 = vmatprep.subr.mxu0 0.0
      %4422 = vmatpush1.xpose.msra.mxu0 0.0
      %4423 = vmatprep.subr.mxu0 0.0
      %4424 = vmatpush1.xpose.msra.mxu0 0.0
      %4425 = vmatprep.subr.mxu0 0.0
      %4426 = vmatpush1.xpose.msra.mxu0 0.0
      %4427 = vmatprep.subr.mxu0 0.0
      %4428 = vmatpush1.xpose.msra.mxu0 0.0
      %4429 = vmatprep.subr.mxu0 0.0
      %4430 = vmatpush1.xpose.msra.mxu0 0.0
      %4431 = vmatprep.subr.mxu0 0.0
      %4432 = vmatpush1.xpose.msra.mxu0 0.0
      %4433 = vmatprep.mubr.f32.mxu0 0.0
      %4434 = vmatmul.mubr.f32.gmra.mrb[0].mxu0 %v4346
      %v4435 = vpop.f32.mrb[0].mxu0
      %v4436 = vadd.f32 0.0, %v4435
      %v4437 = vpop.f32.mrb[0].mxu0
      %4438 = vmatprep.mubr.f32.mxu0 0.0
      %4439 = vmatmul.mubr.f32.gmra.mrb[0].mxu0 %v4349
      %v4440 = vpop.f32.mrb[0].mxu0
      %v4441 = vadd.f32 0.0, %v4440
      %v4442 = vpop.f32.mrb[0].mxu0
      %4443 = vmatprep.mubr.f32.mxu0 0.0
      %4444 = vmatmul.mubr.f32.gmra.mrb[0].mxu0 %v4352
      %v4445 = vpop.f32.mrb[0].mxu0
      %v4446 = vadd.f32 0.0, %v4445
      %v4447 = vpop.f32.mrb[0].mxu0
      %4448 = vmatprep.mubr.f32.mxu0 0.0
      %4449 = vmatmul.mubr.f32.gmra.mrb[0].mxu0 %v4355
      %v4450 = vpop.f32.mrb[0].mxu0
      %v4451 = vadd.f32 0.0, %v4450
      %v4452 = vpop.f32.mrb[0].mxu0
      %4453 = vmatprep.mubr.f32.mxu0 0.0
      %4454 = vmatmul.mubr.f32.gmra.mrb[0].mxu0 %v4358
      %v4455 = vpop.f32.mrb[0].mxu0
      %v4456 = vadd.f32 0.0, %v4455
      %v4457 = vpop.f32.mrb[0].mxu0
      %4458 = vmatprep.mubr.f32.mxu0 0.0
      %4459 = vmatmul.mubr.f32.gmra.mrb[0].mxu0 %v4361
      %v4460 = vpop.f32.mrb[0].mxu0
      %v4461 = vadd.f32 0.0, %v4460
      %v4462 = vpop.f32.mrb[0].mxu0
      %4463 = vmatprep.mubr.f32.mxu0 0.0
      %4464 = vmatmul.mubr.f32.gmra.mrb[0].mxu0 %v4364
      %v4465 = vpop.f32.mrb[0].mxu0
      %v4466 = vadd.f32 0.0, %v4465
      %v4467 = vpop.f32.mrb[0].mxu0
      %4468 = vmatprep.mubr.f32.mxu0 0.0
      %4469 = vmatmul.mubr.f32.gmra.mrb[0].mxu0 %v4367
      %v4470 = vpop.f32.mrb[0].mxu0
      %v4471 = vadd.f32 0.0, %v4470
      %v4472 = vpop.f32.mrb[0].mxu0
      %4473 = vdwg.mxu0
      %4474 = vmax.xlane.f32.xlu0 %v4436
      %v4475 = vpop.xlane.xlu0 %4474
      %4476 = vmax.xlane.f32.xlu0 %v4441
      %v4477 = vpop.xlane.xlu0 %4476
      %4478 = vmax.xlane.f32.xlu0 %v4446
      %v4479 = vpop.xlane.xlu0 %4478
      %4480 = vmax.xlane.f32.xlu0 %v4451
      %v4481 = vpop.xlane.xlu0 %4480
      %4482 = vmax.xlane.f32.xlu0 %v4456
      %v4483 = vpop.xlane.xlu0 %4482
      %4484 = vmax.xlane.f32.xlu0 %v4461
      %v4485 = vpop.xlane.xlu0 %4484
      %4486 = vmax.xlane.f32.xlu0 %v4466
      %v4487 = vpop.xlane.xlu0 %4486
      %4488 = vmax.xlane.f32.xlu0 %v4471
      %v4489 = vpop.xlane.xlu0 %4488
      %v4490 = vsub.f32 %v4436, %v4475
      %v4491 = vsub.f32 %v4441, %v4477
      %v4492 = vsub.f32 %v4446, %v4479
      %v4493 = vsub.f32 %v4451, %v4481
      %v4494 = vsub.f32 %v4456, %v4483
      %v4495 = vsub.f32 %v4461, %v4485
      %v4496 = vsub.f32 %v4466, %v4487
      %v4497 = vsub.f32 %v4471, %v4489
      %v4498 = vmul.f32 %v4490, 1.442695
      %v4499 = vpow.pop %v4498
      %v4500 = vmul.f32 %v4491, 1.442695
      %v4501 = vpow.pop %v4500
      %v4502 = vmul.f32 %v4492, 1.442695
      %v4503 = vpow.pop %v4502
      %v4504 = vmul.f32 %v4493, 1.442695
      %v4505 = vpow.pop %v4504
      %v4506 = vmul.f32 %v4494, 1.442695
      %v4507 = vpow.pop %v4506
      %v4508 = vmul.f32 %v4495, 1.442695
      %v4509 = vpow.pop %v4508
      %v4510 = vmul.f32 %v4496, 1.442695
      %v4511 = vpow.pop %v4510
      %v4512 = vmul.f32 %v4497, 1.442695
      %v4513 = vpow.pop %v4512
      %4514 = vadd.xlane.f32.xlu0 %v4499
      %v4515 = vpop.xlane.xlu0 %4514
      %4516 = vadd.xlane.f32.xlu0 %v4501
      %v4517 = vpop.xlane.xlu0 %4516
      %4518 = vadd.xlane.f32.xlu0 %v4503
      %v4519 = vpop.xlane.xlu0 %4518
      %4520 = vadd.xlane.f32.xlu0 %v4505
      %v4521 = vpop.xlane.xlu0 %4520
      %4522 = vadd.xlane.f32.xlu0 %v4507
      %v4523 = vpop.xlane.xlu0 %4522
      %4524 = vadd.xlane.f32.xlu0 %v4509
      %v4525 = vpop.xlane.xlu0 %4524
      %4526 = vadd.xlane.f32.xlu0 %v4511
      %v4527 = vpop.xlane.xlu0 %4526
      %4528 = vadd.xlane.f32.xlu0 %v4513
      %v4529 = vpop.xlane.xlu0 %4528
      %v4530 = vmul.f32 %v617, %v4436
      %v4531 = vmul.f32 %v618, %v4441
      %v4532 = vmul.f32 %v619, %v4446
      %v4533 = vmul.f32 %v620, %v4451
      %v4534 = vmul.f32 %v621, %v4456
      %v4535 = vmul.f32 %v622, %v4461
      %v4536 = vmul.f32 %v623, %v4466
      %v4537 = vmul.f32 %v624, %v4471
      %4538 = vadd.xlane.f32.xlu0 %v4530
      %v4539 = vpop.xlane.xlu0 %4538
      %4540 = vadd.xlane.f32.xlu0 %v4531
      %v4541 = vpop.xlane.xlu0 %4540
      %4542 = vadd.xlane.f32.xlu0 %v4532
      %v4543 = vpop.xlane.xlu0 %4542
      %4544 = vadd.xlane.f32.xlu0 %v4533
      %v4545 = vpop.xlane.xlu0 %4544
      %4546 = vadd.xlane.f32.xlu0 %v4534
      %v4547 = vpop.xlane.xlu0 %4546
      %4548 = vadd.xlane.f32.xlu0 %v4535
      %v4549 = vpop.xlane.xlu0 %4548
      %4550 = vadd.xlane.f32.xlu0 %v4536
      %v4551 = vpop.xlane.xlu0 %4550
      %4552 = vadd.xlane.f32.xlu0 %v4537
      %v4553 = vpop.xlane.xlu0 %4552
      %v4554 = vlog2.pop %v4515
      %v4555 = vmul.f32 %v4554, 0.6931472
      %v4556 = vlog2.pop %v4517
      %v4557 = vmul.f32 %v4556, 0.6931472
      %v4558 = vlog2.pop %v4519
      %v4559 = vmul.f32 %v4558, 0.6931472
      %v4560 = vlog2.pop %v4521
      %v4561 = vmul.f32 %v4560, 0.6931472
      %v4562 = vlog2.pop %v4523
      %v4563 = vmul.f32 %v4562, 0.6931472
      %v4564 = vlog2.pop %v4525
      %v4565 = vmul.f32 %v4564, 0.6931472
      %v4566 = vlog2.pop %v4527
      %v4567 = vmul.f32 %v4566, 0.6931472
      %v4568 = vlog2.pop %v4529
      %v4569 = vmul.f32 %v4568, 0.6931472
      %v4570 = vadd.f32 %v4475, %v4555
      %v4571 = vadd.f32 %v4477, %v4557
      %v4572 = vadd.f32 %v4479, %v4559
      %v4573 = vadd.f32 %v4481, %v4561
      %v4574 = vadd.f32 %v4483, %v4563
      %v4575 = vadd.f32 %v4485, %v4565
      %v4576 = vadd.f32 %v4487, %v4567
      %v4577 = vadd.f32 %v4489, %v4569
      %v4578 = vsub.f32 %v4570, %v4539
      %v4579 = vsub.f32 %v4571, %v4541
      %v4580 = vsub.f32 %v4572, %v4543
      %v4581 = vsub.f32 %v4573, %v4545
      %v4582 = vsub.f32 %v4574, %v4547
      %v4583 = vsub.f32 %v4575, %v4549
      %v4584 = vsub.f32 %v4576, %v4551
      %v4585 = vsub.f32 %v4577, %v4553
      %v4586 = vmul.f32 %v4578, %v682
      %v4587 = vmul.f32 %v4579, %v683
      %v4588 = vmul.f32 %v4580, %v684
      %v4589 = vmul.f32 %v4581, %v685
      %v4590 = vmul.f32 %v4582, %v686
      %v4591 = vmul.f32 %v4583, %v687
      %v4592 = vmul.f32 %v4584, %v688
      %v4593 = vmul.f32 %v4585, %v689
      %v4594 = vsel %vm706, %v4586, 0.0
      %v4595 = vsel %vm706, %v4587, 0.0
      %v4596 = vadd.f32 %v4594, %v4595
      %v4597 = vsel %vm706, %v4588, 0.0
      %v4598 = vadd.f32 %v4596, %v4597
      %v4599 = vsel %vm706, %v4589, 0.0
      %v4600 = vadd.f32 %v4598, %v4599
      %v4601 = vsel %vm706, %v4590, 0.0
      %v4602 = vadd.f32 %v4600, %v4601
      %v4603 = vsel %vm706, %v4591, 0.0
      %v4604 = vadd.f32 %v4602, %v4603
      %v4605 = vsel %vm706, %v4592, 0.0
      %v4606 = vadd.f32 %v4604, %v4605
      %v4607 = vsel %vm706, %v4593, 0.0
      %v4608 = vadd.f32 %v4606, %v4607
      %4609 = vadd.xlane.f32.xlu0 %v4608
      %v4610 = vpop.xlane.xlu0 %4609
      %v4611 = vrot.slane %v4610, 4
      %v4612 = vadd.f32 %v4610, %v4611
      %v4613 = vrot.slane %v4612, 2
      %v4614 = vadd.f32 %v4612, %v4613
      %v4615 = vrot.slane %v4614, 1
      %v4616 = vadd.f32 %v4614, %v4615
      %s4617 = vtos %v4616
      %v4618 = vstv %s4617
      %v4619 = vmul.f32 %v4618, %v762
      %vm4620 = vcmp.eq.f32.partialorder %v4436, %v4475
      %vm4621 = vcmp.eq.f32.partialorder %v4441, %v4477
      %vm4622 = vcmp.eq.f32.partialorder %v4446, %v4479
      %vm4623 = vcmp.eq.f32.partialorder %v4451, %v4481
      %vm4624 = vcmp.eq.f32.partialorder %v4456, %v4483
      %vm4625 = vcmp.eq.f32.partialorder %v4461, %v4485
      %vm4626 = vcmp.eq.f32.partialorder %v4466, %v4487
      %vm4627 = vcmp.eq.f32.partialorder %v4471, %v4489
      %v4628 = vsel %vm4620, %v576, 128
      %v4629 = vsel %vm4621, %v576, 128
      %v4630 = vsel %vm4622, %v576, 128
      %v4631 = vsel %vm4623, %v576, 128
      %v4632 = vsel %vm4624, %v576, 128
      %v4633 = vsel %vm4625, %v576, 128
      %v4634 = vsel %vm4626, %v576, 128
      %v4635 = vsel %vm4627, %v576, 128
      %v4636 = vand.u32 %v4628, 65535
      %v4637 = vshra.s32 %v4628, 16
      %v4638 = vcvt.s32.f32 %v4636
      %v4639 = vcvt.s32.f32 %v4637
      %4640 = vmin.xlane.f32.xlu0 %v4639
      %v4641 = vpop.xlane.xlu0 %4640
      %vm4642 = vcmp.eq.f32.partialorder %v4639, %v4641
      %v4643 = vsel %vm4642, %v4638, inf
      %4644 = vmin.xlane.f32.xlu0 %v4643
      %v4645 = vpop.xlane.xlu0 %4644
      %v4646 = vcvt.f32.s32 %v4645
      %v4647 = vcvt.f32.s32 %v4641
      %v4648 = vshll.u32 %v4647, 16
      %v4649 = vadd.s32 %v4648, %v4646
      %v4650 = vand.u32 %v4629, 65535
      %v4651 = vshra.s32 %v4629, 16
      %v4652 = vcvt.s32.f32 %v4650
      %v4653 = vcvt.s32.f32 %v4651
      %4654 = vmin.xlane.f32.xlu0 %v4653
      %v4655 = vpop.xlane.xlu0 %4654
      %vm4656 = vcmp.eq.f32.partialorder %v4653, %v4655
      %v4657 = vsel %vm4656, %v4652, inf
      %4658 = vmin.xlane.f32.xlu0 %v4657
      %v4659 = vpop.xlane.xlu0 %4658
      %v4660 = vcvt.f32.s32 %v4659
      %v4661 = vcvt.f32.s32 %v4655
      %v4662 = vshll.u32 %v4661, 16
      %v4663 = vadd.s32 %v4662, %v4660
      %v4664 = vand.u32 %v4630, 65535
      %v4665 = vshra.s32 %v4630, 16
      %v4666 = vcvt.s32.f32 %v4664
      %v4667 = vcvt.s32.f32 %v4665
      %4668 = vmin.xlane.f32.xlu0 %v4667
      %v4669 = vpop.xlane.xlu0 %4668
      %vm4670 = vcmp.eq.f32.partialorder %v4667, %v4669
      %v4671 = vsel %vm4670, %v4666, inf
      %4672 = vmin.xlane.f32.xlu0 %v4671
      %v4673 = vpop.xlane.xlu0 %4672
      %v4674 = vcvt.f32.s32 %v4673
      %v4675 = vcvt.f32.s32 %v4669
      %v4676 = vshll.u32 %v4675, 16
      %v4677 = vadd.s32 %v4676, %v4674
      %v4678 = vand.u32 %v4631, 65535
      %v4679 = vshra.s32 %v4631, 16
      %v4680 = vcvt.s32.f32 %v4678
      %v4681 = vcvt.s32.f32 %v4679
      %4682 = vmin.xlane.f32.xlu0 %v4681
      %v4683 = vpop.xlane.xlu0 %4682
      %vm4684 = vcmp.eq.f32.partialorder %v4681, %v4683
      %v4685 = vsel %vm4684, %v4680, inf
      %4686 = vmin.xlane.f32.xlu0 %v4685
      %v4687 = vpop.xlane.xlu0 %4686
      %v4688 = vcvt.f32.s32 %v4687
      %v4689 = vcvt.f32.s32 %v4683
      %v4690 = vshll.u32 %v4689, 16
      %v4691 = vadd.s32 %v4690, %v4688
      %v4692 = vand.u32 %v4632, 65535
      %v4693 = vshra.s32 %v4632, 16
      %v4694 = vcvt.s32.f32 %v4692
      %v4695 = vcvt.s32.f32 %v4693
      %4696 = vmin.xlane.f32.xlu0 %v4695
      %v4697 = vpop.xlane.xlu0 %4696
      %vm4698 = vcmp.eq.f32.partialorder %v4695, %v4697
      %v4699 = vsel %vm4698, %v4694, inf
      %4700 = vmin.xlane.f32.xlu0 %v4699
      %v4701 = vpop.xlane.xlu0 %4700
      %v4702 = vcvt.f32.s32 %v4701
      %v4703 = vcvt.f32.s32 %v4697
      %v4704 = vshll.u32 %v4703, 16
      %v4705 = vadd.s32 %v4704, %v4702
      %v4706 = vand.u32 %v4633, 65535
      %v4707 = vshra.s32 %v4633, 16
      %v4708 = vcvt.s32.f32 %v4706
      %v4709 = vcvt.s32.f32 %v4707
      %4710 = vmin.xlane.f32.xlu0 %v4709
      %v4711 = vpop.xlane.xlu0 %4710
      %vm4712 = vcmp.eq.f32.partialorder %v4709, %v4711
      %v4713 = vsel %vm4712, %v4708, inf
      %4714 = vmin.xlane.f32.xlu0 %v4713
      %v4715 = vpop.xlane.xlu0 %4714
      %v4716 = vcvt.f32.s32 %v4715
      %v4717 = vcvt.f32.s32 %v4711
      %v4718 = vshll.u32 %v4717, 16
      %v4719 = vadd.s32 %v4718, %v4716
      %v4720 = vand.u32 %v4634, 65535
      %v4721 = vshra.s32 %v4634, 16
      %v4722 = vcvt.s32.f32 %v4720
      %v4723 = vcvt.s32.f32 %v4721
      %4724 = vmin.xlane.f32.xlu0 %v4723
      %v4725 = vpop.xlane.xlu0 %4724
      %vm4726 = vcmp.eq.f32.partialorder %v4723, %v4725
      %v4727 = vsel %vm4726, %v4722, inf
      %4728 = vmin.xlane.f32.xlu0 %v4727
      %v4729 = vpop.xlane.xlu0 %4728
      %v4730 = vcvt.f32.s32 %v4729
      %v4731 = vcvt.f32.s32 %v4725
      %v4732 = vshll.u32 %v4731, 16
      %v4733 = vadd.s32 %v4732, %v4730
      %v4734 = vand.u32 %v4635, 65535
      %v4735 = vshra.s32 %v4635, 16
      %v4736 = vcvt.s32.f32 %v4734
      %v4737 = vcvt.s32.f32 %v4735
      %4738 = vmin.xlane.f32.xlu0 %v4737
      %v4739 = vpop.xlane.xlu0 %4738
      %vm4740 = vcmp.eq.f32.partialorder %v4737, %v4739
      %v4741 = vsel %vm4740, %v4736, inf
      %4742 = vmin.xlane.f32.xlu0 %v4741
      %v4743 = vpop.xlane.xlu0 %4742
      %v4744 = vcvt.f32.s32 %v4743
      %v4745 = vcvt.f32.s32 %v4739
      %v4746 = vshll.u32 %v4745, 16
      %v4747 = vadd.s32 %v4746, %v4744
      %vm4748 = vcmp.eq.s32.totalorder %v4649, %v543
      %vm4749 = vcmp.eq.s32.totalorder %v4663, %v544
      %vm4750 = vcmp.eq.s32.totalorder %v4677, %v545
      %vm4751 = vcmp.eq.s32.totalorder %v4691, %v546
      %vm4752 = vcmp.eq.s32.totalorder %v4705, %v547
      %vm4753 = vcmp.eq.s32.totalorder %v4719, %v548
      %vm4754 = vcmp.eq.s32.totalorder %v4733, %v549
      %vm4755 = vcmp.eq.s32.totalorder %v4747, %v550
      %vm4756 = vmand %vm4748, %vm658
      %vm4757 = vmand %vm4749, %vm659
      %vm4758 = vmand %vm4750, %vm660
      %vm4759 = vmand %vm4751, %vm661
      %vm4760 = vmand %vm4752, %vm662
      %vm4761 = vmand %vm4753, %vm663
      %vm4762 = vmand %vm4754, %vm664
      %vm4763 = vmand %vm4755, %vm665
      %v4764 = vsel %vm4756, 1, 0
      %v4765 = vsel %vm4757, 1, 0
      %v4766 = vsel %vm4758, 1, 0
      %v4767 = vsel %vm4759, 1, 0
      %v4768 = vsel %vm4760, 1, 0
      %v4769 = vsel %vm4761, 1, 0
      %v4770 = vsel %vm4762, 1, 0
      %v4771 = vsel %vm4763, 1, 0
      %v4772 = vcvt.s32.f32 %v4764
      %v4773 = vcvt.s32.f32 %v4765
      %v4774 = vcvt.s32.f32 %v4766
      %v4775 = vcvt.s32.f32 %v4767
      %v4776 = vcvt.s32.f32 %v4768
      %v4777 = vcvt.s32.f32 %v4769
      %v4778 = vcvt.s32.f32 %v4770
      %v4779 = vcvt.s32.f32 %v4771
      %v4780 = vsel %vm706, %v4772, 0.0
      %v4781 = vsel %vm706, %v4773, 0.0
      %v4782 = vadd.f32 %v4780, %v4781
      %v4783 = vsel %vm706, %v4774, 0.0
      %v4784 = vadd.f32 %v4782, %v4783
      %v4785 = vsel %vm706, %v4775, 0.0
      %v4786 = vadd.f32 %v4784, %v4785
      %v4787 = vsel %vm706, %v4776, 0.0
      %v4788 = vadd.f32 %v4786, %v4787
      %v4789 = vsel %vm706, %v4777, 0.0
      %v4790 = vadd.f32 %v4788, %v4789
      %v4791 = vsel %vm706, %v4778, 0.0
      %v4792 = vadd.f32 %v4790, %v4791
      %v4793 = vsel %vm706, %v4779, 0.0
      %v4794 = vadd.f32 %v4792, %v4793
      %4795 = vadd.xlane.f32.xlu0 %v4794
      %v4796 = vpop.xlane.xlu0 %4795
      %v4797 = vrot.slane %v4796, 4
      %v4798 = vadd.f32 %v4796, %v4797
      %v4799 = vrot.slane %v4798, 2
      %v4800 = vadd.f32 %v4798, %v4799
      %v4801 = vrot.slane %v4800, 1
      %v4802 = vadd.f32 %v4800, %v4801
      %s4803 = vtos %v4802
      %vm4804 = vcmp.eq.s32.totalorder %v576, 1
      %v4805 = vsel %vm4804, %v4619, 0.0
      %v4806 = vadd.f32 %v2103, %v4805
      %v4807 = vstv %s4803
      %v4808 = vsel %vm4804, %v4807, 0.0
      %v4809 = vadd.f32 %v2106, %v4808
      %v4810 = vrcp.pop %v4515
      %v4811 = vmul.f32 %v4499, %v4810
      %v4812 = vrcp.pop %v4517
      %v4813 = vmul.f32 %v4501, %v4812
      %v4814 = vrcp.pop %v4519
      %v4815 = vmul.f32 %v4503, %v4814
      %v4816 = vrcp.pop %v4521
      %v4817 = vmul.f32 %v4505, %v4816
      %v4818 = vrcp.pop %v4523
      %v4819 = vmul.f32 %v4507, %v4818
      %v4820 = vrcp.pop %v4525
      %v4821 = vmul.f32 %v4509, %v4820
      %v4822 = vrcp.pop %v4527
      %v4823 = vmul.f32 %v4511, %v4822
      %v4824 = vrcp.pop %v4529
      %v4825 = vmul.f32 %v4513, %v4824
      %v4826 = vsub.f32 %v4811, %v617
      %v4827 = vsub.f32 %v4813, %v618
      %v4828 = vsub.f32 %v4815, %v619
      %v4829 = vsub.f32 %v4817, %v620
      %v4830 = vsub.f32 %v4819, %v621
      %v4831 = vsub.f32 %v4821, %v622
      %v4832 = vsub.f32 %v4823, %v623
      %v4833 = vsub.f32 %v4825, %v624
      %v4834 = vmul.f32 %v4826, %v2134
      %v4835 = vmul.f32 %v4827, %v2139
      %v4836 = vmul.f32 %v4828, %v2144
      %v4837 = vmul.f32 %v4829, %v2149
      %v4838 = vmul.f32 %v4830, %v2154
      %v4839 = vmul.f32 %v4831, %v2159
      %v4840 = vmul.f32 %v4832, %v2164
      %v4841 = vmul.f32 %v4833, %v2169
      %4842 = vmatprep.subr.mxu0 0.0
      %4843 = vmatpush1.msra.mxu0 %v551
      %4844 = vmatprep.subr.mxu0 0.0
      %4845 = vmatpush1.msra.mxu0 %v552
      %4846 = vmatprep.subr.mxu0 0.0
      %4847 = vmatpush1.msra.mxu0 %v553
      %4848 = vmatprep.subr.mxu0 0.0
      %4849 = vmatpush1.msra.mxu0 %v554
      %4850 = vmatprep.subr.mxu0 0.0
      %4851 = vmatpush1.msra.mxu0 %v555
      %4852 = vmatprep.subr.mxu0 0.0
      %4853 = vmatpush1.msra.mxu0 %v556
      %4854 = vmatprep.subr.mxu0 0.0
      %4855 = vmatpush1.msra.mxu0 %v557
      %4856 = vmatprep.subr.mxu0 0.0
      %4857 = vmatpush1.msra.mxu0 %v558
      %4858 = vmatprep.subr.mxu0 0.0
      %4859 = vmatpush1.msra.mxu0 %v559
      %4860 = vmatprep.subr.mxu0 0.0
      %4861 = vmatpush1.msra.mxu0 %v560
      %4862 = vmatprep.subr.mxu0 0.0
      %4863 = vmatpush1.msra.mxu0 %v561
      %4864 = vmatprep.subr.mxu0 0.0
      %4865 = vmatpush1.msra.mxu0 %v562
      %4866 = vmatprep.subr.mxu0 0.0
      %4867 = vmatpush1.msra.mxu0 %v563
      %4868 = vmatprep.subr.mxu0 0.0
      %4869 = vmatpush1.msra.mxu0 %v564
      %4870 = vmatprep.subr.mxu0 0.0
      %4871 = vmatpush1.msra.mxu0 %v565
      %4872 = vmatprep.subr.mxu0 0.0
      %4873 = vmatpush1.msra.mxu0 %v566
      %4874 = vmatprep.subr.mxu0 0.0
      %4875 = vmatpush1.msra.mxu0 0.0
      %4876 = vmatprep.subr.mxu0 0.0
      %4877 = vmatpush1.msra.mxu0 0.0
      %4878 = vmatprep.subr.mxu0 0.0
      %4879 = vmatpush1.msra.mxu0 0.0
      %4880 = vmatprep.subr.mxu0 0.0
      %4881 = vmatpush1.msra.mxu0 0.0
      %4882 = vmatprep.subr.mxu0 0.0
      %4883 = vmatpush1.msra.mxu0 0.0
      %4884 = vmatprep.subr.mxu0 0.0
      %4885 = vmatpush1.msra.mxu0 0.0
      %4886 = vmatprep.subr.mxu0 0.0
      %4887 = vmatpush1.msra.mxu0 0.0
      %4888 = vmatprep.subr.mxu0 0.0
      %4889 = vmatpush1.msra.mxu0 0.0
      %4890 = vmatprep.subr.mxu0 0.0
      %4891 = vmatpush1.msra.mxu0 0.0
      %4892 = vmatprep.subr.mxu0 0.0
      %4893 = vmatpush1.msra.mxu0 0.0
      %4894 = vmatprep.subr.mxu0 0.0
      %4895 = vmatpush1.msra.mxu0 0.0
      %4896 = vmatprep.subr.mxu0 0.0
      %4897 = vmatpush1.msra.mxu0 0.0
      %4898 = vmatprep.subr.mxu0 0.0
      %4899 = vmatpush1.msra.mxu0 0.0
      %4900 = vmatprep.subr.mxu0 0.0
      %4901 = vmatpush1.msra.mxu0 0.0
      %4902 = vmatprep.subr.mxu0 0.0
      %4903 = vmatpush1.msra.mxu0 0.0
      %4904 = vmatprep.subr.mxu0 0.0
      %4905 = vmatpush1.msra.mxu0 0.0
      %4906 = vmatprep.mubr.f32.mxu0 0.0
      %4907 = vmatmul.mubr.f32.gmra.mrb[0].mxu0 %v4834
      %v4908 = vpop.f32.mrb[0].mxu0
      %v4909 = vadd.f32 0.0, %v4908
      %v4910 = vpop.f32.mrb[0].mxu0
      %4911 = vmatprep.mubr.f32.mxu0 0.0
      %4912 = vmatmul.mubr.f32.gmra.mrb[0].mxu0 %v4835
      %v4913 = vpop.f32.mrb[0].mxu0
      %v4914 = vadd.f32 0.0, %v4913
      %v4915 = vpop.f32.mrb[0].mxu0
      %4916 = vmatprep.mubr.f32.mxu0 0.0
      %4917 = vmatmul.mubr.f32.gmra.mrb[0].mxu0 %v4836
      %v4918 = vpop.f32.mrb[0].mxu0
      %v4919 = vadd.f32 0.0, %v4918
      %v4920 = vpop.f32.mrb[0].mxu0
      %4921 = vmatprep.mubr.f32.mxu0 0.0
      %4922 = vmatmul.mubr.f32.gmra.mrb[0].mxu0 %v4837
      %v4923 = vpop.f32.mrb[0].mxu0
      %v4924 = vadd.f32 0.0, %v4923
      %v4925 = vpop.f32.mrb[0].mxu0
      %4926 = vmatprep.mubr.f32.mxu0 0.0
      %4927 = vmatmul.mubr.f32.gmra.mrb[0].mxu0 %v4838
      %v4928 = vpop.f32.mrb[0].mxu0
      %v4929 = vadd.f32 0.0, %v4928
      %v4930 = vpop.f32.mrb[0].mxu0
      %4931 = vmatprep.mubr.f32.mxu0 0.0
      %4932 = vmatmul.mubr.f32.gmra.mrb[0].mxu0 %v4839
      %v4933 = vpop.f32.mrb[0].mxu0
      %v4934 = vadd.f32 0.0, %v4933
      %v4935 = vpop.f32.mrb[0].mxu0
      %4936 = vmatprep.mubr.f32.mxu0 0.0
      %4937 = vmatmul.mubr.f32.gmra.mrb[0].mxu0 %v4840
      %v4938 = vpop.f32.mrb[0].mxu0
      %v4939 = vadd.f32 0.0, %v4938
      %v4940 = vpop.f32.mrb[0].mxu0
      %4941 = vmatprep.mubr.f32.mxu0 0.0
      %4942 = vmatmul.mubr.f32.gmra.mrb[0].mxu0 %v4841
      %v4943 = vpop.f32.mrb[0].mxu0
      %v4944 = vadd.f32 0.0, %v4943
      %v4945 = vpop.f32.mrb[0].mxu0
      %4946 = vdwg.mxu0
      %4947 = vmatprep.subr.mxu0 0.0
      %4948 = vmatpush1.msra.mxu0 %v4909
      %4949 = vmatprep.subr.mxu0 0.0
      %4950 = vmatpush1.msra.mxu0 %v4914
      %4951 = vmatprep.subr.mxu0 0.0
      %4952 = vmatpush1.msra.mxu0 %v4919
      %4953 = vmatprep.subr.mxu0 0.0
      %4954 = vmatpush1.msra.mxu0 %v4924
      %4955 = vmatprep.subr.mxu0 0.0
      %4956 = vmatpush1.msra.mxu0 %v4929
      %4957 = vmatprep.subr.mxu0 0.0
      %4958 = vmatpush1.msra.mxu0 %v4934
      %4959 = vmatprep.subr.mxu0 0.0
      %4960 = vmatpush1.msra.mxu0 %v4939
      %4961 = vmatprep.subr.mxu0 0.0
      %4962 = vmatpush1.msra.mxu0 %v4944
      %4963 = vmatprep.subr.mxu0 0.0
      %4964 = vmatpush1.msra.mxu0 0.0
      %4965 = vmatprep.subr.mxu0 0.0
      %4966 = vmatpush1.msra.mxu0 0.0
      %4967 = vmatprep.subr.mxu0 0.0
      %4968 = vmatpush1.msra.mxu0 0.0
      %4969 = vmatprep.subr.mxu0 0.0
      %4970 = vmatpush1.msra.mxu0 0.0
      %4971 = vmatprep.subr.mxu0 0.0
      %4972 = vmatpush1.msra.mxu0 0.0
      %4973 = vmatprep.subr.mxu0 0.0
      %4974 = vmatpush1.msra.mxu0 0.0
      %4975 = vmatprep.subr.mxu0 0.0
      %4976 = vmatpush1.msra.mxu0 0.0
      %4977 = vmatprep.subr.mxu0 0.0
      %4978 = vmatpush1.msra.mxu0 0.0
      %4979 = vmatprep.subr.mxu0 0.0
      %4980 = vmatpush1.msra.mxu0 0.0
      %4981 = vmatprep.subr.mxu0 0.0
      %4982 = vmatpush1.msra.mxu0 0.0
      %4983 = vmatprep.subr.mxu0 0.0
      %4984 = vmatpush1.msra.mxu0 0.0
      %4985 = vmatprep.subr.mxu0 0.0
      %4986 = vmatpush1.msra.mxu0 0.0
      %4987 = vmatprep.subr.mxu0 0.0
      %4988 = vmatpush1.msra.mxu0 0.0
      %4989 = vmatprep.subr.mxu0 0.0
      %4990 = vmatpush1.msra.mxu0 0.0
      %4991 = vmatprep.subr.mxu0 0.0
      %4992 = vmatpush1.msra.mxu0 0.0
      %4993 = vmatprep.subr.mxu0 0.0
      %4994 = vmatpush1.msra.mxu0 0.0
      %4995 = vmatprep.subr.mxu0 0.0
      %4996 = vmatpush1.msra.mxu0 0.0
      %4997 = vmatprep.subr.mxu0 0.0
      %4998 = vmatpush1.msra.mxu0 0.0
      %4999 = vmatprep.subr.mxu0 0.0
      %5000 = vmatpush1.msra.mxu0 0.0
      %5001 = vmatprep.subr.mxu0 0.0
      %5002 = vmatpush1.msra.mxu0 0.0
      %5003 = vmatprep.subr.mxu0 0.0
      %5004 = vmatpush1.msra.mxu0 0.0
      %5005 = vmatprep.subr.mxu0 0.0
      %5006 = vmatpush1.msra.mxu0 0.0
      %5007 = vmatprep.subr.mxu0 0.0
      %5008 = vmatpush1.msra.mxu0 0.0
      %5009 = vmatprep.subr.mxu0 0.0
      %5010 = vmatpush1.msra.mxu0 0.0
      %5011 = vmatprep.mubr.f32.mxu0 0.0
      %5012 = vmatmul.mubr.f32.gmra.mrb[0].mxu0 %v2286
      %v5013 = vpop.f32.mrb[0].mxu0
      %v5014 = vadd.f32 0.0, %v5013
      %v5015 = vpop.f32.mrb[0].mxu0
      %5016 = vmatprep.mubr.f32.mxu0 0.0
      %5017 = vmatmul.mubr.f32.gmra.mrb[0].mxu0 %v2289
      %v5018 = vpop.f32.mrb[0].mxu0
      %v5019 = vadd.f32 0.0, %v5018
      %v5020 = vpop.f32.mrb[0].mxu0
      %5021 = vmatprep.mubr.f32.mxu0 0.0
      %5022 = vmatmul.mubr.f32.gmra.mrb[0].mxu0 %v2292
      %v5023 = vpop.f32.mrb[0].mxu0
      %v5024 = vadd.f32 0.0, %v5023
      %v5025 = vpop.f32.mrb[0].mxu0
      %5026 = vmatprep.mubr.f32.mxu0 0.0
      %5027 = vmatmul.mubr.f32.gmra.mrb[0].mxu0 %v2295
      %v5028 = vpop.f32.mrb[0].mxu0
      %v5029 = vadd.f32 0.0, %v5028
      %v5030 = vpop.f32.mrb[0].mxu0
      %5031 = vmatprep.mubr.f32.mxu0 0.0
      %5032 = vmatmul.mubr.f32.gmra.mrb[0].mxu0 %v2298
      %v5033 = vpop.f32.mrb[0].mxu0
      %v5034 = vadd.f32 0.0, %v5033
      %v5035 = vpop.f32.mrb[0].mxu0
      %5036 = vmatprep.mubr.f32.mxu0 0.0
      %5037 = vmatmul.mubr.f32.gmra.mrb[0].mxu0 %v2301
      %v5038 = vpop.f32.mrb[0].mxu0
      %v5039 = vadd.f32 0.0, %v5038
      %v5040 = vpop.f32.mrb[0].mxu0
      %5041 = vmatprep.mubr.f32.mxu0 0.0
      %5042 = vmatmul.mubr.f32.gmra.mrb[0].mxu0 %v2304
      %v5043 = vpop.f32.mrb[0].mxu0
      %v5044 = vadd.f32 0.0, %v5043
      %v5045 = vpop.f32.mrb[0].mxu0
      %5046 = vmatprep.mubr.f32.mxu0 0.0
      %5047 = vmatmul.mubr.f32.gmra.mrb[0].mxu0 %v2307
      %v5048 = vpop.f32.mrb[0].mxu0
      %v5049 = vadd.f32 0.0, %v5048
      %v5050 = vpop.f32.mrb[0].mxu0
      %5051 = vmatprep.mubr.f32.mxu0 0.0
      %5052 = vmatmul.mubr.f32.gmra.mrb[0].mxu0 %v2310
      %v5053 = vpop.f32.mrb[0].mxu0
      %v5054 = vadd.f32 0.0, %v5053
      %v5055 = vpop.f32.mrb[0].mxu0
      %5056 = vmatprep.mubr.f32.mxu0 0.0
      %5057 = vmatmul.mubr.f32.gmra.mrb[0].mxu0 %v2313
      %v5058 = vpop.f32.mrb[0].mxu0
      %v5059 = vadd.f32 0.0, %v5058
      %v5060 = vpop.f32.mrb[0].mxu0
      %5061 = vmatprep.mubr.f32.mxu0 0.0
      %5062 = vmatmul.mubr.f32.gmra.mrb[0].mxu0 %v2316
      %v5063 = vpop.f32.mrb[0].mxu0
      %v5064 = vadd.f32 0.0, %v5063
      %v5065 = vpop.f32.mrb[0].mxu0
      %5066 = vmatprep.mubr.f32.mxu0 0.0
      %5067 = vmatmul.mubr.f32.gmra.mrb[0].mxu0 %v2319
      %v5068 = vpop.f32.mrb[0].mxu0
      %v5069 = vadd.f32 0.0, %v5068
      %v5070 = vpop.f32.mrb[0].mxu0
      %5071 = vmatprep.mubr.f32.mxu0 0.0
      %5072 = vmatmul.mubr.f32.gmra.mrb[0].mxu0 %v2322
      %v5073 = vpop.f32.mrb[0].mxu0
      %v5074 = vadd.f32 0.0, %v5073
      %v5075 = vpop.f32.mrb[0].mxu0
      %5076 = vmatprep.mubr.f32.mxu0 0.0
      %5077 = vmatmul.mubr.f32.gmra.mrb[0].mxu0 %v2325
      %v5078 = vpop.f32.mrb[0].mxu0
      %v5079 = vadd.f32 0.0, %v5078
      %v5080 = vpop.f32.mrb[0].mxu0
      %5081 = vmatprep.mubr.f32.mxu0 0.0
      %5082 = vmatmul.mubr.f32.gmra.mrb[0].mxu0 %v2328
      %v5083 = vpop.f32.mrb[0].mxu0
      %v5084 = vadd.f32 0.0, %v5083
      %v5085 = vpop.f32.mrb[0].mxu0
      %5086 = vmatprep.mubr.f32.mxu0 0.0
      %5087 = vmatmul.mubr.f32.gmra.mrb[0].mxu0 %v2331
      %v5088 = vpop.f32.mrb[0].mxu0
      %v5089 = vadd.f32 0.0, %v5088
      %v5090 = vpop.f32.mrb[0].mxu0
      %5091 = vmatprep.mubr.f32.mxu0 0.0
      %5092 = vmatmul.mubr.f32.gmra.mrb[0].mxu0 %v2334
      %v5093 = vpop.f32.mrb[0].mxu0
      %v5094 = vadd.f32 0.0, %v5093
      %v5095 = vpop.f32.mrb[0].mxu0
      %5096 = vmatprep.mubr.f32.mxu0 0.0
      %5097 = vmatmul.mubr.f32.gmra.mrb[0].mxu0 %v2337
      %v5098 = vpop.f32.mrb[0].mxu0
      %v5099 = vadd.f32 0.0, %v5098
      %v5100 = vpop.f32.mrb[0].mxu0
      %5101 = vmatprep.mubr.f32.mxu0 0.0
      %5102 = vmatmul.mubr.f32.gmra.mrb[0].mxu0 %v2340
      %v5103 = vpop.f32.mrb[0].mxu0
      %v5104 = vadd.f32 0.0, %v5103
      %v5105 = vpop.f32.mrb[0].mxu0
      %5106 = vmatprep.mubr.f32.mxu0 0.0
      %5107 = vmatmul.mubr.f32.gmra.mrb[0].mxu0 %v2343
      %v5108 = vpop.f32.mrb[0].mxu0
      %v5109 = vadd.f32 0.0, %v5108
      %v5110 = vpop.f32.mrb[0].mxu0
      %5111 = vmatprep.mubr.f32.mxu0 0.0
      %5112 = vmatmul.mubr.f32.gmra.mrb[0].mxu0 %v2346
      %v5113 = vpop.f32.mrb[0].mxu0
      %v5114 = vadd.f32 0.0, %v5113
      %v5115 = vpop.f32.mrb[0].mxu0
      %5116 = vmatprep.mubr.f32.mxu0 0.0
      %5117 = vmatmul.mubr.f32.gmra.mrb[0].mxu0 %v2349
      %v5118 = vpop.f32.mrb[0].mxu0
      %v5119 = vadd.f32 0.0, %v5118
      %v5120 = vpop.f32.mrb[0].mxu0
      %5121 = vmatprep.mubr.f32.mxu0 0.0
      %5122 = vmatmul.mubr.f32.gmra.mrb[0].mxu0 %v2352
      %v5123 = vpop.f32.mrb[0].mxu0
      %v5124 = vadd.f32 0.0, %v5123
      %v5125 = vpop.f32.mrb[0].mxu0
      %5126 = vmatprep.mubr.f32.mxu0 0.0
      %5127 = vmatmul.mubr.f32.gmra.mrb[0].mxu0 %v2355
      %v5128 = vpop.f32.mrb[0].mxu0
      %v5129 = vadd.f32 0.0, %v5128
      %v5130 = vpop.f32.mrb[0].mxu0
      %5131 = vmatprep.mubr.f32.mxu0 0.0
      %5132 = vmatmul.mubr.f32.gmra.mrb[0].mxu0 %v2358
      %v5133 = vpop.f32.mrb[0].mxu0
      %v5134 = vadd.f32 0.0, %v5133
      %v5135 = vpop.f32.mrb[0].mxu0
      %5136 = vmatprep.mubr.f32.mxu0 0.0
      %5137 = vmatmul.mubr.f32.gmra.mrb[0].mxu0 %v2361
      %v5138 = vpop.f32.mrb[0].mxu0
      %v5139 = vadd.f32 0.0, %v5138
      %v5140 = vpop.f32.mrb[0].mxu0
      %5141 = vmatprep.mubr.f32.mxu0 0.0
      %5142 = vmatmul.mubr.f32.gmra.mrb[0].mxu0 %v2364
      %v5143 = vpop.f32.mrb[0].mxu0
      %v5144 = vadd.f32 0.0, %v5143
      %v5145 = vpop.f32.mrb[0].mxu0
      %5146 = vmatprep.mubr.f32.mxu0 0.0
      %5147 = vmatmul.mubr.f32.gmra.mrb[0].mxu0 %v2367
      %v5148 = vpop.f32.mrb[0].mxu0
      %v5149 = vadd.f32 0.0, %v5148
      %v5150 = vpop.f32.mrb[0].mxu0
      %5151 = vmatprep.mubr.f32.mxu0 0.0
      %5152 = vmatmul.mubr.f32.gmra.mrb[0].mxu0 %v2370
      %v5153 = vpop.f32.mrb[0].mxu0
      %v5154 = vadd.f32 0.0, %v5153
      %v5155 = vpop.f32.mrb[0].mxu0
      %5156 = vmatprep.mubr.f32.mxu0 0.0
      %5157 = vmatmul.mubr.f32.gmra.mrb[0].mxu0 %v2373
      %v5158 = vpop.f32.mrb[0].mxu0
      %v5159 = vadd.f32 0.0, %v5158
      %v5160 = vpop.f32.mrb[0].mxu0
      %5161 = vmatprep.mubr.f32.mxu0 0.0
      %5162 = vmatmul.mubr.f32.gmra.mrb[0].mxu0 %v2376
      %v5163 = vpop.f32.mrb[0].mxu0
      %v5164 = vadd.f32 0.0, %v5163
      %v5165 = vpop.f32.mrb[0].mxu0
      %5166 = vmatprep.mubr.f32.mxu0 0.0
      %5167 = vmatmul.mubr.f32.gmra.mrb[0].mxu0 %v2379
      %v5168 = vpop.f32.mrb[0].mxu0
      %v5169 = vadd.f32 0.0, %v5168
      %v5170 = vpop.f32.mrb[0].mxu0
      %5171 = vmatprep.mubr.f32.mxu0 0.0
      %5172 = vmatmul.mubr.f32.gmra.mrb[0].mxu0 %v2382
      %v5173 = vpop.f32.mrb[0].mxu0
      %v5174 = vadd.f32 0.0, %v5173
      %v5175 = vpop.f32.mrb[0].mxu0
      %5176 = vmatprep.mubr.f32.mxu0 0.0
      %5177 = vmatmul.mubr.f32.gmra.mrb[0].mxu0 %v2385
      %v5178 = vpop.f32.mrb[0].mxu0
      %v5179 = vadd.f32 0.0, %v5178
      %v5180 = vpop.f32.mrb[0].mxu0
      %5181 = vmatprep.mubr.f32.mxu0 0.0
      %5182 = vmatmul.mubr.f32.gmra.mrb[0].mxu0 %v2388
      %v5183 = vpop.f32.mrb[0].mxu0
      %v5184 = vadd.f32 0.0, %v5183
      %v5185 = vpop.f32.mrb[0].mxu0
      %5186 = vmatprep.mubr.f32.mxu0 0.0
      %5187 = vmatmul.mubr.f32.gmra.mrb[0].mxu0 %v2391
      %v5188 = vpop.f32.mrb[0].mxu0
      %v5189 = vadd.f32 0.0, %v5188
      %v5190 = vpop.f32.mrb[0].mxu0
      %5191 = vmatprep.mubr.f32.mxu0 0.0
      %5192 = vmatmul.mubr.f32.gmra.mrb[0].mxu0 %v2394
      %v5193 = vpop.f32.mrb[0].mxu0
      %v5194 = vadd.f32 0.0, %v5193
      %v5195 = vpop.f32.mrb[0].mxu0
      %5196 = vmatprep.mubr.f32.mxu0 0.0
      %5197 = vmatmul.mubr.f32.gmra.mrb[0].mxu0 %v2397
      %v5198 = vpop.f32.mrb[0].mxu0
      %v5199 = vadd.f32 0.0, %v5198
      %v5200 = vpop.f32.mrb[0].mxu0
      %5201 = vmatprep.mubr.f32.mxu0 0.0
      %5202 = vmatmul.mubr.f32.gmra.mrb[0].mxu0 %v2400
      %v5203 = vpop.f32.mrb[0].mxu0
      %v5204 = vadd.f32 0.0, %v5203
      %v5205 = vpop.f32.mrb[0].mxu0
      %5206 = vmatprep.mubr.f32.mxu0 0.0
      %5207 = vmatmul.mubr.f32.gmra.mrb[0].mxu0 %v2403
      %v5208 = vpop.f32.mrb[0].mxu0
      %v5209 = vadd.f32 0.0, %v5208
      %v5210 = vpop.f32.mrb[0].mxu0
      %5211 = vmatprep.mubr.f32.mxu0 0.0
      %5212 = vmatmul.mubr.f32.gmra.mrb[0].mxu0 %v2406
      %v5213 = vpop.f32.mrb[0].mxu0
      %v5214 = vadd.f32 0.0, %v5213
      %v5215 = vpop.f32.mrb[0].mxu0
      %5216 = vmatprep.mubr.f32.mxu0 0.0
      %5217 = vmatmul.mubr.f32.gmra.mrb[0].mxu0 %v2409
      %v5218 = vpop.f32.mrb[0].mxu0
      %v5219 = vadd.f32 0.0, %v5218
      %v5220 = vpop.f32.mrb[0].mxu0
      %5221 = vmatprep.mubr.f32.mxu0 0.0
      %5222 = vmatmul.mubr.f32.gmra.mrb[0].mxu0 %v2412
      %v5223 = vpop.f32.mrb[0].mxu0
      %v5224 = vadd.f32 0.0, %v5223
      %v5225 = vpop.f32.mrb[0].mxu0
      %5226 = vmatprep.mubr.f32.mxu0 0.0
      %5227 = vmatmul.mubr.f32.gmra.mrb[0].mxu0 %v2415
      %v5228 = vpop.f32.mrb[0].mxu0
      %v5229 = vadd.f32 0.0, %v5228
      %v5230 = vpop.f32.mrb[0].mxu0
      %5231 = vmatprep.mubr.f32.mxu0 0.0
      %5232 = vmatmul.mubr.f32.gmra.mrb[0].mxu0 %v2418
      %v5233 = vpop.f32.mrb[0].mxu0
      %v5234 = vadd.f32 0.0, %v5233
      %v5235 = vpop.f32.mrb[0].mxu0
      %5236 = vmatprep.mubr.f32.mxu0 0.0
      %5237 = vmatmul.mubr.f32.gmra.mrb[0].mxu0 %v2421
      %v5238 = vpop.f32.mrb[0].mxu0
      %v5239 = vadd.f32 0.0, %v5238
      %v5240 = vpop.f32.mrb[0].mxu0
      %5241 = vmatprep.mubr.f32.mxu0 0.0
      %5242 = vmatmul.mubr.f32.gmra.mrb[0].mxu0 %v2424
      %v5243 = vpop.f32.mrb[0].mxu0
      %v5244 = vadd.f32 0.0, %v5243
      %v5245 = vpop.f32.mrb[0].mxu0
      %5246 = vmatprep.mubr.f32.mxu0 0.0
      %5247 = vmatmul.mubr.f32.gmra.mrb[0].mxu0 %v2427
      %v5248 = vpop.f32.mrb[0].mxu0
      %v5249 = vadd.f32 0.0, %v5248
      %v5250 = vpop.f32.mrb[0].mxu0
      %5251 = vmatprep.mubr.f32.mxu0 0.0
      %5252 = vmatmul.mubr.f32.gmra.mrb[0].mxu0 %v2430
      %v5253 = vpop.f32.mrb[0].mxu0
      %v5254 = vadd.f32 0.0, %v5253
      %v5255 = vpop.f32.mrb[0].mxu0
      %5256 = vmatprep.mubr.f32.mxu0 0.0
      %5257 = vmatmul.mubr.f32.gmra.mrb[0].mxu0 %v2433
      %v5258 = vpop.f32.mrb[0].mxu0
      %v5259 = vadd.f32 0.0, %v5258
      %v5260 = vpop.f32.mrb[0].mxu0
      %5261 = vmatprep.mubr.f32.mxu0 0.0
      %5262 = vmatmul.mubr.f32.gmra.mrb[0].mxu0 %v2436
      %v5263 = vpop.f32.mrb[0].mxu0
      %v5264 = vadd.f32 0.0, %v5263
      %v5265 = vpop.f32.mrb[0].mxu0
      %5266 = vmatprep.mubr.f32.mxu0 0.0
      %5267 = vmatmul.mubr.f32.gmra.mrb[0].mxu0 %v2439
      %v5268 = vpop.f32.mrb[0].mxu0
      %v5269 = vadd.f32 0.0, %v5268
      %v5270 = vpop.f32.mrb[0].mxu0
      %5271 = vmatprep.mubr.f32.mxu0 0.0
      %5272 = vmatmul.mubr.f32.gmra.mrb[0].mxu0 %v2442
      %v5273 = vpop.f32.mrb[0].mxu0
      %v5274 = vadd.f32 0.0, %v5273
      %v5275 = vpop.f32.mrb[0].mxu0
      %5276 = vmatprep.mubr.f32.mxu0 0.0
      %5277 = vmatmul.mubr.f32.gmra.mrb[0].mxu0 %v2445
      %v5278 = vpop.f32.mrb[0].mxu0
      %v5279 = vadd.f32 0.0, %v5278
      %v5280 = vpop.f32.mrb[0].mxu0
      %5281 = vmatprep.mubr.f32.mxu0 0.0
      %5282 = vmatmul.mubr.f32.gmra.mrb[0].mxu0 %v2448
      %v5283 = vpop.f32.mrb[0].mxu0
      %v5284 = vadd.f32 0.0, %v5283
      %v5285 = vpop.f32.mrb[0].mxu0
      %5286 = vmatprep.mubr.f32.mxu0 0.0
      %5287 = vmatmul.mubr.f32.gmra.mrb[0].mxu0 %v2451
      %v5288 = vpop.f32.mrb[0].mxu0
      %v5289 = vadd.f32 0.0, %v5288
      %v5290 = vpop.f32.mrb[0].mxu0
      %5291 = vmatprep.mubr.f32.mxu0 0.0
      %5292 = vmatmul.mubr.f32.gmra.mrb[0].mxu0 %v2454
      %v5293 = vpop.f32.mrb[0].mxu0
      %v5294 = vadd.f32 0.0, %v5293
      %v5295 = vpop.f32.mrb[0].mxu0
      %5296 = vmatprep.mubr.f32.mxu0 0.0
      %5297 = vmatmul.mubr.f32.gmra.mrb[0].mxu0 %v2457
      %v5298 = vpop.f32.mrb[0].mxu0
      %v5299 = vadd.f32 0.0, %v5298
      %v5300 = vpop.f32.mrb[0].mxu0
      %5301 = vmatprep.mubr.f32.mxu0 0.0
      %5302 = vmatmul.mubr.f32.gmra.mrb[0].mxu0 %v2460
      %v5303 = vpop.f32.mrb[0].mxu0
      %v5304 = vadd.f32 0.0, %v5303
      %v5305 = vpop.f32.mrb[0].mxu0
      %5306 = vmatprep.mubr.f32.mxu0 0.0
      %5307 = vmatmul.mubr.f32.gmra.mrb[0].mxu0 %v2463
      %v5308 = vpop.f32.mrb[0].mxu0
      %v5309 = vadd.f32 0.0, %v5308
      %v5310 = vpop.f32.mrb[0].mxu0
      %5311 = vmatprep.mubr.f32.mxu0 0.0
      %5312 = vmatmul.mubr.f32.gmra.mrb[0].mxu0 %v2466
      %v5313 = vpop.f32.mrb[0].mxu0
      %v5314 = vadd.f32 0.0, %v5313
      %v5315 = vpop.f32.mrb[0].mxu0
      %5316 = vmatprep.mubr.f32.mxu0 0.0
      %5317 = vmatmul.mubr.f32.gmra.mrb[0].mxu0 %v2469
      %v5318 = vpop.f32.mrb[0].mxu0
      %v5319 = vadd.f32 0.0, %v5318
      %v5320 = vpop.f32.mrb[0].mxu0
      %5321 = vmatprep.mubr.f32.mxu0 0.0
      %5322 = vmatmul.mubr.f32.gmra.mrb[0].mxu0 %v2472
      %v5323 = vpop.f32.mrb[0].mxu0
      %v5324 = vadd.f32 0.0, %v5323
      %v5325 = vpop.f32.mrb[0].mxu0
      %5326 = vmatprep.mubr.f32.mxu0 0.0
      %5327 = vmatmul.mubr.f32.gmra.mrb[0].mxu0 %v2475
      %v5328 = vpop.f32.mrb[0].mxu0
      %v5329 = vadd.f32 0.0, %v5328
      %v5330 = vpop.f32.mrb[0].mxu0
      %5331 = vmatprep.mubr.f32.mxu0 0.0
      %5332 = vmatmul.mubr.f32.gmra.mrb[0].mxu0 %v2478
      %v5333 = vpop.f32.mrb[0].mxu0
      %v5334 = vadd.f32 0.0, %v5333
      %v5335 = vpop.f32.mrb[0].mxu0
      %5336 = vmatprep.mubr.f32.mxu0 0.0
      %5337 = vmatmul.mubr.f32.gmra.mrb[0].mxu0 %v2481
      %v5338 = vpop.f32.mrb[0].mxu0
      %v5339 = vadd.f32 0.0, %v5338
      %v5340 = vpop.f32.mrb[0].mxu0
      %5341 = vmatprep.mubr.f32.mxu0 0.0
      %5342 = vmatmul.mubr.f32.gmra.mrb[0].mxu0 %v2484
      %v5343 = vpop.f32.mrb[0].mxu0
      %v5344 = vadd.f32 0.0, %v5343
      %v5345 = vpop.f32.mrb[0].mxu0
      %5346 = vmatprep.mubr.f32.mxu0 0.0
      %5347 = vmatmul.mubr.f32.gmra.mrb[0].mxu0 %v2487
      %v5348 = vpop.f32.mrb[0].mxu0
      %v5349 = vadd.f32 0.0, %v5348
      %v5350 = vpop.f32.mrb[0].mxu0
      %5351 = vmatprep.mubr.f32.mxu0 0.0
      %5352 = vmatmul.mubr.f32.gmra.mrb[0].mxu0 %v2490
      %v5353 = vpop.f32.mrb[0].mxu0
      %v5354 = vadd.f32 0.0, %v5353
      %v5355 = vpop.f32.mrb[0].mxu0
      %5356 = vmatprep.mubr.f32.mxu0 0.0
      %5357 = vmatmul.mubr.f32.gmra.mrb[0].mxu0 %v2493
      %v5358 = vpop.f32.mrb[0].mxu0
      %v5359 = vadd.f32 0.0, %v5358
      %v5360 = vpop.f32.mrb[0].mxu0
      %5361 = vmatprep.mubr.f32.mxu0 0.0
      %5362 = vmatmul.mubr.f32.gmra.mrb[0].mxu0 %v2496
      %v5363 = vpop.f32.mrb[0].mxu0
      %v5364 = vadd.f32 0.0, %v5363
      %v5365 = vpop.f32.mrb[0].mxu0
      %5366 = vmatprep.mubr.f32.mxu0 0.0
      %5367 = vmatmul.mubr.f32.gmra.mrb[0].mxu0 %v2499
      %v5368 = vpop.f32.mrb[0].mxu0
      %v5369 = vadd.f32 0.0, %v5368
      %v5370 = vpop.f32.mrb[0].mxu0
      %5371 = vmatprep.mubr.f32.mxu0 0.0
      %5372 = vmatmul.mubr.f32.gmra.mrb[0].mxu0 %v2502
      %v5373 = vpop.f32.mrb[0].mxu0
      %v5374 = vadd.f32 0.0, %v5373
      %v5375 = vpop.f32.mrb[0].mxu0
      %5376 = vmatprep.mubr.f32.mxu0 0.0
      %5377 = vmatmul.mubr.f32.gmra.mrb[0].mxu0 %v2505
      %v5378 = vpop.f32.mrb[0].mxu0
      %v5379 = vadd.f32 0.0, %v5378
      %v5380 = vpop.f32.mrb[0].mxu0
      %5381 = vmatprep.mubr.f32.mxu0 0.0
      %5382 = vmatmul.mubr.f32.gmra.mrb[0].mxu0 %v2508
      %v5383 = vpop.f32.mrb[0].mxu0
      %v5384 = vadd.f32 0.0, %v5383
      %v5385 = vpop.f32.mrb[0].mxu0
      %5386 = vmatprep.mubr.f32.mxu0 0.0
      %5387 = vmatmul.mubr.f32.gmra.mrb[0].mxu0 %v2511
      %v5388 = vpop.f32.mrb[0].mxu0
      %v5389 = vadd.f32 0.0, %v5388
      %v5390 = vpop.f32.mrb[0].mxu0
      %5391 = vmatprep.mubr.f32.mxu0 0.0
      %5392 = vmatmul.mubr.f32.gmra.mrb[0].mxu0 %v2514
      %v5393 = vpop.f32.mrb[0].mxu0
      %v5394 = vadd.f32 0.0, %v5393
      %v5395 = vpop.f32.mrb[0].mxu0
      %5396 = vmatprep.mubr.f32.mxu0 0.0
      %5397 = vmatmul.mubr.f32.gmra.mrb[0].mxu0 %v2517
      %v5398 = vpop.f32.mrb[0].mxu0
      %v5399 = vadd.f32 0.0, %v5398
      %v5400 = vpop.f32.mrb[0].mxu0
      %5401 = vmatprep.mubr.f32.mxu0 0.0
      %5402 = vmatmul.mubr.f32.gmra.mrb[0].mxu0 %v2520
      %v5403 = vpop.f32.mrb[0].mxu0
      %v5404 = vadd.f32 0.0, %v5403
      %v5405 = vpop.f32.mrb[0].mxu0
      %5406 = vmatprep.mubr.f32.mxu0 0.0
      %5407 = vmatmul.mubr.f32.gmra.mrb[0].mxu0 %v2523
      %v5408 = vpop.f32.mrb[0].mxu0
      %v5409 = vadd.f32 0.0, %v5408
      %v5410 = vpop.f32.mrb[0].mxu0
      %5411 = vmatprep.mubr.f32.mxu0 0.0
      %5412 = vmatmul.mubr.f32.gmra.mrb[0].mxu0 %v2526
      %v5413 = vpop.f32.mrb[0].mxu0
      %v5414 = vadd.f32 0.0, %v5413
      %v5415 = vpop.f32.mrb[0].mxu0
      %5416 = vmatprep.mubr.f32.mxu0 0.0
      %5417 = vmatmul.mubr.f32.gmra.mrb[0].mxu0 %v2529
      %v5418 = vpop.f32.mrb[0].mxu0
      %v5419 = vadd.f32 0.0, %v5418
      %v5420 = vpop.f32.mrb[0].mxu0
      %5421 = vmatprep.mubr.f32.mxu0 0.0
      %5422 = vmatmul.mubr.f32.gmra.mrb[0].mxu0 %v2532
      %v5423 = vpop.f32.mrb[0].mxu0
      %v5424 = vadd.f32 0.0, %v5423
      %v5425 = vpop.f32.mrb[0].mxu0
      %5426 = vmatprep.mubr.f32.mxu0 0.0
      %5427 = vmatmul.mubr.f32.gmra.mrb[0].mxu0 %v2535
      %v5428 = vpop.f32.mrb[0].mxu0
      %v5429 = vadd.f32 0.0, %v5428
      %v5430 = vpop.f32.mrb[0].mxu0
      %5431 = vmatprep.mubr.f32.mxu0 0.0
      %5432 = vmatmul.mubr.f32.gmra.mrb[0].mxu0 %v2538
      %v5433 = vpop.f32.mrb[0].mxu0
      %v5434 = vadd.f32 0.0, %v5433
      %v5435 = vpop.f32.mrb[0].mxu0
      %5436 = vmatprep.mubr.f32.mxu0 0.0
      %5437 = vmatmul.mubr.f32.gmra.mrb[0].mxu0 %v2541
      %v5438 = vpop.f32.mrb[0].mxu0
      %v5439 = vadd.f32 0.0, %v5438
      %v5440 = vpop.f32.mrb[0].mxu0
      %5441 = vmatprep.mubr.f32.mxu0 0.0
      %5442 = vmatmul.mubr.f32.gmra.mrb[0].mxu0 %v2544
      %v5443 = vpop.f32.mrb[0].mxu0
      %v5444 = vadd.f32 0.0, %v5443
      %v5445 = vpop.f32.mrb[0].mxu0
      %5446 = vmatprep.mubr.f32.mxu0 0.0
      %5447 = vmatmul.mubr.f32.gmra.mrb[0].mxu0 %v2547
      %v5448 = vpop.f32.mrb[0].mxu0
      %v5449 = vadd.f32 0.0, %v5448
      %v5450 = vpop.f32.mrb[0].mxu0
      %5451 = vmatprep.mubr.f32.mxu0 0.0
      %5452 = vmatmul.mubr.f32.gmra.mrb[0].mxu0 %v2550
      %v5453 = vpop.f32.mrb[0].mxu0
      %v5454 = vadd.f32 0.0, %v5453
      %v5455 = vpop.f32.mrb[0].mxu0
      %5456 = vmatprep.mubr.f32.mxu0 0.0
      %5457 = vmatmul.mubr.f32.gmra.mrb[0].mxu0 %v2553
      %v5458 = vpop.f32.mrb[0].mxu0
      %v5459 = vadd.f32 0.0, %v5458
      %v5460 = vpop.f32.mrb[0].mxu0
      %5461 = vmatprep.mubr.f32.mxu0 0.0
      %5462 = vmatmul.mubr.f32.gmra.mrb[0].mxu0 %v2556
      %v5463 = vpop.f32.mrb[0].mxu0
      %v5464 = vadd.f32 0.0, %v5463
      %v5465 = vpop.f32.mrb[0].mxu0
      %5466 = vmatprep.mubr.f32.mxu0 0.0
      %5467 = vmatmul.mubr.f32.gmra.mrb[0].mxu0 %v2559
      %v5468 = vpop.f32.mrb[0].mxu0
      %v5469 = vadd.f32 0.0, %v5468
      %v5470 = vpop.f32.mrb[0].mxu0
      %5471 = vmatprep.mubr.f32.mxu0 0.0
      %5472 = vmatmul.mubr.f32.gmra.mrb[0].mxu0 %v2562
      %v5473 = vpop.f32.mrb[0].mxu0
      %v5474 = vadd.f32 0.0, %v5473
      %v5475 = vpop.f32.mrb[0].mxu0
      %5476 = vmatprep.mubr.f32.mxu0 0.0
      %5477 = vmatmul.mubr.f32.gmra.mrb[0].mxu0 %v2565
      %v5478 = vpop.f32.mrb[0].mxu0
      %v5479 = vadd.f32 0.0, %v5478
      %v5480 = vpop.f32.mrb[0].mxu0
      %5481 = vmatprep.mubr.f32.mxu0 0.0
      %5482 = vmatmul.mubr.f32.gmra.mrb[0].mxu0 %v2568
      %v5483 = vpop.f32.mrb[0].mxu0
      %v5484 = vadd.f32 0.0, %v5483
      %v5485 = vpop.f32.mrb[0].mxu0
      %5486 = vmatprep.mubr.f32.mxu0 0.0
      %5487 = vmatmul.mubr.f32.gmra.mrb[0].mxu0 %v2571
      %v5488 = vpop.f32.mrb[0].mxu0
      %v5489 = vadd.f32 0.0, %v5488
      %v5490 = vpop.f32.mrb[0].mxu0
      %5491 = vmatprep.mubr.f32.mxu0 0.0
      %5492 = vmatmul.mubr.f32.gmra.mrb[0].mxu0 %v2574
      %v5493 = vpop.f32.mrb[0].mxu0
      %v5494 = vadd.f32 0.0, %v5493
      %v5495 = vpop.f32.mrb[0].mxu0
      %5496 = vmatprep.mubr.f32.mxu0 0.0
      %5497 = vmatmul.mubr.f32.gmra.mrb[0].mxu0 %v2577
      %v5498 = vpop.f32.mrb[0].mxu0
      %v5499 = vadd.f32 0.0, %v5498
      %v5500 = vpop.f32.mrb[0].mxu0
      %5501 = vmatprep.mubr.f32.mxu0 0.0
      %5502 = vmatmul.mubr.f32.gmra.mrb[0].mxu0 %v2580
      %v5503 = vpop.f32.mrb[0].mxu0
      %v5504 = vadd.f32 0.0, %v5503
      %v5505 = vpop.f32.mrb[0].mxu0
      %5506 = vmatprep.mubr.f32.mxu0 0.0
      %5507 = vmatmul.mubr.f32.gmra.mrb[0].mxu0 %v2583
      %v5508 = vpop.f32.mrb[0].mxu0
      %v5509 = vadd.f32 0.0, %v5508
      %v5510 = vpop.f32.mrb[0].mxu0
      %5511 = vmatprep.mubr.f32.mxu0 0.0
      %5512 = vmatmul.mubr.f32.gmra.mrb[0].mxu0 %v2586
      %v5513 = vpop.f32.mrb[0].mxu0
      %v5514 = vadd.f32 0.0, %v5513
      %v5515 = vpop.f32.mrb[0].mxu0
      %5516 = vmatprep.mubr.f32.mxu0 0.0
      %5517 = vmatmul.mubr.f32.gmra.mrb[0].mxu0 %v2589
      %v5518 = vpop.f32.mrb[0].mxu0
      %v5519 = vadd.f32 0.0, %v5518
      %v5520 = vpop.f32.mrb[0].mxu0
      %5521 = vmatprep.mubr.f32.mxu0 0.0
      %5522 = vmatmul.mubr.f32.gmra.mrb[0].mxu0 %v2592
      %v5523 = vpop.f32.mrb[0].mxu0
      %v5524 = vadd.f32 0.0, %v5523
      %v5525 = vpop.f32.mrb[0].mxu0
      %5526 = vmatprep.mubr.f32.mxu0 0.0
      %5527 = vmatmul.mubr.f32.gmra.mrb[0].mxu0 %v2595
      %v5528 = vpop.f32.mrb[0].mxu0
      %v5529 = vadd.f32 0.0, %v5528
      %v5530 = vpop.f32.mrb[0].mxu0
      %5531 = vmatprep.mubr.f32.mxu0 0.0
      %5532 = vmatmul.mubr.f32.gmra.mrb[0].mxu0 %v2598
      %v5533 = vpop.f32.mrb[0].mxu0
      %v5534 = vadd.f32 0.0, %v5533
      %v5535 = vpop.f32.mrb[0].mxu0
      %5536 = vmatprep.mubr.f32.mxu0 0.0
      %5537 = vmatmul.mubr.f32.gmra.mrb[0].mxu0 %v2601
      %v5538 = vpop.f32.mrb[0].mxu0
      %v5539 = vadd.f32 0.0, %v5538
      %v5540 = vpop.f32.mrb[0].mxu0
      %5541 = vmatprep.mubr.f32.mxu0 0.0
      %5542 = vmatmul.mubr.f32.gmra.mrb[0].mxu0 %v2604
      %v5543 = vpop.f32.mrb[0].mxu0
      %v5544 = vadd.f32 0.0, %v5543
      %v5545 = vpop.f32.mrb[0].mxu0
      %5546 = vmatprep.mubr.f32.mxu0 0.0
      %5547 = vmatmul.mubr.f32.gmra.mrb[0].mxu0 %v2607
      %v5548 = vpop.f32.mrb[0].mxu0
      %v5549 = vadd.f32 0.0, %v5548
      %v5550 = vpop.f32.mrb[0].mxu0
      %5551 = vmatprep.mubr.f32.mxu0 0.0
      %5552 = vmatmul.mubr.f32.gmra.mrb[0].mxu0 %v2610
      %v5553 = vpop.f32.mrb[0].mxu0
      %v5554 = vadd.f32 0.0, %v5553
      %v5555 = vpop.f32.mrb[0].mxu0
      %5556 = vmatprep.mubr.f32.mxu0 0.0
      %5557 = vmatmul.mubr.f32.gmra.mrb[0].mxu0 %v2613
      %v5558 = vpop.f32.mrb[0].mxu0
      %v5559 = vadd.f32 0.0, %v5558
      %v5560 = vpop.f32.mrb[0].mxu0
      %5561 = vmatprep.mubr.f32.mxu0 0.0
      %5562 = vmatmul.mubr.f32.gmra.mrb[0].mxu0 %v2616
      %v5563 = vpop.f32.mrb[0].mxu0
      %v5564 = vadd.f32 0.0, %v5563
      %v5565 = vpop.f32.mrb[0].mxu0
      %5566 = vmatprep.mubr.f32.mxu0 0.0
      %5567 = vmatmul.mubr.f32.gmra.mrb[0].mxu0 %v2619
      %v5568 = vpop.f32.mrb[0].mxu0
      %v5569 = vadd.f32 0.0, %v5568
      %v5570 = vpop.f32.mrb[0].mxu0
      %5571 = vmatprep.mubr.f32.mxu0 0.0
      %5572 = vmatmul.mubr.f32.gmra.mrb[0].mxu0 %v2622
      %v5573 = vpop.f32.mrb[0].mxu0
      %v5574 = vadd.f32 0.0, %v5573
      %v5575 = vpop.f32.mrb[0].mxu0
      %5576 = vmatprep.mubr.f32.mxu0 0.0
      %5577 = vmatmul.mubr.f32.gmra.mrb[0].mxu0 %v2625
      %v5578 = vpop.f32.mrb[0].mxu0
      %v5579 = vadd.f32 0.0, %v5578
      %v5580 = vpop.f32.mrb[0].mxu0
      %5581 = vmatprep.mubr.f32.mxu0 0.0
      %5582 = vmatmul.mubr.f32.gmra.mrb[0].mxu0 %v2628
      %v5583 = vpop.f32.mrb[0].mxu0
      %v5584 = vadd.f32 0.0, %v5583
      %v5585 = vpop.f32.mrb[0].mxu0
      %5586 = vmatprep.mubr.f32.mxu0 0.0
      %5587 = vmatmul.mubr.f32.gmra.mrb[0].mxu0 %v2631
      %v5588 = vpop.f32.mrb[0].mxu0
      %v5589 = vadd.f32 0.0, %v5588
      %v5590 = vpop.f32.mrb[0].mxu0
      %5591 = vmatprep.mubr.f32.mxu0 0.0
      %5592 = vmatmul.mubr.f32.gmra.mrb[0].mxu0 %v2634
      %v5593 = vpop.f32.mrb[0].mxu0
      %v5594 = vadd.f32 0.0, %v5593
      %v5595 = vpop.f32.mrb[0].mxu0
      %5596 = vmatprep.mubr.f32.mxu0 0.0
      %5597 = vmatmul.mubr.f32.gmra.mrb[0].mxu0 %v2637
      %v5598 = vpop.f32.mrb[0].mxu0
      %v5599 = vadd.f32 0.0, %v5598
      %v5600 = vpop.f32.mrb[0].mxu0
      %5601 = vmatprep.mubr.f32.mxu0 0.0
      %5602 = vmatmul.mubr.f32.gmra.mrb[0].mxu0 %v2640
      %v5603 = vpop.f32.mrb[0].mxu0
      %v5604 = vadd.f32 0.0, %v5603
      %v5605 = vpop.f32.mrb[0].mxu0
      %5606 = vmatprep.mubr.f32.mxu0 0.0
      %5607 = vmatmul.mubr.f32.gmra.mrb[0].mxu0 %v2643
      %v5608 = vpop.f32.mrb[0].mxu0
      %v5609 = vadd.f32 0.0, %v5608
      %v5610 = vpop.f32.mrb[0].mxu0
      %5611 = vmatprep.mubr.f32.mxu0 0.0
      %5612 = vmatmul.mubr.f32.gmra.mrb[0].mxu0 %v2646
      %v5613 = vpop.f32.mrb[0].mxu0
      %v5614 = vadd.f32 0.0, %v5613
      %v5615 = vpop.f32.mrb[0].mxu0
      %5616 = vmatprep.mubr.f32.mxu0 0.0
      %5617 = vmatmul.mubr.f32.gmra.mrb[0].mxu0 %v2649
      %v5618 = vpop.f32.mrb[0].mxu0
      %v5619 = vadd.f32 0.0, %v5618
      %v5620 = vpop.f32.mrb[0].mxu0
      %5621 = vmatprep.mubr.f32.mxu0 0.0
      %5622 = vmatmul.mubr.f32.gmra.mrb[0].mxu0 %v2652
      %v5623 = vpop.f32.mrb[0].mxu0
      %v5624 = vadd.f32 0.0, %v5623
      %v5625 = vpop.f32.mrb[0].mxu0
      %5626 = vmatprep.mubr.f32.mxu0 0.0
      %5627 = vmatmul.mubr.f32.gmra.mrb[0].mxu0 %v2655
      %v5628 = vpop.f32.mrb[0].mxu0
      %v5629 = vadd.f32 0.0, %v5628
      %v5630 = vpop.f32.mrb[0].mxu0
      %5631 = vmatprep.mubr.f32.mxu0 0.0
      %5632 = vmatmul.mubr.f32.gmra.mrb[0].mxu0 %v2658
      %v5633 = vpop.f32.mrb[0].mxu0
      %v5634 = vadd.f32 0.0, %v5633
      %v5635 = vpop.f32.mrb[0].mxu0
      %5636 = vmatprep.mubr.f32.mxu0 0.0
      %5637 = vmatmul.mubr.f32.gmra.mrb[0].mxu0 %v2661
      %v5638 = vpop.f32.mrb[0].mxu0
      %v5639 = vadd.f32 0.0, %v5638
      %v5640 = vpop.f32.mrb[0].mxu0
      %5641 = vmatprep.mubr.f32.mxu0 0.0
      %5642 = vmatmul.mubr.f32.gmra.mrb[0].mxu0 %v2664
      %v5643 = vpop.f32.mrb[0].mxu0
      %v5644 = vadd.f32 0.0, %v5643
      %v5645 = vpop.f32.mrb[0].mxu0
      %5646 = vmatprep.mubr.f32.mxu0 0.0
      %5647 = vmatmul.mubr.f32.gmra.mrb[0].mxu0 %v2667
      %v5648 = vpop.f32.mrb[0].mxu0
      %v5649 = vadd.f32 0.0, %v5648
      %v5650 = vpop.f32.mrb[0].mxu0
      %5651 = vdwg.mxu0
      %v5652 = vsel %vm899, %v4909, 0.0
      %v5653 = vsel %vm899, %v4914, 0.0
      %v5654 = vadd.f32 %v5652, %v5653
      %v5655 = vsel %vm899, %v4919, 0.0
      %v5656 = vadd.f32 %v5654, %v5655
      %v5657 = vsel %vm899, %v4924, 0.0
      %v5658 = vadd.f32 %v5656, %v5657
      %v5659 = vsel %vm899, %v4929, 0.0
      %v5660 = vadd.f32 %v5658, %v5659
      %v5661 = vsel %vm899, %v4934, 0.0
      %v5662 = vadd.f32 %v5660, %v5661
      %v5663 = vsel %vm899, %v4939, 0.0
      %v5664 = vadd.f32 %v5662, %v5663
      %v5665 = vsel %vm899, %v4944, 0.0
      %v5666 = vadd.f32 %v5664, %v5665
      %v5667 = vrot.slane %v5666, 4
      %v5668 = vadd.f32 %v5666, %v5667
      %v5669 = vrot.slane %v5668, 2
      %v5670 = vadd.f32 %v5668, %v5669
      %v5671 = vrot.slane %v5670, 1
      %v5672 = vadd.f32 %v5670, %v5671
      %v5673 = vmul.f32 %v5014, 0.4
      %v5674 = vmul.f32 %v5019, 0.4
      %v5675 = vmul.f32 %v5024, 0.4
      %v5676 = vmul.f32 %v5029, 0.4
      %v5677 = vmul.f32 %v5034, 0.4
      %v5678 = vmul.f32 %v5039, 0.4
      %v5679 = vmul.f32 %v5044, 0.4
      %v5680 = vmul.f32 %v5049, 0.4
      %v5681 = vmul.f32 %v5054, 0.4
      %v5682 = vmul.f32 %v5059, 0.4
      %v5683 = vmul.f32 %v5064, 0.4
      %v5684 = vmul.f32 %v5069, 0.4
      %v5685 = vmul.f32 %v5074, 0.4
      %v5686 = vmul.f32 %v5079, 0.4
      %v5687 = vmul.f32 %v5084, 0.4
      %v5688 = vmul.f32 %v5089, 0.4
      %v5689 = vmul.f32 %v5094, 0.4
      %v5690 = vmul.f32 %v5099, 0.4
      %v5691 = vmul.f32 %v5104, 0.4
      %v5692 = vmul.f32 %v5109, 0.4
      %v5693 = vmul.f32 %v5114, 0.4
      %v5694 = vmul.f32 %v5119, 0.4
      %v5695 = vmul.f32 %v5124, 0.4
      %v5696 = vmul.f32 %v5129, 0.4
      %v5697 = vmul.f32 %v5134, 0.4
      %v5698 = vmul.f32 %v5139, 0.4
      %v5699 = vmul.f32 %v5144, 0.4
      %v5700 = vmul.f32 %v5149, 0.4
      %v5701 = vmul.f32 %v5154, 0.4
      %v5702 = vmul.f32 %v5159, 0.4
      %v5703 = vmul.f32 %v5164, 0.4
      %v5704 = vmul.f32 %v5169, 0.4
      %v5705 = vmul.f32 %v5174, 0.4
      %v5706 = vmul.f32 %v5179, 0.4
      %v5707 = vmul.f32 %v5184, 0.4
      %v5708 = vmul.f32 %v5189, 0.4
      %v5709 = vmul.f32 %v5194, 0.4
      %v5710 = vmul.f32 %v5199, 0.4
      %v5711 = vmul.f32 %v5204, 0.4
      %v5712 = vmul.f32 %v5209, 0.4
      %v5713 = vmul.f32 %v5214, 0.4
      %v5714 = vmul.f32 %v5219, 0.4
      %v5715 = vmul.f32 %v5224, 0.4
      %v5716 = vmul.f32 %v5229, 0.4
      %v5717 = vmul.f32 %v5234, 0.4
      %v5718 = vmul.f32 %v5239, 0.4
      %v5719 = vmul.f32 %v5244, 0.4
      %v5720 = vmul.f32 %v5249, 0.4
      %v5721 = vmul.f32 %v5254, 0.4
      %v5722 = vmul.f32 %v5259, 0.4
      %v5723 = vmul.f32 %v5264, 0.4
      %v5724 = vmul.f32 %v5269, 0.4
      %v5725 = vmul.f32 %v5274, 0.4
      %v5726 = vmul.f32 %v5279, 0.4
      %v5727 = vmul.f32 %v5284, 0.4
      %v5728 = vmul.f32 %v5289, 0.4
      %v5729 = vmul.f32 %v5294, 0.4
      %v5730 = vmul.f32 %v5299, 0.4
      %v5731 = vmul.f32 %v5304, 0.4
      %v5732 = vmul.f32 %v5309, 0.4
      %v5733 = vmul.f32 %v5314, 0.4
      %v5734 = vmul.f32 %v5319, 0.4
      %v5735 = vmul.f32 %v5324, 0.4
      %v5736 = vmul.f32 %v5329, 0.4
      %v5737 = vmul.f32 %v5334, 0.4
      %v5738 = vmul.f32 %v5339, 0.4
      %v5739 = vmul.f32 %v5344, 0.4
      %v5740 = vmul.f32 %v5349, 0.4
      %v5741 = vmul.f32 %v5354, 0.4
      %v5742 = vmul.f32 %v5359, 0.4
      %v5743 = vmul.f32 %v5364, 0.4
      %v5744 = vmul.f32 %v5369, 0.4
      %v5745 = vmul.f32 %v5374, 0.4
      %v5746 = vmul.f32 %v5379, 0.4
      %v5747 = vmul.f32 %v5384, 0.4
      %v5748 = vmul.f32 %v5389, 0.4
      %v5749 = vmul.f32 %v5394, 0.4
      %v5750 = vmul.f32 %v5399, 0.4
      %v5751 = vmul.f32 %v5404, 0.4
      %v5752 = vmul.f32 %v5409, 0.4
      %v5753 = vmul.f32 %v5414, 0.4
      %v5754 = vmul.f32 %v5419, 0.4
      %v5755 = vmul.f32 %v5424, 0.4
      %v5756 = vmul.f32 %v5429, 0.4
      %v5757 = vmul.f32 %v5434, 0.4
      %v5758 = vmul.f32 %v5439, 0.4
      %v5759 = vmul.f32 %v5444, 0.4
      %v5760 = vmul.f32 %v5449, 0.4
      %v5761 = vmul.f32 %v5454, 0.4
      %v5762 = vmul.f32 %v5459, 0.4
      %v5763 = vmul.f32 %v5464, 0.4
      %v5764 = vmul.f32 %v5469, 0.4
      %v5765 = vmul.f32 %v5474, 0.4
      %v5766 = vmul.f32 %v5479, 0.4
      %v5767 = vmul.f32 %v5484, 0.4
      %v5768 = vmul.f32 %v5489, 0.4
      %v5769 = vmul.f32 %v5494, 0.4
      %v5770 = vmul.f32 %v5499, 0.4
      %v5771 = vmul.f32 %v5504, 0.4
      %v5772 = vmul.f32 %v5509, 0.4
      %v5773 = vmul.f32 %v5514, 0.4
      %v5774 = vmul.f32 %v5519, 0.4
      %v5775 = vmul.f32 %v5524, 0.4
      %v5776 = vmul.f32 %v5529, 0.4
      %v5777 = vmul.f32 %v5534, 0.4
      %v5778 = vmul.f32 %v5539, 0.4
      %v5779 = vmul.f32 %v5544, 0.4
      %v5780 = vmul.f32 %v5549, 0.4
      %v5781 = vmul.f32 %v5554, 0.4
      %v5782 = vmul.f32 %v5559, 0.4
      %v5783 = vmul.f32 %v5564, 0.4
      %v5784 = vmul.f32 %v5569, 0.4
      %v5785 = vmul.f32 %v5574, 0.4
      %v5786 = vmul.f32 %v5579, 0.4
      %v5787 = vmul.f32 %v5584, 0.4
      %v5788 = vmul.f32 %v5589, 0.4
      %v5789 = vmul.f32 %v5594, 0.4
      %v5790 = vmul.f32 %v5599, 0.4
      %v5791 = vmul.f32 %v5604, 0.4
      %v5792 = vmul.f32 %v5609, 0.4
      %v5793 = vmul.f32 %v5614, 0.4
      %v5794 = vmul.f32 %v5619, 0.4
      %v5795 = vmul.f32 %v5624, 0.4
      %v5796 = vmul.f32 %v5629, 0.4
      %v5797 = vmul.f32 %v5634, 0.4
      %v5798 = vmul.f32 %v5639, 0.4
      %v5799 = vmul.f32 %v5644, 0.4
      %v5800 = vmul.f32 %v5649, 0.4
      %v5801 = vsub.f32 %v3782, %v5673
      %v5802 = vsub.f32 %v3783, %v5674
      %v5803 = vsub.f32 %v3784, %v5675
      %v5804 = vsub.f32 %v3785, %v5676
      %v5805 = vsub.f32 %v3786, %v5677
      %v5806 = vsub.f32 %v3787, %v5678
      %v5807 = vsub.f32 %v3788, %v5679
      %v5808 = vsub.f32 %v3789, %v5680
      %v5809 = vsub.f32 %v3790, %v5681
      %v5810 = vsub.f32 %v3791, %v5682
      %v5811 = vsub.f32 %v3792, %v5683
      %v5812 = vsub.f32 %v3793, %v5684
      %v5813 = vsub.f32 %v3794, %v5685
      %v5814 = vsub.f32 %v3795, %v5686
      %v5815 = vsub.f32 %v3796, %v5687
      %v5816 = vsub.f32 %v3797, %v5688
      %v5817 = vsub.f32 %v3798, %v5689
      %v5818 = vsub.f32 %v3799, %v5690
      %v5819 = vsub.f32 %v3800, %v5691
      %v5820 = vsub.f32 %v3801, %v5692
      %v5821 = vsub.f32 %v3802, %v5693
      %v5822 = vsub.f32 %v3803, %v5694
      %v5823 = vsub.f32 %v3804, %v5695
      %v5824 = vsub.f32 %v3805, %v5696
      %v5825 = vsub.f32 %v3806, %v5697
      %v5826 = vsub.f32 %v3807, %v5698
      %v5827 = vsub.f32 %v3808, %v5699
      %v5828 = vsub.f32 %v3809, %v5700
      %v5829 = vsub.f32 %v3810, %v5701
      %v5830 = vsub.f32 %v3811, %v5702
      %v5831 = vsub.f32 %v3812, %v5703
      %v5832 = vsub.f32 %v3813, %v5704
      %v5833 = vsub.f32 %v3814, %v5705
      %v5834 = vsub.f32 %v3815, %v5706
      %v5835 = vsub.f32 %v3816, %v5707
      %v5836 = vsub.f32 %v3817, %v5708
      %v5837 = vsub.f32 %v3818, %v5709
      %v5838 = vsub.f32 %v3819, %v5710
      %v5839 = vsub.f32 %v3820, %v5711
      %v5840 = vsub.f32 %v3821, %v5712
      %v5841 = vsub.f32 %v3822, %v5713
      %v5842 = vsub.f32 %v3823, %v5714
      %v5843 = vsub.f32 %v3824, %v5715
      %v5844 = vsub.f32 %v3825, %v5716
      %v5845 = vsub.f32 %v3826, %v5717
      %v5846 = vsub.f32 %v3827, %v5718
      %v5847 = vsub.f32 %v3828, %v5719
      %v5848 = vsub.f32 %v3829, %v5720
      %v5849 = vsub.f32 %v3830, %v5721
      %v5850 = vsub.f32 %v3831, %v5722
      %v5851 = vsub.f32 %v3832, %v5723
      %v5852 = vsub.f32 %v3833, %v5724
      %v5853 = vsub.f32 %v3834, %v5725
      %v5854 = vsub.f32 %v3835, %v5726
      %v5855 = vsub.f32 %v3836, %v5727
      %v5856 = vsub.f32 %v3837, %v5728
      %v5857 = vsub.f32 %v3838, %v5729
      %v5858 = vsub.f32 %v3839, %v5730
      %v5859 = vsub.f32 %v3840, %v5731
      %v5860 = vsub.f32 %v3841, %v5732
      %v5861 = vsub.f32 %v3842, %v5733
      %v5862 = vsub.f32 %v3843, %v5734
      %v5863 = vsub.f32 %v3844, %v5735
      %v5864 = vsub.f32 %v3845, %v5736
      %v5865 = vsub.f32 %v3846, %v5737
      %v5866 = vsub.f32 %v3847, %v5738
      %v5867 = vsub.f32 %v3848, %v5739
      %v5868 = vsub.f32 %v3849, %v5740
      %v5869 = vsub.f32 %v3850, %v5741
      %v5870 = vsub.f32 %v3851, %v5742
      %v5871 = vsub.f32 %v3852, %v5743
      %v5872 = vsub.f32 %v3853, %v5744
      %v5873 = vsub.f32 %v3854, %v5745
      %v5874 = vsub.f32 %v3855, %v5746
      %v5875 = vsub.f32 %v3856, %v5747
      %v5876 = vsub.f32 %v3857, %v5748
      %v5877 = vsub.f32 %v3858, %v5749
      %v5878 = vsub.f32 %v3859, %v5750
      %v5879 = vsub.f32 %v3860, %v5751
      %v5880 = vsub.f32 %v3861, %v5752
      %v5881 = vsub.f32 %v3862, %v5753
      %v5882 = vsub.f32 %v3863, %v5754
      %v5883 = vsub.f32 %v3864, %v5755
      %v5884 = vsub.f32 %v3865, %v5756
      %v5885 = vsub.f32 %v3866, %v5757
      %v5886 = vsub.f32 %v3867, %v5758
      %v5887 = vsub.f32 %v3868, %v5759
      %v5888 = vsub.f32 %v3869, %v5760
      %v5889 = vsub.f32 %v3870, %v5761
      %v5890 = vsub.f32 %v3871, %v5762
      %v5891 = vsub.f32 %v3872, %v5763
      %v5892 = vsub.f32 %v3873, %v5764
      %v5893 = vsub.f32 %v3874, %v5765
      %v5894 = vsub.f32 %v3875, %v5766
      %v5895 = vsub.f32 %v3876, %v5767
      %v5896 = vsub.f32 %v3877, %v5768
      %v5897 = vsub.f32 %v3878, %v5769
      %v5898 = vsub.f32 %v3879, %v5770
      %v5899 = vsub.f32 %v3880, %v5771
      %v5900 = vsub.f32 %v3881, %v5772
      %v5901 = vsub.f32 %v3882, %v5773
      %v5902 = vsub.f32 %v3883, %v5774
      %v5903 = vsub.f32 %v3884, %v5775
      %v5904 = vsub.f32 %v3885, %v5776
      %v5905 = vsub.f32 %v3886, %v5777
      %v5906 = vsub.f32 %v3887, %v5778
      %v5907 = vsub.f32 %v3888, %v5779
      %v5908 = vsub.f32 %v3889, %v5780
      %v5909 = vsub.f32 %v3890, %v5781
      %v5910 = vsub.f32 %v3891, %v5782
      %v5911 = vsub.f32 %v3892, %v5783
      %v5912 = vsub.f32 %v3893, %v5784
      %v5913 = vsub.f32 %v3894, %v5785
      %v5914 = vsub.f32 %v3895, %v5786
      %v5915 = vsub.f32 %v3896, %v5787
      %v5916 = vsub.f32 %v3897, %v5788
      %v5917 = vsub.f32 %v3898, %v5789
      %v5918 = vsub.f32 %v3899, %v5790
      %v5919 = vsub.f32 %v3900, %v5791
      %v5920 = vsub.f32 %v3901, %v5792
      %v5921 = vsub.f32 %v3902, %v5793
      %v5922 = vsub.f32 %v3903, %v5794
      %v5923 = vsub.f32 %v3904, %v5795
      %v5924 = vsub.f32 %v3905, %v5796
      %v5925 = vsub.f32 %v3906, %v5797
      %v5926 = vsub.f32 %v3907, %v5798
      %v5927 = vsub.f32 %v3908, %v5799
      %v5928 = vsub.f32 %v3909, %v5800
      %5929 = vst.msk [vmem:[#allocation2] sm:$0xff] %vm899, %v5801
      %5930 = vst.msk [vmem:[#allocation2 + $0x8] sm:$0xff] %vm899, %v5802
      %5931 = vst.msk [vmem:[#allocation2 + $0x10] sm:$0xff] %vm899, %v5803
      %5932 = vst.msk [vmem:[#allocation2 + $0x18] sm:$0xff] %vm899, %v5804
      %5933 = vst.msk [vmem:[#allocation2 + $0x20] sm:$0xff] %vm899, %v5805
      %5934 = vst.msk [vmem:[#allocation2 + $0x28] sm:$0xff] %vm899, %v5806
      %5935 = vst.msk [vmem:[#allocation2 + $0x30] sm:$0xff] %vm899, %v5807
      %5936 = vst.msk [vmem:[#allocation2 + $0x38] sm:$0xff] %vm899, %v5808
      %5937 = vst.msk [vmem:[#allocation2 + $0x40] sm:$0xff] %vm899, %v5809
      %5938 = vst.msk [vmem:[#allocation2 + $0x48] sm:$0xff] %vm899, %v5810
      %5939 = vst.msk [vmem:[#allocation2 + $0x50] sm:$0xff] %vm899, %v5811
      %5940 = vst.msk [vmem:[#allocation2 + $0x58] sm:$0xff] %vm899, %v5812
      %5941 = vst.msk [vmem:[#allocation2 + $0x60] sm:$0xff] %vm899, %v5813
      %5942 = vst.msk [vmem:[#allocation2 + $0x68] sm:$0xff] %vm899, %v5814
      %5943 = vst.msk [vmem:[#allocation2 + $0x70] sm:$0xff] %vm899, %v5815
      %5944 = vst.msk [vmem:[#allocation2 + $0x78] sm:$0xff] %vm899, %v5816
      %5945 = vst.msk [vmem:[#allocation2 + $0x80] sm:$0xff] %vm899, %v5817
      %5946 = vst.msk [vmem:[#allocation2 + $0x88] sm:$0xff] %vm899, %v5818
      %5947 = vst.msk [vmem:[#allocation2 + $0x90] sm:$0xff] %vm899, %v5819
      %5948 = vst.msk [vmem:[#allocation2 + $0x98] sm:$0xff] %vm899, %v5820
      %5949 = vst.msk [vmem:[#allocation2 + $0xa0] sm:$0xff] %vm899, %v5821
      %5950 = vst.msk [vmem:[#allocation2 + $0xa8] sm:$0xff] %vm899, %v5822
      %5951 = vst.msk [vmem:[#allocation2 + $0xb0] sm:$0xff] %vm899, %v5823
      %5952 = vst.msk [vmem:[#allocation2 + $0xb8] sm:$0xff] %vm899, %v5824
      %5953 = vst.msk [vmem:[#allocation2 + $0xc0] sm:$0xff] %vm899, %v5825
      %5954 = vst.msk [vmem:[#allocation2 + $0xc8] sm:$0xff] %vm899, %v5826
      %5955 = vst.msk [vmem:[#allocation2 + $0xd0] sm:$0xff] %vm899, %v5827
      %5956 = vst.msk [vmem:[#allocation2 + $0xd8] sm:$0xff] %vm899, %v5828
      %5957 = vst.msk [vmem:[#allocation2 + $0xe0] sm:$0xff] %vm899, %v5829
      %5958 = vst.msk [vmem:[#allocation2 + $0xe8] sm:$0xff] %vm899, %v5830
      %5959 = vst.msk [vmem:[#allocation2 + $0xf0] sm:$0xff] %vm899, %v5831
      %5960 = vst.msk [vmem:[#allocation2 + $0xf8] sm:$0xff] %vm899, %v5832
      %5961 = vst.msk [vmem:[#allocation2 + $0x100] sm:$0xff] %vm899, %v5833
      %5962 = vst.msk [vmem:[#allocation2 + $0x108] sm:$0xff] %vm899, %v5834
      %5963 = vst.msk [vmem:[#allocation2 + $0x110] sm:$0xff] %vm899, %v5835
      %5964 = vst.msk [vmem:[#allocation2 + $0x118] sm:$0xff] %vm899, %v5836
      %5965 = vst.msk [vmem:[#allocation2 + $0x120] sm:$0xff] %vm899, %v5837
      %5966 = vst.msk [vmem:[#allocation2 + $0x128] sm:$0xff] %vm899, %v5838
      %5967 = vst.msk [vmem:[#allocation2 + $0x130] sm:$0xff] %vm899, %v5839
      %5968 = vst.msk [vmem:[#allocation2 + $0x138] sm:$0xff] %vm899, %v5840
      %5969 = vst.msk [vmem:[#allocation2 + $0x140] sm:$0xff] %vm899, %v5841
      %5970 = vst.msk [vmem:[#allocation2 + $0x148] sm:$0xff] %vm899, %v5842
      %5971 = vst.msk [vmem:[#allocation2 + $0x150] sm:$0xff] %vm899, %v5843
      %5972 = vst.msk [vmem:[#allocation2 + $0x158] sm:$0xff] %vm899, %v5844
      %5973 = vst.msk [vmem:[#allocation2 + $0x160] sm:$0xff] %vm899, %v5845
      %5974 = vst.msk [vmem:[#allocation2 + $0x168] sm:$0xff] %vm899, %v5846
      %5975 = vst.msk [vmem:[#allocation2 + $0x170] sm:$0xff] %vm899, %v5847
      %5976 = vst.msk [vmem:[#allocation2 + $0x178] sm:$0xff] %vm899, %v5848
      %5977 = vst.msk [vmem:[#allocation2 + $0x180] sm:$0xff] %vm899, %v5849
      %5978 = vst.msk [vmem:[#allocation2 + $0x188] sm:$0xff] %vm899, %v5850
      %5979 = vst.msk [vmem:[#allocation2 + $0x190] sm:$0xff] %vm899, %v5851
      %5980 = vst.msk [vmem:[#allocation2 + $0x198] sm:$0xff] %vm899, %v5852
      %5981 = vst.msk [vmem:[#allocation2 + $0x1a0] sm:$0xff] %vm899, %v5853
      %5982 = vst.msk [vmem:[#allocation2 + $0x1a8] sm:$0xff] %vm899, %v5854
      %5983 = vst.msk [vmem:[#allocation2 + $0x1b0] sm:$0xff] %vm899, %v5855
      %5984 = vst.msk [vmem:[#allocation2 + $0x1b8] sm:$0xff] %vm899, %v5856
      %5985 = vst.msk [vmem:[#allocation2 + $0x1c0] sm:$0xff] %vm899, %v5857
      %5986 = vst.msk [vmem:[#allocation2 + $0x1c8] sm:$0xff] %vm899, %v5858
      %5987 = vst.msk [vmem:[#allocation2 + $0x1d0] sm:$0xff] %vm899, %v5859
      %5988 = vst.msk [vmem:[#allocation2 + $0x1d8] sm:$0xff] %vm899, %v5860
      %5989 = vst.msk [vmem:[#allocation2 + $0x1e0] sm:$0xff] %vm899, %v5861
      %5990 = vst.msk [vmem:[#allocation2 + $0x1e8] sm:$0xff] %vm899, %v5862
      %5991 = vst.msk [vmem:[#allocation2 + $0x1f0] sm:$0xff] %vm899, %v5863
      %5992 = vst.msk [vmem:[#allocation2 + $0x1f8] sm:$0xff] %vm899, %v5864
      %5993 = vst.msk [vmem:[#allocation2 + $0x200] sm:$0xff] %vm899, %v5865
      %5994 = vst.msk [vmem:[#allocation2 + $0x208] sm:$0xff] %vm899, %v5866
      %5995 = vst.msk [vmem:[#allocation2 + $0x210] sm:$0xff] %vm899, %v5867
      %5996 = vst.msk [vmem:[#allocation2 + $0x218] sm:$0xff] %vm899, %v5868
      %5997 = vst.msk [vmem:[#allocation2 + $0x220] sm:$0xff] %vm899, %v5869
      %5998 = vst.msk [vmem:[#allocation2 + $0x228] sm:$0xff] %vm899, %v5870
      %5999 = vst.msk [vmem:[#allocation2 + $0x230] sm:$0xff] %vm899, %v5871
      %6000 = vst.msk [vmem:[#allocation2 + $0x238] sm:$0xff] %vm899, %v5872
      %6001 = vst.msk [vmem:[#allocation2 + $0x240] sm:$0xff] %vm899, %v5873
      %6002 = vst.msk [vmem:[#allocation2 + $0x248] sm:$0xff] %vm899, %v5874
      %6003 = vst.msk [vmem:[#allocation2 + $0x250] sm:$0xff] %vm899, %v5875
      %6004 = vst.msk [vmem:[#allocation2 + $0x258] sm:$0xff] %vm899, %v5876
      %6005 = vst.msk [vmem:[#allocation2 + $0x260] sm:$0xff] %vm899, %v5877
      %6006 = vst.msk [vmem:[#allocation2 + $0x268] sm:$0xff] %vm899, %v5878
      %6007 = vst.msk [vmem:[#allocation2 + $0x270] sm:$0xff] %vm899, %v5879
      %6008 = vst.msk [vmem:[#allocation2 + $0x278] sm:$0xff] %vm899, %v5880
      %6009 = vst.msk [vmem:[#allocation2 + $0x280] sm:$0xff] %vm899, %v5881
      %6010 = vst.msk [vmem:[#allocation2 + $0x288] sm:$0xff] %vm899, %v5882
      %6011 = vst.msk [vmem:[#allocation2 + $0x290] sm:$0xff] %vm899, %v5883
      %6012 = vst.msk [vmem:[#allocation2 + $0x298] sm:$0xff] %vm899, %v5884
      %6013 = vst.msk [vmem:[#allocation2 + $0x2a0] sm:$0xff] %vm899, %v5885
      %6014 = vst.msk [vmem:[#allocation2 + $0x2a8] sm:$0xff] %vm899, %v5886
      %6015 = vst.msk [vmem:[#allocation2 + $0x2b0] sm:$0xff] %vm899, %v5887
      %6016 = vst.msk [vmem:[#allocation2 + $0x2b8] sm:$0xff] %vm899, %v5888
      %6017 = vst.msk [vmem:[#allocation2 + $0x2c0] sm:$0xff] %vm899, %v5889
      %6018 = vst.msk [vmem:[#allocation2 + $0x2c8] sm:$0xff] %vm899, %v5890
      %6019 = vst.msk [vmem:[#allocation2 + $0x2d0] sm:$0xff] %vm899, %v5891
      %6020 = vst.msk [vmem:[#allocation2 + $0x2d8] sm:$0xff] %vm899, %v5892
      %6021 = vst.msk [vmem:[#allocation2 + $0x2e0] sm:$0xff] %vm899, %v5893
      %6022 = vst.msk [vmem:[#allocation2 + $0x2e8] sm:$0xff] %vm899, %v5894
      %6023 = vst.msk [vmem:[#allocation2 + $0x2f0] sm:$0xff] %vm899, %v5895
      %6024 = vst.msk [vmem:[#allocation2 + $0x2f8] sm:$0xff] %vm899, %v5896
      %6025 = vst.msk [vmem:[#allocation2 + $0x300] sm:$0xff] %vm899, %v5897
      %6026 = vst.msk [vmem:[#allocation2 + $0x308] sm:$0xff] %vm899, %v5898
      %6027 = vst.msk [vmem:[#allocation2 + $0x310] sm:$0xff] %vm899, %v5899
      %6028 = vst.msk [vmem:[#allocation2 + $0x318] sm:$0xff] %vm899, %v5900
      %6029 = vst.msk [vmem:[#allocation2 + $0x320] sm:$0xff] %vm899, %v5901
      %6030 = vst.msk [vmem:[#allocation2 + $0x328] sm:$0xff] %vm899, %v5902
      %6031 = vst.msk [vmem:[#allocation2 + $0x330] sm:$0xff] %vm899, %v5903
      %6032 = vst.msk [vmem:[#allocation2 + $0x338] sm:$0xff] %vm899, %v5904
      %6033 = vst.msk [vmem:[#allocation2 + $0x340] sm:$0xff] %vm899, %v5905
      %6034 = vst.msk [vmem:[#allocation2 + $0x348] sm:$0xff] %vm899, %v5906
      %6035 = vst.msk [vmem:[#allocation2 + $0x350] sm:$0xff] %vm899, %v5907
      %6036 = vst.msk [vmem:[#allocation2 + $0x358] sm:$0xff] %vm899, %v5908
      %6037 = vst.msk [vmem:[#allocation2 + $0x360] sm:$0xff] %vm899, %v5909
      %6038 = vst.msk [vmem:[#allocation2 + $0x368] sm:$0xff] %vm899, %v5910
      %6039 = vst.msk [vmem:[#allocation2 + $0x370] sm:$0xff] %vm899, %v5911
      %6040 = vst.msk [vmem:[#allocation2 + $0x378] sm:$0xff] %vm899, %v5912
      %6041 = vst.msk [vmem:[#allocation2 + $0x380] sm:$0xff] %vm899, %v5913
      %6042 = vst.msk [vmem:[#allocation2 + $0x388] sm:$0xff] %vm899, %v5914
      %6043 = vst.msk [vmem:[#allocation2 + $0x390] sm:$0xff] %vm899, %v5915
      %6044 = vst.msk [vmem:[#allocation2 + $0x398] sm:$0xff] %vm899, %v5916
      %6045 = vst.msk [vmem:[#allocation2 + $0x3a0] sm:$0xff] %vm899, %v5917
      %6046 = vst.msk [vmem:[#allocation2 + $0x3a8] sm:$0xff] %vm899, %v5918
      %6047 = vst.msk [vmem:[#allocation2 + $0x3b0] sm:$0xff] %vm899, %v5919
      %6048 = vst.msk [vmem:[#allocation2 + $0x3b8] sm:$0xff] %vm899, %v5920
      %6049 = vst.msk [vmem:[#allocation2 + $0x3c0] sm:$0xff] %vm899, %v5921
      %6050 = vst.msk [vmem:[#allocation2 + $0x3c8] sm:$0xff] %vm899, %v5922
      %6051 = vst.msk [vmem:[#allocation2 + $0x3d0] sm:$0xff] %vm899, %v5923
      %6052 = vst.msk [vmem:[#allocation2 + $0x3d8] sm:$0xff] %vm899, %v5924
      %6053 = vst.msk [vmem:[#allocation2 + $0x3e0] sm:$0xff] %vm899, %v5925
      %6054 = vst.msk [vmem:[#allocation2 + $0x3e8] sm:$0xff] %vm899, %v5926
      %6055 = vst.msk [vmem:[#allocation2 + $0x3f0] sm:$0xff] %vm899, %v5927
      %6056 = vst.msk [vmem:[#allocation2 + $0x3f8] sm:$0xff] %vm899, %v5928
      %v6057 = vmul.f32 %v5672, 0.4
      %v6058 = vsub.f32 %v3910, %v6057
      %6059 = vst.msk [vmem:[#allocation3] sm:$0x1] %vm1029, %v6058
      %v6060 = vld [vmem:[#allocation2] sm:$0xff]
      %v6061 = vld [vmem:[#allocation2 + $0x8] sm:$0xff]
      %v6062 = vld [vmem:[#allocation2 + $0x10] sm:$0xff]
      %v6063 = vld [vmem:[#allocation2 + $0x18] sm:$0xff]
      %v6064 = vld [vmem:[#allocation2 + $0x20] sm:$0xff]
      %v6065 = vld [vmem:[#allocation2 + $0x28] sm:$0xff]
      %v6066 = vld [vmem:[#allocation2 + $0x30] sm:$0xff]
      %v6067 = vld [vmem:[#allocation2 + $0x38] sm:$0xff]
      %v6068 = vld [vmem:[#allocation2 + $0x40] sm:$0xff]
      %v6069 = vld [vmem:[#allocation2 + $0x48] sm:$0xff]
      %v6070 = vld [vmem:[#allocation2 + $0x50] sm:$0xff]
      %v6071 = vld [vmem:[#allocation2 + $0x58] sm:$0xff]
      %v6072 = vld [vmem:[#allocation2 + $0x60] sm:$0xff]
      %v6073 = vld [vmem:[#allocation2 + $0x68] sm:$0xff]
      %v6074 = vld [vmem:[#allocation2 + $0x70] sm:$0xff]
      %v6075 = vld [vmem:[#allocation2 + $0x78] sm:$0xff]
      %v6076 = vld [vmem:[#allocation2 + $0x80] sm:$0xff]
      %v6077 = vld [vmem:[#allocation2 + $0x88] sm:$0xff]
      %v6078 = vld [vmem:[#allocation2 + $0x90] sm:$0xff]
      %v6079 = vld [vmem:[#allocation2 + $0x98] sm:$0xff]
      %v6080 = vld [vmem:[#allocation2 + $0xa0] sm:$0xff]
      %v6081 = vld [vmem:[#allocation2 + $0xa8] sm:$0xff]
      %v6082 = vld [vmem:[#allocation2 + $0xb0] sm:$0xff]
      %v6083 = vld [vmem:[#allocation2 + $0xb8] sm:$0xff]
      %v6084 = vld [vmem:[#allocation2 + $0xc0] sm:$0xff]
      %v6085 = vld [vmem:[#allocation2 + $0xc8] sm:$0xff]
      %v6086 = vld [vmem:[#allocation2 + $0xd0] sm:$0xff]
      %v6087 = vld [vmem:[#allocation2 + $0xd8] sm:$0xff]
      %v6088 = vld [vmem:[#allocation2 + $0xe0] sm:$0xff]
      %v6089 = vld [vmem:[#allocation2 + $0xe8] sm:$0xff]
      %v6090 = vld [vmem:[#allocation2 + $0xf0] sm:$0xff]
      %v6091 = vld [vmem:[#allocation2 + $0xf8] sm:$0xff]
      %v6092 = vld [vmem:[#allocation2 + $0x100] sm:$0xff]
      %v6093 = vld [vmem:[#allocation2 + $0x108] sm:$0xff]
      %v6094 = vld [vmem:[#allocation2 + $0x110] sm:$0xff]
      %v6095 = vld [vmem:[#allocation2 + $0x118] sm:$0xff]
      %v6096 = vld [vmem:[#allocation2 + $0x120] sm:$0xff]
      %v6097 = vld [vmem:[#allocation2 + $0x128] sm:$0xff]
      %v6098 = vld [vmem:[#allocation2 + $0x130] sm:$0xff]
      %v6099 = vld [vmem:[#allocation2 + $0x138] sm:$0xff]
      %v6100 = vld [vmem:[#allocation2 + $0x140] sm:$0xff]
      %v6101 = vld [vmem:[#allocation2 + $0x148] sm:$0xff]
      %v6102 = vld [vmem:[#allocation2 + $0x150] sm:$0xff]
      %v6103 = vld [vmem:[#allocation2 + $0x158] sm:$0xff]
      %v6104 = vld [vmem:[#allocation2 + $0x160] sm:$0xff]
      %v6105 = vld [vmem:[#allocation2 + $0x168] sm:$0xff]
      %v6106 = vld [vmem:[#allocation2 + $0x170] sm:$0xff]
      %v6107 = vld [vmem:[#allocation2 + $0x178] sm:$0xff]
      %v6108 = vld [vmem:[#allocation2 + $0x180] sm:$0xff]
      %v6109 = vld [vmem:[#allocation2 + $0x188] sm:$0xff]
      %v6110 = vld [vmem:[#allocation2 + $0x190] sm:$0xff]
      %v6111 = vld [vmem:[#allocation2 + $0x198] sm:$0xff]
      %v6112 = vld [vmem:[#allocation2 + $0x1a0] sm:$0xff]
      %v6113 = vld [vmem:[#allocation2 + $0x1a8] sm:$0xff]
      %v6114 = vld [vmem:[#allocation2 + $0x1b0] sm:$0xff]
      %v6115 = vld [vmem:[#allocation2 + $0x1b8] sm:$0xff]
      %v6116 = vld [vmem:[#allocation2 + $0x1c0] sm:$0xff]
      %v6117 = vld [vmem:[#allocation2 + $0x1c8] sm:$0xff]
      %v6118 = vld [vmem:[#allocation2 + $0x1d0] sm:$0xff]
      %v6119 = vld [vmem:[#allocation2 + $0x1d8] sm:$0xff]
      %v6120 = vld [vmem:[#allocation2 + $0x1e0] sm:$0xff]
      %v6121 = vld [vmem:[#allocation2 + $0x1e8] sm:$0xff]
      %v6122 = vld [vmem:[#allocation2 + $0x1f0] sm:$0xff]
      %v6123 = vld [vmem:[#allocation2 + $0x1f8] sm:$0xff]
      %v6124 = vld [vmem:[#allocation2 + $0x200] sm:$0xff]
      %v6125 = vld [vmem:[#allocation2 + $0x208] sm:$0xff]
      %v6126 = vld [vmem:[#allocation2 + $0x210] sm:$0xff]
      %v6127 = vld [vmem:[#allocation2 + $0x218] sm:$0xff]
      %v6128 = vld [vmem:[#allocation2 + $0x220] sm:$0xff]
      %v6129 = vld [vmem:[#allocation2 + $0x228] sm:$0xff]
      %v6130 = vld [vmem:[#allocation2 + $0x230] sm:$0xff]
      %v6131 = vld [vmem:[#allocation2 + $0x238] sm:$0xff]
      %v6132 = vld [vmem:[#allocation2 + $0x240] sm:$0xff]
      %v6133 = vld [vmem:[#allocation2 + $0x248] sm:$0xff]
      %v6134 = vld [vmem:[#allocation2 + $0x250] sm:$0xff]
      %v6135 = vld [vmem:[#allocation2 + $0x258] sm:$0xff]
      %v6136 = vld [vmem:[#allocation2 + $0x260] sm:$0xff]
      %v6137 = vld [vmem:[#allocation2 + $0x268] sm:$0xff]
      %v6138 = vld [vmem:[#allocation2 + $0x270] sm:$0xff]
      %v6139 = vld [vmem:[#allocation2 + $0x278] sm:$0xff]
      %v6140 = vld [vmem:[#allocation2 + $0x280] sm:$0xff]
      %v6141 = vld [vmem:[#allocation2 + $0x288] sm:$0xff]
      %v6142 = vld [vmem:[#allocation2 + $0x290] sm:$0xff]
      %v6143 = vld [vmem:[#allocation2 + $0x298] sm:$0xff]
      %v6144 = vld [vmem:[#allocation2 + $0x2a0] sm:$0xff]
      %v6145 = vld [vmem:[#allocation2 + $0x2a8] sm:$0xff]
      %v6146 = vld [vmem:[#allocation2 + $0x2b0] sm:$0xff]
      %v6147 = vld [vmem:[#allocation2 + $0x2b8] sm:$0xff]
      %v6148 = vld [vmem:[#allocation2 + $0x2c0] sm:$0xff]
      %v6149 = vld [vmem:[#allocation2 + $0x2c8] sm:$0xff]
      %v6150 = vld [vmem:[#allocation2 + $0x2d0] sm:$0xff]
      %v6151 = vld [vmem:[#allocation2 + $0x2d8] sm:$0xff]
      %v6152 = vld [vmem:[#allocation2 + $0x2e0] sm:$0xff]
      %v6153 = vld [vmem:[#allocation2 + $0x2e8] sm:$0xff]
      %v6154 = vld [vmem:[#allocation2 + $0x2f0] sm:$0xff]
      %v6155 = vld [vmem:[#allocation2 + $0x2f8] sm:$0xff]
      %v6156 = vld [vmem:[#allocation2 + $0x300] sm:$0xff]
      %v6157 = vld [vmem:[#allocation2 + $0x308] sm:$0xff]
      %v6158 = vld [vmem:[#allocation2 + $0x310] sm:$0xff]
      %v6159 = vld [vmem:[#allocation2 + $0x318] sm:$0xff]
      %v6160 = vld [vmem:[#allocation2 + $0x320] sm:$0xff]
      %v6161 = vld [vmem:[#allocation2 + $0x328] sm:$0xff]
      %v6162 = vld [vmem:[#allocation2 + $0x330] sm:$0xff]
      %v6163 = vld [vmem:[#allocation2 + $0x338] sm:$0xff]
      %v6164 = vld [vmem:[#allocation2 + $0x340] sm:$0xff]
      %v6165 = vld [vmem:[#allocation2 + $0x348] sm:$0xff]
      %v6166 = vld [vmem:[#allocation2 + $0x350] sm:$0xff]
      %v6167 = vld [vmem:[#allocation2 + $0x358] sm:$0xff]
      %v6168 = vld [vmem:[#allocation2 + $0x360] sm:$0xff]
      %v6169 = vld [vmem:[#allocation2 + $0x368] sm:$0xff]
      %v6170 = vld [vmem:[#allocation2 + $0x370] sm:$0xff]
      %v6171 = vld [vmem:[#allocation2 + $0x378] sm:$0xff]
      %v6172 = vld [vmem:[#allocation2 + $0x380] sm:$0xff]
      %v6173 = vld [vmem:[#allocation2 + $0x388] sm:$0xff]
      %v6174 = vld [vmem:[#allocation2 + $0x390] sm:$0xff]
      %v6175 = vld [vmem:[#allocation2 + $0x398] sm:$0xff]
      %v6176 = vld [vmem:[#allocation2 + $0x3a0] sm:$0xff]
      %v6177 = vld [vmem:[#allocation2 + $0x3a8] sm:$0xff]
      %v6178 = vld [vmem:[#allocation2 + $0x3b0] sm:$0xff]
      %v6179 = vld [vmem:[#allocation2 + $0x3b8] sm:$0xff]
      %v6180 = vld [vmem:[#allocation2 + $0x3c0] sm:$0xff]
      %v6181 = vld [vmem:[#allocation2 + $0x3c8] sm:$0xff]
      %v6182 = vld [vmem:[#allocation2 + $0x3d0] sm:$0xff]
      %v6183 = vld [vmem:[#allocation2 + $0x3d8] sm:$0xff]
      %v6184 = vld [vmem:[#allocation2 + $0x3e0] sm:$0xff]
      %v6185 = vld [vmem:[#allocation2 + $0x3e8] sm:$0xff]
      %v6186 = vld [vmem:[#allocation2 + $0x3f0] sm:$0xff]
      %v6187 = vld [vmem:[#allocation2 + $0x3f8] sm:$0xff]
      %v6188 = vld [vmem:[#allocation3] sm:$0x1]
      %v6190 = vlaneseq
      %v6191 = vshrl.u32 %v6190, 7
      %v6192 = vsub.s32 0, %v6191
      %v6193 = vrot.slane %v6188, %v6192
      %6195 = vmatprep.subr.mxu0 0.0
      %6196 = vmatpush1.msra.mxu0 %v6060
      %6197 = vmatprep.subr.mxu0 0.0
      %6198 = vmatpush1.msra.mxu0 %v6061
      %6199 = vmatprep.subr.mxu0 0.0
      %6200 = vmatpush1.msra.mxu0 %v6062
      %6201 = vmatprep.subr.mxu0 0.0
      %6202 = vmatpush1.msra.mxu0 %v6063
      %6203 = vmatprep.subr.mxu0 0.0
      %6204 = vmatpush1.msra.mxu0 %v6064
      %6205 = vmatprep.subr.mxu0 0.0
      %6206 = vmatpush1.msra.mxu0 %v6065
      %6207 = vmatprep.subr.mxu0 0.0
      %6208 = vmatpush1.msra.mxu0 %v6066
      %6209 = vmatprep.subr.mxu0 0.0
      %6210 = vmatpush1.msra.mxu0 %v6067
      %6211 = vmatprep.subr.mxu0 0.0
      %6212 = vmatpush1.msra.mxu0 %v6068
      %6213 = vmatprep.subr.mxu0 0.0
      %6214 = vmatpush1.msra.mxu0 %v6069
      %6215 = vmatprep.subr.mxu0 0.0
      %6216 = vmatpush1.msra.mxu0 %v6070
      %6217 = vmatprep.subr.mxu0 0.0
      %6218 = vmatpush1.msra.mxu0 %v6071
      %6219 = vmatprep.subr.mxu0 0.0
      %6220 = vmatpush1.msra.mxu0 %v6072
      %6221 = vmatprep.subr.mxu0 0.0
      %6222 = vmatpush1.msra.mxu0 %v6073
      %6223 = vmatprep.subr.mxu0 0.0
      %6224 = vmatpush1.msra.mxu0 %v6074
      %6225 = vmatprep.subr.mxu0 0.0
      %6226 = vmatpush1.msra.mxu0 %v6075
      %6227 = vmatprep.subr.mxu0 0.0
      %6228 = vmatpush1.msra.mxu0 %v6076
      %6229 = vmatprep.subr.mxu0 0.0
      %6230 = vmatpush1.msra.mxu0 %v6077
      %6231 = vmatprep.subr.mxu0 0.0
      %6232 = vmatpush1.msra.mxu0 %v6078
      %6233 = vmatprep.subr.mxu0 0.0
      %6234 = vmatpush1.msra.mxu0 %v6079
      %6235 = vmatprep.subr.mxu0 0.0
      %6236 = vmatpush1.msra.mxu0 %v6080
      %6237 = vmatprep.subr.mxu0 0.0
      %6238 = vmatpush1.msra.mxu0 %v6081
      %6239 = vmatprep.subr.mxu0 0.0
      %6240 = vmatpush1.msra.mxu0 %v6082
      %6241 = vmatprep.subr.mxu0 0.0
      %6242 = vmatpush1.msra.mxu0 %v6083
      %6243 = vmatprep.subr.mxu0 0.0
      %6244 = vmatpush1.msra.mxu0 %v6084
      %6245 = vmatprep.subr.mxu0 0.0
      %6246 = vmatpush1.msra.mxu0 %v6085
      %6247 = vmatprep.subr.mxu0 0.0
      %6248 = vmatpush1.msra.mxu0 %v6086
      %6249 = vmatprep.subr.mxu0 0.0
      %6250 = vmatpush1.msra.mxu0 %v6087
      %6251 = vmatprep.subr.mxu0 0.0
      %6252 = vmatpush1.msra.mxu0 %v6088
      %6253 = vmatprep.subr.mxu0 0.0
      %6254 = vmatpush1.msra.mxu0 %v6089
      %6255 = vmatprep.subr.mxu0 0.0
      %6256 = vmatpush1.msra.mxu0 %v6090
      %6257 = vmatprep.subr.mxu0 0.0
      %6258 = vmatpush1.msra.mxu0 %v6091
      %6259 = vmatprep.mubr.f32.mxu0 %v352
      %6260 = vmatmul.mubr.f32.gmra.mrb[0].mxu0 %v351
      %v6261 = vpop.f32.mrb[0].mxu0
      %v6262 = vadd.f32 %v6193, %v6261
      %v6263 = vpop.f32.mrb[0].mxu0
      %6264 = vmatprep.mubr.f32.mxu0 %v360
      %6265 = vmatmul.mubr.f32.gmra.mrb[0].mxu0 %v359
      %v6266 = vpop.f32.mrb[0].mxu0
      %v6267 = vadd.f32 %v6193, %v6266
      %v6268 = vpop.f32.mrb[0].mxu0
      %6269 = vmatprep.mubr.f32.mxu0 %v368
      %6270 = vmatmul.mubr.f32.gmra.mrb[0].mxu0 %v367
      %v6271 = vpop.f32.mrb[0].mxu0
      %v6272 = vadd.f32 %v6193, %v6271
      %v6273 = vpop.f32.mrb[0].mxu0
      %6274 = vmatprep.mubr.f32.mxu0 %v376
      %6275 = vmatmul.mubr.f32.gmra.mrb[0].mxu0 %v375
      %v6276 = vpop.f32.mrb[0].mxu0
      %v6277 = vadd.f32 %v6193, %v6276
      %v6278 = vpop.f32.mrb[0].mxu0
      %6279 = vmatprep.mubr.f32.mxu0 %v384
      %6280 = vmatmul.mubr.f32.gmra.mrb[0].mxu0 %v383
      %v6281 = vpop.f32.mrb[0].mxu0
      %v6282 = vadd.f32 %v6193, %v6281
      %v6283 = vpop.f32.mrb[0].mxu0
      %6284 = vmatprep.mubr.f32.mxu0 %v392
      %6285 = vmatmul.mubr.f32.gmra.mrb[0].mxu0 %v391
      %v6286 = vpop.f32.mrb[0].mxu0
      %v6287 = vadd.f32 %v6193, %v6286
      %v6288 = vpop.f32.mrb[0].mxu0
      %6289 = vmatprep.mubr.f32.mxu0 %v400
      %6290 = vmatmul.mubr.f32.gmra.mrb[0].mxu0 %v399
      %v6291 = vpop.f32.mrb[0].mxu0
      %v6292 = vadd.f32 %v6193, %v6291
      %v6293 = vpop.f32.mrb[0].mxu0
      %6294 = vmatprep.mubr.f32.mxu0 %v408
      %6295 = vmatmul.mubr.f32.gmra.mrb[0].mxu0 %v407
      %v6296 = vpop.f32.mrb[0].mxu0
      %v6297 = vadd.f32 %v6193, %v6296
      %v6298 = vpop.f32.mrb[0].mxu0
      %6299 = vdwg.mxu0
      %6300 = vmatprep.subr.mxu0 0.0
      %6301 = vmatpush1.msra.mxu0 %v6092
      %6302 = vmatprep.subr.mxu0 0.0
      %6303 = vmatpush1.msra.mxu0 %v6093
      %6304 = vmatprep.subr.mxu0 0.0
      %6305 = vmatpush1.msra.mxu0 %v6094
      %6306 = vmatprep.subr.mxu0 0.0
      %6307 = vmatpush1.msra.mxu0 %v6095
      %6308 = vmatprep.subr.mxu0 0.0
      %6309 = vmatpush1.msra.mxu0 %v6096
      %6310 = vmatprep.subr.mxu0 0.0
      %6311 = vmatpush1.msra.mxu0 %v6097
      %6312 = vmatprep.subr.mxu0 0.0
      %6313 = vmatpush1.msra.mxu0 %v6098
      %6314 = vmatprep.subr.mxu0 0.0
      %6315 = vmatpush1.msra.mxu0 %v6099
      %6316 = vmatprep.subr.mxu0 0.0
      %6317 = vmatpush1.msra.mxu0 %v6100
      %6318 = vmatprep.subr.mxu0 0.0
      %6319 = vmatpush1.msra.mxu0 %v6101
      %6320 = vmatprep.subr.mxu0 0.0
      %6321 = vmatpush1.msra.mxu0 %v6102
      %6322 = vmatprep.subr.mxu0 0.0
      %6323 = vmatpush1.msra.mxu0 %v6103
      %6324 = vmatprep.subr.mxu0 0.0
      %6325 = vmatpush1.msra.mxu0 %v6104
      %6326 = vmatprep.subr.mxu0 0.0
      %6327 = vmatpush1.msra.mxu0 %v6105
      %6328 = vmatprep.subr.mxu0 0.0
      %6329 = vmatpush1.msra.mxu0 %v6106
      %6330 = vmatprep.subr.mxu0 0.0
      %6331 = vmatpush1.msra.mxu0 %v6107
      %6332 = vmatprep.subr.mxu0 0.0
      %6333 = vmatpush1.msra.mxu0 %v6108
      %6334 = vmatprep.subr.mxu0 0.0
      %6335 = vmatpush1.msra.mxu0 %v6109
      %6336 = vmatprep.subr.mxu0 0.0
      %6337 = vmatpush1.msra.mxu0 %v6110
      %6338 = vmatprep.subr.mxu0 0.0
      %6339 = vmatpush1.msra.mxu0 %v6111
      %6340 = vmatprep.subr.mxu0 0.0
      %6341 = vmatpush1.msra.mxu0 %v6112
      %6342 = vmatprep.subr.mxu0 0.0
      %6343 = vmatpush1.msra.mxu0 %v6113
      %6344 = vmatprep.subr.mxu0 0.0
      %6345 = vmatpush1.msra.mxu0 %v6114
      %6346 = vmatprep.subr.mxu0 0.0
      %6347 = vmatpush1.msra.mxu0 %v6115
      %6348 = vmatprep.subr.mxu0 0.0
      %6349 = vmatpush1.msra.mxu0 %v6116
      %6350 = vmatprep.subr.mxu0 0.0
      %6351 = vmatpush1.msra.mxu0 %v6117
      %6352 = vmatprep.subr.mxu0 0.0
      %6353 = vmatpush1.msra.mxu0 %v6118
      %6354 = vmatprep.subr.mxu0 0.0
      %6355 = vmatpush1.msra.mxu0 %v6119
      %6356 = vmatprep.subr.mxu0 0.0
      %6357 = vmatpush1.msra.mxu0 %v6120
      %6358 = vmatprep.subr.mxu0 0.0
      %6359 = vmatpush1.msra.mxu0 %v6121
      %6360 = vmatprep.subr.mxu0 0.0
      %6361 = vmatpush1.msra.mxu0 %v6122
      %6362 = vmatprep.subr.mxu0 0.0
      %6363 = vmatpush1.msra.mxu0 %v6123
      %6364 = vmatprep.mubr.f32.mxu0 %v354
      %6365 = vmatmul.mubr.f32.gmra.mrb[0].mxu0 %v353
      %v6366 = vpop.f32.mrb[0].mxu0
      %v6367 = vadd.f32 %v6262, %v6366
      %v6368 = vpop.f32.mrb[0].mxu0
      %6369 = vmatprep.mubr.f32.mxu0 %v362
      %6370 = vmatmul.mubr.f32.gmra.mrb[0].mxu0 %v361
      %v6371 = vpop.f32.mrb[0].mxu0
      %v6372 = vadd.f32 %v6267, %v6371
      %v6373 = vpop.f32.mrb[0].mxu0
      %6374 = vmatprep.mubr.f32.mxu0 %v370
      %6375 = vmatmul.mubr.f32.gmra.mrb[0].mxu0 %v369
      %v6376 = vpop.f32.mrb[0].mxu0
      %v6377 = vadd.f32 %v6272, %v6376
      %v6378 = vpop.f32.mrb[0].mxu0
      %6379 = vmatprep.mubr.f32.mxu0 %v378
      %6380 = vmatmul.mubr.f32.gmra.mrb[0].mxu0 %v377
      %v6381 = vpop.f32.mrb[0].mxu0
      %v6382 = vadd.f32 %v6277, %v6381
      %v6383 = vpop.f32.mrb[0].mxu0
      %6384 = vmatprep.mubr.f32.mxu0 %v386
      %6385 = vmatmul.mubr.f32.gmra.mrb[0].mxu0 %v385
      %v6386 = vpop.f32.mrb[0].mxu0
      %v6387 = vadd.f32 %v6282, %v6386
      %v6388 = vpop.f32.mrb[0].mxu0
      %6389 = vmatprep.mubr.f32.mxu0 %v394
      %6390 = vmatmul.mubr.f32.gmra.mrb[0].mxu0 %v393
      %v6391 = vpop.f32.mrb[0].mxu0
      %v6392 = vadd.f32 %v6287, %v6391
      %v6393 = vpop.f32.mrb[0].mxu0
      %6394 = vmatprep.mubr.f32.mxu0 %v402
      %6395 = vmatmul.mubr.f32.gmra.mrb[0].mxu0 %v401
      %v6396 = vpop.f32.mrb[0].mxu0
      %v6397 = vadd.f32 %v6292, %v6396
      %v6398 = vpop.f32.mrb[0].mxu0
      %6399 = vmatprep.mubr.f32.mxu0 %v410
      %6400 = vmatmul.mubr.f32.gmra.mrb[0].mxu0 %v409
      %v6401 = vpop.f32.mrb[0].mxu0
      %v6402 = vadd.f32 %v6297, %v6401
      %v6403 = vpop.f32.mrb[0].mxu0
      %6404 = vdwg.mxu0
      %6405 = vmatprep.subr.mxu0 0.0
      %6406 = vmatpush1.msra.mxu0 %v6124
      %6407 = vmatprep.subr.mxu0 0.0
      %6408 = vmatpush1.msra.mxu0 %v6125
      %6409 = vmatprep.subr.mxu0 0.0
      %6410 = vmatpush1.msra.mxu0 %v6126
      %6411 = vmatprep.subr.mxu0 0.0
      %6412 = vmatpush1.msra.mxu0 %v6127
      %6413 = vmatprep.subr.mxu0 0.0
      %6414 = vmatpush1.msra.mxu0 %v6128
      %6415 = vmatprep.subr.mxu0 0.0
      %6416 = vmatpush1.msra.mxu0 %v6129
      %6417 = vmatprep.subr.mxu0 0.0
      %6418 = vmatpush1.msra.mxu0 %v6130
      %6419 = vmatprep.subr.mxu0 0.0
      %6420 = vmatpush1.msra.mxu0 %v6131
      %6421 = vmatprep.subr.mxu0 0.0
      %6422 = vmatpush1.msra.mxu0 %v6132
      %6423 = vmatprep.subr.mxu0 0.0
      %6424 = vmatpush1.msra.mxu0 %v6133
      %6425 = vmatprep.subr.mxu0 0.0
      %6426 = vmatpush1.msra.mxu0 %v6134
      %6427 = vmatprep.subr.mxu0 0.0
      %6428 = vmatpush1.msra.mxu0 %v6135
      %6429 = vmatprep.subr.mxu0 0.0
      %6430 = vmatpush1.msra.mxu0 %v6136
      %6431 = vmatprep.subr.mxu0 0.0
      %6432 = vmatpush1.msra.mxu0 %v6137
      %6433 = vmatprep.subr.mxu0 0.0
      %6434 = vmatpush1.msra.mxu0 %v6138
      %6435 = vmatprep.subr.mxu0 0.0
      %6436 = vmatpush1.msra.mxu0 %v6139
      %6437 = vmatprep.subr.mxu0 0.0
      %6438 = vmatpush1.msra.mxu0 %v6140
      %6439 = vmatprep.subr.mxu0 0.0
      %6440 = vmatpush1.msra.mxu0 %v6141
      %6441 = vmatprep.subr.mxu0 0.0
      %6442 = vmatpush1.msra.mxu0 %v6142
      %6443 = vmatprep.subr.mxu0 0.0
      %6444 = vmatpush1.msra.mxu0 %v6143
      %6445 = vmatprep.subr.mxu0 0.0
      %6446 = vmatpush1.msra.mxu0 %v6144
      %6447 = vmatprep.subr.mxu0 0.0
      %6448 = vmatpush1.msra.mxu0 %v6145
      %6449 = vmatprep.subr.mxu0 0.0
      %6450 = vmatpush1.msra.mxu0 %v6146
      %6451 = vmatprep.subr.mxu0 0.0
      %6452 = vmatpush1.msra.mxu0 %v6147
      %6453 = vmatprep.subr.mxu0 0.0
      %6454 = vmatpush1.msra.mxu0 %v6148
      %6455 = vmatprep.subr.mxu0 0.0
      %6456 = vmatpush1.msra.mxu0 %v6149
      %6457 = vmatprep.subr.mxu0 0.0
      %6458 = vmatpush1.msra.mxu0 %v6150
      %6459 = vmatprep.subr.mxu0 0.0
      %6460 = vmatpush1.msra.mxu0 %v6151
      %6461 = vmatprep.subr.mxu0 0.0
      %6462 = vmatpush1.msra.mxu0 %v6152
      %6463 = vmatprep.subr.mxu0 0.0
      %6464 = vmatpush1.msra.mxu0 %v6153
      %6465 = vmatprep.subr.mxu0 0.0
      %6466 = vmatpush1.msra.mxu0 %v6154
      %6467 = vmatprep.subr.mxu0 0.0
      %6468 = vmatpush1.msra.mxu0 %v6155
      %6469 = vmatprep.mubr.f32.mxu0 %v356
      %6470 = vmatmul.mubr.f32.gmra.mrb[0].mxu0 %v355
      %v6471 = vpop.f32.mrb[0].mxu0
      %v6472 = vadd.f32 %v6367, %v6471
      %v6473 = vpop.f32.mrb[0].mxu0
      %6474 = vmatprep.mubr.f32.mxu0 %v364
      %6475 = vmatmul.mubr.f32.gmra.mrb[0].mxu0 %v363
      %v6476 = vpop.f32.mrb[0].mxu0
      %v6477 = vadd.f32 %v6372, %v6476
      %v6478 = vpop.f32.mrb[0].mxu0
      %6479 = vmatprep.mubr.f32.mxu0 %v372
      %6480 = vmatmul.mubr.f32.gmra.mrb[0].mxu0 %v371
      %v6481 = vpop.f32.mrb[0].mxu0
      %v6482 = vadd.f32 %v6377, %v6481
      %v6483 = vpop.f32.mrb[0].mxu0
      %6484 = vmatprep.mubr.f32.mxu0 %v380
      %6485 = vmatmul.mubr.f32.gmra.mrb[0].mxu0 %v379
      %v6486 = vpop.f32.mrb[0].mxu0
      %v6487 = vadd.f32 %v6382, %v6486
      %v6488 = vpop.f32.mrb[0].mxu0
      %6489 = vmatprep.mubr.f32.mxu0 %v388
      %6490 = vmatmul.mubr.f32.gmra.mrb[0].mxu0 %v387
      %v6491 = vpop.f32.mrb[0].mxu0
      %v6492 = vadd.f32 %v6387, %v6491
      %v6493 = vpop.f32.mrb[0].mxu0
      %6494 = vmatprep.mubr.f32.mxu0 %v396
      %6495 = vmatmul.mubr.f32.gmra.mrb[0].mxu0 %v395
      %v6496 = vpop.f32.mrb[0].mxu0
      %v6497 = vadd.f32 %v6392, %v6496
      %v6498 = vpop.f32.mrb[0].mxu0
      %6499 = vmatprep.mubr.f32.mxu0 %v404
      %6500 = vmatmul.mubr.f32.gmra.mrb[0].mxu0 %v403
      %v6501 = vpop.f32.mrb[0].mxu0
      %v6502 = vadd.f32 %v6397, %v6501
      %v6503 = vpop.f32.mrb[0].mxu0
      %6504 = vmatprep.mubr.f32.mxu0 %v412
      %6505 = vmatmul.mubr.f32.gmra.mrb[0].mxu0 %v411
      %v6506 = vpop.f32.mrb[0].mxu0
      %v6507 = vadd.f32 %v6402, %v6506
      %v6508 = vpop.f32.mrb[0].mxu0
      %6509 = vdwg.mxu0
      %6510 = vmatprep.subr.mxu0 0.0
      %6511 = vmatpush1.msra.mxu0 %v6156
      %6512 = vmatprep.subr.mxu0 0.0
      %6513 = vmatpush1.msra.mxu0 %v6157
      %6514 = vmatprep.subr.mxu0 0.0
      %6515 = vmatpush1.msra.mxu0 %v6158
      %6516 = vmatprep.subr.mxu0 0.0
      %6517 = vmatpush1.msra.mxu0 %v6159
      %6518 = vmatprep.subr.mxu0 0.0
      %6519 = vmatpush1.msra.mxu0 %v6160
      %6520 = vmatprep.subr.mxu0 0.0
      %6521 = vmatpush1.msra.mxu0 %v6161
      %6522 = vmatprep.subr.mxu0 0.0
      %6523 = vmatpush1.msra.mxu0 %v6162
      %6524 = vmatprep.subr.mxu0 0.0
      %6525 = vmatpush1.msra.mxu0 %v6163
      %6526 = vmatprep.subr.mxu0 0.0
      %6527 = vmatpush1.msra.mxu0 %v6164
      %6528 = vmatprep.subr.mxu0 0.0
      %6529 = vmatpush1.msra.mxu0 %v6165
      %6530 = vmatprep.subr.mxu0 0.0
      %6531 = vmatpush1.msra.mxu0 %v6166
      %6532 = vmatprep.subr.mxu0 0.0
      %6533 = vmatpush1.msra.mxu0 %v6167
      %6534 = vmatprep.subr.mxu0 0.0
      %6535 = vmatpush1.msra.mxu0 %v6168
      %6536 = vmatprep.subr.mxu0 0.0
      %6537 = vmatpush1.msra.mxu0 %v6169
      %6538 = vmatprep.subr.mxu0 0.0
      %6539 = vmatpush1.msra.mxu0 %v6170
      %6540 = vmatprep.subr.mxu0 0.0
      %6541 = vmatpush1.msra.mxu0 %v6171
      %6542 = vmatprep.subr.mxu0 0.0
      %6543 = vmatpush1.msra.mxu0 %v6172
      %6544 = vmatprep.subr.mxu0 0.0
      %6545 = vmatpush1.msra.mxu0 %v6173
      %6546 = vmatprep.subr.mxu0 0.0
      %6547 = vmatpush1.msra.mxu0 %v6174
      %6548 = vmatprep.subr.mxu0 0.0
      %6549 = vmatpush1.msra.mxu0 %v6175
      %6550 = vmatprep.subr.mxu0 0.0
      %6551 = vmatpush1.msra.mxu0 %v6176
      %6552 = vmatprep.subr.mxu0 0.0
      %6553 = vmatpush1.msra.mxu0 %v6177
      %6554 = vmatprep.subr.mxu0 0.0
      %6555 = vmatpush1.msra.mxu0 %v6178
      %6556 = vmatprep.subr.mxu0 0.0
      %6557 = vmatpush1.msra.mxu0 %v6179
      %6558 = vmatprep.subr.mxu0 0.0
      %6559 = vmatpush1.msra.mxu0 %v6180
      %6560 = vmatprep.subr.mxu0 0.0
      %6561 = vmatpush1.msra.mxu0 %v6181
      %6562 = vmatprep.subr.mxu0 0.0
      %6563 = vmatpush1.msra.mxu0 %v6182
      %6564 = vmatprep.subr.mxu0 0.0
      %6565 = vmatpush1.msra.mxu0 %v6183
      %6566 = vmatprep.subr.mxu0 0.0
      %6567 = vmatpush1.msra.mxu0 %v6184
      %6568 = vmatprep.subr.mxu0 0.0
      %6569 = vmatpush1.msra.mxu0 %v6185
      %6570 = vmatprep.subr.mxu0 0.0
      %6571 = vmatpush1.msra.mxu0 %v6186
      %6572 = vmatprep.subr.mxu0 0.0
      %6573 = vmatpush1.msra.mxu0 %v6187
      %6574 = vmatprep.mubr.f32.mxu0 %v358
      %6575 = vmatmul.mubr.f32.gmra.mrb[0].mxu0 %v357
      %v6576 = vpop.f32.mrb[0].mxu0
      %v6577 = vadd.f32 %v6472, %v6576
      %v6578 = vpop.f32.mrb[0].mxu0
      %6579 = vmatprep.mubr.f32.mxu0 %v366
      %6580 = vmatmul.mubr.f32.gmra.mrb[0].mxu0 %v365
      %v6581 = vpop.f32.mrb[0].mxu0
      %v6582 = vadd.f32 %v6477, %v6581
      %v6583 = vpop.f32.mrb[0].mxu0
      %6584 = vmatprep.mubr.f32.mxu0 %v374
      %6585 = vmatmul.mubr.f32.gmra.mrb[0].mxu0 %v373
      %v6586 = vpop.f32.mrb[0].mxu0
      %v6587 = vadd.f32 %v6482, %v6586
      %v6588 = vpop.f32.mrb[0].mxu0
      %6589 = vmatprep.mubr.f32.mxu0 %v382
      %6590 = vmatmul.mubr.f32.gmra.mrb[0].mxu0 %v381
      %v6591 = vpop.f32.mrb[0].mxu0
      %v6592 = vadd.f32 %v6487, %v6591
      %v6593 = vpop.f32.mrb[0].mxu0
      %6594 = vmatprep.mubr.f32.mxu0 %v390
      %6595 = vmatmul.mubr.f32.gmra.mrb[0].mxu0 %v389
      %v6596 = vpop.f32.mrb[0].mxu0
      %v6597 = vadd.f32 %v6492, %v6596
      %v6598 = vpop.f32.mrb[0].mxu0
      %6599 = vmatprep.mubr.f32.mxu0 %v398
      %6600 = vmatmul.mubr.f32.gmra.mrb[0].mxu0 %v397
      %v6601 = vpop.f32.mrb[0].mxu0
      %v6602 = vadd.f32 %v6497, %v6601
      %v6603 = vpop.f32.mrb[0].mxu0
      %6604 = vmatprep.mubr.f32.mxu0 %v406
      %6605 = vmatmul.mubr.f32.gmra.mrb[0].mxu0 %v405
      %v6606 = vpop.f32.mrb[0].mxu0
      %v6607 = vadd.f32 %v6502, %v6606
      %v6608 = vpop.f32.mrb[0].mxu0
      %6609 = vmatprep.mubr.f32.mxu0 %v414
      %6610 = vmatmul.mubr.f32.gmra.mrb[0].mxu0 %v413
      %v6611 = vpop.f32.mrb[0].mxu0
      %v6612 = vadd.f32 %v6507, %v6611
      %v6613 = vpop.f32.mrb[0].mxu0
      %6614 = vdwg.mxu0
      %v6615 = vadd.f32 %v6577, %v567
      %v6616 = vadd.f32 %v6582, %v568
      %v6617 = vadd.f32 %v6587, %v569
      %v6618 = vadd.f32 %v6592, %v570
      %v6619 = vadd.f32 %v6597, %v571
      %v6620 = vadd.f32 %v6602, %v572
      %v6621 = vadd.f32 %v6607, %v573
      %v6622 = vadd.f32 %v6612, %v574
      %v6624 = vsel %vm899, %v6615, 0
      %v6627 = vsel %vm899, %v6616, 0
      %v6630 = vsel %vm899, %v6617, 0
      %v6633 = vsel %vm899, %v6618, 0
      %v6636 = vsel %vm899, %v6619, 0
      %v6639 = vsel %vm899, %v6620, 0
      %v6642 = vsel %vm899, %v6621, 0
      %v6645 = vsel %vm899, %v6622, 0
      %6647 = vmatprep.subr.mxu0 0.0
      %6648 = vmatpush1.xpose.msra.mxu0 %v1619
      %6649 = vmatprep.subr.mxu0 0.0
      %6650 = vmatpush1.xpose.msra.mxu0 %v1622
      %6651 = vmatprep.subr.mxu0 0.0
      %6652 = vmatpush1.xpose.msra.mxu0 %v1625
      %6653 = vmatprep.subr.mxu0 0.0
      %6654 = vmatpush1.xpose.msra.mxu0 %v1628
      %6655 = vmatprep.subr.mxu0 0.0
      %6656 = vmatpush1.xpose.msra.mxu0 %v1631
      %6657 = vmatprep.subr.mxu0 0.0
      %6658 = vmatpush1.xpose.msra.mxu0 %v1634
      %6659 = vmatprep.subr.mxu0 0.0
      %6660 = vmatpush1.xpose.msra.mxu0 %v1637
      %6661 = vmatprep.subr.mxu0 0.0
      %6662 = vmatpush1.xpose.msra.mxu0 %v1640
      %6663 = vmatprep.subr.mxu0 0.0
      %6664 = vmatpush1.xpose.msra.mxu0 %v1643
      %6665 = vmatprep.subr.mxu0 0.0
      %6666 = vmatpush1.xpose.msra.mxu0 %v1646
      %6667 = vmatprep.subr.mxu0 0.0
      %6668 = vmatpush1.xpose.msra.mxu0 %v1649
      %6669 = vmatprep.subr.mxu0 0.0
      %6670 = vmatpush1.xpose.msra.mxu0 %v1652
      %6671 = vmatprep.subr.mxu0 0.0
      %6672 = vmatpush1.xpose.msra.mxu0 %v1655
      %6673 = vmatprep.subr.mxu0 0.0
      %6674 = vmatpush1.xpose.msra.mxu0 %v1658
      %6675 = vmatprep.subr.mxu0 0.0
      %6676 = vmatpush1.xpose.msra.mxu0 %v1661
      %6677 = vmatprep.subr.mxu0 0.0
      %6678 = vmatpush1.xpose.msra.mxu0 %v1664
      %6679 = vmatprep.subr.mxu0 0.0
      %6680 = vmatpush1.xpose.msra.mxu0 0.0
      %6681 = vmatprep.subr.mxu0 0.0
      %6682 = vmatpush1.xpose.msra.mxu0 0.0
      %6683 = vmatprep.subr.mxu0 0.0
      %6684 = vmatpush1.xpose.msra.mxu0 0.0
      %6685 = vmatprep.subr.mxu0 0.0
      %6686 = vmatpush1.xpose.msra.mxu0 0.0
      %6687 = vmatprep.subr.mxu0 0.0
      %6688 = vmatpush1.xpose.msra.mxu0 0.0
      %6689 = vmatprep.subr.mxu0 0.0
      %6690 = vmatpush1.xpose.msra.mxu0 0.0
      %6691 = vmatprep.subr.mxu0 0.0
      %6692 = vmatpush1.xpose.msra.mxu0 0.0
      %6693 = vmatprep.subr.mxu0 0.0
      %6694 = vmatpush1.xpose.msra.mxu0 0.0
      %6695 = vmatprep.subr.mxu0 0.0
      %6696 = vmatpush1.xpose.msra.mxu0 0.0
      %6697 = vmatprep.subr.mxu0 0.0
      %6698 = vmatpush1.xpose.msra.mxu0 0.0
      %6699 = vmatprep.subr.mxu0 0.0
      %6700 = vmatpush1.xpose.msra.mxu0 0.0
      %6701 = vmatprep.subr.mxu0 0.0
      %6702 = vmatpush1.xpose.msra.mxu0 0.0
      %6703 = vmatprep.subr.mxu0 0.0
      %6704 = vmatpush1.xpose.msra.mxu0 0.0
      %6705 = vmatprep.subr.mxu0 0.0
      %6706 = vmatpush1.xpose.msra.mxu0 0.0
      %6707 = vmatprep.subr.mxu0 0.0
      %6708 = vmatpush1.xpose.msra.mxu0 0.0
      %6709 = vmatprep.subr.mxu0 0.0
      %6710 = vmatpush1.xpose.msra.mxu0 0.0
      %6711 = vmatprep.mubr.f32.mxu0 0.0
      %6712 = vmatmul.mubr.f32.gmra.mrb[0].mxu0 %v6624
      %v6713 = vpop.f32.mrb[0].mxu0
      %v6714 = vadd.f32 0.0, %v6713
      %v6715 = vpop.f32.mrb[0].mxu0
      %6716 = vmatprep.mubr.f32.mxu0 0.0
      %6717 = vmatmul.mubr.f32.gmra.mrb[0].mxu0 %v6627
      %v6718 = vpop.f32.mrb[0].mxu0
      %v6719 = vadd.f32 0.0, %v6718
      %v6720 = vpop.f32.mrb[0].mxu0
      %6721 = vmatprep.mubr.f32.mxu0 0.0
      %6722 = vmatmul.mubr.f32.gmra.mrb[0].mxu0 %v6630
      %v6723 = vpop.f32.mrb[0].mxu0
      %v6724 = vadd.f32 0.0, %v6723
      %v6725 = vpop.f32.mrb[0].mxu0
      %6726 = vmatprep.mubr.f32.mxu0 0.0
      %6727 = vmatmul.mubr.f32.gmra.mrb[0].mxu0 %v6633
      %v6728 = vpop.f32.mrb[0].mxu0
      %v6729 = vadd.f32 0.0, %v6728
      %v6730 = vpop.f32.mrb[0].mxu0
      %6731 = vmatprep.mubr.f32.mxu0 0.0
      %6732 = vmatmul.mubr.f32.gmra.mrb[0].mxu0 %v6636
      %v6733 = vpop.f32.mrb[0].mxu0
      %v6734 = vadd.f32 0.0, %v6733
      %v6735 = vpop.f32.mrb[0].mxu0
      %6736 = vmatprep.mubr.f32.mxu0 0.0
      %6737 = vmatmul.mubr.f32.gmra.mrb[0].mxu0 %v6639
      %v6738 = vpop.f32.mrb[0].mxu0
      %v6739 = vadd.f32 0.0, %v6738
      %v6740 = vpop.f32.mrb[0].mxu0
      %6741 = vmatprep.mubr.f32.mxu0 0.0
      %6742 = vmatmul.mubr.f32.gmra.mrb[0].mxu0 %v6642
      %v6743 = vpop.f32.mrb[0].mxu0
      %v6744 = vadd.f32 0.0, %v6743
      %v6745 = vpop.f32.mrb[0].mxu0
      %6746 = vmatprep.mubr.f32.mxu0 0.0
      %6747 = vmatmul.mubr.f32.gmra.mrb[0].mxu0 %v6645
      %v6748 = vpop.f32.mrb[0].mxu0
      %v6749 = vadd.f32 0.0, %v6748
      %v6750 = vpop.f32.mrb[0].mxu0
      %6751 = vdwg.mxu0
      %6752 = vmax.xlane.f32.xlu0 %v6714
      %v6753 = vpop.xlane.xlu0 %6752
      %6754 = vmax.xlane.f32.xlu0 %v6719
      %v6755 = vpop.xlane.xlu0 %6754
      %6756 = vmax.xlane.f32.xlu0 %v6724
      %v6757 = vpop.xlane.xlu0 %6756
      %6758 = vmax.xlane.f32.xlu0 %v6729
      %v6759 = vpop.xlane.xlu0 %6758
      %6760 = vmax.xlane.f32.xlu0 %v6734
      %v6761 = vpop.xlane.xlu0 %6760
      %6762 = vmax.xlane.f32.xlu0 %v6739
      %v6763 = vpop.xlane.xlu0 %6762
      %6764 = vmax.xlane.f32.xlu0 %v6744
      %v6765 = vpop.xlane.xlu0 %6764
      %6766 = vmax.xlane.f32.xlu0 %v6749
      %v6767 = vpop.xlane.xlu0 %6766
      %v6768 = vsub.f32 %v6714, %v6753
      %v6769 = vsub.f32 %v6719, %v6755
      %v6770 = vsub.f32 %v6724, %v6757
      %v6771 = vsub.f32 %v6729, %v6759
      %v6772 = vsub.f32 %v6734, %v6761
      %v6773 = vsub.f32 %v6739, %v6763
      %v6774 = vsub.f32 %v6744, %v6765
      %v6775 = vsub.f32 %v6749, %v6767
      %v6776 = vmul.f32 %v6768, 1.442695
      %v6777 = vpow.pop %v6776
      %v6778 = vmul.f32 %v6769, 1.442695
      %v6779 = vpow.pop %v6778
      %v6780 = vmul.f32 %v6770, 1.442695
      %v6781 = vpow.pop %v6780
      %v6782 = vmul.f32 %v6771, 1.442695
      %v6783 = vpow.pop %v6782
      %v6784 = vmul.f32 %v6772, 1.442695
      %v6785 = vpow.pop %v6784
      %v6786 = vmul.f32 %v6773, 1.442695
      %v6787 = vpow.pop %v6786
      %v6788 = vmul.f32 %v6774, 1.442695
      %v6789 = vpow.pop %v6788
      %v6790 = vmul.f32 %v6775, 1.442695
      %v6791 = vpow.pop %v6790
      %6792 = vadd.xlane.f32.xlu0 %v6777
      %v6793 = vpop.xlane.xlu0 %6792
      %6794 = vadd.xlane.f32.xlu0 %v6779
      %v6795 = vpop.xlane.xlu0 %6794
      %6796 = vadd.xlane.f32.xlu0 %v6781
      %v6797 = vpop.xlane.xlu0 %6796
      %6798 = vadd.xlane.f32.xlu0 %v6783
      %v6799 = vpop.xlane.xlu0 %6798
      %6800 = vadd.xlane.f32.xlu0 %v6785
      %v6801 = vpop.xlane.xlu0 %6800
      %6802 = vadd.xlane.f32.xlu0 %v6787
      %v6803 = vpop.xlane.xlu0 %6802
      %6804 = vadd.xlane.f32.xlu0 %v6789
      %v6805 = vpop.xlane.xlu0 %6804
      %6806 = vadd.xlane.f32.xlu0 %v6791
      %v6807 = vpop.xlane.xlu0 %6806
      %v6808 = vmul.f32 %v617, %v6714
      %v6809 = vmul.f32 %v618, %v6719
      %v6810 = vmul.f32 %v619, %v6724
      %v6811 = vmul.f32 %v620, %v6729
      %v6812 = vmul.f32 %v621, %v6734
      %v6813 = vmul.f32 %v622, %v6739
      %v6814 = vmul.f32 %v623, %v6744
      %v6815 = vmul.f32 %v624, %v6749
      %6816 = vadd.xlane.f32.xlu0 %v6808
      %v6817 = vpop.xlane.xlu0 %6816
      %6818 = vadd.xlane.f32.xlu0 %v6809
      %v6819 = vpop.xlane.xlu0 %6818
      %6820 = vadd.xlane.f32.xlu0 %v6810
      %v6821 = vpop.xlane.xlu0 %6820
      %6822 = vadd.xlane.f32.xlu0 %v6811
      %v6823 = vpop.xlane.xlu0 %6822
      %6824 = vadd.xlane.f32.xlu0 %v6812
      %v6825 = vpop.xlane.xlu0 %6824
      %6826 = vadd.xlane.f32.xlu0 %v6813
      %v6827 = vpop.xlane.xlu0 %6826
      %6828 = vadd.xlane.f32.xlu0 %v6814
      %v6829 = vpop.xlane.xlu0 %6828
      %6830 = vadd.xlane.f32.xlu0 %v6815
      %v6831 = vpop.xlane.xlu0 %6830
      %v6832 = vlog2.pop %v6793
      %v6833 = vmul.f32 %v6832, 0.6931472
      %v6834 = vlog2.pop %v6795
      %v6835 = vmul.f32 %v6834, 0.6931472
      %v6836 = vlog2.pop %v6797
      %v6837 = vmul.f32 %v6836, 0.6931472
      %v6838 = vlog2.pop %v6799
      %v6839 = vmul.f32 %v6838, 0.6931472
      %v6840 = vlog2.pop %v6801
      %v6841 = vmul.f32 %v6840, 0.6931472
      %v6842 = vlog2.pop %v6803
      %v6843 = vmul.f32 %v6842, 0.6931472
      %v6844 = vlog2.pop %v6805
      %v6845 = vmul.f32 %v6844, 0.6931472
      %v6846 = vlog2.pop %v6807
      %v6847 = vmul.f32 %v6846, 0.6931472
      %v6848 = vadd.f32 %v6753, %v6833
      %v6849 = vadd.f32 %v6755, %v6835
      %v6850 = vadd.f32 %v6757, %v6837
      %v6851 = vadd.f32 %v6759, %v6839
      %v6852 = vadd.f32 %v6761, %v6841
      %v6853 = vadd.f32 %v6763, %v6843
      %v6854 = vadd.f32 %v6765, %v6845
      %v6855 = vadd.f32 %v6767, %v6847
      %v6856 = vsub.f32 %v6848, %v6817
      %v6857 = vsub.f32 %v6849, %v6819
      %v6858 = vsub.f32 %v6850, %v6821
      %v6859 = vsub.f32 %v6851, %v6823
      %v6860 = vsub.f32 %v6852, %v6825
      %v6861 = vsub.f32 %v6853, %v6827
      %v6862 = vsub.f32 %v6854, %v6829
      %v6863 = vsub.f32 %v6855, %v6831
      %v6864 = vmul.f32 %v6856, %v682
      %v6865 = vmul.f32 %v6857, %v683
      %v6866 = vmul.f32 %v6858, %v684
      %v6867 = vmul.f32 %v6859, %v685
      %v6868 = vmul.f32 %v6860, %v686
      %v6869 = vmul.f32 %v6861, %v687
      %v6870 = vmul.f32 %v6862, %v688
      %v6871 = vmul.f32 %v6863, %v689
      %v6872 = vsel %vm706, %v6864, 0.0
      %v6873 = vsel %vm706, %v6865, 0.0
      %v6874 = vadd.f32 %v6872, %v6873
      %v6875 = vsel %vm706, %v6866, 0.0
      %v6876 = vadd.f32 %v6874, %v6875
      %v6877 = vsel %vm706, %v6867, 0.0
      %v6878 = vadd.f32 %v6876, %v6877
      %v6879 = vsel %vm706, %v6868, 0.0
      %v6880 = vadd.f32 %v6878, %v6879
      %v6881 = vsel %vm706, %v6869, 0.0
      %v6882 = vadd.f32 %v6880, %v6881
      %v6883 = vsel %vm706, %v6870, 0.0
      %v6884 = vadd.f32 %v6882, %v6883
      %v6885 = vsel %vm706, %v6871, 0.0
      %v6886 = vadd.f32 %v6884, %v6885
      %6887 = vadd.xlane.f32.xlu0 %v6886
      %v6888 = vpop.xlane.xlu0 %6887
      %v6889 = vrot.slane %v6888, 4
      %v6890 = vadd.f32 %v6888, %v6889
      %v6891 = vrot.slane %v6890, 2
      %v6892 = vadd.f32 %v6890, %v6891
      %v6893 = vrot.slane %v6892, 1
      %v6894 = vadd.f32 %v6892, %v6893
      %s6895 = vtos %v6894
      %v6896 = vstv %s6895
      %v6897 = vmul.f32 %v6896, %v762
      %vm6898 = vcmp.eq.f32.partialorder %v6714, %v6753
      %vm6899 = vcmp.eq.f32.partialorder %v6719, %v6755
      %vm6900 = vcmp.eq.f32.partialorder %v6724, %v6757
      %vm6901 = vcmp.eq.f32.partialorder %v6729, %v6759
      %vm6902 = vcmp.eq.f32.partialorder %v6734, %v6761
      %vm6903 = vcmp.eq.f32.partialorder %v6739, %v6763
      %vm6904 = vcmp.eq.f32.partialorder %v6744, %v6765
      %vm6905 = vcmp.eq.f32.partialorder %v6749, %v6767
      %v6906 = vsel %vm6898, %v576, 128
      %v6907 = vsel %vm6899, %v576, 128
      %v6908 = vsel %vm6900, %v576, 128
      %v6909 = vsel %vm6901, %v576, 128
      %v6910 = vsel %vm6902, %v576, 128
      %v6911 = vsel %vm6903, %v576, 128
      %v6912 = vsel %vm6904, %v576, 128
      %v6913 = vsel %vm6905, %v576, 128
      %v6914 = vand.u32 %v6906, 65535
      %v6915 = vshra.s32 %v6906, 16
      %v6916 = vcvt.s32.f32 %v6914
      %v6917 = vcvt.s32.f32 %v6915
      %6918 = vmin.xlane.f32.xlu0 %v6917
      %v6919 = vpop.xlane.xlu0 %6918
      %vm6920 = vcmp.eq.f32.partialorder %v6917, %v6919
      %v6921 = vsel %vm6920, %v6916, inf
      %6922 = vmin.xlane.f32.xlu0 %v6921
      %v6923 = vpop.xlane.xlu0 %6922
      %v6924 = vcvt.f32.s32 %v6923
      %v6925 = vcvt.f32.s32 %v6919
      %v6926 = vshll.u32 %v6925, 16
      %v6927 = vadd.s32 %v6926, %v6924
      %v6928 = vand.u32 %v6907, 65535
      %v6929 = vshra.s32 %v6907, 16
      %v6930 = vcvt.s32.f32 %v6928
      %v6931 = vcvt.s32.f32 %v6929
      %6932 = vmin.xlane.f32.xlu0 %v6931
      %v6933 = vpop.xlane.xlu0 %6932
      %vm6934 = vcmp.eq.f32.partialorder %v6931, %v6933
      %v6935 = vsel %vm6934, %v6930, inf
      %6936 = vmin.xlane.f32.xlu0 %v6935
      %v6937 = vpop.xlane.xlu0 %6936
      %v6938 = vcvt.f32.s32 %v6937
      %v6939 = vcvt.f32.s32 %v6933
      %v6940 = vshll.u32 %v6939, 16
      %v6941 = vadd.s32 %v6940, %v6938
      %v6942 = vand.u32 %v6908, 65535
      %v6943 = vshra.s32 %v6908, 16
      %v6944 = vcvt.s32.f32 %v6942
      %v6945 = vcvt.s32.f32 %v6943
      %6946 = vmin.xlane.f32.xlu0 %v6945
      %v6947 = vpop.xlane.xlu0 %6946
      %vm6948 = vcmp.eq.f32.partialorder %v6945, %v6947
      %v6949 = vsel %vm6948, %v6944, inf
      %6950 = vmin.xlane.f32.xlu0 %v6949
      %v6951 = vpop.xlane.xlu0 %6950
      %v6952 = vcvt.f32.s32 %v6951
      %v6953 = vcvt.f32.s32 %v6947
      %v6954 = vshll.u32 %v6953, 16
      %v6955 = vadd.s32 %v6954, %v6952
      %v6956 = vand.u32 %v6909, 65535
      %v6957 = vshra.s32 %v6909, 16
      %v6958 = vcvt.s32.f32 %v6956
      %v6959 = vcvt.s32.f32 %v6957
      %6960 = vmin.xlane.f32.xlu0 %v6959
      %v6961 = vpop.xlane.xlu0 %6960
      %vm6962 = vcmp.eq.f32.partialorder %v6959, %v6961
      %v6963 = vsel %vm6962, %v6958, inf
      %6964 = vmin.xlane.f32.xlu0 %v6963
      %v6965 = vpop.xlane.xlu0 %6964
      %v6966 = vcvt.f32.s32 %v6965
      %v6967 = vcvt.f32.s32 %v6961
      %v6968 = vshll.u32 %v6967, 16
      %v6969 = vadd.s32 %v6968, %v6966
      %v6970 = vand.u32 %v6910, 65535
      %v6971 = vshra.s32 %v6910, 16
      %v6972 = vcvt.s32.f32 %v6970
      %v6973 = vcvt.s32.f32 %v6971
      %6974 = vmin.xlane.f32.xlu0 %v6973
      %v6975 = vpop.xlane.xlu0 %6974
      %vm6976 = vcmp.eq.f32.partialorder %v6973, %v6975
      %v6977 = vsel %vm6976, %v6972, inf
      %6978 = vmin.xlane.f32.xlu0 %v6977
      %v6979 = vpop.xlane.xlu0 %6978
      %v6980 = vcvt.f32.s32 %v6979
      %v6981 = vcvt.f32.s32 %v6975
      %v6982 = vshll.u32 %v6981, 16
      %v6983 = vadd.s32 %v6982, %v6980
      %v6984 = vand.u32 %v6911, 65535
      %v6985 = vshra.s32 %v6911, 16
      %v6986 = vcvt.s32.f32 %v6984
      %v6987 = vcvt.s32.f32 %v6985
      %6988 = vmin.xlane.f32.xlu0 %v6987
      %v6989 = vpop.xlane.xlu0 %6988
      %vm6990 = vcmp.eq.f32.partialorder %v6987, %v6989
      %v6991 = vsel %vm6990, %v6986, inf
      %6992 = vmin.xlane.f32.xlu0 %v6991
      %v6993 = vpop.xlane.xlu0 %6992
      %v6994 = vcvt.f32.s32 %v6993
      %v6995 = vcvt.f32.s32 %v6989
      %v6996 = vshll.u32 %v6995, 16
      %v6997 = vadd.s32 %v6996, %v6994
      %v6998 = vand.u32 %v6912, 65535
      %v6999 = vshra.s32 %v6912, 16
      %v7000 = vcvt.s32.f32 %v6998
      %v7001 = vcvt.s32.f32 %v6999
      %7002 = vmin.xlane.f32.xlu0 %v7001
      %v7003 = vpop.xlane.xlu0 %7002
      %vm7004 = vcmp.eq.f32.partialorder %v7001, %v7003
      %v7005 = vsel %vm7004, %v7000, inf
      %7006 = vmin.xlane.f32.xlu0 %v7005
      %v7007 = vpop.xlane.xlu0 %7006
      %v7008 = vcvt.f32.s32 %v7007
      %v7009 = vcvt.f32.s32 %v7003
      %v7010 = vshll.u32 %v7009, 16
      %v7011 = vadd.s32 %v7010, %v7008
      %v7012 = vand.u32 %v6913, 65535
      %v7013 = vshra.s32 %v6913, 16
      %v7014 = vcvt.s32.f32 %v7012
      %v7015 = vcvt.s32.f32 %v7013
      %7016 = vmin.xlane.f32.xlu0 %v7015
      %v7017 = vpop.xlane.xlu0 %7016
      %vm7018 = vcmp.eq.f32.partialorder %v7015, %v7017
      %v7019 = vsel %vm7018, %v7014, inf
      %7020 = vmin.xlane.f32.xlu0 %v7019
      %v7021 = vpop.xlane.xlu0 %7020
      %v7022 = vcvt.f32.s32 %v7021
      %v7023 = vcvt.f32.s32 %v7017
      %v7024 = vshll.u32 %v7023, 16
      %v7025 = vadd.s32 %v7024, %v7022
      %vm7026 = vcmp.eq.s32.totalorder %v6927, %v543
      %vm7027 = vcmp.eq.s32.totalorder %v6941, %v544
      %vm7028 = vcmp.eq.s32.totalorder %v6955, %v545
      %vm7029 = vcmp.eq.s32.totalorder %v6969, %v546
      %vm7030 = vcmp.eq.s32.totalorder %v6983, %v547
      %vm7031 = vcmp.eq.s32.totalorder %v6997, %v548
      %vm7032 = vcmp.eq.s32.totalorder %v7011, %v549
      %vm7033 = vcmp.eq.s32.totalorder %v7025, %v550
      %vm7034 = vmand %vm7026, %vm658
      %vm7035 = vmand %vm7027, %vm659
      %vm7036 = vmand %vm7028, %vm660
      %vm7037 = vmand %vm7029, %vm661
      %vm7038 = vmand %vm7030, %vm662
      %vm7039 = vmand %vm7031, %vm663
      %vm7040 = vmand %vm7032, %vm664
      %vm7041 = vmand %vm7033, %vm665
      %v7042 = vsel %vm7034, 1, 0
      %v7043 = vsel %vm7035, 1, 0
      %v7044 = vsel %vm7036, 1, 0
      %v7045 = vsel %vm7037, 1, 0
      %v7046 = vsel %vm7038, 1, 0
      %v7047 = vsel %vm7039, 1, 0
      %v7048 = vsel %vm7040, 1, 0
      %v7049 = vsel %vm7041, 1, 0
      %v7050 = vcvt.s32.f32 %v7042
      %v7051 = vcvt.s32.f32 %v7043
      %v7052 = vcvt.s32.f32 %v7044
      %v7053 = vcvt.s32.f32 %v7045
      %v7054 = vcvt.s32.f32 %v7046
      %v7055 = vcvt.s32.f32 %v7047
      %v7056 = vcvt.s32.f32 %v7048
      %v7057 = vcvt.s32.f32 %v7049
      %v7058 = vsel %vm706, %v7050, 0.0
      %v7059 = vsel %vm706, %v7051, 0.0
      %v7060 = vadd.f32 %v7058, %v7059
      %v7061 = vsel %vm706, %v7052, 0.0
      %v7062 = vadd.f32 %v7060, %v7061
      %v7063 = vsel %vm706, %v7053, 0.0
      %v7064 = vadd.f32 %v7062, %v7063
      %v7065 = vsel %vm706, %v7054, 0.0
      %v7066 = vadd.f32 %v7064, %v7065
      %v7067 = vsel %vm706, %v7055, 0.0
      %v7068 = vadd.f32 %v7066, %v7067
      %v7069 = vsel %vm706, %v7056, 0.0
      %v7070 = vadd.f32 %v7068, %v7069
      %v7071 = vsel %vm706, %v7057, 0.0
      %v7072 = vadd.f32 %v7070, %v7071
      %7073 = vadd.xlane.f32.xlu0 %v7072
      %v7074 = vpop.xlane.xlu0 %7073
      %v7075 = vrot.slane %v7074, 4
      %v7076 = vadd.f32 %v7074, %v7075
      %v7077 = vrot.slane %v7076, 2
      %v7078 = vadd.f32 %v7076, %v7077
      %v7079 = vrot.slane %v7078, 1
      %v7080 = vadd.f32 %v7078, %v7079
      %s7081 = vtos %v7080
      %vm7082 = vcmp.eq.s32.totalorder %v576, 2
      %v7083 = vsel %vm7082, %v6897, 0.0
      %v7084 = vadd.f32 %v4806, %v7083
      %v7085 = vstv %s7081
      %v7086 = vsel %vm7082, %v7085, 0.0
      %v7087 = vadd.f32 %v4809, %v7086
      %v7088 = vrcp.pop %v6793
      %v7089 = vmul.f32 %v6777, %v7088
      %v7090 = vrcp.pop %v6795
      %v7091 = vmul.f32 %v6779, %v7090
      %v7092 = vrcp.pop %v6797
      %v7093 = vmul.f32 %v6781, %v7092
      %v7094 = vrcp.pop %v6799
      %v7095 = vmul.f32 %v6783, %v7094
      %v7096 = vrcp.pop %v6801
      %v7097 = vmul.f32 %v6785, %v7096
      %v7098 = vrcp.pop %v6803
      %v7099 = vmul.f32 %v6787, %v7098
      %v7100 = vrcp.pop %v6805
      %v7101 = vmul.f32 %v6789, %v7100
      %v7102 = vrcp.pop %v6807
      %v7103 = vmul.f32 %v6791, %v7102
      %v7104 = vsub.f32 %v7089, %v617
      %v7105 = vsub.f32 %v7091, %v618
      %v7106 = vsub.f32 %v7093, %v619
      %v7107 = vsub.f32 %v7095, %v620
      %v7108 = vsub.f32 %v7097, %v621
      %v7109 = vsub.f32 %v7099, %v622
      %v7110 = vsub.f32 %v7101, %v623
      %v7111 = vsub.f32 %v7103, %v624
      %v7112 = vmul.f32 %v7104, %v2134
      %v7113 = vmul.f32 %v7105, %v2139
      %v7114 = vmul.f32 %v7106, %v2144
      %v7115 = vmul.f32 %v7107, %v2149
      %v7116 = vmul.f32 %v7108, %v2154
      %v7117 = vmul.f32 %v7109, %v2159
      %v7118 = vmul.f32 %v7110, %v2164
      %v7119 = vmul.f32 %v7111, %v2169
      %7120 = vmatprep.subr.mxu0 0.0
      %7121 = vmatpush1.msra.mxu0 %v551
      %7122 = vmatprep.subr.mxu0 0.0
      %7123 = vmatpush1.msra.mxu0 %v552
      %7124 = vmatprep.subr.mxu0 0.0
      %7125 = vmatpush1.msra.mxu0 %v553
      %7126 = vmatprep.subr.mxu0 0.0
      %7127 = vmatpush1.msra.mxu0 %v554
      %7128 = vmatprep.subr.mxu0 0.0
      %7129 = vmatpush1.msra.mxu0 %v555
      %7130 = vmatprep.subr.mxu0 0.0
      %7131 = vmatpush1.msra.mxu0 %v556
      %7132 = vmatprep.subr.mxu0 0.0
      %7133 = vmatpush1.msra.mxu0 %v557
      %7134 = vmatprep.subr.mxu0 0.0
      %7135 = vmatpush1.msra.mxu0 %v558
      %7136 = vmatprep.subr.mxu0 0.0
      %7137 = vmatpush1.msra.mxu0 %v559
      %7138 = vmatprep.subr.mxu0 0.0
      %7139 = vmatpush1.msra.mxu0 %v560
      %7140 = vmatprep.subr.mxu0 0.0
      %7141 = vmatpush1.msra.mxu0 %v561
      %7142 = vmatprep.subr.mxu0 0.0
      %7143 = vmatpush1.msra.mxu0 %v562
      %7144 = vmatprep.subr.mxu0 0.0
      %7145 = vmatpush1.msra.mxu0 %v563
      %7146 = vmatprep.subr.mxu0 0.0
      %7147 = vmatpush1.msra.mxu0 %v564
      %7148 = vmatprep.subr.mxu0 0.0
      %7149 = vmatpush1.msra.mxu0 %v565
      %7150 = vmatprep.subr.mxu0 0.0
      %7151 = vmatpush1.msra.mxu0 %v566
      %7152 = vmatprep.subr.mxu0 0.0
      %7153 = vmatpush1.msra.mxu0 0.0
      %7154 = vmatprep.subr.mxu0 0.0
      %7155 = vmatpush1.msra.mxu0 0.0
      %7156 = vmatprep.subr.mxu0 0.0
      %7157 = vmatpush1.msra.mxu0 0.0
      %7158 = vmatprep.subr.mxu0 0.0
      %7159 = vmatpush1.msra.mxu0 0.0
      %7160 = vmatprep.subr.mxu0 0.0
      %7161 = vmatpush1.msra.mxu0 0.0
      %7162 = vmatprep.subr.mxu0 0.0
      %7163 = vmatpush1.msra.mxu0 0.0
      %7164 = vmatprep.subr.mxu0 0.0
      %7165 = vmatpush1.msra.mxu0 0.0
      %7166 = vmatprep.subr.mxu0 0.0
      %7167 = vmatpush1.msra.mxu0 0.0
      %7168 = vmatprep.subr.mxu0 0.0
      %7169 = vmatpush1.msra.mxu0 0.0
      %7170 = vmatprep.subr.mxu0 0.0
      %7171 = vmatpush1.msra.mxu0 0.0
      %7172 = vmatprep.subr.mxu0 0.0
      %7173 = vmatpush1.msra.mxu0 0.0
      %7174 = vmatprep.subr.mxu0 0.0
      %7175 = vmatpush1.msra.mxu0 0.0
      %7176 = vmatprep.subr.mxu0 0.0
      %7177 = vmatpush1.msra.mxu0 0.0
      %7178 = vmatprep.subr.mxu0 0.0
      %7179 = vmatpush1.msra.mxu0 0.0
      %7180 = vmatprep.subr.mxu0 0.0
      %7181 = vmatpush1.msra.mxu0 0.0
      %7182 = vmatprep.subr.mxu0 0.0
      %7183 = vmatpush1.msra.mxu0 0.0
      %7184 = vmatprep.mubr.f32.mxu0 0.0
      %7185 = vmatmul.mubr.f32.gmra.mrb[0].mxu0 %v7112
      %v7186 = vpop.f32.mrb[0].mxu0
      %v7187 = vadd.f32 0.0, %v7186
      %v7188 = vpop.f32.mrb[0].mxu0
      %7189 = vmatprep.mubr.f32.mxu0 0.0
      %7190 = vmatmul.mubr.f32.gmra.mrb[0].mxu0 %v7113
      %v7191 = vpop.f32.mrb[0].mxu0
      %v7192 = vadd.f32 0.0, %v7191
      %v7193 = vpop.f32.mrb[0].mxu0
      %7194 = vmatprep.mubr.f32.mxu0 0.0
      %7195 = vmatmul.mubr.f32.gmra.mrb[0].mxu0 %v7114
      %v7196 = vpop.f32.mrb[0].mxu0
      %v7197 = vadd.f32 0.0, %v7196
      %v7198 = vpop.f32.mrb[0].mxu0
      %7199 = vmatprep.mubr.f32.mxu0 0.0
      %7200 = vmatmul.mubr.f32.gmra.mrb[0].mxu0 %v7115
      %v7201 = vpop.f32.mrb[0].mxu0
      %v7202 = vadd.f32 0.0, %v7201
      %v7203 = vpop.f32.mrb[0].mxu0
      %7204 = vmatprep.mubr.f32.mxu0 0.0
      %7205 = vmatmul.mubr.f32.gmra.mrb[0].mxu0 %v7116
      %v7206 = vpop.f32.mrb[0].mxu0
      %v7207 = vadd.f32 0.0, %v7206
      %v7208 = vpop.f32.mrb[0].mxu0
      %7209 = vmatprep.mubr.f32.mxu0 0.0
      %7210 = vmatmul.mubr.f32.gmra.mrb[0].mxu0 %v7117
      %v7211 = vpop.f32.mrb[0].mxu0
      %v7212 = vadd.f32 0.0, %v7211
      %v7213 = vpop.f32.mrb[0].mxu0
      %7214 = vmatprep.mubr.f32.mxu0 0.0
      %7215 = vmatmul.mubr.f32.gmra.mrb[0].mxu0 %v7118
      %v7216 = vpop.f32.mrb[0].mxu0
      %v7217 = vadd.f32 0.0, %v7216
      %v7218 = vpop.f32.mrb[0].mxu0
      %7219 = vmatprep.mubr.f32.mxu0 0.0
      %7220 = vmatmul.mubr.f32.gmra.mrb[0].mxu0 %v7119
      %v7221 = vpop.f32.mrb[0].mxu0
      %v7222 = vadd.f32 0.0, %v7221
      %v7223 = vpop.f32.mrb[0].mxu0
      %7224 = vdwg.mxu0
      %7225 = vmatprep.subr.mxu0 0.0
      %7226 = vmatpush1.msra.mxu0 %v7187
      %7227 = vmatprep.subr.mxu0 0.0
      %7228 = vmatpush1.msra.mxu0 %v7192
      %7229 = vmatprep.subr.mxu0 0.0
      %7230 = vmatpush1.msra.mxu0 %v7197
      %7231 = vmatprep.subr.mxu0 0.0
      %7232 = vmatpush1.msra.mxu0 %v7202
      %7233 = vmatprep.subr.mxu0 0.0
      %7234 = vmatpush1.msra.mxu0 %v7207
      %7235 = vmatprep.subr.mxu0 0.0
      %7236 = vmatpush1.msra.mxu0 %v7212
      %7237 = vmatprep.subr.mxu0 0.0
      %7238 = vmatpush1.msra.mxu0 %v7217
      %7239 = vmatprep.subr.mxu0 0.0
      %7240 = vmatpush1.msra.mxu0 %v7222
      %7241 = vmatprep.subr.mxu0 0.0
      %7242 = vmatpush1.msra.mxu0 0.0
      %7243 = vmatprep.subr.mxu0 0.0
      %7244 = vmatpush1.msra.mxu0 0.0
      %7245 = vmatprep.subr.mxu0 0.0
      %7246 = vmatpush1.msra.mxu0 0.0
      %7247 = vmatprep.subr.mxu0 0.0
      %7248 = vmatpush1.msra.mxu0 0.0
      %7249 = vmatprep.subr.mxu0 0.0
      %7250 = vmatpush1.msra.mxu0 0.0
      %7251 = vmatprep.subr.mxu0 0.0
      %7252 = vmatpush1.msra.mxu0 0.0
      %7253 = vmatprep.subr.mxu0 0.0
      %7254 = vmatpush1.msra.mxu0 0.0
      %7255 = vmatprep.subr.mxu0 0.0
      %7256 = vmatpush1.msra.mxu0 0.0
      %7257 = vmatprep.subr.mxu0 0.0
      %7258 = vmatpush1.msra.mxu0 0.0
      %7259 = vmatprep.subr.mxu0 0.0
      %7260 = vmatpush1.msra.mxu0 0.0
      %7261 = vmatprep.subr.mxu0 0.0
      %7262 = vmatpush1.msra.mxu0 0.0
      %7263 = vmatprep.subr.mxu0 0.0
      %7264 = vmatpush1.msra.mxu0 0.0
      %7265 = vmatprep.subr.mxu0 0.0
      %7266 = vmatpush1.msra.mxu0 0.0
      %7267 = vmatprep.subr.mxu0 0.0
      %7268 = vmatpush1.msra.mxu0 0.0
      %7269 = vmatprep.subr.mxu0 0.0
      %7270 = vmatpush1.msra.mxu0 0.0
      %7271 = vmatprep.subr.mxu0 0.0
      %7272 = vmatpush1.msra.mxu0 0.0
      %7273 = vmatprep.subr.mxu0 0.0
      %7274 = vmatpush1.msra.mxu0 0.0
      %7275 = vmatprep.subr.mxu0 0.0
      %7276 = vmatpush1.msra.mxu0 0.0
      %7277 = vmatprep.subr.mxu0 0.0
      %7278 = vmatpush1.msra.mxu0 0.0
      %7279 = vmatprep.subr.mxu0 0.0
      %7280 = vmatpush1.msra.mxu0 0.0
      %7281 = vmatprep.subr.mxu0 0.0
      %7282 = vmatpush1.msra.mxu0 0.0
      %7283 = vmatprep.subr.mxu0 0.0
      %7284 = vmatpush1.msra.mxu0 0.0
      %7285 = vmatprep.subr.mxu0 0.0
      %7286 = vmatpush1.msra.mxu0 0.0
      %7287 = vmatprep.subr.mxu0 0.0
      %7288 = vmatpush1.msra.mxu0 0.0
      %7289 = vmatprep.mubr.f32.mxu0 0.0
      %7290 = vmatmul.mubr.f32.gmra.mrb[0].mxu0 %v2286
      %v7291 = vpop.f32.mrb[0].mxu0
      %v7292 = vadd.f32 0.0, %v7291
      %v7293 = vpop.f32.mrb[0].mxu0
      %7294 = vmatprep.mubr.f32.mxu0 0.0
      %7295 = vmatmul.mubr.f32.gmra.mrb[0].mxu0 %v2289
      %v7296 = vpop.f32.mrb[0].mxu0
      %v7297 = vadd.f32 0.0, %v7296
      %v7298 = vpop.f32.mrb[0].mxu0
      %7299 = vmatprep.mubr.f32.mxu0 0.0
      %7300 = vmatmul.mubr.f32.gmra.mrb[0].mxu0 %v2292
      %v7301 = vpop.f32.mrb[0].mxu0
      %v7302 = vadd.f32 0.0, %v7301
      %v7303 = vpop.f32.mrb[0].mxu0
      %7304 = vmatprep.mubr.f32.mxu0 0.0
      %7305 = vmatmul.mubr.f32.gmra.mrb[0].mxu0 %v2295
      %v7306 = vpop.f32.mrb[0].mxu0
      %v7307 = vadd.f32 0.0, %v7306
      %v7308 = vpop.f32.mrb[0].mxu0
      %7309 = vmatprep.mubr.f32.mxu0 0.0
      %7310 = vmatmul.mubr.f32.gmra.mrb[0].mxu0 %v2298
      %v7311 = vpop.f32.mrb[0].mxu0
      %v7312 = vadd.f32 0.0, %v7311
      %v7313 = vpop.f32.mrb[0].mxu0
      %7314 = vmatprep.mubr.f32.mxu0 0.0
      %7315 = vmatmul.mubr.f32.gmra.mrb[0].mxu0 %v2301
      %v7316 = vpop.f32.mrb[0].mxu0
      %v7317 = vadd.f32 0.0, %v7316
      %v7318 = vpop.f32.mrb[0].mxu0
      %7319 = vmatprep.mubr.f32.mxu0 0.0
      %7320 = vmatmul.mubr.f32.gmra.mrb[0].mxu0 %v2304
      %v7321 = vpop.f32.mrb[0].mxu0
      %v7322 = vadd.f32 0.0, %v7321
      %v7323 = vpop.f32.mrb[0].mxu0
      %7324 = vmatprep.mubr.f32.mxu0 0.0
      %7325 = vmatmul.mubr.f32.gmra.mrb[0].mxu0 %v2307
      %v7326 = vpop.f32.mrb[0].mxu0
      %v7327 = vadd.f32 0.0, %v7326
      %v7328 = vpop.f32.mrb[0].mxu0
      %7329 = vmatprep.mubr.f32.mxu0 0.0
      %7330 = vmatmul.mubr.f32.gmra.mrb[0].mxu0 %v2310
      %v7331 = vpop.f32.mrb[0].mxu0
      %v7332 = vadd.f32 0.0, %v7331
      %v7333 = vpop.f32.mrb[0].mxu0
      %7334 = vmatprep.mubr.f32.mxu0 0.0
      %7335 = vmatmul.mubr.f32.gmra.mrb[0].mxu0 %v2313
      %v7336 = vpop.f32.mrb[0].mxu0
      %v7337 = vadd.f32 0.0, %v7336
      %v7338 = vpop.f32.mrb[0].mxu0
      %7339 = vmatprep.mubr.f32.mxu0 0.0
      %7340 = vmatmul.mubr.f32.gmra.mrb[0].mxu0 %v2316
      %v7341 = vpop.f32.mrb[0].mxu0
      %v7342 = vadd.f32 0.0, %v7341
      %v7343 = vpop.f32.mrb[0].mxu0
      %7344 = vmatprep.mubr.f32.mxu0 0.0
      %7345 = vmatmul.mubr.f32.gmra.mrb[0].mxu0 %v2319
      %v7346 = vpop.f32.mrb[0].mxu0
      %v7347 = vadd.f32 0.0, %v7346
      %v7348 = vpop.f32.mrb[0].mxu0
      %7349 = vmatprep.mubr.f32.mxu0 0.0
      %7350 = vmatmul.mubr.f32.gmra.mrb[0].mxu0 %v2322
      %v7351 = vpop.f32.mrb[0].mxu0
      %v7352 = vadd.f32 0.0, %v7351
      %v7353 = vpop.f32.mrb[0].mxu0
      %7354 = vmatprep.mubr.f32.mxu0 0.0
      %7355 = vmatmul.mubr.f32.gmra.mrb[0].mxu0 %v2325
      %v7356 = vpop.f32.mrb[0].mxu0
      %v7357 = vadd.f32 0.0, %v7356
      %v7358 = vpop.f32.mrb[0].mxu0
      %7359 = vmatprep.mubr.f32.mxu0 0.0
      %7360 = vmatmul.mubr.f32.gmra.mrb[0].mxu0 %v2328
      %v7361 = vpop.f32.mrb[0].mxu0
      %v7362 = vadd.f32 0.0, %v7361
      %v7363 = vpop.f32.mrb[0].mxu0
      %7364 = vmatprep.mubr.f32.mxu0 0.0
      %7365 = vmatmul.mubr.f32.gmra.mrb[0].mxu0 %v2331
      %v7366 = vpop.f32.mrb[0].mxu0
      %v7367 = vadd.f32 0.0, %v7366
      %v7368 = vpop.f32.mrb[0].mxu0
      %7369 = vmatprep.mubr.f32.mxu0 0.0
      %7370 = vmatmul.mubr.f32.gmra.mrb[0].mxu0 %v2334
      %v7371 = vpop.f32.mrb[0].mxu0
      %v7372 = vadd.f32 0.0, %v7371
      %v7373 = vpop.f32.mrb[0].mxu0
      %7374 = vmatprep.mubr.f32.mxu0 0.0
      %7375 = vmatmul.mubr.f32.gmra.mrb[0].mxu0 %v2337
      %v7376 = vpop.f32.mrb[0].mxu0
      %v7377 = vadd.f32 0.0, %v7376
      %v7378 = vpop.f32.mrb[0].mxu0
      %7379 = vmatprep.mubr.f32.mxu0 0.0
      %7380 = vmatmul.mubr.f32.gmra.mrb[0].mxu0 %v2340
      %v7381 = vpop.f32.mrb[0].mxu0
      %v7382 = vadd.f32 0.0, %v7381
      %v7383 = vpop.f32.mrb[0].mxu0
      %7384 = vmatprep.mubr.f32.mxu0 0.0
      %7385 = vmatmul.mubr.f32.gmra.mrb[0].mxu0 %v2343
      %v7386 = vpop.f32.mrb[0].mxu0
      %v7387 = vadd.f32 0.0, %v7386
      %v7388 = vpop.f32.mrb[0].mxu0
      %7389 = vmatprep.mubr.f32.mxu0 0.0
      %7390 = vmatmul.mubr.f32.gmra.mrb[0].mxu0 %v2346
      %v7391 = vpop.f32.mrb[0].mxu0
      %v7392 = vadd.f32 0.0, %v7391
      %v7393 = vpop.f32.mrb[0].mxu0
      %7394 = vmatprep.mubr.f32.mxu0 0.0
      %7395 = vmatmul.mubr.f32.gmra.mrb[0].mxu0 %v2349
      %v7396 = vpop.f32.mrb[0].mxu0
      %v7397 = vadd.f32 0.0, %v7396
      %v7398 = vpop.f32.mrb[0].mxu0
      %7399 = vmatprep.mubr.f32.mxu0 0.0
      %7400 = vmatmul.mubr.f32.gmra.mrb[0].mxu0 %v2352
      %v7401 = vpop.f32.mrb[0].mxu0
      %v7402 = vadd.f32 0.0, %v7401
      %v7403 = vpop.f32.mrb[0].mxu0
      %7404 = vmatprep.mubr.f32.mxu0 0.0
      %7405 = vmatmul.mubr.f32.gmra.mrb[0].mxu0 %v2355
      %v7406 = vpop.f32.mrb[0].mxu0
      %v7407 = vadd.f32 0.0, %v7406
      %v7408 = vpop.f32.mrb[0].mxu0
      %7409 = vmatprep.mubr.f32.mxu0 0.0
      %7410 = vmatmul.mubr.f32.gmra.mrb[0].mxu0 %v2358
      %v7411 = vpop.f32.mrb[0].mxu0
      %v7412 = vadd.f32 0.0, %v7411
      %v7413 = vpop.f32.mrb[0].mxu0
      %7414 = vmatprep.mubr.f32.mxu0 0.0
      %7415 = vmatmul.mubr.f32.gmra.mrb[0].mxu0 %v2361
      %v7416 = vpop.f32.mrb[0].mxu0
      %v7417 = vadd.f32 0.0, %v7416
      %v7418 = vpop.f32.mrb[0].mxu0
      %7419 = vmatprep.mubr.f32.mxu0 0.0
      %7420 = vmatmul.mubr.f32.gmra.mrb[0].mxu0 %v2364
      %v7421 = vpop.f32.mrb[0].mxu0
      %v7422 = vadd.f32 0.0, %v7421
      %v7423 = vpop.f32.mrb[0].mxu0
      %7424 = vmatprep.mubr.f32.mxu0 0.0
      %7425 = vmatmul.mubr.f32.gmra.mrb[0].mxu0 %v2367
      %v7426 = vpop.f32.mrb[0].mxu0
      %v7427 = vadd.f32 0.0, %v7426
      %v7428 = vpop.f32.mrb[0].mxu0
      %7429 = vmatprep.mubr.f32.mxu0 0.0
      %7430 = vmatmul.mubr.f32.gmra.mrb[0].mxu0 %v2370
      %v7431 = vpop.f32.mrb[0].mxu0
      %v7432 = vadd.f32 0.0, %v7431
      %v7433 = vpop.f32.mrb[0].mxu0
      %7434 = vmatprep.mubr.f32.mxu0 0.0
      %7435 = vmatmul.mubr.f32.gmra.mrb[0].mxu0 %v2373
      %v7436 = vpop.f32.mrb[0].mxu0
      %v7437 = vadd.f32 0.0, %v7436
      %v7438 = vpop.f32.mrb[0].mxu0
      %7439 = vmatprep.mubr.f32.mxu0 0.0
      %7440 = vmatmul.mubr.f32.gmra.mrb[0].mxu0 %v2376
      %v7441 = vpop.f32.mrb[0].mxu0
      %v7442 = vadd.f32 0.0, %v7441
      %v7443 = vpop.f32.mrb[0].mxu0
      %7444 = vmatprep.mubr.f32.mxu0 0.0
      %7445 = vmatmul.mubr.f32.gmra.mrb[0].mxu0 %v2379
      %v7446 = vpop.f32.mrb[0].mxu0
      %v7447 = vadd.f32 0.0, %v7446
      %v7448 = vpop.f32.mrb[0].mxu0
      %7449 = vmatprep.mubr.f32.mxu0 0.0
      %7450 = vmatmul.mubr.f32.gmra.mrb[0].mxu0 %v2382
      %v7451 = vpop.f32.mrb[0].mxu0
      %v7452 = vadd.f32 0.0, %v7451
      %v7453 = vpop.f32.mrb[0].mxu0
      %7454 = vmatprep.mubr.f32.mxu0 0.0
      %7455 = vmatmul.mubr.f32.gmra.mrb[0].mxu0 %v2385
      %v7456 = vpop.f32.mrb[0].mxu0
      %v7457 = vadd.f32 0.0, %v7456
      %v7458 = vpop.f32.mrb[0].mxu0
      %7459 = vmatprep.mubr.f32.mxu0 0.0
      %7460 = vmatmul.mubr.f32.gmra.mrb[0].mxu0 %v2388
      %v7461 = vpop.f32.mrb[0].mxu0
      %v7462 = vadd.f32 0.0, %v7461
      %v7463 = vpop.f32.mrb[0].mxu0
      %7464 = vmatprep.mubr.f32.mxu0 0.0
      %7465 = vmatmul.mubr.f32.gmra.mrb[0].mxu0 %v2391
      %v7466 = vpop.f32.mrb[0].mxu0
      %v7467 = vadd.f32 0.0, %v7466
      %v7468 = vpop.f32.mrb[0].mxu0
      %7469 = vmatprep.mubr.f32.mxu0 0.0
      %7470 = vmatmul.mubr.f32.gmra.mrb[0].mxu0 %v2394
      %v7471 = vpop.f32.mrb[0].mxu0
      %v7472 = vadd.f32 0.0, %v7471
      %v7473 = vpop.f32.mrb[0].mxu0
      %7474 = vmatprep.mubr.f32.mxu0 0.0
      %7475 = vmatmul.mubr.f32.gmra.mrb[0].mxu0 %v2397
      %v7476 = vpop.f32.mrb[0].mxu0
      %v7477 = vadd.f32 0.0, %v7476
      %v7478 = vpop.f32.mrb[0].mxu0
      %7479 = vmatprep.mubr.f32.mxu0 0.0
      %7480 = vmatmul.mubr.f32.gmra.mrb[0].mxu0 %v2400
      %v7481 = vpop.f32.mrb[0].mxu0
      %v7482 = vadd.f32 0.0, %v7481
      %v7483 = vpop.f32.mrb[0].mxu0
      %7484 = vmatprep.mubr.f32.mxu0 0.0
      %7485 = vmatmul.mubr.f32.gmra.mrb[0].mxu0 %v2403
      %v7486 = vpop.f32.mrb[0].mxu0
      %v7487 = vadd.f32 0.0, %v7486
      %v7488 = vpop.f32.mrb[0].mxu0
      %7489 = vmatprep.mubr.f32.mxu0 0.0
      %7490 = vmatmul.mubr.f32.gmra.mrb[0].mxu0 %v2406
      %v7491 = vpop.f32.mrb[0].mxu0
      %v7492 = vadd.f32 0.0, %v7491
      %v7493 = vpop.f32.mrb[0].mxu0
      %7494 = vmatprep.mubr.f32.mxu0 0.0
      %7495 = vmatmul.mubr.f32.gmra.mrb[0].mxu0 %v2409
      %v7496 = vpop.f32.mrb[0].mxu0
      %v7497 = vadd.f32 0.0, %v7496
      %v7498 = vpop.f32.mrb[0].mxu0
      %7499 = vmatprep.mubr.f32.mxu0 0.0
      %7500 = vmatmul.mubr.f32.gmra.mrb[0].mxu0 %v2412
      %v7501 = vpop.f32.mrb[0].mxu0
      %v7502 = vadd.f32 0.0, %v7501
      %v7503 = vpop.f32.mrb[0].mxu0
      %7504 = vmatprep.mubr.f32.mxu0 0.0
      %7505 = vmatmul.mubr.f32.gmra.mrb[0].mxu0 %v2415
      %v7506 = vpop.f32.mrb[0].mxu0
      %v7507 = vadd.f32 0.0, %v7506
      %v7508 = vpop.f32.mrb[0].mxu0
      %7509 = vmatprep.mubr.f32.mxu0 0.0
      %7510 = vmatmul.mubr.f32.gmra.mrb[0].mxu0 %v2418
      %v7511 = vpop.f32.mrb[0].mxu0
      %v7512 = vadd.f32 0.0, %v7511
      %v7513 = vpop.f32.mrb[0].mxu0
      %7514 = vmatprep.mubr.f32.mxu0 0.0
      %7515 = vmatmul.mubr.f32.gmra.mrb[0].mxu0 %v2421
      %v7516 = vpop.f32.mrb[0].mxu0
      %v7517 = vadd.f32 0.0, %v7516
      %v7518 = vpop.f32.mrb[0].mxu0
      %7519 = vmatprep.mubr.f32.mxu0 0.0
      %7520 = vmatmul.mubr.f32.gmra.mrb[0].mxu0 %v2424
      %v7521 = vpop.f32.mrb[0].mxu0
      %v7522 = vadd.f32 0.0, %v7521
      %v7523 = vpop.f32.mrb[0].mxu0
      %7524 = vmatprep.mubr.f32.mxu0 0.0
      %7525 = vmatmul.mubr.f32.gmra.mrb[0].mxu0 %v2427
      %v7526 = vpop.f32.mrb[0].mxu0
      %v7527 = vadd.f32 0.0, %v7526
      %v7528 = vpop.f32.mrb[0].mxu0
      %7529 = vmatprep.mubr.f32.mxu0 0.0
      %7530 = vmatmul.mubr.f32.gmra.mrb[0].mxu0 %v2430
      %v7531 = vpop.f32.mrb[0].mxu0
      %v7532 = vadd.f32 0.0, %v7531
      %v7533 = vpop.f32.mrb[0].mxu0
      %7534 = vmatprep.mubr.f32.mxu0 0.0
      %7535 = vmatmul.mubr.f32.gmra.mrb[0].mxu0 %v2433
      %v7536 = vpop.f32.mrb[0].mxu0
      %v7537 = vadd.f32 0.0, %v7536
      %v7538 = vpop.f32.mrb[0].mxu0
      %7539 = vmatprep.mubr.f32.mxu0 0.0
      %7540 = vmatmul.mubr.f32.gmra.mrb[0].mxu0 %v2436
      %v7541 = vpop.f32.mrb[0].mxu0
      %v7542 = vadd.f32 0.0, %v7541
      %v7543 = vpop.f32.mrb[0].mxu0
      %7544 = vmatprep.mubr.f32.mxu0 0.0
      %7545 = vmatmul.mubr.f32.gmra.mrb[0].mxu0 %v2439
      %v7546 = vpop.f32.mrb[0].mxu0
      %v7547 = vadd.f32 0.0, %v7546
      %v7548 = vpop.f32.mrb[0].mxu0
      %7549 = vmatprep.mubr.f32.mxu0 0.0
      %7550 = vmatmul.mubr.f32.gmra.mrb[0].mxu0 %v2442
      %v7551 = vpop.f32.mrb[0].mxu0
      %v7552 = vadd.f32 0.0, %v7551
      %v7553 = vpop.f32.mrb[0].mxu0
      %7554 = vmatprep.mubr.f32.mxu0 0.0
      %7555 = vmatmul.mubr.f32.gmra.mrb[0].mxu0 %v2445
      %v7556 = vpop.f32.mrb[0].mxu0
      %v7557 = vadd.f32 0.0, %v7556
      %v7558 = vpop.f32.mrb[0].mxu0
      %7559 = vmatprep.mubr.f32.mxu0 0.0
      %7560 = vmatmul.mubr.f32.gmra.mrb[0].mxu0 %v2448
      %v7561 = vpop.f32.mrb[0].mxu0
      %v7562 = vadd.f32 0.0, %v7561
      %v7563 = vpop.f32.mrb[0].mxu0
      %7564 = vmatprep.mubr.f32.mxu0 0.0
      %7565 = vmatmul.mubr.f32.gmra.mrb[0].mxu0 %v2451
      %v7566 = vpop.f32.mrb[0].mxu0
      %v7567 = vadd.f32 0.0, %v7566
      %v7568 = vpop.f32.mrb[0].mxu0
      %7569 = vmatprep.mubr.f32.mxu0 0.0
      %7570 = vmatmul.mubr.f32.gmra.mrb[0].mxu0 %v2454
      %v7571 = vpop.f32.mrb[0].mxu0
      %v7572 = vadd.f32 0.0, %v7571
      %v7573 = vpop.f32.mrb[0].mxu0
      %7574 = vmatprep.mubr.f32.mxu0 0.0
      %7575 = vmatmul.mubr.f32.gmra.mrb[0].mxu0 %v2457
      %v7576 = vpop.f32.mrb[0].mxu0
      %v7577 = vadd.f32 0.0, %v7576
      %v7578 = vpop.f32.mrb[0].mxu0
      %7579 = vmatprep.mubr.f32.mxu0 0.0
      %7580 = vmatmul.mubr.f32.gmra.mrb[0].mxu0 %v2460
      %v7581 = vpop.f32.mrb[0].mxu0
      %v7582 = vadd.f32 0.0, %v7581
      %v7583 = vpop.f32.mrb[0].mxu0
      %7584 = vmatprep.mubr.f32.mxu0 0.0
      %7585 = vmatmul.mubr.f32.gmra.mrb[0].mxu0 %v2463
      %v7586 = vpop.f32.mrb[0].mxu0
      %v7587 = vadd.f32 0.0, %v7586
      %v7588 = vpop.f32.mrb[0].mxu0
      %7589 = vmatprep.mubr.f32.mxu0 0.0
      %7590 = vmatmul.mubr.f32.gmra.mrb[0].mxu0 %v2466
      %v7591 = vpop.f32.mrb[0].mxu0
      %v7592 = vadd.f32 0.0, %v7591
      %v7593 = vpop.f32.mrb[0].mxu0
      %7594 = vmatprep.mubr.f32.mxu0 0.0
      %7595 = vmatmul.mubr.f32.gmra.mrb[0].mxu0 %v2469
      %v7596 = vpop.f32.mrb[0].mxu0
      %v7597 = vadd.f32 0.0, %v7596
      %v7598 = vpop.f32.mrb[0].mxu0
      %7599 = vmatprep.mubr.f32.mxu0 0.0
      %7600 = vmatmul.mubr.f32.gmra.mrb[0].mxu0 %v2472
      %v7601 = vpop.f32.mrb[0].mxu0
      %v7602 = vadd.f32 0.0, %v7601
      %v7603 = vpop.f32.mrb[0].mxu0
      %7604 = vmatprep.mubr.f32.mxu0 0.0
      %7605 = vmatmul.mubr.f32.gmra.mrb[0].mxu0 %v2475
      %v7606 = vpop.f32.mrb[0].mxu0
      %v7607 = vadd.f32 0.0, %v7606
      %v7608 = vpop.f32.mrb[0].mxu0
      %7609 = vmatprep.mubr.f32.mxu0 0.0
      %7610 = vmatmul.mubr.f32.gmra.mrb[0].mxu0 %v2478
      %v7611 = vpop.f32.mrb[0].mxu0
      %v7612 = vadd.f32 0.0, %v7611
      %v7613 = vpop.f32.mrb[0].mxu0
      %7614 = vmatprep.mubr.f32.mxu0 0.0
      %7615 = vmatmul.mubr.f32.gmra.mrb[0].mxu0 %v2481
      %v7616 = vpop.f32.mrb[0].mxu0
      %v7617 = vadd.f32 0.0, %v7616
      %v7618 = vpop.f32.mrb[0].mxu0
      %7619 = vmatprep.mubr.f32.mxu0 0.0
      %7620 = vmatmul.mubr.f32.gmra.mrb[0].mxu0 %v2484
      %v7621 = vpop.f32.mrb[0].mxu0
      %v7622 = vadd.f32 0.0, %v7621
      %v7623 = vpop.f32.mrb[0].mxu0
      %7624 = vmatprep.mubr.f32.mxu0 0.0
      %7625 = vmatmul.mubr.f32.gmra.mrb[0].mxu0 %v2487
      %v7626 = vpop.f32.mrb[0].mxu0
      %v7627 = vadd.f32 0.0, %v7626
      %v7628 = vpop.f32.mrb[0].mxu0
      %7629 = vmatprep.mubr.f32.mxu0 0.0
      %7630 = vmatmul.mubr.f32.gmra.mrb[0].mxu0 %v2490
      %v7631 = vpop.f32.mrb[0].mxu0
      %v7632 = vadd.f32 0.0, %v7631
      %v7633 = vpop.f32.mrb[0].mxu0
      %7634 = vmatprep.mubr.f32.mxu0 0.0
      %7635 = vmatmul.mubr.f32.gmra.mrb[0].mxu0 %v2493
      %v7636 = vpop.f32.mrb[0].mxu0
      %v7637 = vadd.f32 0.0, %v7636
      %v7638 = vpop.f32.mrb[0].mxu0
      %7639 = vmatprep.mubr.f32.mxu0 0.0
      %7640 = vmatmul.mubr.f32.gmra.mrb[0].mxu0 %v2496
      %v7641 = vpop.f32.mrb[0].mxu0
      %v7642 = vadd.f32 0.0, %v7641
      %v7643 = vpop.f32.mrb[0].mxu0
      %7644 = vmatprep.mubr.f32.mxu0 0.0
      %7645 = vmatmul.mubr.f32.gmra.mrb[0].mxu0 %v2499
      %v7646 = vpop.f32.mrb[0].mxu0
      %v7647 = vadd.f32 0.0, %v7646
      %v7648 = vpop.f32.mrb[0].mxu0
      %7649 = vmatprep.mubr.f32.mxu0 0.0
      %7650 = vmatmul.mubr.f32.gmra.mrb[0].mxu0 %v2502
      %v7651 = vpop.f32.mrb[0].mxu0
      %v7652 = vadd.f32 0.0, %v7651
      %v7653 = vpop.f32.mrb[0].mxu0
      %7654 = vmatprep.mubr.f32.mxu0 0.0
      %7655 = vmatmul.mubr.f32.gmra.mrb[0].mxu0 %v2505
      %v7656 = vpop.f32.mrb[0].mxu0
      %v7657 = vadd.f32 0.0, %v7656
      %v7658 = vpop.f32.mrb[0].mxu0
      %7659 = vmatprep.mubr.f32.mxu0 0.0
      %7660 = vmatmul.mubr.f32.gmra.mrb[0].mxu0 %v2508
      %v7661 = vpop.f32.mrb[0].mxu0
      %v7662 = vadd.f32 0.0, %v7661
      %v7663 = vpop.f32.mrb[0].mxu0
      %7664 = vmatprep.mubr.f32.mxu0 0.0
      %7665 = vmatmul.mubr.f32.gmra.mrb[0].mxu0 %v2511
      %v7666 = vpop.f32.mrb[0].mxu0
      %v7667 = vadd.f32 0.0, %v7666
      %v7668 = vpop.f32.mrb[0].mxu0
      %7669 = vmatprep.mubr.f32.mxu0 0.0
      %7670 = vmatmul.mubr.f32.gmra.mrb[0].mxu0 %v2514
      %v7671 = vpop.f32.mrb[0].mxu0
      %v7672 = vadd.f32 0.0, %v7671
      %v7673 = vpop.f32.mrb[0].mxu0
      %7674 = vmatprep.mubr.f32.mxu0 0.0
      %7675 = vmatmul.mubr.f32.gmra.mrb[0].mxu0 %v2517
      %v7676 = vpop.f32.mrb[0].mxu0
      %v7677 = vadd.f32 0.0, %v7676
      %v7678 = vpop.f32.mrb[0].mxu0
      %7679 = vmatprep.mubr.f32.mxu0 0.0
      %7680 = vmatmul.mubr.f32.gmra.mrb[0].mxu0 %v2520
      %v7681 = vpop.f32.mrb[0].mxu0
      %v7682 = vadd.f32 0.0, %v7681
      %v7683 = vpop.f32.mrb[0].mxu0
      %7684 = vmatprep.mubr.f32.mxu0 0.0
      %7685 = vmatmul.mubr.f32.gmra.mrb[0].mxu0 %v2523
      %v7686 = vpop.f32.mrb[0].mxu0
      %v7687 = vadd.f32 0.0, %v7686
      %v7688 = vpop.f32.mrb[0].mxu0
      %7689 = vmatprep.mubr.f32.mxu0 0.0
      %7690 = vmatmul.mubr.f32.gmra.mrb[0].mxu0 %v2526
      %v7691 = vpop.f32.mrb[0].mxu0
      %v7692 = vadd.f32 0.0, %v7691
      %v7693 = vpop.f32.mrb[0].mxu0
      %7694 = vmatprep.mubr.f32.mxu0 0.0
      %7695 = vmatmul.mubr.f32.gmra.mrb[0].mxu0 %v2529
      %v7696 = vpop.f32.mrb[0].mxu0
      %v7697 = vadd.f32 0.0, %v7696
      %v7698 = vpop.f32.mrb[0].mxu0
      %7699 = vmatprep.mubr.f32.mxu0 0.0
      %7700 = vmatmul.mubr.f32.gmra.mrb[0].mxu0 %v2532
      %v7701 = vpop.f32.mrb[0].mxu0
      %v7702 = vadd.f32 0.0, %v7701
      %v7703 = vpop.f32.mrb[0].mxu0
      %7704 = vmatprep.mubr.f32.mxu0 0.0
      %7705 = vmatmul.mubr.f32.gmra.mrb[0].mxu0 %v2535
      %v7706 = vpop.f32.mrb[0].mxu0
      %v7707 = vadd.f32 0.0, %v7706
      %v7708 = vpop.f32.mrb[0].mxu0
      %7709 = vmatprep.mubr.f32.mxu0 0.0
      %7710 = vmatmul.mubr.f32.gmra.mrb[0].mxu0 %v2538
      %v7711 = vpop.f32.mrb[0].mxu0
      %v7712 = vadd.f32 0.0, %v7711
      %v7713 = vpop.f32.mrb[0].mxu0
      %7714 = vmatprep.mubr.f32.mxu0 0.0
      %7715 = vmatmul.mubr.f32.gmra.mrb[0].mxu0 %v2541
      %v7716 = vpop.f32.mrb[0].mxu0
      %v7717 = vadd.f32 0.0, %v7716
      %v7718 = vpop.f32.mrb[0].mxu0
      %7719 = vmatprep.mubr.f32.mxu0 0.0
      %7720 = vmatmul.mubr.f32.gmra.mrb[0].mxu0 %v2544
      %v7721 = vpop.f32.mrb[0].mxu0
      %v7722 = vadd.f32 0.0, %v7721
      %v7723 = vpop.f32.mrb[0].mxu0
      %7724 = vmatprep.mubr.f32.mxu0 0.0
      %7725 = vmatmul.mubr.f32.gmra.mrb[0].mxu0 %v2547
      %v7726 = vpop.f32.mrb[0].mxu0
      %v7727 = vadd.f32 0.0, %v7726
      %v7728 = vpop.f32.mrb[0].mxu0
      %7729 = vmatprep.mubr.f32.mxu0 0.0
      %7730 = vmatmul.mubr.f32.gmra.mrb[0].mxu0 %v2550
      %v7731 = vpop.f32.mrb[0].mxu0
      %v7732 = vadd.f32 0.0, %v7731
      %v7733 = vpop.f32.mrb[0].mxu0
      %7734 = vmatprep.mubr.f32.mxu0 0.0
      %7735 = vmatmul.mubr.f32.gmra.mrb[0].mxu0 %v2553
      %v7736 = vpop.f32.mrb[0].mxu0
      %v7737 = vadd.f32 0.0, %v7736
      %v7738 = vpop.f32.mrb[0].mxu0
      %7739 = vmatprep.mubr.f32.mxu0 0.0
      %7740 = vmatmul.mubr.f32.gmra.mrb[0].mxu0 %v2556
      %v7741 = vpop.f32.mrb[0].mxu0
      %v7742 = vadd.f32 0.0, %v7741
      %v7743 = vpop.f32.mrb[0].mxu0
      %7744 = vmatprep.mubr.f32.mxu0 0.0
      %7745 = vmatmul.mubr.f32.gmra.mrb[0].mxu0 %v2559
      %v7746 = vpop.f32.mrb[0].mxu0
      %v7747 = vadd.f32 0.0, %v7746
      %v7748 = vpop.f32.mrb[0].mxu0
      %7749 = vmatprep.mubr.f32.mxu0 0.0
      %7750 = vmatmul.mubr.f32.gmra.mrb[0].mxu0 %v2562
      %v7751 = vpop.f32.mrb[0].mxu0
      %v7752 = vadd.f32 0.0, %v7751
      %v7753 = vpop.f32.mrb[0].mxu0
      %7754 = vmatprep.mubr.f32.mxu0 0.0
      %7755 = vmatmul.mubr.f32.gmra.mrb[0].mxu0 %v2565
      %v7756 = vpop.f32.mrb[0].mxu0
      %v7757 = vadd.f32 0.0, %v7756
      %v7758 = vpop.f32.mrb[0].mxu0
      %7759 = vmatprep.mubr.f32.mxu0 0.0
      %7760 = vmatmul.mubr.f32.gmra.mrb[0].mxu0 %v2568
      %v7761 = vpop.f32.mrb[0].mxu0
      %v7762 = vadd.f32 0.0, %v7761
      %v7763 = vpop.f32.mrb[0].mxu0
      %7764 = vmatprep.mubr.f32.mxu0 0.0
      %7765 = vmatmul.mubr.f32.gmra.mrb[0].mxu0 %v2571
      %v7766 = vpop.f32.mrb[0].mxu0
      %v7767 = vadd.f32 0.0, %v7766
      %v7768 = vpop.f32.mrb[0].mxu0
      %7769 = vmatprep.mubr.f32.mxu0 0.0
      %7770 = vmatmul.mubr.f32.gmra.mrb[0].mxu0 %v2574
      %v7771 = vpop.f32.mrb[0].mxu0
      %v7772 = vadd.f32 0.0, %v7771
      %v7773 = vpop.f32.mrb[0].mxu0
      %7774 = vmatprep.mubr.f32.mxu0 0.0
      %7775 = vmatmul.mubr.f32.gmra.mrb[0].mxu0 %v2577
      %v7776 = vpop.f32.mrb[0].mxu0
      %v7777 = vadd.f32 0.0, %v7776
      %v7778 = vpop.f32.mrb[0].mxu0
      %7779 = vmatprep.mubr.f32.mxu0 0.0
      %7780 = vmatmul.mubr.f32.gmra.mrb[0].mxu0 %v2580
      %v7781 = vpop.f32.mrb[0].mxu0
      %v7782 = vadd.f32 0.0, %v7781
      %v7783 = vpop.f32.mrb[0].mxu0
      %7784 = vmatprep.mubr.f32.mxu0 0.0
      %7785 = vmatmul.mubr.f32.gmra.mrb[0].mxu0 %v2583
      %v7786 = vpop.f32.mrb[0].mxu0
      %v7787 = vadd.f32 0.0, %v7786
      %v7788 = vpop.f32.mrb[0].mxu0
      %7789 = vmatprep.mubr.f32.mxu0 0.0
      %7790 = vmatmul.mubr.f32.gmra.mrb[0].mxu0 %v2586
      %v7791 = vpop.f32.mrb[0].mxu0
      %v7792 = vadd.f32 0.0, %v7791
      %v7793 = vpop.f32.mrb[0].mxu0
      %7794 = vmatprep.mubr.f32.mxu0 0.0
      %7795 = vmatmul.mubr.f32.gmra.mrb[0].mxu0 %v2589
      %v7796 = vpop.f32.mrb[0].mxu0
      %v7797 = vadd.f32 0.0, %v7796
      %v7798 = vpop.f32.mrb[0].mxu0
      %7799 = vmatprep.mubr.f32.mxu0 0.0
      %7800 = vmatmul.mubr.f32.gmra.mrb[0].mxu0 %v2592
      %v7801 = vpop.f32.mrb[0].mxu0
      %v7802 = vadd.f32 0.0, %v7801
      %v7803 = vpop.f32.mrb[0].mxu0
      %7804 = vmatprep.mubr.f32.mxu0 0.0
      %7805 = vmatmul.mubr.f32.gmra.mrb[0].mxu0 %v2595
      %v7806 = vpop.f32.mrb[0].mxu0
      %v7807 = vadd.f32 0.0, %v7806
      %v7808 = vpop.f32.mrb[0].mxu0
      %7809 = vmatprep.mubr.f32.mxu0 0.0
      %7810 = vmatmul.mubr.f32.gmra.mrb[0].mxu0 %v2598
      %v7811 = vpop.f32.mrb[0].mxu0
      %v7812 = vadd.f32 0.0, %v7811
      %v7813 = vpop.f32.mrb[0].mxu0
      %7814 = vmatprep.mubr.f32.mxu0 0.0
      %7815 = vmatmul.mubr.f32.gmra.mrb[0].mxu0 %v2601
      %v7816 = vpop.f32.mrb[0].mxu0
      %v7817 = vadd.f32 0.0, %v7816
      %v7818 = vpop.f32.mrb[0].mxu0
      %7819 = vmatprep.mubr.f32.mxu0 0.0
      %7820 = vmatmul.mubr.f32.gmra.mrb[0].mxu0 %v2604
      %v7821 = vpop.f32.mrb[0].mxu0
      %v7822 = vadd.f32 0.0, %v7821
      %v7823 = vpop.f32.mrb[0].mxu0
      %7824 = vmatprep.mubr.f32.mxu0 0.0
      %7825 = vmatmul.mubr.f32.gmra.mrb[0].mxu0 %v2607
      %v7826 = vpop.f32.mrb[0].mxu0
      %v7827 = vadd.f32 0.0, %v7826
      %v7828 = vpop.f32.mrb[0].mxu0
      %7829 = vmatprep.mubr.f32.mxu0 0.0
      %7830 = vmatmul.mubr.f32.gmra.mrb[0].mxu0 %v2610
      %v7831 = vpop.f32.mrb[0].mxu0
      %v7832 = vadd.f32 0.0, %v7831
      %v7833 = vpop.f32.mrb[0].mxu0
      %7834 = vmatprep.mubr.f32.mxu0 0.0
      %7835 = vmatmul.mubr.f32.gmra.mrb[0].mxu0 %v2613
      %v7836 = vpop.f32.mrb[0].mxu0
      %v7837 = vadd.f32 0.0, %v7836
      %v7838 = vpop.f32.mrb[0].mxu0
      %7839 = vmatprep.mubr.f32.mxu0 0.0
      %7840 = vmatmul.mubr.f32.gmra.mrb[0].mxu0 %v2616
      %v7841 = vpop.f32.mrb[0].mxu0
      %v7842 = vadd.f32 0.0, %v7841
      %v7843 = vpop.f32.mrb[0].mxu0
      %7844 = vmatprep.mubr.f32.mxu0 0.0
      %7845 = vmatmul.mubr.f32.gmra.mrb[0].mxu0 %v2619
      %v7846 = vpop.f32.mrb[0].mxu0
      %v7847 = vadd.f32 0.0, %v7846
      %v7848 = vpop.f32.mrb[0].mxu0
      %7849 = vmatprep.mubr.f32.mxu0 0.0
      %7850 = vmatmul.mubr.f32.gmra.mrb[0].mxu0 %v2622
      %v7851 = vpop.f32.mrb[0].mxu0
      %v7852 = vadd.f32 0.0, %v7851
      %v7853 = vpop.f32.mrb[0].mxu0
      %7854 = vmatprep.mubr.f32.mxu0 0.0
      %7855 = vmatmul.mubr.f32.gmra.mrb[0].mxu0 %v2625
      %v7856 = vpop.f32.mrb[0].mxu0
      %v7857 = vadd.f32 0.0, %v7856
      %v7858 = vpop.f32.mrb[0].mxu0
      %7859 = vmatprep.mubr.f32.mxu0 0.0
      %7860 = vmatmul.mubr.f32.gmra.mrb[0].mxu0 %v2628
      %v7861 = vpop.f32.mrb[0].mxu0
      %v7862 = vadd.f32 0.0, %v7861
      %v7863 = vpop.f32.mrb[0].mxu0
      %7864 = vmatprep.mubr.f32.mxu0 0.0
      %7865 = vmatmul.mubr.f32.gmra.mrb[0].mxu0 %v2631
      %v7866 = vpop.f32.mrb[0].mxu0
      %v7867 = vadd.f32 0.0, %v7866
      %v7868 = vpop.f32.mrb[0].mxu0
      %7869 = vmatprep.mubr.f32.mxu0 0.0
      %7870 = vmatmul.mubr.f32.gmra.mrb[0].mxu0 %v2634
      %v7871 = vpop.f32.mrb[0].mxu0
      %v7872 = vadd.f32 0.0, %v7871
      %v7873 = vpop.f32.mrb[0].mxu0
      %7874 = vmatprep.mubr.f32.mxu0 0.0
      %7875 = vmatmul.mubr.f32.gmra.mrb[0].mxu0 %v2637
      %v7876 = vpop.f32.mrb[0].mxu0
      %v7877 = vadd.f32 0.0, %v7876
      %v7878 = vpop.f32.mrb[0].mxu0
      %7879 = vmatprep.mubr.f32.mxu0 0.0
      %7880 = vmatmul.mubr.f32.gmra.mrb[0].mxu0 %v2640
      %v7881 = vpop.f32.mrb[0].mxu0
      %v7882 = vadd.f32 0.0, %v7881
      %v7883 = vpop.f32.mrb[0].mxu0
      %7884 = vmatprep.mubr.f32.mxu0 0.0
      %7885 = vmatmul.mubr.f32.gmra.mrb[0].mxu0 %v2643
      %v7886 = vpop.f32.mrb[0].mxu0
      %v7887 = vadd.f32 0.0, %v7886
      %v7888 = vpop.f32.mrb[0].mxu0
      %7889 = vmatprep.mubr.f32.mxu0 0.0
      %7890 = vmatmul.mubr.f32.gmra.mrb[0].mxu0 %v2646
      %v7891 = vpop.f32.mrb[0].mxu0
      %v7892 = vadd.f32 0.0, %v7891
      %v7893 = vpop.f32.mrb[0].mxu0
      %7894 = vmatprep.mubr.f32.mxu0 0.0
      %7895 = vmatmul.mubr.f32.gmra.mrb[0].mxu0 %v2649
      %v7896 = vpop.f32.mrb[0].mxu0
      %v7897 = vadd.f32 0.0, %v7896
      %v7898 = vpop.f32.mrb[0].mxu0
      %7899 = vmatprep.mubr.f32.mxu0 0.0
      %7900 = vmatmul.mubr.f32.gmra.mrb[0].mxu0 %v2652
      %v7901 = vpop.f32.mrb[0].mxu0
      %v7902 = vadd.f32 0.0, %v7901
      %v7903 = vpop.f32.mrb[0].mxu0
      %7904 = vmatprep.mubr.f32.mxu0 0.0
      %7905 = vmatmul.mubr.f32.gmra.mrb[0].mxu0 %v2655
      %v7906 = vpop.f32.mrb[0].mxu0
      %v7907 = vadd.f32 0.0, %v7906
      %v7908 = vpop.f32.mrb[0].mxu0
      %7909 = vmatprep.mubr.f32.mxu0 0.0
      %7910 = vmatmul.mubr.f32.gmra.mrb[0].mxu0 %v2658
      %v7911 = vpop.f32.mrb[0].mxu0
      %v7912 = vadd.f32 0.0, %v7911
      %v7913 = vpop.f32.mrb[0].mxu0
      %7914 = vmatprep.mubr.f32.mxu0 0.0
      %7915 = vmatmul.mubr.f32.gmra.mrb[0].mxu0 %v2661
      %v7916 = vpop.f32.mrb[0].mxu0
      %v7917 = vadd.f32 0.0, %v7916
      %v7918 = vpop.f32.mrb[0].mxu0
      %7919 = vmatprep.mubr.f32.mxu0 0.0
      %7920 = vmatmul.mubr.f32.gmra.mrb[0].mxu0 %v2664
      %v7921 = vpop.f32.mrb[0].mxu0
      %v7922 = vadd.f32 0.0, %v7921
      %v7923 = vpop.f32.mrb[0].mxu0
      %7924 = vmatprep.mubr.f32.mxu0 0.0
      %7925 = vmatmul.mubr.f32.gmra.mrb[0].mxu0 %v2667
      %v7926 = vpop.f32.mrb[0].mxu0
      %v7927 = vadd.f32 0.0, %v7926
      %v7928 = vpop.f32.mrb[0].mxu0
      %7929 = vdwg.mxu0
      %v7930 = vsel %vm899, %v7187, 0.0
      %v7931 = vsel %vm899, %v7192, 0.0
      %v7932 = vadd.f32 %v7930, %v7931
      %v7933 = vsel %vm899, %v7197, 0.0
      %v7934 = vadd.f32 %v7932, %v7933
      %v7935 = vsel %vm899, %v7202, 0.0
      %v7936 = vadd.f32 %v7934, %v7935
      %v7937 = vsel %vm899, %v7207, 0.0
      %v7938 = vadd.f32 %v7936, %v7937
      %v7939 = vsel %vm899, %v7212, 0.0
      %v7940 = vadd.f32 %v7938, %v7939
      %v7941 = vsel %vm899, %v7217, 0.0
      %v7942 = vadd.f32 %v7940, %v7941
      %v7943 = vsel %vm899, %v7222, 0.0
      %v7944 = vadd.f32 %v7942, %v7943
      %v7945 = vrot.slane %v7944, 4
      %v7946 = vadd.f32 %v7944, %v7945
      %v7947 = vrot.slane %v7946, 2
      %v7948 = vadd.f32 %v7946, %v7947
      %v7949 = vrot.slane %v7948, 1
      %v7950 = vadd.f32 %v7948, %v7949
      %v7951 = vmul.f32 %v7292, 0.4
      %v7952 = vmul.f32 %v7297, 0.4
      %v7953 = vmul.f32 %v7302, 0.4
      %v7954 = vmul.f32 %v7307, 0.4
      %v7955 = vmul.f32 %v7312, 0.4
      %v7956 = vmul.f32 %v7317, 0.4
      %v7957 = vmul.f32 %v7322, 0.4
      %v7958 = vmul.f32 %v7327, 0.4
      %v7959 = vmul.f32 %v7332, 0.4
      %v7960 = vmul.f32 %v7337, 0.4
      %v7961 = vmul.f32 %v7342, 0.4
      %v7962 = vmul.f32 %v7347, 0.4
      %v7963 = vmul.f32 %v7352, 0.4
      %v7964 = vmul.f32 %v7357, 0.4
      %v7965 = vmul.f32 %v7362, 0.4
      %v7966 = vmul.f32 %v7367, 0.4
      %v7967 = vmul.f32 %v7372, 0.4
      %v7968 = vmul.f32 %v7377, 0.4
      %v7969 = vmul.f32 %v7382, 0.4
      %v7970 = vmul.f32 %v7387, 0.4
      %v7971 = vmul.f32 %v7392, 0.4
      %v7972 = vmul.f32 %v7397, 0.4
      %v7973 = vmul.f32 %v7402, 0.4
      %v7974 = vmul.f32 %v7407, 0.4
      %v7975 = vmul.f32 %v7412, 0.4
      %v7976 = vmul.f32 %v7417, 0.4
      %v7977 = vmul.f32 %v7422, 0.4
      %v7978 = vmul.f32 %v7427, 0.4
      %v7979 = vmul.f32 %v7432, 0.4
      %v7980 = vmul.f32 %v7437, 0.4
      %v7981 = vmul.f32 %v7442, 0.4
      %v7982 = vmul.f32 %v7447, 0.4
      %v7983 = vmul.f32 %v7452, 0.4
      %v7984 = vmul.f32 %v7457, 0.4
      %v7985 = vmul.f32 %v7462, 0.4
      %v7986 = vmul.f32 %v7467, 0.4
      %v7987 = vmul.f32 %v7472, 0.4
      %v7988 = vmul.f32 %v7477, 0.4
      %v7989 = vmul.f32 %v7482, 0.4
      %v7990 = vmul.f32 %v7487, 0.4
      %v7991 = vmul.f32 %v7492, 0.4
      %v7992 = vmul.f32 %v7497, 0.4
      %v7993 = vmul.f32 %v7502, 0.4
      %v7994 = vmul.f32 %v7507, 0.4
      %v7995 = vmul.f32 %v7512, 0.4
      %v7996 = vmul.f32 %v7517, 0.4
      %v7997 = vmul.f32 %v7522, 0.4
      %v7998 = vmul.f32 %v7527, 0.4
      %v7999 = vmul.f32 %v7532, 0.4
      %v8000 = vmul.f32 %v7537, 0.4
      %v8001 = vmul.f32 %v7542, 0.4
      %v8002 = vmul.f32 %v7547, 0.4
      %v8003 = vmul.f32 %v7552, 0.4
      %v8004 = vmul.f32 %v7557, 0.4
      %v8005 = vmul.f32 %v7562, 0.4
      %v8006 = vmul.f32 %v7567, 0.4
      %v8007 = vmul.f32 %v7572, 0.4
      %v8008 = vmul.f32 %v7577, 0.4
      %v8009 = vmul.f32 %v7582, 0.4
      %v8010 = vmul.f32 %v7587, 0.4
      %v8011 = vmul.f32 %v7592, 0.4
      %v8012 = vmul.f32 %v7597, 0.4
      %v8013 = vmul.f32 %v7602, 0.4
      %v8014 = vmul.f32 %v7607, 0.4
      %v8015 = vmul.f32 %v7612, 0.4
      %v8016 = vmul.f32 %v7617, 0.4
      %v8017 = vmul.f32 %v7622, 0.4
      %v8018 = vmul.f32 %v7627, 0.4
      %v8019 = vmul.f32 %v7632, 0.4
      %v8020 = vmul.f32 %v7637, 0.4
      %v8021 = vmul.f32 %v7642, 0.4
      %v8022 = vmul.f32 %v7647, 0.4
      %v8023 = vmul.f32 %v7652, 0.4
      %v8024 = vmul.f32 %v7657, 0.4
      %v8025 = vmul.f32 %v7662, 0.4
      %v8026 = vmul.f32 %v7667, 0.4
      %v8027 = vmul.f32 %v7672, 0.4
      %v8028 = vmul.f32 %v7677, 0.4
      %v8029 = vmul.f32 %v7682, 0.4
      %v8030 = vmul.f32 %v7687, 0.4
      %v8031 = vmul.f32 %v7692, 0.4
      %v8032 = vmul.f32 %v7697, 0.4
      %v8033 = vmul.f32 %v7702, 0.4
      %v8034 = vmul.f32 %v7707, 0.4
      %v8035 = vmul.f32 %v7712, 0.4
      %v8036 = vmul.f32 %v7717, 0.4
      %v8037 = vmul.f32 %v7722, 0.4
      %v8038 = vmul.f32 %v7727, 0.4
      %v8039 = vmul.f32 %v7732, 0.4
      %v8040 = vmul.f32 %v7737, 0.4
      %v8041 = vmul.f32 %v7742, 0.4
      %v8042 = vmul.f32 %v7747, 0.4
      %v8043 = vmul.f32 %v7752, 0.4
      %v8044 = vmul.f32 %v7757, 0.4
      %v8045 = vmul.f32 %v7762, 0.4
      %v8046 = vmul.f32 %v7767, 0.4
      %v8047 = vmul.f32 %v7772, 0.4
      %v8048 = vmul.f32 %v7777, 0.4
      %v8049 = vmul.f32 %v7782, 0.4
      %v8050 = vmul.f32 %v7787, 0.4
      %v8051 = vmul.f32 %v7792, 0.4
      %v8052 = vmul.f32 %v7797, 0.4
      %v8053 = vmul.f32 %v7802, 0.4
      %v8054 = vmul.f32 %v7807, 0.4
      %v8055 = vmul.f32 %v7812, 0.4
      %v8056 = vmul.f32 %v7817, 0.4
      %v8057 = vmul.f32 %v7822, 0.4
      %v8058 = vmul.f32 %v7827, 0.4
      %v8059 = vmul.f32 %v7832, 0.4
      %v8060 = vmul.f32 %v7837, 0.4
      %v8061 = vmul.f32 %v7842, 0.4
      %v8062 = vmul.f32 %v7847, 0.4
      %v8063 = vmul.f32 %v7852, 0.4
      %v8064 = vmul.f32 %v7857, 0.4
      %v8065 = vmul.f32 %v7862, 0.4
      %v8066 = vmul.f32 %v7867, 0.4
      %v8067 = vmul.f32 %v7872, 0.4
      %v8068 = vmul.f32 %v7877, 0.4
      %v8069 = vmul.f32 %v7882, 0.4
      %v8070 = vmul.f32 %v7887, 0.4
      %v8071 = vmul.f32 %v7892, 0.4
      %v8072 = vmul.f32 %v7897, 0.4
      %v8073 = vmul.f32 %v7902, 0.4
      %v8074 = vmul.f32 %v7907, 0.4
      %v8075 = vmul.f32 %v7912, 0.4
      %v8076 = vmul.f32 %v7917, 0.4
      %v8077 = vmul.f32 %v7922, 0.4
      %v8078 = vmul.f32 %v7927, 0.4
      %v8079 = vsub.f32 %v6060, %v7951
      %v8080 = vsub.f32 %v6061, %v7952
      %v8081 = vsub.f32 %v6062, %v7953
      %v8082 = vsub.f32 %v6063, %v7954
      %v8083 = vsub.f32 %v6064, %v7955
      %v8084 = vsub.f32 %v6065, %v7956
      %v8085 = vsub.f32 %v6066, %v7957
      %v8086 = vsub.f32 %v6067, %v7958
      %v8087 = vsub.f32 %v6068, %v7959
      %v8088 = vsub.f32 %v6069, %v7960
      %v8089 = vsub.f32 %v6070, %v7961
      %v8090 = vsub.f32 %v6071, %v7962
      %v8091 = vsub.f32 %v6072, %v7963
      %v8092 = vsub.f32 %v6073, %v7964
      %v8093 = vsub.f32 %v6074, %v7965
      %v8094 = vsub.f32 %v6075, %v7966
      %v8095 = vsub.f32 %v6076, %v7967
      %v8096 = vsub.f32 %v6077, %v7968
      %v8097 = vsub.f32 %v6078, %v7969
      %v8098 = vsub.f32 %v6079, %v7970
      %v8099 = vsub.f32 %v6080, %v7971
      %v8100 = vsub.f32 %v6081, %v7972
      %v8101 = vsub.f32 %v6082, %v7973
      %v8102 = vsub.f32 %v6083, %v7974
      %v8103 = vsub.f32 %v6084, %v7975
      %v8104 = vsub.f32 %v6085, %v7976
      %v8105 = vsub.f32 %v6086, %v7977
      %v8106 = vsub.f32 %v6087, %v7978
      %v8107 = vsub.f32 %v6088, %v7979
      %v8108 = vsub.f32 %v6089, %v7980
      %v8109 = vsub.f32 %v6090, %v7981
      %v8110 = vsub.f32 %v6091, %v7982
      %v8111 = vsub.f32 %v6092, %v7983
      %v8112 = vsub.f32 %v6093, %v7984
      %v8113 = vsub.f32 %v6094, %v7985
      %v8114 = vsub.f32 %v6095, %v7986
      %v8115 = vsub.f32 %v6096, %v7987
      %v8116 = vsub.f32 %v6097, %v7988
      %v8117 = vsub.f32 %v6098, %v7989
      %v8118 = vsub.f32 %v6099, %v7990
      %v8119 = vsub.f32 %v6100, %v7991
      %v8120 = vsub.f32 %v6101, %v7992
      %v8121 = vsub.f32 %v6102, %v7993
      %v8122 = vsub.f32 %v6103, %v7994
      %v8123 = vsub.f32 %v6104, %v7995
      %v8124 = vsub.f32 %v6105, %v7996
      %v8125 = vsub.f32 %v6106, %v7997
      %v8126 = vsub.f32 %v6107, %v7998
      %v8127 = vsub.f32 %v6108, %v7999
      %v8128 = vsub.f32 %v6109, %v8000
      %v8129 = vsub.f32 %v6110, %v8001
      %v8130 = vsub.f32 %v6111, %v8002
      %v8131 = vsub.f32 %v6112, %v8003
      %v8132 = vsub.f32 %v6113, %v8004
      %v8133 = vsub.f32 %v6114, %v8005
      %v8134 = vsub.f32 %v6115, %v8006
      %v8135 = vsub.f32 %v6116, %v8007
      %v8136 = vsub.f32 %v6117, %v8008
      %v8137 = vsub.f32 %v6118, %v8009
      %v8138 = vsub.f32 %v6119, %v8010
      %v8139 = vsub.f32 %v6120, %v8011
      %v8140 = vsub.f32 %v6121, %v8012
      %v8141 = vsub.f32 %v6122, %v8013
      %v8142 = vsub.f32 %v6123, %v8014
      %v8143 = vsub.f32 %v6124, %v8015
      %v8144 = vsub.f32 %v6125, %v8016
      %v8145 = vsub.f32 %v6126, %v8017
      %v8146 = vsub.f32 %v6127, %v8018
      %v8147 = vsub.f32 %v6128, %v8019
      %v8148 = vsub.f32 %v6129, %v8020
      %v8149 = vsub.f32 %v6130, %v8021
      %v8150 = vsub.f32 %v6131, %v8022
      %v8151 = vsub.f32 %v6132, %v8023
      %v8152 = vsub.f32 %v6133, %v8024
      %v8153 = vsub.f32 %v6134, %v8025
      %v8154 = vsub.f32 %v6135, %v8026
      %v8155 = vsub.f32 %v6136, %v8027
      %v8156 = vsub.f32 %v6137, %v8028
      %v8157 = vsub.f32 %v6138, %v8029
      %v8158 = vsub.f32 %v6139, %v8030
      %v8159 = vsub.f32 %v6140, %v8031
      %v8160 = vsub.f32 %v6141, %v8032
      %v8161 = vsub.f32 %v6142, %v8033
      %v8162 = vsub.f32 %v6143, %v8034
      %v8163 = vsub.f32 %v6144, %v8035
      %v8164 = vsub.f32 %v6145, %v8036
      %v8165 = vsub.f32 %v6146, %v8037
      %v8166 = vsub.f32 %v6147, %v8038
      %v8167 = vsub.f32 %v6148, %v8039
      %v8168 = vsub.f32 %v6149, %v8040
      %v8169 = vsub.f32 %v6150, %v8041
      %v8170 = vsub.f32 %v6151, %v8042
      %v8171 = vsub.f32 %v6152, %v8043
      %v8172 = vsub.f32 %v6153, %v8044
      %v8173 = vsub.f32 %v6154, %v8045
      %v8174 = vsub.f32 %v6155, %v8046
      %v8175 = vsub.f32 %v6156, %v8047
      %v8176 = vsub.f32 %v6157, %v8048
      %v8177 = vsub.f32 %v6158, %v8049
      %v8178 = vsub.f32 %v6159, %v8050
      %v8179 = vsub.f32 %v6160, %v8051
      %v8180 = vsub.f32 %v6161, %v8052
      %v8181 = vsub.f32 %v6162, %v8053
      %v8182 = vsub.f32 %v6163, %v8054
      %v8183 = vsub.f32 %v6164, %v8055
      %v8184 = vsub.f32 %v6165, %v8056
      %v8185 = vsub.f32 %v6166, %v8057
      %v8186 = vsub.f32 %v6167, %v8058
      %v8187 = vsub.f32 %v6168, %v8059
      %v8188 = vsub.f32 %v6169, %v8060
      %v8189 = vsub.f32 %v6170, %v8061
      %v8190 = vsub.f32 %v6171, %v8062
      %v8191 = vsub.f32 %v6172, %v8063
      %v8192 = vsub.f32 %v6173, %v8064
      %v8193 = vsub.f32 %v6174, %v8065
      %v8194 = vsub.f32 %v6175, %v8066
      %v8195 = vsub.f32 %v6176, %v8067
      %v8196 = vsub.f32 %v6177, %v8068
      %v8197 = vsub.f32 %v6178, %v8069
      %v8198 = vsub.f32 %v6179, %v8070
      %v8199 = vsub.f32 %v6180, %v8071
      %v8200 = vsub.f32 %v6181, %v8072
      %v8201 = vsub.f32 %v6182, %v8073
      %v8202 = vsub.f32 %v6183, %v8074
      %v8203 = vsub.f32 %v6184, %v8075
      %v8204 = vsub.f32 %v6185, %v8076
      %v8205 = vsub.f32 %v6186, %v8077
      %v8206 = vsub.f32 %v6187, %v8078
      %8207 = vst.msk [vmem:[#allocation2] sm:$0xff] %vm899, %v8079
      %8208 = vst.msk [vmem:[#allocation2 + $0x8] sm:$0xff] %vm899, %v8080
      %8209 = vst.msk [vmem:[#allocation2 + $0x10] sm:$0xff] %vm899, %v8081
      %8210 = vst.msk [vmem:[#allocation2 + $0x18] sm:$0xff] %vm899, %v8082
      %8211 = vst.msk [vmem:[#allocation2 + $0x20] sm:$0xff] %vm899, %v8083
      %8212 = vst.msk [vmem:[#allocation2 + $0x28] sm:$0xff] %vm899, %v8084
      %8213 = vst.msk [vmem:[#allocation2 + $0x30] sm:$0xff] %vm899, %v8085
      %8214 = vst.msk [vmem:[#allocation2 + $0x38] sm:$0xff] %vm899, %v8086
      %8215 = vst.msk [vmem:[#allocation2 + $0x40] sm:$0xff] %vm899, %v8087
      %8216 = vst.msk [vmem:[#allocation2 + $0x48] sm:$0xff] %vm899, %v8088
      %8217 = vst.msk [vmem:[#allocation2 + $0x50] sm:$0xff] %vm899, %v8089
      %8218 = vst.msk [vmem:[#allocation2 + $0x58] sm:$0xff] %vm899, %v8090
      %8219 = vst.msk [vmem:[#allocation2 + $0x60] sm:$0xff] %vm899, %v8091
      %8220 = vst.msk [vmem:[#allocation2 + $0x68] sm:$0xff] %vm899, %v8092
      %8221 = vst.msk [vmem:[#allocation2 + $0x70] sm:$0xff] %vm899, %v8093
      %8222 = vst.msk [vmem:[#allocation2 + $0x78] sm:$0xff] %vm899, %v8094
      %8223 = vst.msk [vmem:[#allocation2 + $0x80] sm:$0xff] %vm899, %v8095
      %8224 = vst.msk [vmem:[#allocation2 + $0x88] sm:$0xff] %vm899, %v8096
      %8225 = vst.msk [vmem:[#allocation2 + $0x90] sm:$0xff] %vm899, %v8097
      %8226 = vst.msk [vmem:[#allocation2 + $0x98] sm:$0xff] %vm899, %v8098
      %8227 = vst.msk [vmem:[#allocation2 + $0xa0] sm:$0xff] %vm899, %v8099
      %8228 = vst.msk [vmem:[#allocation2 + $0xa8] sm:$0xff] %vm899, %v8100
      %8229 = vst.msk [vmem:[#allocation2 + $0xb0] sm:$0xff] %vm899, %v8101
      %8230 = vst.msk [vmem:[#allocation2 + $0xb8] sm:$0xff] %vm899, %v8102
      %8231 = vst.msk [vmem:[#allocation2 + $0xc0] sm:$0xff] %vm899, %v8103
      %8232 = vst.msk [vmem:[#allocation2 + $0xc8] sm:$0xff] %vm899, %v8104
      %8233 = vst.msk [vmem:[#allocation2 + $0xd0] sm:$0xff] %vm899, %v8105
      %8234 = vst.msk [vmem:[#allocation2 + $0xd8] sm:$0xff] %vm899, %v8106
      %8235 = vst.msk [vmem:[#allocation2 + $0xe0] sm:$0xff] %vm899, %v8107
      %8236 = vst.msk [vmem:[#allocation2 + $0xe8] sm:$0xff] %vm899, %v8108
      %8237 = vst.msk [vmem:[#allocation2 + $0xf0] sm:$0xff] %vm899, %v8109
      %8238 = vst.msk [vmem:[#allocation2 + $0xf8] sm:$0xff] %vm899, %v8110
      %8239 = vst.msk [vmem:[#allocation2 + $0x100] sm:$0xff] %vm899, %v8111
      %8240 = vst.msk [vmem:[#allocation2 + $0x108] sm:$0xff] %vm899, %v8112
      %8241 = vst.msk [vmem:[#allocation2 + $0x110] sm:$0xff] %vm899, %v8113
      %8242 = vst.msk [vmem:[#allocation2 + $0x118] sm:$0xff] %vm899, %v8114
      %8243 = vst.msk [vmem:[#allocation2 + $0x120] sm:$0xff] %vm899, %v8115
      %8244 = vst.msk [vmem:[#allocation2 + $0x128] sm:$0xff] %vm899, %v8116
      %8245 = vst.msk [vmem:[#allocation2 + $0x130] sm:$0xff] %vm899, %v8117
      %8246 = vst.msk [vmem:[#allocation2 + $0x138] sm:$0xff] %vm899, %v8118
      %8247 = vst.msk [vmem:[#allocation2 + $0x140] sm:$0xff] %vm899, %v8119
      %8248 = vst.msk [vmem:[#allocation2 + $0x148] sm:$0xff] %vm899, %v8120
      %8249 = vst.msk [vmem:[#allocation2 + $0x150] sm:$0xff] %vm899, %v8121
      %8250 = vst.msk [vmem:[#allocation2 + $0x158] sm:$0xff] %vm899, %v8122
      %8251 = vst.msk [vmem:[#allocation2 + $0x160] sm:$0xff] %vm899, %v8123
      %8252 = vst.msk [vmem:[#allocation2 + $0x168] sm:$0xff] %vm899, %v8124
      %8253 = vst.msk [vmem:[#allocation2 + $0x170] sm:$0xff] %vm899, %v8125
      %8254 = vst.msk [vmem:[#allocation2 + $0x178] sm:$0xff] %vm899, %v8126
      %8255 = vst.msk [vmem:[#allocation2 + $0x180] sm:$0xff] %vm899, %v8127
      %8256 = vst.msk [vmem:[#allocation2 + $0x188] sm:$0xff] %vm899, %v8128
      %8257 = vst.msk [vmem:[#allocation2 + $0x190] sm:$0xff] %vm899, %v8129
      %8258 = vst.msk [vmem:[#allocation2 + $0x198] sm:$0xff] %vm899, %v8130
      %8259 = vst.msk [vmem:[#allocation2 + $0x1a0] sm:$0xff] %vm899, %v8131
      %8260 = vst.msk [vmem:[#allocation2 + $0x1a8] sm:$0xff] %vm899, %v8132
      %8261 = vst.msk [vmem:[#allocation2 + $0x1b0] sm:$0xff] %vm899, %v8133
      %8262 = vst.msk [vmem:[#allocation2 + $0x1b8] sm:$0xff] %vm899, %v8134
      %8263 = vst.msk [vmem:[#allocation2 + $0x1c0] sm:$0xff] %vm899, %v8135
      %8264 = vst.msk [vmem:[#allocation2 + $0x1c8] sm:$0xff] %vm899, %v8136
      %8265 = vst.msk [vmem:[#allocation2 + $0x1d0] sm:$0xff] %vm899, %v8137
      %8266 = vst.msk [vmem:[#allocation2 + $0x1d8] sm:$0xff] %vm899, %v8138
      %8267 = vst.msk [vmem:[#allocation2 + $0x1e0] sm:$0xff] %vm899, %v8139
      %8268 = vst.msk [vmem:[#allocation2 + $0x1e8] sm:$0xff] %vm899, %v8140
      %8269 = vst.msk [vmem:[#allocation2 + $0x1f0] sm:$0xff] %vm899, %v8141
      %8270 = vst.msk [vmem:[#allocation2 + $0x1f8] sm:$0xff] %vm899, %v8142
      %8271 = vst.msk [vmem:[#allocation2 + $0x200] sm:$0xff] %vm899, %v8143
      %8272 = vst.msk [vmem:[#allocation2 + $0x208] sm:$0xff] %vm899, %v8144
      %8273 = vst.msk [vmem:[#allocation2 + $0x210] sm:$0xff] %vm899, %v8145
      %8274 = vst.msk [vmem:[#allocation2 + $0x218] sm:$0xff] %vm899, %v8146
      %8275 = vst.msk [vmem:[#allocation2 + $0x220] sm:$0xff] %vm899, %v8147
      %8276 = vst.msk [vmem:[#allocation2 + $0x228] sm:$0xff] %vm899, %v8148
      %8277 = vst.msk [vmem:[#allocation2 + $0x230] sm:$0xff] %vm899, %v8149
      %8278 = vst.msk [vmem:[#allocation2 + $0x238] sm:$0xff] %vm899, %v8150
      %8279 = vst.msk [vmem:[#allocation2 + $0x240] sm:$0xff] %vm899, %v8151
      %8280 = vst.msk [vmem:[#allocation2 + $0x248] sm:$0xff] %vm899, %v8152
      %8281 = vst.msk [vmem:[#allocation2 + $0x250] sm:$0xff] %vm899, %v8153
      %8282 = vst.msk [vmem:[#allocation2 + $0x258] sm:$0xff] %vm899, %v8154
      %8283 = vst.msk [vmem:[#allocation2 + $0x260] sm:$0xff] %vm899, %v8155
      %8284 = vst.msk [vmem:[#allocation2 + $0x268] sm:$0xff] %vm899, %v8156
      %8285 = vst.msk [vmem:[#allocation2 + $0x270] sm:$0xff] %vm899, %v8157
      %8286 = vst.msk [vmem:[#allocation2 + $0x278] sm:$0xff] %vm899, %v8158
      %8287 = vst.msk [vmem:[#allocation2 + $0x280] sm:$0xff] %vm899, %v8159
      %8288 = vst.msk [vmem:[#allocation2 + $0x288] sm:$0xff] %vm899, %v8160
      %8289 = vst.msk [vmem:[#allocation2 + $0x290] sm:$0xff] %vm899, %v8161
      %8290 = vst.msk [vmem:[#allocation2 + $0x298] sm:$0xff] %vm899, %v8162
      %8291 = vst.msk [vmem:[#allocation2 + $0x2a0] sm:$0xff] %vm899, %v8163
      %8292 = vst.msk [vmem:[#allocation2 + $0x2a8] sm:$0xff] %vm899, %v8164
      %8293 = vst.msk [vmem:[#allocation2 + $0x2b0] sm:$0xff] %vm899, %v8165
      %8294 = vst.msk [vmem:[#allocation2 + $0x2b8] sm:$0xff] %vm899, %v8166
      %8295 = vst.msk [vmem:[#allocation2 + $0x2c0] sm:$0xff] %vm899, %v8167
      %8296 = vst.msk [vmem:[#allocation2 + $0x2c8] sm:$0xff] %vm899, %v8168
      %8297 = vst.msk [vmem:[#allocation2 + $0x2d0] sm:$0xff] %vm899, %v8169
      %8298 = vst.msk [vmem:[#allocation2 + $0x2d8] sm:$0xff] %vm899, %v8170
      %8299 = vst.msk [vmem:[#allocation2 + $0x2e0] sm:$0xff] %vm899, %v8171
      %8300 = vst.msk [vmem:[#allocation2 + $0x2e8] sm:$0xff] %vm899, %v8172
      %8301 = vst.msk [vmem:[#allocation2 + $0x2f0] sm:$0xff] %vm899, %v8173
      %8302 = vst.msk [vmem:[#allocation2 + $0x2f8] sm:$0xff] %vm899, %v8174
      %8303 = vst.msk [vmem:[#allocation2 + $0x300] sm:$0xff] %vm899, %v8175
      %8304 = vst.msk [vmem:[#allocation2 + $0x308] sm:$0xff] %vm899, %v8176
      %8305 = vst.msk [vmem:[#allocation2 + $0x310] sm:$0xff] %vm899, %v8177
      %8306 = vst.msk [vmem:[#allocation2 + $0x318] sm:$0xff] %vm899, %v8178
      %8307 = vst.msk [vmem:[#allocation2 + $0x320] sm:$0xff] %vm899, %v8179
      %8308 = vst.msk [vmem:[#allocation2 + $0x328] sm:$0xff] %vm899, %v8180
      %8309 = vst.msk [vmem:[#allocation2 + $0x330] sm:$0xff] %vm899, %v8181
      %8310 = vst.msk [vmem:[#allocation2 + $0x338] sm:$0xff] %vm899, %v8182
      %8311 = vst.msk [vmem:[#allocation2 + $0x340] sm:$0xff] %vm899, %v8183
      %8312 = vst.msk [vmem:[#allocation2 + $0x348] sm:$0xff] %vm899, %v8184
      %8313 = vst.msk [vmem:[#allocation2 + $0x350] sm:$0xff] %vm899, %v8185
      %8314 = vst.msk [vmem:[#allocation2 + $0x358] sm:$0xff] %vm899, %v8186
      %8315 = vst.msk [vmem:[#allocation2 + $0x360] sm:$0xff] %vm899, %v8187
      %8316 = vst.msk [vmem:[#allocation2 + $0x368] sm:$0xff] %vm899, %v8188
      %8317 = vst.msk [vmem:[#allocation2 + $0x370] sm:$0xff] %vm899, %v8189
      %8318 = vst.msk [vmem:[#allocation2 + $0x378] sm:$0xff] %vm899, %v8190
      %8319 = vst.msk [vmem:[#allocation2 + $0x380] sm:$0xff] %vm899, %v8191
      %8320 = vst.msk [vmem:[#allocation2 + $0x388] sm:$0xff] %vm899, %v8192
      %8321 = vst.msk [vmem:[#allocation2 + $0x390] sm:$0xff] %vm899, %v8193
      %8322 = vst.msk [vmem:[#allocation2 + $0x398] sm:$0xff] %vm899, %v8194
      %8323 = vst.msk [vmem:[#allocation2 + $0x3a0] sm:$0xff] %vm899, %v8195
      %8324 = vst.msk [vmem:[#allocation2 + $0x3a8] sm:$0xff] %vm899, %v8196
      %8325 = vst.msk [vmem:[#allocation2 + $0x3b0] sm:$0xff] %vm899, %v8197
      %8326 = vst.msk [vmem:[#allocation2 + $0x3b8] sm:$0xff] %vm899, %v8198
      %8327 = vst.msk [vmem:[#allocation2 + $0x3c0] sm:$0xff] %vm899, %v8199
      %8328 = vst.msk [vmem:[#allocation2 + $0x3c8] sm:$0xff] %vm899, %v8200
      %8329 = vst.msk [vmem:[#allocation2 + $0x3d0] sm:$0xff] %vm899, %v8201
      %8330 = vst.msk [vmem:[#allocation2 + $0x3d8] sm:$0xff] %vm899, %v8202
      %8331 = vst.msk [vmem:[#allocation2 + $0x3e0] sm:$0xff] %vm899, %v8203
      %8332 = vst.msk [vmem:[#allocation2 + $0x3e8] sm:$0xff] %vm899, %v8204
      %8333 = vst.msk [vmem:[#allocation2 + $0x3f0] sm:$0xff] %vm899, %v8205
      %8334 = vst.msk [vmem:[#allocation2 + $0x3f8] sm:$0xff] %vm899, %v8206
      %v8335 = vmul.f32 %v7950, 0.4
      %v8336 = vsub.f32 %v6188, %v8335
      %8337 = vst.msk [vmem:[#allocation3] sm:$0x1] %vm1029, %v8336
      %v8338 = vld [vmem:[#allocation2] sm:$0xff]
      %v8339 = vld [vmem:[#allocation2 + $0x8] sm:$0xff]
      %v8340 = vld [vmem:[#allocation2 + $0x10] sm:$0xff]
      %v8341 = vld [vmem:[#allocation2 + $0x18] sm:$0xff]
      %v8342 = vld [vmem:[#allocation2 + $0x20] sm:$0xff]
      %v8343 = vld [vmem:[#allocation2 + $0x28] sm:$0xff]
      %v8344 = vld [vmem:[#allocation2 + $0x30] sm:$0xff]
      %v8345 = vld [vmem:[#allocation2 + $0x38] sm:$0xff]
      %v8346 = vld [vmem:[#allocation2 + $0x40] sm:$0xff]
      %v8347 = vld [vmem:[#allocation2 + $0x48] sm:$0xff]
      %v8348 = vld [vmem:[#allocation2 + $0x50] sm:$0xff]
      %v8349 = vld [vmem:[#allocation2 + $0x58] sm:$0xff]
      %v8350 = vld [vmem:[#allocation2 + $0x60] sm:$0xff]
      %v8351 = vld [vmem:[#allocation2 + $0x68] sm:$0xff]
      %v8352 = vld [vmem:[#allocation2 + $0x70] sm:$0xff]
      %v8353 = vld [vmem:[#allocation2 + $0x78] sm:$0xff]
      %v8354 = vld [vmem:[#allocation2 + $0x80] sm:$0xff]
      %v8355 = vld [vmem:[#allocation2 + $0x88] sm:$0xff]
      %v8356 = vld [vmem:[#allocation2 + $0x90] sm:$0xff]
      %v8357 = vld [vmem:[#allocation2 + $0x98] sm:$0xff]
      %v8358 = vld [vmem:[#allocation2 + $0xa0] sm:$0xff]
      %v8359 = vld [vmem:[#allocation2 + $0xa8] sm:$0xff]
      %v8360 = vld [vmem:[#allocation2 + $0xb0] sm:$0xff]
      %v8361 = vld [vmem:[#allocation2 + $0xb8] sm:$0xff]
      %v8362 = vld [vmem:[#allocation2 + $0xc0] sm:$0xff]
      %v8363 = vld [vmem:[#allocation2 + $0xc8] sm:$0xff]
      %v8364 = vld [vmem:[#allocation2 + $0xd0] sm:$0xff]
      %v8365 = vld [vmem:[#allocation2 + $0xd8] sm:$0xff]
      %v8366 = vld [vmem:[#allocation2 + $0xe0] sm:$0xff]
      %v8367 = vld [vmem:[#allocation2 + $0xe8] sm:$0xff]
      %v8368 = vld [vmem:[#allocation2 + $0xf0] sm:$0xff]
      %v8369 = vld [vmem:[#allocation2 + $0xf8] sm:$0xff]
      %v8370 = vld [vmem:[#allocation2 + $0x100] sm:$0xff]
      %v8371 = vld [vmem:[#allocation2 + $0x108] sm:$0xff]
      %v8372 = vld [vmem:[#allocation2 + $0x110] sm:$0xff]
      %v8373 = vld [vmem:[#allocation2 + $0x118] sm:$0xff]
      %v8374 = vld [vmem:[#allocation2 + $0x120] sm:$0xff]
      %v8375 = vld [vmem:[#allocation2 + $0x128] sm:$0xff]
      %v8376 = vld [vmem:[#allocation2 + $0x130] sm:$0xff]
      %v8377 = vld [vmem:[#allocation2 + $0x138] sm:$0xff]
      %v8378 = vld [vmem:[#allocation2 + $0x140] sm:$0xff]
      %v8379 = vld [vmem:[#allocation2 + $0x148] sm:$0xff]
      %v8380 = vld [vmem:[#allocation2 + $0x150] sm:$0xff]
      %v8381 = vld [vmem:[#allocation2 + $0x158] sm:$0xff]
      %v8382 = vld [vmem:[#allocation2 + $0x160] sm:$0xff]
      %v8383 = vld [vmem:[#allocation2 + $0x168] sm:$0xff]
      %v8384 = vld [vmem:[#allocation2 + $0x170] sm:$0xff]
      %v8385 = vld [vmem:[#allocation2 + $0x178] sm:$0xff]
      %v8386 = vld [vmem:[#allocation2 + $0x180] sm:$0xff]
      %v8387 = vld [vmem:[#allocation2 + $0x188] sm:$0xff]
      %v8388 = vld [vmem:[#allocation2 + $0x190] sm:$0xff]
      %v8389 = vld [vmem:[#allocation2 + $0x198] sm:$0xff]
      %v8390 = vld [vmem:[#allocation2 + $0x1a0] sm:$0xff]
      %v8391 = vld [vmem:[#allocation2 + $0x1a8] sm:$0xff]
      %v8392 = vld [vmem:[#allocation2 + $0x1b0] sm:$0xff]
      %v8393 = vld [vmem:[#allocation2 + $0x1b8] sm:$0xff]
      %v8394 = vld [vmem:[#allocation2 + $0x1c0] sm:$0xff]
      %v8395 = vld [vmem:[#allocation2 + $0x1c8] sm:$0xff]
      %v8396 = vld [vmem:[#allocation2 + $0x1d0] sm:$0xff]
      %v8397 = vld [vmem:[#allocation2 + $0x1d8] sm:$0xff]
      %v8398 = vld [vmem:[#allocation2 + $0x1e0] sm:$0xff]
      %v8399 = vld [vmem:[#allocation2 + $0x1e8] sm:$0xff]
      %v8400 = vld [vmem:[#allocation2 + $0x1f0] sm:$0xff]
      %v8401 = vld [vmem:[#allocation2 + $0x1f8] sm:$0xff]
      %v8402 = vld [vmem:[#allocation2 + $0x200] sm:$0xff]
      %v8403 = vld [vmem:[#allocation2 + $0x208] sm:$0xff]
      %v8404 = vld [vmem:[#allocation2 + $0x210] sm:$0xff]
      %v8405 = vld [vmem:[#allocation2 + $0x218] sm:$0xff]
      %v8406 = vld [vmem:[#allocation2 + $0x220] sm:$0xff]
      %v8407 = vld [vmem:[#allocation2 + $0x228] sm:$0xff]
      %v8408 = vld [vmem:[#allocation2 + $0x230] sm:$0xff]
      %v8409 = vld [vmem:[#allocation2 + $0x238] sm:$0xff]
      %v8410 = vld [vmem:[#allocation2 + $0x240] sm:$0xff]
      %v8411 = vld [vmem:[#allocation2 + $0x248] sm:$0xff]
      %v8412 = vld [vmem:[#allocation2 + $0x250] sm:$0xff]
      %v8413 = vld [vmem:[#allocation2 + $0x258] sm:$0xff]
      %v8414 = vld [vmem:[#allocation2 + $0x260] sm:$0xff]
      %v8415 = vld [vmem:[#allocation2 + $0x268] sm:$0xff]
      %v8416 = vld [vmem:[#allocation2 + $0x270] sm:$0xff]
      %v8417 = vld [vmem:[#allocation2 + $0x278] sm:$0xff]
      %v8418 = vld [vmem:[#allocation2 + $0x280] sm:$0xff]
      %v8419 = vld [vmem:[#allocation2 + $0x288] sm:$0xff]
      %v8420 = vld [vmem:[#allocation2 + $0x290] sm:$0xff]
      %v8421 = vld [vmem:[#allocation2 + $0x298] sm:$0xff]
      %v8422 = vld [vmem:[#allocation2 + $0x2a0] sm:$0xff]
      %v8423 = vld [vmem:[#allocation2 + $0x2a8] sm:$0xff]
      %v8424 = vld [vmem:[#allocation2 + $0x2b0] sm:$0xff]
      %v8425 = vld [vmem:[#allocation2 + $0x2b8] sm:$0xff]
      %v8426 = vld [vmem:[#allocation2 + $0x2c0] sm:$0xff]
      %v8427 = vld [vmem:[#allocation2 + $0x2c8] sm:$0xff]
      %v8428 = vld [vmem:[#allocation2 + $0x2d0] sm:$0xff]
      %v8429 = vld [vmem:[#allocation2 + $0x2d8] sm:$0xff]
      %v8430 = vld [vmem:[#allocation2 + $0x2e0] sm:$0xff]
      %v8431 = vld [vmem:[#allocation2 + $0x2e8] sm:$0xff]
      %v8432 = vld [vmem:[#allocation2 + $0x2f0] sm:$0xff]
      %v8433 = vld [vmem:[#allocation2 + $0x2f8] sm:$0xff]
      %v8434 = vld [vmem:[#allocation2 + $0x300] sm:$0xff]
      %v8435 = vld [vmem:[#allocation2 + $0x308] sm:$0xff]
      %v8436 = vld [vmem:[#allocation2 + $0x310] sm:$0xff]
      %v8437 = vld [vmem:[#allocation2 + $0x318] sm:$0xff]
      %v8438 = vld [vmem:[#allocation2 + $0x320] sm:$0xff]
      %v8439 = vld [vmem:[#allocation2 + $0x328] sm:$0xff]
      %v8440 = vld [vmem:[#allocation2 + $0x330] sm:$0xff]
      %v8441 = vld [vmem:[#allocation2 + $0x338] sm:$0xff]
      %v8442 = vld [vmem:[#allocation2 + $0x340] sm:$0xff]
      %v8443 = vld [vmem:[#allocation2 + $0x348] sm:$0xff]
      %v8444 = vld [vmem:[#allocation2 + $0x350] sm:$0xff]
      %v8445 = vld [vmem:[#allocation2 + $0x358] sm:$0xff]
      %v8446 = vld [vmem:[#allocation2 + $0x360] sm:$0xff]
      %v8447 = vld [vmem:[#allocation2 + $0x368] sm:$0xff]
      %v8448 = vld [vmem:[#allocation2 + $0x370] sm:$0xff]
      %v8449 = vld [vmem:[#allocation2 + $0x378] sm:$0xff]
      %v8450 = vld [vmem:[#allocation2 + $0x380] sm:$0xff]
      %v8451 = vld [vmem:[#allocation2 + $0x388] sm:$0xff]
      %v8452 = vld [vmem:[#allocation2 + $0x390] sm:$0xff]
      %v8453 = vld [vmem:[#allocation2 + $0x398] sm:$0xff]
      %v8454 = vld [vmem:[#allocation2 + $0x3a0] sm:$0xff]
      %v8455 = vld [vmem:[#allocation2 + $0x3a8] sm:$0xff]
      %v8456 = vld [vmem:[#allocation2 + $0x3b0] sm:$0xff]
      %v8457 = vld [vmem:[#allocation2 + $0x3b8] sm:$0xff]
      %v8458 = vld [vmem:[#allocation2 + $0x3c0] sm:$0xff]
      %v8459 = vld [vmem:[#allocation2 + $0x3c8] sm:$0xff]
      %v8460 = vld [vmem:[#allocation2 + $0x3d0] sm:$0xff]
      %v8461 = vld [vmem:[#allocation2 + $0x3d8] sm:$0xff]
      %v8462 = vld [vmem:[#allocation2 + $0x3e0] sm:$0xff]
      %v8463 = vld [vmem:[#allocation2 + $0x3e8] sm:$0xff]
      %v8464 = vld [vmem:[#allocation2 + $0x3f0] sm:$0xff]
      %v8465 = vld [vmem:[#allocation2 + $0x3f8] sm:$0xff]
      %v8466 = vld [vmem:[#allocation3] sm:$0x1]
      %v8468 = vlaneseq
      %v8469 = vshrl.u32 %v8468, 7
      %v8470 = vsub.s32 0, %v8469
      %v8471 = vrot.slane %v8466, %v8470
      %8473 = vmatprep.subr.mxu0 0.0
      %8474 = vmatpush1.msra.mxu0 %v8338
      %8475 = vmatprep.subr.mxu0 0.0
      %8476 = vmatpush1.msra.mxu0 %v8339
      %8477 = vmatprep.subr.mxu0 0.0
      %8478 = vmatpush1.msra.mxu0 %v8340
      %8479 = vmatprep.subr.mxu0 0.0
      %8480 = vmatpush1.msra.mxu0 %v8341
      %8481 = vmatprep.subr.mxu0 0.0
      %8482 = vmatpush1.msra.mxu0 %v8342
      %8483 = vmatprep.subr.mxu0 0.0
      %8484 = vmatpush1.msra.mxu0 %v8343
      %8485 = vmatprep.subr.mxu0 0.0
      %8486 = vmatpush1.msra.mxu0 %v8344
      %8487 = vmatprep.subr.mxu0 0.0
      %8488 = vmatpush1.msra.mxu0 %v8345
      %8489 = vmatprep.subr.mxu0 0.0
      %8490 = vmatpush1.msra.mxu0 %v8346
      %8491 = vmatprep.subr.mxu0 0.0
      %8492 = vmatpush1.msra.mxu0 %v8347
      %8493 = vmatprep.subr.mxu0 0.0
      %8494 = vmatpush1.msra.mxu0 %v8348
      %8495 = vmatprep.subr.mxu0 0.0
      %8496 = vmatpush1.msra.mxu0 %v8349
      %8497 = vmatprep.subr.mxu0 0.0
      %8498 = vmatpush1.msra.mxu0 %v8350
      %8499 = vmatprep.subr.mxu0 0.0
      %8500 = vmatpush1.msra.mxu0 %v8351
      %8501 = vmatprep.subr.mxu0 0.0
      %8502 = vmatpush1.msra.mxu0 %v8352
      %8503 = vmatprep.subr.mxu0 0.0
      %8504 = vmatpush1.msra.mxu0 %v8353
      %8505 = vmatprep.subr.mxu0 0.0
      %8506 = vmatpush1.msra.mxu0 %v8354
      %8507 = vmatprep.subr.mxu0 0.0
      %8508 = vmatpush1.msra.mxu0 %v8355
      %8509 = vmatprep.subr.mxu0 0.0
      %8510 = vmatpush1.msra.mxu0 %v8356
      %8511 = vmatprep.subr.mxu0 0.0
      %8512 = vmatpush1.msra.mxu0 %v8357
      %8513 = vmatprep.subr.mxu0 0.0
      %8514 = vmatpush1.msra.mxu0 %v8358
      %8515 = vmatprep.subr.mxu0 0.0
      %8516 = vmatpush1.msra.mxu0 %v8359
      %8517 = vmatprep.subr.mxu0 0.0
      %8518 = vmatpush1.msra.mxu0 %v8360
      %8519 = vmatprep.subr.mxu0 0.0
      %8520 = vmatpush1.msra.mxu0 %v8361
      %8521 = vmatprep.subr.mxu0 0.0
      %8522 = vmatpush1.msra.mxu0 %v8362
      %8523 = vmatprep.subr.mxu0 0.0
      %8524 = vmatpush1.msra.mxu0 %v8363
      %8525 = vmatprep.subr.mxu0 0.0
      %8526 = vmatpush1.msra.mxu0 %v8364
      %8527 = vmatprep.subr.mxu0 0.0
      %8528 = vmatpush1.msra.mxu0 %v8365
      %8529 = vmatprep.subr.mxu0 0.0
      %8530 = vmatpush1.msra.mxu0 %v8366
      %8531 = vmatprep.subr.mxu0 0.0
      %8532 = vmatpush1.msra.mxu0 %v8367
      %8533 = vmatprep.subr.mxu0 0.0
      %8534 = vmatpush1.msra.mxu0 %v8368
      %8535 = vmatprep.subr.mxu0 0.0
      %8536 = vmatpush1.msra.mxu0 %v8369
      %8537 = vmatprep.mubr.f32.mxu0 %v352
      %8538 = vmatmul.mubr.f32.gmra.mrb[0].mxu0 %v351
      %v8539 = vpop.f32.mrb[0].mxu0
      %v8540 = vadd.f32 %v8471, %v8539
      %v8541 = vpop.f32.mrb[0].mxu0
      %8542 = vmatprep.mubr.f32.mxu0 %v360
      %8543 = vmatmul.mubr.f32.gmra.mrb[0].mxu0 %v359
      %v8544 = vpop.f32.mrb[0].mxu0
      %v8545 = vadd.f32 %v8471, %v8544
      %v8546 = vpop.f32.mrb[0].mxu0
      %8547 = vmatprep.mubr.f32.mxu0 %v368
      %8548 = vmatmul.mubr.f32.gmra.mrb[0].mxu0 %v367
      %v8549 = vpop.f32.mrb[0].mxu0
      %v8550 = vadd.f32 %v8471, %v8549
      %v8551 = vpop.f32.mrb[0].mxu0
      %8552 = vmatprep.mubr.f32.mxu0 %v376
      %8553 = vmatmul.mubr.f32.gmra.mrb[0].mxu0 %v375
      %v8554 = vpop.f32.mrb[0].mxu0
      %v8555 = vadd.f32 %v8471, %v8554
      %v8556 = vpop.f32.mrb[0].mxu0
      %8557 = vmatprep.mubr.f32.mxu0 %v384
      %8558 = vmatmul.mubr.f32.gmra.mrb[0].mxu0 %v383
      %v8559 = vpop.f32.mrb[0].mxu0
      %v8560 = vadd.f32 %v8471, %v8559
      %v8561 = vpop.f32.mrb[0].mxu0
      %8562 = vmatprep.mubr.f32.mxu0 %v392
      %8563 = vmatmul.mubr.f32.gmra.mrb[0].mxu0 %v391
      %v8564 = vpop.f32.mrb[0].mxu0
      %v8565 = vadd.f32 %v8471, %v8564
      %v8566 = vpop.f32.mrb[0].mxu0
      %8567 = vmatprep.mubr.f32.mxu0 %v400
      %8568 = vmatmul.mubr.f32.gmra.mrb[0].mxu0 %v399
      %v8569 = vpop.f32.mrb[0].mxu0
      %v8570 = vadd.f32 %v8471, %v8569
      %v8571 = vpop.f32.mrb[0].mxu0
      %8572 = vmatprep.mubr.f32.mxu0 %v408
      %8573 = vmatmul.mubr.f32.gmra.mrb[0].mxu0 %v407
      %v8574 = vpop.f32.mrb[0].mxu0
      %v8575 = vadd.f32 %v8471, %v8574
      %v8576 = vpop.f32.mrb[0].mxu0
      %8577 = vdwg.mxu0
      %8578 = vmatprep.subr.mxu0 0.0
      %8579 = vmatpush1.msra.mxu0 %v8370
      %8580 = vmatprep.subr.mxu0 0.0
      %8581 = vmatpush1.msra.mxu0 %v8371
      %8582 = vmatprep.subr.mxu0 0.0
      %8583 = vmatpush1.msra.mxu0 %v8372
      %8584 = vmatprep.subr.mxu0 0.0
      %8585 = vmatpush1.msra.mxu0 %v8373
      %8586 = vmatprep.subr.mxu0 0.0
      %8587 = vmatpush1.msra.mxu0 %v8374
      %8588 = vmatprep.subr.mxu0 0.0
      %8589 = vmatpush1.msra.mxu0 %v8375
      %8590 = vmatprep.subr.mxu0 0.0
      %8591 = vmatpush1.msra.mxu0 %v8376
      %8592 = vmatprep.subr.mxu0 0.0
      %8593 = vmatpush1.msra.mxu0 %v8377
      %8594 = vmatprep.subr.mxu0 0.0
      %8595 = vmatpush1.msra.mxu0 %v8378
      %8596 = vmatprep.subr.mxu0 0.0
      %8597 = vmatpush1.msra.mxu0 %v8379
      %8598 = vmatprep.subr.mxu0 0.0
      %8599 = vmatpush1.msra.mxu0 %v8380
      %8600 = vmatprep.subr.mxu0 0.0
      %8601 = vmatpush1.msra.mxu0 %v8381
      %8602 = vmatprep.subr.mxu0 0.0
      %8603 = vmatpush1.msra.mxu0 %v8382
      %8604 = vmatprep.subr.mxu0 0.0
      %8605 = vmatpush1.msra.mxu0 %v8383
      %8606 = vmatprep.subr.mxu0 0.0
      %8607 = vmatpush1.msra.mxu0 %v8384
      %8608 = vmatprep.subr.mxu0 0.0
      %8609 = vmatpush1.msra.mxu0 %v8385
      %8610 = vmatprep.subr.mxu0 0.0
      %8611 = vmatpush1.msra.mxu0 %v8386
      %8612 = vmatprep.subr.mxu0 0.0
      %8613 = vmatpush1.msra.mxu0 %v8387
      %8614 = vmatprep.subr.mxu0 0.0
      %8615 = vmatpush1.msra.mxu0 %v8388
      %8616 = vmatprep.subr.mxu0 0.0
      %8617 = vmatpush1.msra.mxu0 %v8389
      %8618 = vmatprep.subr.mxu0 0.0
      %8619 = vmatpush1.msra.mxu0 %v8390
      %8620 = vmatprep.subr.mxu0 0.0
      %8621 = vmatpush1.msra.mxu0 %v8391
      %8622 = vmatprep.subr.mxu0 0.0
      %8623 = vmatpush1.msra.mxu0 %v8392
      %8624 = vmatprep.subr.mxu0 0.0
      %8625 = vmatpush1.msra.mxu0 %v8393
      %8626 = vmatprep.subr.mxu0 0.0
      %8627 = vmatpush1.msra.mxu0 %v8394
      %8628 = vmatprep.subr.mxu0 0.0
      %8629 = vmatpush1.msra.mxu0 %v8395
      %8630 = vmatprep.subr.mxu0 0.0
      %8631 = vmatpush1.msra.mxu0 %v8396
      %8632 = vmatprep.subr.mxu0 0.0
      %8633 = vmatpush1.msra.mxu0 %v8397
      %8634 = vmatprep.subr.mxu0 0.0
      %8635 = vmatpush1.msra.mxu0 %v8398
      %8636 = vmatprep.subr.mxu0 0.0
      %8637 = vmatpush1.msra.mxu0 %v8399
      %8638 = vmatprep.subr.mxu0 0.0
      %8639 = vmatpush1.msra.mxu0 %v8400
      %8640 = vmatprep.subr.mxu0 0.0
      %8641 = vmatpush1.msra.mxu0 %v8401
      %8642 = vmatprep.mubr.f32.mxu0 %v354
      %8643 = vmatmul.mubr.f32.gmra.mrb[0].mxu0 %v353
      %v8644 = vpop.f32.mrb[0].mxu0
      %v8645 = vadd.f32 %v8540, %v8644
      %v8646 = vpop.f32.mrb[0].mxu0
      %8647 = vmatprep.mubr.f32.mxu0 %v362
      %8648 = vmatmul.mubr.f32.gmra.mrb[0].mxu0 %v361
      %v8649 = vpop.f32.mrb[0].mxu0
      %v8650 = vadd.f32 %v8545, %v8649
      %v8651 = vpop.f32.mrb[0].mxu0
      %8652 = vmatprep.mubr.f32.mxu0 %v370
      %8653 = vmatmul.mubr.f32.gmra.mrb[0].mxu0 %v369
      %v8654 = vpop.f32.mrb[0].mxu0
      %v8655 = vadd.f32 %v8550, %v8654
      %v8656 = vpop.f32.mrb[0].mxu0
      %8657 = vmatprep.mubr.f32.mxu0 %v378
      %8658 = vmatmul.mubr.f32.gmra.mrb[0].mxu0 %v377
      %v8659 = vpop.f32.mrb[0].mxu0
      %v8660 = vadd.f32 %v8555, %v8659
      %v8661 = vpop.f32.mrb[0].mxu0
      %8662 = vmatprep.mubr.f32.mxu0 %v386
      %8663 = vmatmul.mubr.f32.gmra.mrb[0].mxu0 %v385
      %v8664 = vpop.f32.mrb[0].mxu0
      %v8665 = vadd.f32 %v8560, %v8664
      %v8666 = vpop.f32.mrb[0].mxu0
      %8667 = vmatprep.mubr.f32.mxu0 %v394
      %8668 = vmatmul.mubr.f32.gmra.mrb[0].mxu0 %v393
      %v8669 = vpop.f32.mrb[0].mxu0
      %v8670 = vadd.f32 %v8565, %v8669
      %v8671 = vpop.f32.mrb[0].mxu0
      %8672 = vmatprep.mubr.f32.mxu0 %v402
      %8673 = vmatmul.mubr.f32.gmra.mrb[0].mxu0 %v401
      %v8674 = vpop.f32.mrb[0].mxu0
      %v8675 = vadd.f32 %v8570, %v8674
      %v8676 = vpop.f32.mrb[0].mxu0
      %8677 = vmatprep.mubr.f32.mxu0 %v410
      %8678 = vmatmul.mubr.f32.gmra.mrb[0].mxu0 %v409
      %v8679 = vpop.f32.mrb[0].mxu0
      %v8680 = vadd.f32 %v8575, %v8679
      %v8681 = vpop.f32.mrb[0].mxu0
      %8682 = vdwg.mxu0
      %8683 = vmatprep.subr.mxu0 0.0
      %8684 = vmatpush1.msra.mxu0 %v8402
      %8685 = vmatprep.subr.mxu0 0.0
      %8686 = vmatpush1.msra.mxu0 %v8403
      %8687 = vmatprep.subr.mxu0 0.0
      %8688 = vmatpush1.msra.mxu0 %v8404
      %8689 = vmatprep.subr.mxu0 0.0
      %8690 = vmatpush1.msra.mxu0 %v8405
      %8691 = vmatprep.subr.mxu0 0.0
      %8692 = vmatpush1.msra.mxu0 %v8406
      %8693 = vmatprep.subr.mxu0 0.0
      %8694 = vmatpush1.msra.mxu0 %v8407
      %8695 = vmatprep.subr.mxu0 0.0
      %8696 = vmatpush1.msra.mxu0 %v8408
      %8697 = vmatprep.subr.mxu0 0.0
      %8698 = vmatpush1.msra.mxu0 %v8409
      %8699 = vmatprep.subr.mxu0 0.0
      %8700 = vmatpush1.msra.mxu0 %v8410
      %8701 = vmatprep.subr.mxu0 0.0
      %8702 = vmatpush1.msra.mxu0 %v8411
      %8703 = vmatprep.subr.mxu0 0.0
      %8704 = vmatpush1.msra.mxu0 %v8412
      %8705 = vmatprep.subr.mxu0 0.0
      %8706 = vmatpush1.msra.mxu0 %v8413
      %8707 = vmatprep.subr.mxu0 0.0
      %8708 = vmatpush1.msra.mxu0 %v8414
      %8709 = vmatprep.subr.mxu0 0.0
      %8710 = vmatpush1.msra.mxu0 %v8415
      %8711 = vmatprep.subr.mxu0 0.0
      %8712 = vmatpush1.msra.mxu0 %v8416
      %8713 = vmatprep.subr.mxu0 0.0
      %8714 = vmatpush1.msra.mxu0 %v8417
      %8715 = vmatprep.subr.mxu0 0.0
      %8716 = vmatpush1.msra.mxu0 %v8418
      %8717 = vmatprep.subr.mxu0 0.0
      %8718 = vmatpush1.msra.mxu0 %v8419
      %8719 = vmatprep.subr.mxu0 0.0
      %8720 = vmatpush1.msra.mxu0 %v8420
      %8721 = vmatprep.subr.mxu0 0.0
      %8722 = vmatpush1.msra.mxu0 %v8421
      %8723 = vmatprep.subr.mxu0 0.0
      %8724 = vmatpush1.msra.mxu0 %v8422
      %8725 = vmatprep.subr.mxu0 0.0
      %8726 = vmatpush1.msra.mxu0 %v8423
      %8727 = vmatprep.subr.mxu0 0.0
      %8728 = vmatpush1.msra.mxu0 %v8424
      %8729 = vmatprep.subr.mxu0 0.0
      %8730 = vmatpush1.msra.mxu0 %v8425
      %8731 = vmatprep.subr.mxu0 0.0
      %8732 = vmatpush1.msra.mxu0 %v8426
      %8733 = vmatprep.subr.mxu0 0.0
      %8734 = vmatpush1.msra.mxu0 %v8427
      %8735 = vmatprep.subr.mxu0 0.0
      %8736 = vmatpush1.msra.mxu0 %v8428
      %8737 = vmatprep.subr.mxu0 0.0
      %8738 = vmatpush1.msra.mxu0 %v8429
      %8739 = vmatprep.subr.mxu0 0.0
      %8740 = vmatpush1.msra.mxu0 %v8430
      %8741 = vmatprep.subr.mxu0 0.0
      %8742 = vmatpush1.msra.mxu0 %v8431
      %8743 = vmatprep.subr.mxu0 0.0
      %8744 = vmatpush1.msra.mxu0 %v8432
      %8745 = vmatprep.subr.mxu0 0.0
      %8746 = vmatpush1.msra.mxu0 %v8433
      %8747 = vmatprep.mubr.f32.mxu0 %v356
      %8748 = vmatmul.mubr.f32.gmra.mrb[0].mxu0 %v355
      %v8749 = vpop.f32.mrb[0].mxu0
      %v8750 = vadd.f32 %v8645, %v8749
      %v8751 = vpop.f32.mrb[0].mxu0
      %8752 = vmatprep.mubr.f32.mxu0 %v364
      %8753 = vmatmul.mubr.f32.gmra.mrb[0].mxu0 %v363
      %v8754 = vpop.f32.mrb[0].mxu0
      %v8755 = vadd.f32 %v8650, %v8754
      %v8756 = vpop.f32.mrb[0].mxu0
      %8757 = vmatprep.mubr.f32.mxu0 %v372
      %8758 = vmatmul.mubr.f32.gmra.mrb[0].mxu0 %v371
      %v8759 = vpop.f32.mrb[0].mxu0
      %v8760 = vadd.f32 %v8655, %v8759
      %v8761 = vpop.f32.mrb[0].mxu0
      %8762 = vmatprep.mubr.f32.mxu0 %v380
      %8763 = vmatmul.mubr.f32.gmra.mrb[0].mxu0 %v379
      %v8764 = vpop.f32.mrb[0].mxu0
      %v8765 = vadd.f32 %v8660, %v8764
      %v8766 = vpop.f32.mrb[0].mxu0
      %8767 = vmatprep.mubr.f32.mxu0 %v388
      %8768 = vmatmul.mubr.f32.gmra.mrb[0].mxu0 %v387
      %v8769 = vpop.f32.mrb[0].mxu0
      %v8770 = vadd.f32 %v8665, %v8769
      %v8771 = vpop.f32.mrb[0].mxu0
      %8772 = vmatprep.mubr.f32.mxu0 %v396
      %8773 = vmatmul.mubr.f32.gmra.mrb[0].mxu0 %v395
      %v8774 = vpop.f32.mrb[0].mxu0
      %v8775 = vadd.f32 %v8670, %v8774
      %v8776 = vpop.f32.mrb[0].mxu0
      %8777 = vmatprep.mubr.f32.mxu0 %v404
      %8778 = vmatmul.mubr.f32.gmra.mrb[0].mxu0 %v403
      %v8779 = vpop.f32.mrb[0].mxu0
      %v8780 = vadd.f32 %v8675, %v8779
      %v8781 = vpop.f32.mrb[0].mxu0
      %8782 = vmatprep.mubr.f32.mxu0 %v412
      %8783 = vmatmul.mubr.f32.gmra.mrb[0].mxu0 %v411
      %v8784 = vpop.f32.mrb[0].mxu0
      %v8785 = vadd.f32 %v8680, %v8784
      %v8786 = vpop.f32.mrb[0].mxu0
      %8787 = vdwg.mxu0
      %8788 = vmatprep.subr.mxu0 0.0
      %8789 = vmatpush1.msra.mxu0 %v8434
      %8790 = vmatprep.subr.mxu0 0.0
      %8791 = vmatpush1.msra.mxu0 %v8435
      %8792 = vmatprep.subr.mxu0 0.0
      %8793 = vmatpush1.msra.mxu0 %v8436
      %8794 = vmatprep.subr.mxu0 0.0
      %8795 = vmatpush1.msra.mxu0 %v8437
      %8796 = vmatprep.subr.mxu0 0.0
      %8797 = vmatpush1.msra.mxu0 %v8438
      %8798 = vmatprep.subr.mxu0 0.0
      %8799 = vmatpush1.msra.mxu0 %v8439
      %8800 = vmatprep.subr.mxu0 0.0
      %8801 = vmatpush1.msra.mxu0 %v8440
      %8802 = vmatprep.subr.mxu0 0.0
      %8803 = vmatpush1.msra.mxu0 %v8441
      %8804 = vmatprep.subr.mxu0 0.0
      %8805 = vmatpush1.msra.mxu0 %v8442
      %8806 = vmatprep.subr.mxu0 0.0
      %8807 = vmatpush1.msra.mxu0 %v8443
      %8808 = vmatprep.subr.mxu0 0.0
      %8809 = vmatpush1.msra.mxu0 %v8444
      %8810 = vmatprep.subr.mxu0 0.0
      %8811 = vmatpush1.msra.mxu0 %v8445
      %8812 = vmatprep.subr.mxu0 0.0
      %8813 = vmatpush1.msra.mxu0 %v8446
      %8814 = vmatprep.subr.mxu0 0.0
      %8815 = vmatpush1.msra.mxu0 %v8447
      %8816 = vmatprep.subr.mxu0 0.0
      %8817 = vmatpush1.msra.mxu0 %v8448
      %8818 = vmatprep.subr.mxu0 0.0
      %8819 = vmatpush1.msra.mxu0 %v8449
      %8820 = vmatprep.subr.mxu0 0.0
      %8821 = vmatpush1.msra.mxu0 %v8450
      %8822 = vmatprep.subr.mxu0 0.0
      %8823 = vmatpush1.msra.mxu0 %v8451
      %8824 = vmatprep.subr.mxu0 0.0
      %8825 = vmatpush1.msra.mxu0 %v8452
      %8826 = vmatprep.subr.mxu0 0.0
      %8827 = vmatpush1.msra.mxu0 %v8453
      %8828 = vmatprep.subr.mxu0 0.0
      %8829 = vmatpush1.msra.mxu0 %v8454
      %8830 = vmatprep.subr.mxu0 0.0
      %8831 = vmatpush1.msra.mxu0 %v8455
      %8832 = vmatprep.subr.mxu0 0.0
      %8833 = vmatpush1.msra.mxu0 %v8456
      %8834 = vmatprep.subr.mxu0 0.0
      %8835 = vmatpush1.msra.mxu0 %v8457
      %8836 = vmatprep.subr.mxu0 0.0
      %8837 = vmatpush1.msra.mxu0 %v8458
      %8838 = vmatprep.subr.mxu0 0.0
      %8839 = vmatpush1.msra.mxu0 %v8459
      %8840 = vmatprep.subr.mxu0 0.0
      %8841 = vmatpush1.msra.mxu0 %v8460
      %8842 = vmatprep.subr.mxu0 0.0
      %8843 = vmatpush1.msra.mxu0 %v8461
      %8844 = vmatprep.subr.mxu0 0.0
      %8845 = vmatpush1.msra.mxu0 %v8462
      %8846 = vmatprep.subr.mxu0 0.0
      %8847 = vmatpush1.msra.mxu0 %v8463
      %8848 = vmatprep.subr.mxu0 0.0
      %8849 = vmatpush1.msra.mxu0 %v8464
      %8850 = vmatprep.subr.mxu0 0.0
      %8851 = vmatpush1.msra.mxu0 %v8465
      %8852 = vmatprep.mubr.f32.mxu0 %v358
      %8853 = vmatmul.mubr.f32.gmra.mrb[0].mxu0 %v357
      %v8854 = vpop.f32.mrb[0].mxu0
      %v8855 = vadd.f32 %v8750, %v8854
      %v8856 = vpop.f32.mrb[0].mxu0
      %8857 = vmatprep.mubr.f32.mxu0 %v366
      %8858 = vmatmul.mubr.f32.gmra.mrb[0].mxu0 %v365
      %v8859 = vpop.f32.mrb[0].mxu0
      %v8860 = vadd.f32 %v8755, %v8859
      %v8861 = vpop.f32.mrb[0].mxu0
      %8862 = vmatprep.mubr.f32.mxu0 %v374
      %8863 = vmatmul.mubr.f32.gmra.mrb[0].mxu0 %v373
      %v8864 = vpop.f32.mrb[0].mxu0
      %v8865 = vadd.f32 %v8760, %v8864
      %v8866 = vpop.f32.mrb[0].mxu0
      %8867 = vmatprep.mubr.f32.mxu0 %v382
      %8868 = vmatmul.mubr.f32.gmra.mrb[0].mxu0 %v381
      %v8869 = vpop.f32.mrb[0].mxu0
      %v8870 = vadd.f32 %v8765, %v8869
      %v8871 = vpop.f32.mrb[0].mxu0
      %8872 = vmatprep.mubr.f32.mxu0 %v390
      %8873 = vmatmul.mubr.f32.gmra.mrb[0].mxu0 %v389
      %v8874 = vpop.f32.mrb[0].mxu0
      %v8875 = vadd.f32 %v8770, %v8874
      %v8876 = vpop.f32.mrb[0].mxu0
      %8877 = vmatprep.mubr.f32.mxu0 %v398
      %8878 = vmatmul.mubr.f32.gmra.mrb[0].mxu0 %v397
      %v8879 = vpop.f32.mrb[0].mxu0
      %v8880 = vadd.f32 %v8775, %v8879
      %v8881 = vpop.f32.mrb[0].mxu0
      %8882 = vmatprep.mubr.f32.mxu0 %v406
      %8883 = vmatmul.mubr.f32.gmra.mrb[0].mxu0 %v405
      %v8884 = vpop.f32.mrb[0].mxu0
      %v8885 = vadd.f32 %v8780, %v8884
      %v8886 = vpop.f32.mrb[0].mxu0
      %8887 = vmatprep.mubr.f32.mxu0 %v414
      %8888 = vmatmul.mubr.f32.gmra.mrb[0].mxu0 %v413
      %v8889 = vpop.f32.mrb[0].mxu0
      %v8890 = vadd.f32 %v8785, %v8889
      %v8891 = vpop.f32.mrb[0].mxu0
      %8892 = vdwg.mxu0
      %v8893 = vadd.f32 %v8855, %v567
      %v8894 = vadd.f32 %v8860, %v568
      %v8895 = vadd.f32 %v8865, %v569
      %v8896 = vadd.f32 %v8870, %v570
      %v8897 = vadd.f32 %v8875, %v571
      %v8898 = vadd.f32 %v8880, %v572
      %v8899 = vadd.f32 %v8885, %v573
      %v8900 = vadd.f32 %v8890, %v574
      %v8902 = vsel %vm899, %v8893, 0
      %v8905 = vsel %vm899, %v8894, 0
      %v8908 = vsel %vm899, %v8895, 0
      %v8911 = vsel %vm899, %v8896, 0
      %v8914 = vsel %vm899, %v8897, 0
      %v8917 = vsel %vm899, %v8898, 0
      %v8920 = vsel %vm899, %v8899, 0
      %v8923 = vsel %vm899, %v8900, 0
      %8925 = vmatprep.subr.mxu0 0.0
      %8926 = vmatpush1.xpose.msra.mxu0 %v1619
      %8927 = vmatprep.subr.mxu0 0.0
      %8928 = vmatpush1.xpose.msra.mxu0 %v1622
      %8929 = vmatprep.subr.mxu0 0.0
      %8930 = vmatpush1.xpose.msra.mxu0 %v1625
      %8931 = vmatprep.subr.mxu0 0.0
      %8932 = vmatpush1.xpose.msra.mxu0 %v1628
      %8933 = vmatprep.subr.mxu0 0.0
      %8934 = vmatpush1.xpose.msra.mxu0 %v1631
      %8935 = vmatprep.subr.mxu0 0.0
      %8936 = vmatpush1.xpose.msra.mxu0 %v1634
      %8937 = vmatprep.subr.mxu0 0.0
      %8938 = vmatpush1.xpose.msra.mxu0 %v1637
      %8939 = vmatprep.subr.mxu0 0.0
      %8940 = vmatpush1.xpose.msra.mxu0 %v1640
      %8941 = vmatprep.subr.mxu0 0.0
      %8942 = vmatpush1.xpose.msra.mxu0 %v1643
      %8943 = vmatprep.subr.mxu0 0.0
      %8944 = vmatpush1.xpose.msra.mxu0 %v1646
      %8945 = vmatprep.subr.mxu0 0.0
      %8946 = vmatpush1.xpose.msra.mxu0 %v1649
      %8947 = vmatprep.subr.mxu0 0.0
      %8948 = vmatpush1.xpose.msra.mxu0 %v1652
      %8949 = vmatprep.subr.mxu0 0.0
      %8950 = vmatpush1.xpose.msra.mxu0 %v1655
      %8951 = vmatprep.subr.mxu0 0.0
      %8952 = vmatpush1.xpose.msra.mxu0 %v1658
      %8953 = vmatprep.subr.mxu0 0.0
      %8954 = vmatpush1.xpose.msra.mxu0 %v1661
      %8955 = vmatprep.subr.mxu0 0.0
      %8956 = vmatpush1.xpose.msra.mxu0 %v1664
      %8957 = vmatprep.subr.mxu0 0.0
      %8958 = vmatpush1.xpose.msra.mxu0 0.0
      %8959 = vmatprep.subr.mxu0 0.0
      %8960 = vmatpush1.xpose.msra.mxu0 0.0
      %8961 = vmatprep.subr.mxu0 0.0
      %8962 = vmatpush1.xpose.msra.mxu0 0.0
      %8963 = vmatprep.subr.mxu0 0.0
      %8964 = vmatpush1.xpose.msra.mxu0 0.0
      %8965 = vmatprep.subr.mxu0 0.0
      %8966 = vmatpush1.xpose.msra.mxu0 0.0
      %8967 = vmatprep.subr.mxu0 0.0
      %8968 = vmatpush1.xpose.msra.mxu0 0.0
      %8969 = vmatprep.subr.mxu0 0.0
      %8970 = vmatpush1.xpose.msra.mxu0 0.0
      %8971 = vmatprep.subr.mxu0 0.0
      %8972 = vmatpush1.xpose.msra.mxu0 0.0
      %8973 = vmatprep.subr.mxu0 0.0
      %8974 = vmatpush1.xpose.msra.mxu0 0.0
      %8975 = vmatprep.subr.mxu0 0.0
      %8976 = vmatpush1.xpose.msra.mxu0 0.0
      %8977 = vmatprep.subr.mxu0 0.0
      %8978 = vmatpush1.xpose.msra.mxu0 0.0
      %8979 = vmatprep.subr.mxu0 0.0
      %8980 = vmatpush1.xpose.msra.mxu0 0.0
      %8981 = vmatprep.subr.mxu0 0.0
      %8982 = vmatpush1.xpose.msra.mxu0 0.0
      %8983 = vmatprep.subr.mxu0 0.0
      %8984 = vmatpush1.xpose.msra.mxu0 0.0
      %8985 = vmatprep.subr.mxu0 0.0
      %8986 = vmatpush1.xpose.msra.mxu0 0.0
      %8987 = vmatprep.subr.mxu0 0.0
      %8988 = vmatpush1.xpose.msra.mxu0 0.0
      %8989 = vmatprep.mubr.f32.mxu0 0.0
      %8990 = vmatmul.mubr.f32.gmra.mrb[0].mxu0 %v8902
      %v8991 = vpop.f32.mrb[0].mxu0
      %v8992 = vadd.f32 0.0, %v8991
      %v8993 = vpop.f32.mrb[0].mxu0
      %8994 = vmatprep.mubr.f32.mxu0 0.0
      %8995 = vmatmul.mubr.f32.gmra.mrb[0].mxu0 %v8905
      %v8996 = vpop.f32.mrb[0].mxu0
      %v8997 = vadd.f32 0.0, %v8996
      %v8998 = vpop.f32.mrb[0].mxu0
      %8999 = vmatprep.mubr.f32.mxu0 0.0
      %9000 = vmatmul.mubr.f32.gmra.mrb[0].mxu0 %v8908
      %v9001 = vpop.f32.mrb[0].mxu0
      %v9002 = vadd.f32 0.0, %v9001
      %v9003 = vpop.f32.mrb[0].mxu0
      %9004 = vmatprep.mubr.f32.mxu0 0.0
      %9005 = vmatmul.mubr.f32.gmra.mrb[0].mxu0 %v8911
      %v9006 = vpop.f32.mrb[0].mxu0
      %v9007 = vadd.f32 0.0, %v9006
      %v9008 = vpop.f32.mrb[0].mxu0
      %9009 = vmatprep.mubr.f32.mxu0 0.0
      %9010 = vmatmul.mubr.f32.gmra.mrb[0].mxu0 %v8914
      %v9011 = vpop.f32.mrb[0].mxu0
      %v9012 = vadd.f32 0.0, %v9011
      %v9013 = vpop.f32.mrb[0].mxu0
      %9014 = vmatprep.mubr.f32.mxu0 0.0
      %9015 = vmatmul.mubr.f32.gmra.mrb[0].mxu0 %v8917
      %v9016 = vpop.f32.mrb[0].mxu0
      %v9017 = vadd.f32 0.0, %v9016
      %v9018 = vpop.f32.mrb[0].mxu0
      %9019 = vmatprep.mubr.f32.mxu0 0.0
      %9020 = vmatmul.mubr.f32.gmra.mrb[0].mxu0 %v8920
      %v9021 = vpop.f32.mrb[0].mxu0
      %v9022 = vadd.f32 0.0, %v9021
      %v9023 = vpop.f32.mrb[0].mxu0
      %9024 = vmatprep.mubr.f32.mxu0 0.0
      %9025 = vmatmul.mubr.f32.gmra.mrb[0].mxu0 %v8923
      %v9026 = vpop.f32.mrb[0].mxu0
      %v9027 = vadd.f32 0.0, %v9026
      %v9028 = vpop.f32.mrb[0].mxu0
      %9029 = vdwg.mxu0
      %9030 = vmax.xlane.f32.xlu0 %v8992
      %v9031 = vpop.xlane.xlu0 %9030
      %9032 = vmax.xlane.f32.xlu0 %v8997
      %v9033 = vpop.xlane.xlu0 %9032
      %9034 = vmax.xlane.f32.xlu0 %v9002
      %v9035 = vpop.xlane.xlu0 %9034
      %9036 = vmax.xlane.f32.xlu0 %v9007
      %v9037 = vpop.xlane.xlu0 %9036
      %9038 = vmax.xlane.f32.xlu0 %v9012
      %v9039 = vpop.xlane.xlu0 %9038
      %9040 = vmax.xlane.f32.xlu0 %v9017
      %v9041 = vpop.xlane.xlu0 %9040
      %9042 = vmax.xlane.f32.xlu0 %v9022
      %v9043 = vpop.xlane.xlu0 %9042
      %9044 = vmax.xlane.f32.xlu0 %v9027
      %v9045 = vpop.xlane.xlu0 %9044
      %v9046 = vsub.f32 %v8992, %v9031
      %v9047 = vsub.f32 %v8997, %v9033
      %v9048 = vsub.f32 %v9002, %v9035
      %v9049 = vsub.f32 %v9007, %v9037
      %v9050 = vsub.f32 %v9012, %v9039
      %v9051 = vsub.f32 %v9017, %v9041
      %v9052 = vsub.f32 %v9022, %v9043
      %v9053 = vsub.f32 %v9027, %v9045
      %v9054 = vmul.f32 %v9046, 1.442695
      %v9055 = vpow.pop %v9054
      %v9056 = vmul.f32 %v9047, 1.442695
      %v9057 = vpow.pop %v9056
      %v9058 = vmul.f32 %v9048, 1.442695
      %v9059 = vpow.pop %v9058
      %v9060 = vmul.f32 %v9049, 1.442695
      %v9061 = vpow.pop %v9060
      %v9062 = vmul.f32 %v9050, 1.442695
      %v9063 = vpow.pop %v9062
      %v9064 = vmul.f32 %v9051, 1.442695
      %v9065 = vpow.pop %v9064
      %v9066 = vmul.f32 %v9052, 1.442695
      %v9067 = vpow.pop %v9066
      %v9068 = vmul.f32 %v9053, 1.442695
      %v9069 = vpow.pop %v9068
      %9070 = vadd.xlane.f32.xlu0 %v9055
      %v9071 = vpop.xlane.xlu0 %9070
      %9072 = vadd.xlane.f32.xlu0 %v9057
      %v9073 = vpop.xlane.xlu0 %9072
      %9074 = vadd.xlane.f32.xlu0 %v9059
      %v9075 = vpop.xlane.xlu0 %9074
      %9076 = vadd.xlane.f32.xlu0 %v9061
      %v9077 = vpop.xlane.xlu0 %9076
      %9078 = vadd.xlane.f32.xlu0 %v9063
      %v9079 = vpop.xlane.xlu0 %9078
      %9080 = vadd.xlane.f32.xlu0 %v9065
      %v9081 = vpop.xlane.xlu0 %9080
      %9082 = vadd.xlane.f32.xlu0 %v9067
      %v9083 = vpop.xlane.xlu0 %9082
      %9084 = vadd.xlane.f32.xlu0 %v9069
      %v9085 = vpop.xlane.xlu0 %9084
      %v9086 = vmul.f32 %v617, %v8992
      %v9087 = vmul.f32 %v618, %v8997
      %v9088 = vmul.f32 %v619, %v9002
      %v9089 = vmul.f32 %v620, %v9007
      %v9090 = vmul.f32 %v621, %v9012
      %v9091 = vmul.f32 %v622, %v9017
      %v9092 = vmul.f32 %v623, %v9022
      %v9093 = vmul.f32 %v624, %v9027
      %9094 = vadd.xlane.f32.xlu0 %v9086
      %v9095 = vpop.xlane.xlu0 %9094
      %9096 = vadd.xlane.f32.xlu0 %v9087
      %v9097 = vpop.xlane.xlu0 %9096
      %9098 = vadd.xlane.f32.xlu0 %v9088
      %v9099 = vpop.xlane.xlu0 %9098
      %9100 = vadd.xlane.f32.xlu0 %v9089
      %v9101 = vpop.xlane.xlu0 %9100
      %9102 = vadd.xlane.f32.xlu0 %v9090
      %v9103 = vpop.xlane.xlu0 %9102
      %9104 = vadd.xlane.f32.xlu0 %v9091
      %v9105 = vpop.xlane.xlu0 %9104
      %9106 = vadd.xlane.f32.xlu0 %v9092
      %v9107 = vpop.xlane.xlu0 %9106
      %9108 = vadd.xlane.f32.xlu0 %v9093
      %v9109 = vpop.xlane.xlu0 %9108
      %v9110 = vlog2.pop %v9071
      %v9111 = vmul.f32 %v9110, 0.6931472
      %v9112 = vlog2.pop %v9073
      %v9113 = vmul.f32 %v9112, 0.6931472
      %v9114 = vlog2.pop %v9075
      %v9115 = vmul.f32 %v9114, 0.6931472
      %v9116 = vlog2.pop %v9077
      %v9117 = vmul.f32 %v9116, 0.6931472
      %v9118 = vlog2.pop %v9079
      %v9119 = vmul.f32 %v9118, 0.6931472
      %v9120 = vlog2.pop %v9081
      %v9121 = vmul.f32 %v9120, 0.6931472
      %v9122 = vlog2.pop %v9083
      %v9123 = vmul.f32 %v9122, 0.6931472
      %v9124 = vlog2.pop %v9085
      %v9125 = vmul.f32 %v9124, 0.6931472
      %v9126 = vadd.f32 %v9031, %v9111
      %v9127 = vadd.f32 %v9033, %v9113
      %v9128 = vadd.f32 %v9035, %v9115
      %v9129 = vadd.f32 %v9037, %v9117
      %v9130 = vadd.f32 %v9039, %v9119
      %v9131 = vadd.f32 %v9041, %v9121
      %v9132 = vadd.f32 %v9043, %v9123
      %v9133 = vadd.f32 %v9045, %v9125
      %v9134 = vsub.f32 %v9126, %v9095
      %v9135 = vsub.f32 %v9127, %v9097
      %v9136 = vsub.f32 %v9128, %v9099
      %v9137 = vsub.f32 %v9129, %v9101
      %v9138 = vsub.f32 %v9130, %v9103
      %v9139 = vsub.f32 %v9131, %v9105
      %v9140 = vsub.f32 %v9132, %v9107
      %v9141 = vsub.f32 %v9133, %v9109
      %v9142 = vmul.f32 %v9134, %v682
      %v9143 = vmul.f32 %v9135, %v683
      %v9144 = vmul.f32 %v9136, %v684
      %v9145 = vmul.f32 %v9137, %v685
      %v9146 = vmul.f32 %v9138, %v686
      %v9147 = vmul.f32 %v9139, %v687
      %v9148 = vmul.f32 %v9140, %v688
      %v9149 = vmul.f32 %v9141, %v689
      %v9150 = vsel %vm706, %v9142, 0.0
      %v9151 = vsel %vm706, %v9143, 0.0
      %v9152 = vadd.f32 %v9150, %v9151
      %v9153 = vsel %vm706, %v9144, 0.0
      %v9154 = vadd.f32 %v9152, %v9153
      %v9155 = vsel %vm706, %v9145, 0.0
      %v9156 = vadd.f32 %v9154, %v9155
      %v9157 = vsel %vm706, %v9146, 0.0
      %v9158 = vadd.f32 %v9156, %v9157
      %v9159 = vsel %vm706, %v9147, 0.0
      %v9160 = vadd.f32 %v9158, %v9159
      %v9161 = vsel %vm706, %v9148, 0.0
      %v9162 = vadd.f32 %v9160, %v9161
      %v9163 = vsel %vm706, %v9149, 0.0
      %v9164 = vadd.f32 %v9162, %v9163
      %9165 = vadd.xlane.f32.xlu0 %v9164
      %v9166 = vpop.xlane.xlu0 %9165
      %v9167 = vrot.slane %v9166, 4
      %v9168 = vadd.f32 %v9166, %v9167
      %v9169 = vrot.slane %v9168, 2
      %v9170 = vadd.f32 %v9168, %v9169
      %v9171 = vrot.slane %v9170, 1
      %v9172 = vadd.f32 %v9170, %v9171
      %s9173 = vtos %v9172
      %v9174 = vstv %s9173
      %v9175 = vmul.f32 %v9174, %v762
      %vm9176 = vcmp.eq.f32.partialorder %v8992, %v9031
      %vm9177 = vcmp.eq.f32.partialorder %v8997, %v9033
      %vm9178 = vcmp.eq.f32.partialorder %v9002, %v9035
      %vm9179 = vcmp.eq.f32.partialorder %v9007, %v9037
      %vm9180 = vcmp.eq.f32.partialorder %v9012, %v9039
      %vm9181 = vcmp.eq.f32.partialorder %v9017, %v9041
      %vm9182 = vcmp.eq.f32.partialorder %v9022, %v9043
      %vm9183 = vcmp.eq.f32.partialorder %v9027, %v9045
      %v9184 = vsel %vm9176, %v576, 128
      %v9185 = vsel %vm9177, %v576, 128
      %v9186 = vsel %vm9178, %v576, 128
      %v9187 = vsel %vm9179, %v576, 128
      %v9188 = vsel %vm9180, %v576, 128
      %v9189 = vsel %vm9181, %v576, 128
      %v9190 = vsel %vm9182, %v576, 128
      %v9191 = vsel %vm9183, %v576, 128
      %v9192 = vand.u32 %v9184, 65535
      %v9193 = vshra.s32 %v9184, 16
      %v9194 = vcvt.s32.f32 %v9192
      %v9195 = vcvt.s32.f32 %v9193
      %9196 = vmin.xlane.f32.xlu0 %v9195
      %v9197 = vpop.xlane.xlu0 %9196
      %vm9198 = vcmp.eq.f32.partialorder %v9195, %v9197
      %v9199 = vsel %vm9198, %v9194, inf
      %9200 = vmin.xlane.f32.xlu0 %v9199
      %v9201 = vpop.xlane.xlu0 %9200
      %v9202 = vcvt.f32.s32 %v9201
      %v9203 = vcvt.f32.s32 %v9197
      %v9204 = vshll.u32 %v9203, 16
      %v9205 = vadd.s32 %v9204, %v9202
      %v9206 = vand.u32 %v9185, 65535
      %v9207 = vshra.s32 %v9185, 16
      %v9208 = vcvt.s32.f32 %v9206
      %v9209 = vcvt.s32.f32 %v9207
      %9210 = vmin.xlane.f32.xlu0 %v9209
      %v9211 = vpop.xlane.xlu0 %9210
      %vm9212 = vcmp.eq.f32.partialorder %v9209, %v9211
      %v9213 = vsel %vm9212, %v9208, inf
      %9214 = vmin.xlane.f32.xlu0 %v9213
      %v9215 = vpop.xlane.xlu0 %9214
      %v9216 = vcvt.f32.s32 %v9215
      %v9217 = vcvt.f32.s32 %v9211
      %v9218 = vshll.u32 %v9217, 16
      %v9219 = vadd.s32 %v9218, %v9216
      %v9220 = vand.u32 %v9186, 65535
      %v9221 = vshra.s32 %v9186, 16
      %v9222 = vcvt.s32.f32 %v9220
      %v9223 = vcvt.s32.f32 %v9221
      %9224 = vmin.xlane.f32.xlu0 %v9223
      %v9225 = vpop.xlane.xlu0 %9224
      %vm9226 = vcmp.eq.f32.partialorder %v9223, %v9225
      %v9227 = vsel %vm9226, %v9222, inf
      %9228 = vmin.xlane.f32.xlu0 %v9227
      %v9229 = vpop.xlane.xlu0 %9228
      %v9230 = vcvt.f32.s32 %v9229
      %v9231 = vcvt.f32.s32 %v9225
      %v9232 = vshll.u32 %v9231, 16
      %v9233 = vadd.s32 %v9232, %v9230
      %v9234 = vand.u32 %v9187, 65535
      %v9235 = vshra.s32 %v9187, 16
      %v9236 = vcvt.s32.f32 %v9234
      %v9237 = vcvt.s32.f32 %v9235
      %9238 = vmin.xlane.f32.xlu0 %v9237
      %v9239 = vpop.xlane.xlu0 %9238
      %vm9240 = vcmp.eq.f32.partialorder %v9237, %v9239
      %v9241 = vsel %vm9240, %v9236, inf
      %9242 = vmin.xlane.f32.xlu0 %v9241
      %v9243 = vpop.xlane.xlu0 %9242
      %v9244 = vcvt.f32.s32 %v9243
      %v9245 = vcvt.f32.s32 %v9239
      %v9246 = vshll.u32 %v9245, 16
      %v9247 = vadd.s32 %v9246, %v9244
      %v9248 = vand.u32 %v9188, 65535
      %v9249 = vshra.s32 %v9188, 16
      %v9250 = vcvt.s32.f32 %v9248
      %v9251 = vcvt.s32.f32 %v9249
      %9252 = vmin.xlane.f32.xlu0 %v9251
      %v9253 = vpop.xlane.xlu0 %9252
      %vm9254 = vcmp.eq.f32.partialorder %v9251, %v9253
      %v9255 = vsel %vm9254, %v9250, inf
      %9256 = vmin.xlane.f32.xlu0 %v9255
      %v9257 = vpop.xlane.xlu0 %9256
      %v9258 = vcvt.f32.s32 %v9257
      %v9259 = vcvt.f32.s32 %v9253
      %v9260 = vshll.u32 %v9259, 16
      %v9261 = vadd.s32 %v9260, %v9258
      %v9262 = vand.u32 %v9189, 65535
      %v9263 = vshra.s32 %v9189, 16
      %v9264 = vcvt.s32.f32 %v9262
      %v9265 = vcvt.s32.f32 %v9263
      %9266 = vmin.xlane.f32.xlu0 %v9265
      %v9267 = vpop.xlane.xlu0 %9266
      %vm9268 = vcmp.eq.f32.partialorder %v9265, %v9267
      %v9269 = vsel %vm9268, %v9264, inf
      %9270 = vmin.xlane.f32.xlu0 %v9269
      %v9271 = vpop.xlane.xlu0 %9270
      %v9272 = vcvt.f32.s32 %v9271
      %v9273 = vcvt.f32.s32 %v9267
      %v9274 = vshll.u32 %v9273, 16
      %v9275 = vadd.s32 %v9274, %v9272
      %v9276 = vand.u32 %v9190, 65535
      %v9277 = vshra.s32 %v9190, 16
      %v9278 = vcvt.s32.f32 %v9276
      %v9279 = vcvt.s32.f32 %v9277
      %9280 = vmin.xlane.f32.xlu0 %v9279
      %v9281 = vpop.xlane.xlu0 %9280
      %vm9282 = vcmp.eq.f32.partialorder %v9279, %v9281
      %v9283 = vsel %vm9282, %v9278, inf
      %9284 = vmin.xlane.f32.xlu0 %v9283
      %v9285 = vpop.xlane.xlu0 %9284
      %v9286 = vcvt.f32.s32 %v9285
      %v9287 = vcvt.f32.s32 %v9281
      %v9288 = vshll.u32 %v9287, 16
      %v9289 = vadd.s32 %v9288, %v9286
      %v9290 = vand.u32 %v9191, 65535
      %v9291 = vshra.s32 %v9191, 16
      %v9292 = vcvt.s32.f32 %v9290
      %v9293 = vcvt.s32.f32 %v9291
      %9294 = vmin.xlane.f32.xlu0 %v9293
      %v9295 = vpop.xlane.xlu0 %9294
      %vm9296 = vcmp.eq.f32.partialorder %v9293, %v9295
      %v9297 = vsel %vm9296, %v9292, inf
      %9298 = vmin.xlane.f32.xlu0 %v9297
      %v9299 = vpop.xlane.xlu0 %9298
      %v9300 = vcvt.f32.s32 %v9299
      %v9301 = vcvt.f32.s32 %v9295
      %v9302 = vshll.u32 %v9301, 16
      %v9303 = vadd.s32 %v9302, %v9300
      %vm9304 = vcmp.eq.s32.totalorder %v9205, %v543
      %vm9305 = vcmp.eq.s32.totalorder %v9219, %v544
      %vm9306 = vcmp.eq.s32.totalorder %v9233, %v545
      %vm9307 = vcmp.eq.s32.totalorder %v9247, %v546
      %vm9308 = vcmp.eq.s32.totalorder %v9261, %v547
      %vm9309 = vcmp.eq.s32.totalorder %v9275, %v548
      %vm9310 = vcmp.eq.s32.totalorder %v9289, %v549
      %vm9311 = vcmp.eq.s32.totalorder %v9303, %v550
      %vm9312 = vmand %vm9304, %vm658
      %vm9313 = vmand %vm9305, %vm659
      %vm9314 = vmand %vm9306, %vm660
      %vm9315 = vmand %vm9307, %vm661
      %vm9316 = vmand %vm9308, %vm662
      %vm9317 = vmand %vm9309, %vm663
      %vm9318 = vmand %vm9310, %vm664
      %vm9319 = vmand %vm9311, %vm665
      %v9320 = vsel %vm9312, 1, 0
      %v9321 = vsel %vm9313, 1, 0
      %v9322 = vsel %vm9314, 1, 0
      %v9323 = vsel %vm9315, 1, 0
      %v9324 = vsel %vm9316, 1, 0
      %v9325 = vsel %vm9317, 1, 0
      %v9326 = vsel %vm9318, 1, 0
      %v9327 = vsel %vm9319, 1, 0
      %v9328 = vcvt.s32.f32 %v9320
      %v9329 = vcvt.s32.f32 %v9321
      %v9330 = vcvt.s32.f32 %v9322
      %v9331 = vcvt.s32.f32 %v9323
      %v9332 = vcvt.s32.f32 %v9324
      %v9333 = vcvt.s32.f32 %v9325
      %v9334 = vcvt.s32.f32 %v9326
      %v9335 = vcvt.s32.f32 %v9327
      %v9336 = vsel %vm706, %v9328, 0.0
      %v9337 = vsel %vm706, %v9329, 0.0
      %v9338 = vadd.f32 %v9336, %v9337
      %v9339 = vsel %vm706, %v9330, 0.0
      %v9340 = vadd.f32 %v9338, %v9339
      %v9341 = vsel %vm706, %v9331, 0.0
      %v9342 = vadd.f32 %v9340, %v9341
      %v9343 = vsel %vm706, %v9332, 0.0
      %v9344 = vadd.f32 %v9342, %v9343
      %v9345 = vsel %vm706, %v9333, 0.0
      %v9346 = vadd.f32 %v9344, %v9345
      %v9347 = vsel %vm706, %v9334, 0.0
      %v9348 = vadd.f32 %v9346, %v9347
      %v9349 = vsel %vm706, %v9335, 0.0
      %v9350 = vadd.f32 %v9348, %v9349
      %9351 = vadd.xlane.f32.xlu0 %v9350
      %v9352 = vpop.xlane.xlu0 %9351
      %v9353 = vrot.slane %v9352, 4
      %v9354 = vadd.f32 %v9352, %v9353
      %v9355 = vrot.slane %v9354, 2
      %v9356 = vadd.f32 %v9354, %v9355
      %v9357 = vrot.slane %v9356, 1
      %v9358 = vadd.f32 %v9356, %v9357
      %s9359 = vtos %v9358
      %vm9360 = vcmp.eq.s32.totalorder %v576, 3
      %v9361 = vsel %vm9360, %v9175, 0.0
      %v9362 = vadd.f32 %v7084, %v9361
      %v9363 = vstv %s9359
      %v9364 = vsel %vm9360, %v9363, 0.0
      %v9365 = vadd.f32 %v7087, %v9364
      %vm9366 = vcmask 24576
      %9367 = vst.msk [vmem:[%s347] sm:$0x1] %vm9366, %v9362
      %9368 = vst.msk [vmem:[%s350] sm:$0x1] %vm9366, %v9365
      %p9369 = scmp.lt.s32.totalorder %s20, 1
      %s9370 = scalar_select %p9369, %s20, 1
      %s9371 = scalar_lea.vmem %s7, %s9370
      %p9372 = scmp.lt.s32.totalorder %s20, 1
      %s9373 = scalar_select %p9372, %s20, 1
      %s9374 = scalar_lea.vmem %s8, %s9373
      // Predicated region
      $region49: #{_meta_forward_device.1} parent=47 // pred_check
        %p9375 = pneg %p200
      $region50: #{_meta_forward_device.1} parent=47 // pred_check_branch
        %9377 = sbr.rel (%p9375) target = $region52
      $region51: #{_meta_forward_device.1} parent=47 // pred_region
        _
      $region52: #{_meta_forward_device.1} parent=47 // pred_fallthru
        _
      // Predicated region
      $region53: #{_meta_forward_device.1} parent=47 // pred_check
        %p9378 = pneg %p226
      $region54: #{_meta_forward_device.1} parent=47 // pred_check_branch
        %9380 = sbr.rel (%p9378) target = $region56
      $region55: #{_meta_forward_device.1} parent=47 // pred_region
        _
      $region56: #{_meta_forward_device.1} parent=47 // pred_fallthru
        _
    $region48: #{_meta_forward_device.1} parent=5 // pred_fallthru
      _
    %p9381 = scmp.le.s32.totalorder 2, %s15
    // Predicated region
    $region57: #{_meta_forward_device.1} parent=5 // pred_check
      %p9382 = pneg %p9381
    $region58: #{_meta_forward_device.1} parent=5 // pred_check_branch
      %9384 = sbr.rel (%p9382) target = $region60
    $region59: #{_meta_forward_device.1} parent=5 // pred_region
      %s9385 = ssub.s32 %s15, 2
      // Predicated region
      $region61: #{_meta_forward_device.1} parent=59 // pred_check
        %p9386 = pneg %p206
      $region62: #{_meta_forward_device.1} parent=59 // pred_check_branch
        %9388 = sbr.rel (%p9386) target = $region64
      $region63: #{_meta_forward_device.1} parent=59 // pred_region
        %p9389 = scmp.lt.s32.totalorder %s21, 1
        %s9390 = scalar_select %p9389, %s21, 1
        %s9391 = scalar_lea.vmem %s7, %s9390
      $region64: #{_meta_forward_device.1} parent=59 // pred_fallthru
        _
      // Predicated region
      $region65: #{_meta_forward_device.1} parent=59 // pred_check
        %p9392 = pneg %p232
      $region66: #{_meta_forward_device.1} parent=59 // pred_check_branch
        %9394 = sbr.rel (%p9392) target = $region68
      $region67: #{_meta_forward_device.1} parent=59 // pred_region
        %p9395 = scmp.lt.s32.totalorder %s21, 1
        %s9396 = scalar_select %p9395, %s21, 1
        %s9397 = scalar_lea.vmem %s8, %s9396
      $region68: #{_meta_forward_device.1} parent=59 // pred_fallthru
        _
    $region60: #{_meta_forward_device.1} parent=5 // pred_fallthru
      _
  $region6: #{_meta_forward_device.1} parent=0 // loop_footer
    %s19 = sadd.s32 1, %s15
  $region7: #{_meta_forward_device.1} parent=0 // loop_footer_branch
    %14 = sbr.rel target = $region3
  $region8: #{_meta_forward_device.1} parent=0 // loop_exit
    _

</llo_original>
